<compile_context>
chip_gen: v5e
topology: v5e:2x2
jax: 0.10.0
libtpu: 0.0.40
codegen_flags: <defaults>
</compile_context>

<pallas_src>
import math

import jax
import jax.numpy as jnp
from jax.experimental import pallas as pl
from jax.experimental.pallas import tpu as pltpu

# ----------------------------- config (small) ------------------------------
N_EMBS = 32
N_HIDDEN = 32
VOCAB = 50
VP = 128                 # vocab padded to full lane width (one-hot + logits)
N_HEAD = 8
D_K = N_EMBS // N_HEAD
N_BLOCK = 4
B = 2
S_ABS = 10               # abstract length
S_TTL = 8                # title length
T_DEC = S_TTL - 1        # decoder steps
BS_ABS = B * S_ABS       # 20 real encoder rows
BS_PAD = 24              # encoder rows padded to sublane multiple
TB = T_DEC * B           # 14 real decoder rows (t-major: row = t*B + b)
TB_PAD = 16              # decoder rows padded to sublane multiple
LN_EPS = 1e-6

# packed token array layout (rows)
TOK_TTL = BS_PAD                 # 24: title-input tokens start
TOK_TGT = TOK_TTL + TB_PAD       # 40: title-target tokens start
TOK_ROWS = TOK_TGT + TB_PAD      # 56

# packed per-block parameter layout (rows within one block, stride BLK_ROWS)
BOFF_WQ, BOFF_WK, BOFF_WV, BOFF_WO, BOFF_W1, BOFF_W2 = 0, 32, 64, 96, 128, 160
(BROW_LN0_G, BROW_LN0_B, BROW_BQ, BROW_BK, BROW_BV, BROW_BO,
 BROW_LN1_G, BROW_LN1_B, BROW_B1, BROW_B2) = range(192, 202)
BLK_ROWS = 208

# packed misc parameter layout (rows)
OFF_PROJ_W = 0
OFF_WIH0, OFF_WHH0, OFF_WIH1, OFF_WHH1 = 32, 128, 224, 320
OFF_LINA, OFF_LINB = 416, 448
(ROW_PROJ_B, ROW_ENC_G, ROW_ENC_B, ROW_DEC_G, ROW_DEC_B) = range(480, 485)
MISC_ROWS = 488

OUT_ROWS = 40            # rows 0:32 = out_w, row 32 = out_b (-1e9 in pad lanes)


# --------------------------- single fused kernel ---------------------------

def _model_kernel(tok_ref, emb_ref, blk_ref, misc_ref, outw_ref, loss_ref, dec_sc):
    f32 = jnp.float32

    def dot(a, b):
        return jnp.dot(a, b, preferred_element_type=f32)

    def mvec(r):                                   # [1, 32] vector from misc pack
        return misc_ref[r:r + 1, :]

    def mmat(r):                                   # [32, 32] matrix from misc pack
        return misc_ref[r:r + N_HIDDEN, :]

    def ln(x, g, beta):                            # torch LayerNorm w/ unbiased std
        n = x.shape[-1]
        mu = jnp.mean(x, axis=-1, keepdims=True)
        d = x - mu
        var = jnp.sum(d * d, axis=-1, keepdims=True) * (1.0 / (n - 1))
        inv = pl.reciprocal(jnp.sqrt(var) + LN_EPS, approx=True)
        return g * d * inv + beta

    def softmax_rows(s):
        s = s - jnp.max(s, axis=-1, keepdims=True)
        e = jnp.exp(s)
        return e * pl.reciprocal(jnp.sum(e, axis=-1, keepdims=True), approx=True)

    # ---- embedding gather: one one-hot matmul for ALL token rows ----------
    tok = tok_ref[...]                                                   # [56,1] i32
    oh = (tok == jax.lax.broadcasted_iota(jnp.int32, (TOK_ROWS, VP), 1)).astype(f32)
    emb_all = dot(oh, emb_ref[...])                                      # [56,32]

    x = emb_all[0:BS_PAD, :]                                             # [24,32] enc
    emb_ttl = emb_all[TOK_TTL:TOK_TTL + TB_PAD, :]                       # [16,32] dec

    # ---- text_project (Linear + Sigmoid) + Transformer pre-norm -----------
    x = jax.nn.sigmoid(dot(x, mmat(OFF_PROJ_W)) + mvec(ROW_PROJ_B))
    x = ln(x, mvec(ROW_ENC_G), mvec(ROW_ENC_B))

    # ---- constants hoisted out of the block loop ---------------------------
    lane = jax.lax.broadcasted_iota(jnp.int32, (1, N_EMBS), 1)
    head_masks = [((lane >= h * D_K) & (lane < (h + 1) * D_K)).astype(f32)
                  for h in range(N_HEAD)]
    ri = jax.lax.broadcasted_iota(jnp.int32, (BS_PAD, BS_PAD), 0)
    ci = jax.lax.broadcasted_iota(jnp.int32, (BS_PAD, BS_PAD), 1)
    batch_bias = jnp.full((BS_PAD, BS_PAD), -1e9, f32)
    for b in range(B):
        lo, hi = b * S_ABS, (b + 1) * S_ABS
        inb = (ri >= lo) & (ri < hi) & (ci >= lo) & (ci < hi)
        batch_bias = jnp.where(inb, 0.0, batch_bias)

    scale = 1.0 / math.sqrt(D_K)

    # ---- transformer blocks (fully unrolled) -------------------------------
    for blk in range(N_BLOCK):
        base = blk * BLK_ROWS

        def bvec(r, base=base):
            return blk_ref[base + r:base + r + 1, :]

        def bmat(r, base=base):
            return blk_ref[base + r:base + r + N_EMBS, :]

        # q from normed x, k/v from the un-normed block input (reference lambda)
        xn = ln(x, bvec(BROW_LN0_G), bvec(BROW_LN0_B))
        q = dot(xn, bmat(BOFF_WQ)) + bvec(BROW_BQ)
        k = dot(x, bmat(BOFF_WK)) + bvec(BROW_BK)
        v = dot(x, bmat(BOFF_WV)) + bvec(BROW_BV)

        acc = None
        for h in range(N_HEAD):
            kh = k * head_masks[h]                 # zero non-head lanes of k and v;
            vh = v * head_masks[h]                 # q stays full-width (contraction
            s = jax.lax.dot_general(               #  over masked k picks head lanes)
                q, kh, (((1,), (1,)), ((), ())),
                preferred_element_type=f32) * scale + batch_bias
            p = softmax_rows(s)                    # block-diag bias kills cross-batch
            hv = dot(p, vh)                        # lands in head-h lanes only
            acc = hv if acc is None else acc + hv
        x = x + dot(acc, bmat(BOFF_WO)) + bvec(BROW_BO)   # single out-proj / block

        xn = ln(x, bvec(BROW_LN1_G), bvec(BROW_LN1_B))
        hf = jnp.maximum(dot(xn, bmat(BOFF_W1)) + bvec(BROW_B1), 0.0)
        x = x + dot(hf, bmat(BOFF_W2)) + bvec(BROW_B2)

    # ---- G = per-batch mean over the sequence (pooling matmul) -------------
    rb = jax.lax.broadcasted_iota(jnp.int32, (B, BS_PAD), 0)
    cb = jax.lax.broadcasted_iota(jnp.int32, (B, BS_PAD), 1)
    pool = jnp.where((cb >= rb * S_ABS) & (cb < (rb + 1) * S_ABS),
                     1.0 / S_ABS, 0.0).astype(f32)
    G = dot(pool, x)                                                     # [2,32]

    # ---- GRU decoder --------------------------------------------------------
    # layer-0 input projections are independent of the recurrence -> hoisted
    gi0_r = dot(emb_ttl, mmat(OFF_WIH0))
    gi0_z = dot(emb_ttl, mmat(OFF_WIH0 + 32))
    gi0_n = dot(emb_ttl, mmat(OFF_WIH0 + 64))

    whh0_r, whh0_z, whh0_n = mmat(OFF_WHH0), mmat(OFF_WHH0 + 32), mmat(OFF_WHH0 + 64)
    wih1_r, wih1_z, wih1_n = mmat(OFF_WIH1), mmat(OFF_WIH1 + 32), mmat(OFF_WIH1 + 64)
    whh1_r, whh1_z, whh1_n = mmat(OFF_WHH1), mmat(OFF_WHH1 + 32), mmat(OFF_WHH1 + 64)
    linwa, linwb = mmat(OFF_LINA), mmat(OFF_LINB)

    dec_sc[...] = jnp.zeros_like(dec_sc)           # zero (incl. 2 pad rows)

    h0 = G                                         # G repeated 2x -> h[0] = h[1] = G
    h1 = G
    for t in range(T_DEC):
        r0 = t * B
        # layer-0 GRU cell (per-gate weights, no 96-lane slices)
        r = jax.nn.sigmoid(gi0_r[r0:r0 + B, :] + dot(h0, whh0_r))
        z = jax.nn.sigmoid(gi0_z[r0:r0 + B, :] + dot(h0, whh0_z))
        n = jnp.tanh(gi0_n[r0:r0 + B, :] + r * dot(h0, whh0_n))
        nh1 = (1.0 - z) * n + z * h0
        # layer-1 GRU cell
        r2 = jax.nn.sigmoid(dot(nh1, wih1_r) + dot(h1, whh1_r))
        z2 = jax.nn.sigmoid(dot(nh1, wih1_z) + dot(h1, whh1_z))
        n2 = jnp.tanh(dot(nh1, wih1_n) + r2 * dot(h1, whh1_n))
        nh2 = (1.0 - z2) * n2 + z2 * h1
        # GRU_Decoder.attn returns its *input* hidden state (reference bug)
        # -> identity; 2H->H linear split into two [32,32] matmuls (no concat)
        new_h0 = jnp.tanh(dot(h0, linwa) + dot(nh2, linwb))
        dec_sc[r0:r0 + B, :] = new_h0
        h0, h1 = new_h0, nh2

    out = ln(dec_sc[...], mvec(ROW_DEC_G), mvec(ROW_DEC_B))              # [16,32]
    logits = dot(out, outw_ref[0:N_HIDDEN, :]) + outw_ref[N_HIDDEN:N_HIDDEN + 1, :]

    # ---- cross-entropy (ignore_index=0) + mean over TB positions ------------
    # pad lanes (>=VOCAB) carry bias -1e9 -> contribute 0 to the softmax;
    # pad rows (>=TB) have target 0 -> masked out.
    tgt = tok_ref[TOK_TGT:TOK_TGT + TB_PAD, :]                           # [16,1]
    mx = jnp.max(logits, axis=-1, keepdims=True)
    e = jnp.exp(logits - mx)
    lse = jnp.log(jnp.sum(e, axis=-1, keepdims=True)) + mx
    oh_t = (tgt == jax.lax.broadcasted_iota(jnp.int32, (TB_PAD, VP), 1)).astype(f32)
    tgt_logit = jnp.sum(logits * oh_t, axis=-1, keepdims=True)
    mask = (tgt != 0).astype(f32)
    ce = (lse - tgt_logit) * mask                                        # [16,1]
    weights = jnp.full((1, TB_PAD), 1.0 / TB, f32)
    loss_ref[...] = dot(weights, ce)


def _full_spec(arr):
    nd = arr.ndim
    return pl.BlockSpec(tuple(arr.shape), lambda nd=nd: (0,) * nd)


# ------------------------------ host wrapper --------------------------------

def pack_params(p):
    """Pack all parameters into 4 VMEM-friendly arrays (few DMAs, aligned rows)."""
    f32 = jnp.float32

    emb = jnp.zeros((VP, N_EMBS), f32).at[:VOCAB].set(p["word_emb"])

    blocks = []
    for i in range(N_BLOCK):
        mats = jnp.concatenate(
            [p["blk_wq"][i], p["blk_wk"][i], p["blk_wv"][i],
             p["blk_wo"][i], p["blk_w1"][i], p["blk_w2"][i]], axis=0)         # [192,32]
        vecs = jnp.stack(
            [p["blk_ln0_g"][i], p["blk_ln0_b"][i],
             p["blk_bq"][i], p["blk_bk"][i], p["blk_bv"][i], p["blk_bo"][i],
             p["blk_ln1_g"][i], p["blk_ln1_b"][i],
             p["blk_b1"][i], p["blk_b2"][i]], axis=0)                          # [10,32]
        pad = jnp.zeros((BLK_ROWS - 202, N_EMBS), f32)
        blocks.append(jnp.concatenate([mats, vecs, pad], axis=0))              # [208,32]
    blk = jnp.concatenate(blocks, axis=0)                                      # [832,32]

    def split3(w):                                   # [in, 3H] -> 3 x [in, H] (r,z,n)
        return [w[:, :N_HIDDEN], w[:, N_HIDDEN:2 * N_HIDDEN], w[:, 2 * N_HIDDEN:]]

    mats = [p["proj_w"]]
    for name in ("w_ih0", "w_hh0", "w_ih1", "w_hh1"):
        mats += split3(p[name])
    mats += [p["lin_w"][:N_HIDDEN], p["lin_w"][N_HIDDEN:]]
    mats = jnp.concatenate(mats, axis=0)                                       # [480,32]
    vecs = jnp.stack([p["proj_b"], p["enc_norm_g"], p["enc_norm_b"],
                      p["dec_norm_g"], p["dec_norm_b"]], axis=0)               # [5,32]
    misc = jnp.concatenate(
        [mats, vecs, jnp.zeros((MISC_ROWS - 485, N_HIDDEN), f32)], axis=0)     # [488,32]

    outw = jnp.zeros((OUT_ROWS, VP), f32)
    outw = outw.at[:N_HIDDEN, :VOCAB].set(p["out_w"])
    bias_row = jnp.full((VP,), -1e9, f32).at[:VOCAB].set(p["out_b"])
    outw = outw.at[N_HIDDEN].set(bias_row)                                     # [40,128]

    return dict(emb=emb, blk=blk, misc=misc, outw=outw)


def model_forward(packed, Abstract, Title):
    # pack all token ids into one int32 array (aligned offsets 0 / 24 / 40)
    abs_flat = Abstract.reshape(BS_ABS).astype(jnp.int32)                  # b*S + s
    ttl_in = Title[:, :-1].T.reshape(TB).astype(jnp.int32)                 # t*B + b
    ttl_tgt = Title.T[1:].reshape(TB).astype(jnp.int32)                    # t*B + b
    tok = jnp.zeros((TOK_ROWS,), jnp.int32)
    tok = tok.at[0:BS_ABS].set(abs_flat)
    tok = tok.at[TOK_TTL:TOK_TTL + TB].set(ttl_in)
    tok = tok.at[TOK_TGT:TOK_TGT + TB].set(ttl_tgt)
    tok = tok.reshape(TOK_ROWS, 1)

    inputs = [tok, packed["emb"], packed["blk"], packed["misc"], packed["outw"]]
    loss = pl.pallas_call(
        _model_kernel,
        out_shape=jax.ShapeDtypeStruct((1, 1), jnp.float32),
        in_specs=[_full_spec(a) for a in inputs],
        out_specs=pl.BlockSpec((1, 1), lambda: (0, 0)),
        scratch_shapes=[pltpu.VMEM((TB_PAD, N_HIDDEN), jnp.float32)],
    )(*inputs)
    return loss[0, 0]


# ------------------------------- parameters --------------------------------

def init_params(key):
    def nrm(shape, scale=0.05):
        nonlocal key
        key, sub = jax.random.split(key)
        return jax.random.normal(sub, shape, jnp.float32) * scale

    ones = lambda *s: jnp.ones(s, jnp.float32)
    zeros = lambda *s: jnp.zeros(s, jnp.float32)

    params = dict(
        word_emb=nrm((VOCAB, N_EMBS), 0.1),
        proj_w=nrm((N_EMBS, N_HIDDEN)), proj_b=nrm((N_HIDDEN,), 0.01),
        enc_norm_g=ones(N_EMBS), enc_norm_b=zeros(N_EMBS),
        blk_ln0_g=ones(N_BLOCK, N_EMBS), blk_ln0_b=zeros(N_BLOCK, N_EMBS),
        blk_ln1_g=ones(N_BLOCK, N_EMBS), blk_ln1_b=zeros(N_BLOCK, N_EMBS),
        blk_wq=nrm((N_BLOCK, N_EMBS, N_EMBS)), blk_bq=nrm((N_BLOCK, N_EMBS), 0.01),
        blk_wk=nrm((N_BLOCK, N_EMBS, N_EMBS)), blk_bk=nrm((N_BLOCK, N_EMBS), 0.01),
        blk_wv=nrm((N_BLOCK, N_EMBS, N_EMBS)), blk_bv=nrm((N_BLOCK, N_EMBS), 0.01),
        blk_wo=nrm((N_BLOCK, N_EMBS, N_EMBS)), blk_bo=nrm((N_BLOCK, N_EMBS), 0.01),
        blk_w1=nrm((N_BLOCK, N_EMBS, N_HIDDEN)), blk_b1=nrm((N_BLOCK, N_HIDDEN), 0.01),
        blk_w2=nrm((N_BLOCK, N_HIDDEN, N_EMBS)), blk_b2=nrm((N_BLOCK, N_EMBS), 0.01),
        # [in, out] layout, gate order (r, z, n); GRUCell / linear are bias=False
        w_ih0=nrm((N_EMBS, 3 * N_HIDDEN)), w_hh0=nrm((N_HIDDEN, 3 * N_HIDDEN)),
        w_ih1=nrm((N_HIDDEN, 3 * N_HIDDEN)), w_hh1=nrm((N_HIDDEN, 3 * N_HIDDEN)),
        lin_w=nrm((2 * N_HIDDEN, N_HIDDEN)),
        dec_norm_g=ones(N_HIDDEN), dec_norm_b=zeros(N_HIDDEN),
        out_w=nrm((N_HIDDEN, VOCAB)), out_b=nrm((VOCAB,), 0.01),
    )
    # TODO(synk): PositionalEncoder and gru_l2/gru_l3 are created in __init__ but
    # never used in Model.forward, so they are omitted here.
    return params


# ---------------------------------- main ------------------------------------

if __name__ == "__main__":
    key = jax.random.PRNGKey(0)
    kp, ka, kt = jax.random.split(key, 3)
    params = init_params(kp)
    packed = pack_params(params)

    Abstract = jax.random.randint(ka, (B, S_ABS), 0, VOCAB, dtype=jnp.int32)
    Title = jax.random.randint(kt, (B, S_TTL), 0, VOCAB, dtype=jnp.int32)

    loss = jax.jit(model_forward)(packed, Abstract, Title)
    loss = jax.block_until_ready(loss)
    assert loss.shape == () and jnp.isfinite(loss)
    print("KERNEL_OK")
</pallas_src>

<mosaic_0001>
module attributes {stable_mosaic.version = 11 : i64} {
  func.func @_model_kernel(%arg0: memref<56x1xi32, #tpu.memory_space<vmem>>, %arg1: memref<128x32xf32, #tpu.memory_space<vmem>>, %arg2: memref<832x32xf32, #tpu.memory_space<vmem>>, %arg3: memref<488x32xf32, #tpu.memory_space<vmem>>, %arg4: memref<40x128xf32, #tpu.memory_space<vmem>>, %arg5: memref<1x1xf32, #tpu.memory_space<vmem>>, %arg6: memref<16x32xf32, #tpu.memory_space<vmem>>) attributes {dimension_semantics = [], scalar_prefetch = 0 : i64, scratch_operands = 1 : i64, tpu.core_type = #tpu.core_type<tc>} {
    %c0 = arith.constant 0 : index
    %c0_0 = arith.constant 0 : index
    %0 = vector.load %arg0[%c0, %c0_0] : memref<56x1xi32, #tpu.memory_space<vmem>>, vector<56x1xi32>
    %1 = tpu.iota {dimensions = array<i32: 1>} : vector<56x128xi32>
    %2 = vector.broadcast %0 : vector<56x1xi32> to vector<56x128xi32>
    %3 = arith.cmpi eq, %2, %1 : vector<56x128xi32>
    %4 = arith.extui %3 : vector<56x128xi1> to vector<56x128xi32>
    %5 = arith.sitofp %4 : vector<56x128xi32> to vector<56x128xf32>
    %c0_1 = arith.constant 0 : index
    %c0_2 = arith.constant 0 : index
    %6 = vector.load %arg1[%c0_1, %c0_2] : memref<128x32xf32, #tpu.memory_space<vmem>>, vector<128x32xf32>
    %cst = arith.constant dense<0.000000e+00> : vector<56x32xf32>
    %7 = tpu.matmul %5, %6, %cst {dimension_numbers = #tpu.dot_dimension_numbers<[1], [0], [0], [1], [0, 0, 1, 1], [], []>} : vector<56x128xf32>, vector<128x32xf32>, vector<56x32xf32> -> vector<56x32xf32>
    %8 = vector.extract_strided_slice %7 {offsets = [0, 0], sizes = [24, 32], strides = [1, 1]} : vector<56x32xf32> to vector<24x32xf32>
    %9 = vector.extract_strided_slice %7 {offsets = [24, 0], sizes = [16, 32], strides = [1, 1]} : vector<56x32xf32> to vector<16x32xf32>
    %c0_3 = arith.constant 0 : index
    %c0_4 = arith.constant 0 : index
    %10 = vector.load %arg3[%c0_3, %c0_4] : memref<488x32xf32, #tpu.memory_space<vmem>>, vector<32x32xf32>
    %cst_5 = arith.constant dense<0.000000e+00> : vector<24x32xf32>
    %11 = tpu.matmul %8, %10, %cst_5 {dimension_numbers = #tpu.dot_dimension_numbers<[1], [0], [0], [1], [0, 0, 1, 1], [], []>} : vector<24x32xf32>, vector<32x32xf32>, vector<24x32xf32> -> vector<24x32xf32>
    %c480 = arith.constant 480 : index
    %c0_6 = arith.constant 0 : index
    %12 = vector.load %arg3[%c480, %c0_6] : memref<488x32xf32, #tpu.memory_space<vmem>>, vector<1x32xf32>
    %13 = vector.broadcast %12 : vector<1x32xf32> to vector<24x32xf32>
    %14 = arith.addf %11, %13 : vector<24x32xf32>
    %15 = arith.negf %14 : vector<24x32xf32>
    %16 = math.exp %15 : vector<24x32xf32>
    %cst_7 = arith.constant 1.000000e+00 : f32
    %17 = vector.broadcast %cst_7 : f32 to vector<24x32xf32>
    %18 = arith.addf %17, %16 : vector<24x32xf32>
    %19 = arith.divf %17, %18 : vector<24x32xf32>
    %c481 = arith.constant 481 : index
    %c0_8 = arith.constant 0 : index
    %20 = vector.load %arg3[%c481, %c0_8] : memref<488x32xf32, #tpu.memory_space<vmem>>, vector<1x32xf32>
    %c482 = arith.constant 482 : index
    %c0_9 = arith.constant 0 : index
    %21 = vector.load %arg3[%c482, %c0_9] : memref<488x32xf32, #tpu.memory_space<vmem>>, vector<1x32xf32>
    %cst_10 = arith.constant dense<0.000000e+00> : vector<24xf32>
    %22 = vector.multi_reduction <add>, %19, %cst_10 [1] : vector<24x32xf32> to vector<24xf32>
    %23 = vector.shape_cast %22 : vector<24xf32> to vector<24x1xf32>
    %cst_11 = arith.constant 3.200000e+01 : f32
    %24 = vector.broadcast %cst_11 : f32 to vector<24x1xf32>
    %25 = arith.divf %23, %24 : vector<24x1xf32>
    %26 = vector.broadcast %25 : vector<24x1xf32> to vector<24x32xf32>
    %27 = arith.subf %19, %26 : vector<24x32xf32>
    %28 = arith.mulf %27, %27 : vector<24x32xf32>
    %cst_12 = arith.constant dense<0.000000e+00> : vector<24xf32>
    %29 = vector.multi_reduction <add>, %28, %cst_12 [1] : vector<24x32xf32> to vector<24xf32>
    %30 = vector.shape_cast %29 : vector<24xf32> to vector<24x1xf32>
    %cst_13 = arith.constant 0.0322580636 : f32
    %31 = vector.broadcast %cst_13 : f32 to vector<24x1xf32>
    %32 = arith.mulf %30, %31 : vector<24x1xf32>
    %33 = math.sqrt %32 : vector<24x1xf32>
    %cst_14 = arith.constant 9.99999997E-7 : f32
    %34 = vector.broadcast %cst_14 : f32 to vector<24x1xf32>
    %35 = arith.addf %33, %34 : vector<24x1xf32>
    %36 = tpu.reciprocal %35 {approx = true} : vector<24x1xf32> -> vector<24x1xf32>
    %37 = vector.broadcast %20 : vector<1x32xf32> to vector<24x32xf32>
    %38 = arith.mulf %37, %27 : vector<24x32xf32>
    %39 = vector.broadcast %36 : vector<24x1xf32> to vector<24x32xf32>
    %40 = arith.mulf %38, %39 : vector<24x32xf32>
    %41 = vector.broadcast %21 : vector<1x32xf32> to vector<24x32xf32>
    %42 = arith.addf %40, %41 : vector<24x32xf32>
    %43 = tpu.iota {dimensions = array<i32: 1>} : vector<1x32xi32>
    %c0_i32 = arith.constant 0 : i32
    %44 = vector.broadcast %c0_i32 : i32 to vector<1x32xi32>
    %45 = arith.cmpi sge, %43, %44 : vector<1x32xi32>
    %c4_i32 = arith.constant 4 : i32
    %46 = vector.broadcast %c4_i32 : i32 to vector<1x32xi32>
    %47 = arith.cmpi slt, %43, %46 : vector<1x32xi32>
    %48 = arith.andi %45, %47 : vector<1x32xi1>
    %49 = arith.extui %48 : vector<1x32xi1> to vector<1x32xi32>
    %50 = arith.sitofp %49 : vector<1x32xi32> to vector<1x32xf32>
    %c4_i32_15 = arith.constant 4 : i32
    %51 = vector.broadcast %c4_i32_15 : i32 to vector<1x32xi32>
    %52 = arith.cmpi sge, %43, %51 : vector<1x32xi32>
    %c8_i32 = arith.constant 8 : i32
    %53 = vector.broadcast %c8_i32 : i32 to vector<1x32xi32>
    %54 = arith.cmpi slt, %43, %53 : vector<1x32xi32>
    %55 = arith.andi %52, %54 : vector<1x32xi1>
    %56 = arith.extui %55 : vector<1x32xi1> to vector<1x32xi32>
    %57 = arith.sitofp %56 : vector<1x32xi32> to vector<1x32xf32>
    %c8_i32_16 = arith.constant 8 : i32
    %58 = vector.broadcast %c8_i32_16 : i32 to vector<1x32xi32>
    %59 = arith.cmpi sge, %43, %58 : vector<1x32xi32>
    %c12_i32 = arith.constant 12 : i32
    %60 = vector.broadcast %c12_i32 : i32 to vector<1x32xi32>
    %61 = arith.cmpi slt, %43, %60 : vector<1x32xi32>
    %62 = arith.andi %59, %61 : vector<1x32xi1>
    %63 = arith.extui %62 : vector<1x32xi1> to vector<1x32xi32>
    %64 = arith.sitofp %63 : vector<1x32xi32> to vector<1x32xf32>
    %c12_i32_17 = arith.constant 12 : i32
    %65 = vector.broadcast %c12_i32_17 : i32 to vector<1x32xi32>
    %66 = arith.cmpi sge, %43, %65 : vector<1x32xi32>
    %c16_i32 = arith.constant 16 : i32
    %67 = vector.broadcast %c16_i32 : i32 to vector<1x32xi32>
    %68 = arith.cmpi slt, %43, %67 : vector<1x32xi32>
    %69 = arith.andi %66, %68 : vector<1x32xi1>
    %70 = arith.extui %69 : vector<1x32xi1> to vector<1x32xi32>
    %71 = arith.sitofp %70 : vector<1x32xi32> to vector<1x32xf32>
    %c16_i32_18 = arith.constant 16 : i32
    %72 = vector.broadcast %c16_i32_18 : i32 to vector<1x32xi32>
    %73 = arith.cmpi sge, %43, %72 : vector<1x32xi32>
    %c20_i32 = arith.constant 20 : i32
    %74 = vector.broadcast %c20_i32 : i32 to vector<1x32xi32>
    %75 = arith.cmpi slt, %43, %74 : vector<1x32xi32>
    %76 = arith.andi %73, %75 : vector<1x32xi1>
    %77 = arith.extui %76 : vector<1x32xi1> to vector<1x32xi32>
    %78 = arith.sitofp %77 : vector<1x32xi32> to vector<1x32xf32>
    %c20_i32_19 = arith.constant 20 : i32
    %79 = vector.broadcast %c20_i32_19 : i32 to vector<1x32xi32>
    %80 = arith.cmpi sge, %43, %79 : vector<1x32xi32>
    %c24_i32 = arith.constant 24 : i32
    %81 = vector.broadcast %c24_i32 : i32 to vector<1x32xi32>
    %82 = arith.cmpi slt, %43, %81 : vector<1x32xi32>
    %83 = arith.andi %80, %82 : vector<1x32xi1>
    %84 = arith.extui %83 : vector<1x32xi1> to vector<1x32xi32>
    %85 = arith.sitofp %84 : vector<1x32xi32> to vector<1x32xf32>
    %c24_i32_20 = arith.constant 24 : i32
    %86 = vector.broadcast %c24_i32_20 : i32 to vector<1x32xi32>
    %87 = arith.cmpi sge, %43, %86 : vector<1x32xi32>
    %c28_i32 = arith.constant 28 : i32
    %88 = vector.broadcast %c28_i32 : i32 to vector<1x32xi32>
    %89 = arith.cmpi slt, %43, %88 : vector<1x32xi32>
    %90 = arith.andi %87, %89 : vector<1x32xi1>
    %91 = arith.extui %90 : vector<1x32xi1> to vector<1x32xi32>
    %92 = arith.sitofp %91 : vector<1x32xi32> to vector<1x32xf32>
    %c28_i32_21 = arith.constant 28 : i32
    %93 = vector.broadcast %c28_i32_21 : i32 to vector<1x32xi32>
    %94 = arith.cmpi sge, %43, %93 : vector<1x32xi32>
    %c32_i32 = arith.constant 32 : i32
    %95 = vector.broadcast %c32_i32 : i32 to vector<1x32xi32>
    %96 = arith.cmpi slt, %43, %95 : vector<1x32xi32>
    %97 = arith.andi %94, %96 : vector<1x32xi1>
    %98 = arith.extui %97 : vector<1x32xi1> to vector<1x32xi32>
    %99 = arith.sitofp %98 : vector<1x32xi32> to vector<1x32xf32>
    %100 = tpu.iota {dimensions = array<i32: 0>} : vector<24x24xi32>
    %101 = tpu.iota {dimensions = array<i32: 1>} : vector<24x24xi32>
    %cst_22 = arith.constant -1.000000e+09 : f32
    %102 = vector.broadcast %cst_22 : f32 to vector<24x24xf32>
    %c0_i32_23 = arith.constant 0 : i32
    %103 = vector.broadcast %c0_i32_23 : i32 to vector<24x24xi32>
    %104 = arith.cmpi sge, %100, %103 : vector<24x24xi32>
    %c10_i32 = arith.constant 10 : i32
    %105 = vector.broadcast %c10_i32 : i32 to vector<24x24xi32>
    %106 = arith.cmpi slt, %100, %105 : vector<24x24xi32>
    %107 = arith.andi %104, %106 : vector<24x24xi1>
    %c0_i32_24 = arith.constant 0 : i32
    %108 = vector.broadcast %c0_i32_24 : i32 to vector<24x24xi32>
    %109 = arith.cmpi sge, %101, %108 : vector<24x24xi32>
    %110 = arith.andi %107, %109 : vector<24x24xi1>
    %c10_i32_25 = arith.constant 10 : i32
    %111 = vector.broadcast %c10_i32_25 : i32 to vector<24x24xi32>
    %112 = arith.cmpi slt, %101, %111 : vector<24x24xi32>
    %113 = arith.andi %110, %112 : vector<24x24xi1>
    %cst_26 = arith.constant 0.000000e+00 : f32
    %114 = vector.broadcast %cst_26 : f32 to vector<24x24xf32>
    %115 = arith.select %113, %114, %102 : vector<24x24xi1>, vector<24x24xf32>
    %c10_i32_27 = arith.constant 10 : i32
    %116 = vector.broadcast %c10_i32_27 : i32 to vector<24x24xi32>
    %117 = arith.cmpi sge, %100, %116 : vector<24x24xi32>
    %c20_i32_28 = arith.constant 20 : i32
    %118 = vector.broadcast %c20_i32_28 : i32 to vector<24x24xi32>
    %119 = arith.cmpi slt, %100, %118 : vector<24x24xi32>
    %120 = arith.andi %117, %119 : vector<24x24xi1>
    %c10_i32_29 = arith.constant 10 : i32
    %121 = vector.broadcast %c10_i32_29 : i32 to vector<24x24xi32>
    %122 = arith.cmpi sge, %101, %121 : vector<24x24xi32>
    %123 = arith.andi %120, %122 : vector<24x24xi1>
    %c20_i32_30 = arith.constant 20 : i32
    %124 = vector.broadcast %c20_i32_30 : i32 to vector<24x24xi32>
    %125 = arith.cmpi slt, %101, %124 : vector<24x24xi32>
    %126 = arith.andi %123, %125 : vector<24x24xi1>
    %cst_31 = arith.constant 0.000000e+00 : f32
    %127 = vector.broadcast %cst_31 : f32 to vector<24x24xf32>
    %128 = arith.select %126, %127, %115 : vector<24x24xi1>, vector<24x24xf32>
    %c192 = arith.constant 192 : index
    %c0_32 = arith.constant 0 : index
    %129 = vector.load %arg2[%c192, %c0_32] : memref<832x32xf32, #tpu.memory_space<vmem>>, vector<1x32xf32>
    %c193 = arith.constant 193 : index
    %c0_33 = arith.constant 0 : index
    %130 = vector.load %arg2[%c193, %c0_33] : memref<832x32xf32, #tpu.memory_space<vmem>>, vector<1x32xf32>
    %cst_34 = arith.constant dense<0.000000e+00> : vector<24xf32>
    %131 = vector.multi_reduction <add>, %42, %cst_34 [1] : vector<24x32xf32> to vector<24xf32>
    %132 = vector.shape_cast %131 : vector<24xf32> to vector<24x1xf32>
    %cst_35 = arith.constant 3.200000e+01 : f32
    %133 = vector.broadcast %cst_35 : f32 to vector<24x1xf32>
    %134 = arith.divf %132, %133 : vector<24x1xf32>
    %135 = vector.broadcast %134 : vector<24x1xf32> to vector<24x32xf32>
    %136 = arith.subf %42, %135 : vector<24x32xf32>
    %137 = arith.mulf %136, %136 : vector<24x32xf32>
    %cst_36 = arith.constant dense<0.000000e+00> : vector<24xf32>
    %138 = vector.multi_reduction <add>, %137, %cst_36 [1] : vector<24x32xf32> to vector<24xf32>
    %139 = vector.shape_cast %138 : vector<24xf32> to vector<24x1xf32>
    %cst_37 = arith.constant 0.0322580636 : f32
    %140 = vector.broadcast %cst_37 : f32 to vector<24x1xf32>
    %141 = arith.mulf %139, %140 : vector<24x1xf32>
    %142 = math.sqrt %141 : vector<24x1xf32>
    %cst_38 = arith.constant 9.99999997E-7 : f32
    %143 = vector.broadcast %cst_38 : f32 to vector<24x1xf32>
    %144 = arith.addf %142, %143 : vector<24x1xf32>
    %145 = tpu.reciprocal %144 {approx = true} : vector<24x1xf32> -> vector<24x1xf32>
    %146 = vector.broadcast %129 : vector<1x32xf32> to vector<24x32xf32>
    %147 = arith.mulf %146, %136 : vector<24x32xf32>
    %148 = vector.broadcast %145 : vector<24x1xf32> to vector<24x32xf32>
    %149 = arith.mulf %147, %148 : vector<24x32xf32>
    %150 = vector.broadcast %130 : vector<1x32xf32> to vector<24x32xf32>
    %151 = arith.addf %149, %150 : vector<24x32xf32>
    %c0_39 = arith.constant 0 : index
    %c0_40 = arith.constant 0 : index
    %152 = vector.load %arg2[%c0_39, %c0_40] : memref<832x32xf32, #tpu.memory_space<vmem>>, vector<32x32xf32>
    %cst_41 = arith.constant dense<0.000000e+00> : vector<24x32xf32>
    %153 = tpu.matmul %151, %152, %cst_41 {dimension_numbers = #tpu.dot_dimension_numbers<[1], [0], [0], [1], [0, 0, 1, 1], [], []>} : vector<24x32xf32>, vector<32x32xf32>, vector<24x32xf32> -> vector<24x32xf32>
    %c194 = arith.constant 194 : index
    %c0_42 = arith.constant 0 : index
    %154 = vector.load %arg2[%c194, %c0_42] : memref<832x32xf32, #tpu.memory_space<vmem>>, vector<1x32xf32>
    %155 = vector.broadcast %154 : vector<1x32xf32> to vector<24x32xf32>
    %156 = arith.addf %153, %155 : vector<24x32xf32>
    %c32 = arith.constant 32 : index
    %c0_43 = arith.constant 0 : index
    %157 = vector.load %arg2[%c32, %c0_43] : memref<832x32xf32, #tpu.memory_space<vmem>>, vector<32x32xf32>
    %cst_44 = arith.constant dense<0.000000e+00> : vector<24x32xf32>
    %158 = tpu.matmul %42, %157, %cst_44 {dimension_numbers = #tpu.dot_dimension_numbers<[1], [0], [0], [1], [0, 0, 1, 1], [], []>} : vector<24x32xf32>, vector<32x32xf32>, vector<24x32xf32> -> vector<24x32xf32>
    %c195 = arith.constant 195 : index
    %c0_45 = arith.constant 0 : index
    %159 = vector.load %arg2[%c195, %c0_45] : memref<832x32xf32, #tpu.memory_space<vmem>>, vector<1x32xf32>
    %160 = vector.broadcast %159 : vector<1x32xf32> to vector<24x32xf32>
    %161 = arith.addf %158, %160 : vector<24x32xf32>
    %c64 = arith.constant 64 : index
    %c0_46 = arith.constant 0 : index
    %162 = vector.load %arg2[%c64, %c0_46] : memref<832x32xf32, #tpu.memory_space<vmem>>, vector<32x32xf32>
    %cst_47 = arith.constant dense<0.000000e+00> : vector<24x32xf32>
    %163 = tpu.matmul %42, %162, %cst_47 {dimension_numbers = #tpu.dot_dimension_numbers<[1], [0], [0], [1], [0, 0, 1, 1], [], []>} : vector<24x32xf32>, vector<32x32xf32>, vector<24x32xf32> -> vector<24x32xf32>
    %c196 = arith.constant 196 : index
    %c0_48 = arith.constant 0 : index
    %164 = vector.load %arg2[%c196, %c0_48] : memref<832x32xf32, #tpu.memory_space<vmem>>, vector<1x32xf32>
    %165 = vector.broadcast %164 : vector<1x32xf32> to vector<24x32xf32>
    %166 = arith.addf %163, %165 : vector<24x32xf32>
    %167 = vector.broadcast %50 : vector<1x32xf32> to vector<24x32xf32>
    %168 = arith.mulf %161, %167 : vector<24x32xf32>
    %169 = vector.broadcast %50 : vector<1x32xf32> to vector<24x32xf32>
    %170 = arith.mulf %166, %169 : vector<24x32xf32>
    %cst_49 = arith.constant dense<0.000000e+00> : vector<24x24xf32>
    %171 = tpu.matmul %156, %168, %cst_49 {dimension_numbers = #tpu.dot_dimension_numbers<[1], [1], [0], [0], [0, 0, 1, 0], [], []>} : vector<24x32xf32>, vector<24x32xf32>, vector<24x24xf32> -> vector<24x24xf32>
    %cst_50 = arith.constant 5.000000e-01 : f32
    %172 = vector.broadcast %cst_50 : f32 to vector<24x24xf32>
    %173 = arith.mulf %171, %172 : vector<24x24xf32>
    %174 = arith.addf %173, %128 : vector<24x24xf32>
    %cst_51 = arith.constant dense<0xFF800000> : vector<24xf32>
    %175 = vector.multi_reduction <maximumf>, %174, %cst_51 [1] : vector<24x24xf32> to vector<24xf32>
    %176 = vector.shape_cast %175 : vector<24xf32> to vector<24x1xf32>
    %177 = vector.broadcast %176 : vector<24x1xf32> to vector<24x24xf32>
    %178 = arith.subf %174, %177 : vector<24x24xf32>
    %179 = math.exp %178 : vector<24x24xf32>
    %cst_52 = arith.constant dense<0.000000e+00> : vector<24xf32>
    %180 = vector.multi_reduction <add>, %179, %cst_52 [1] : vector<24x24xf32> to vector<24xf32>
    %181 = vector.shape_cast %180 : vector<24xf32> to vector<24x1xf32>
    %182 = tpu.reciprocal %181 {approx = true} : vector<24x1xf32> -> vector<24x1xf32>
    %183 = vector.broadcast %182 : vector<24x1xf32> to vector<24x24xf32>
    %184 = arith.mulf %179, %183 : vector<24x24xf32>
    %cst_53 = arith.constant dense<0.000000e+00> : vector<24x32xf32>
    %185 = tpu.matmul %184, %170, %cst_53 {dimension_numbers = #tpu.dot_dimension_numbers<[1], [0], [0], [1], [0, 0, 1, 1], [], []>} : vector<24x24xf32>, vector<24x32xf32>, vector<24x32xf32> -> vector<24x32xf32>
    %186 = vector.broadcast %57 : vector<1x32xf32> to vector<24x32xf32>
    %187 = arith.mulf %161, %186 : vector<24x32xf32>
    %188 = vector.broadcast %57 : vector<1x32xf32> to vector<24x32xf32>
    %189 = arith.mulf %166, %188 : vector<24x32xf32>
    %cst_54 = arith.constant dense<0.000000e+00> : vector<24x24xf32>
    %190 = tpu.matmul %156, %187, %cst_54 {dimension_numbers = #tpu.dot_dimension_numbers<[1], [1], [0], [0], [0, 0, 1, 0], [], []>} : vector<24x32xf32>, vector<24x32xf32>, vector<24x24xf32> -> vector<24x24xf32>
    %cst_55 = arith.constant 5.000000e-01 : f32
    %191 = vector.broadcast %cst_55 : f32 to vector<24x24xf32>
    %192 = arith.mulf %190, %191 : vector<24x24xf32>
    %193 = arith.addf %192, %128 : vector<24x24xf32>
    %cst_56 = arith.constant dense<0xFF800000> : vector<24xf32>
    %194 = vector.multi_reduction <maximumf>, %193, %cst_56 [1] : vector<24x24xf32> to vector<24xf32>
    %195 = vector.shape_cast %194 : vector<24xf32> to vector<24x1xf32>
    %196 = vector.broadcast %195 : vector<24x1xf32> to vector<24x24xf32>
    %197 = arith.subf %193, %196 : vector<24x24xf32>
    %198 = math.exp %197 : vector<24x24xf32>
    %cst_57 = arith.constant dense<0.000000e+00> : vector<24xf32>
    %199 = vector.multi_reduction <add>, %198, %cst_57 [1] : vector<24x24xf32> to vector<24xf32>
    %200 = vector.shape_cast %199 : vector<24xf32> to vector<24x1xf32>
    %201 = tpu.reciprocal %200 {approx = true} : vector<24x1xf32> -> vector<24x1xf32>
    %202 = vector.broadcast %201 : vector<24x1xf32> to vector<24x24xf32>
    %203 = arith.mulf %198, %202 : vector<24x24xf32>
    %cst_58 = arith.constant dense<0.000000e+00> : vector<24x32xf32>
    %204 = tpu.matmul %203, %189, %cst_58 {dimension_numbers = #tpu.dot_dimension_numbers<[1], [0], [0], [1], [0, 0, 1, 1], [], []>} : vector<24x24xf32>, vector<24x32xf32>, vector<24x32xf32> -> vector<24x32xf32>
    %205 = arith.addf %185, %204 : vector<24x32xf32>
    %206 = vector.broadcast %64 : vector<1x32xf32> to vector<24x32xf32>
    %207 = arith.mulf %161, %206 : vector<24x32xf32>
    %208 = vector.broadcast %64 : vector<1x32xf32> to vector<24x32xf32>
    %209 = arith.mulf %166, %208 : vector<24x32xf32>
    %cst_59 = arith.constant dense<0.000000e+00> : vector<24x24xf32>
    %210 = tpu.matmul %156, %207, %cst_59 {dimension_numbers = #tpu.dot_dimension_numbers<[1], [1], [0], [0], [0, 0, 1, 0], [], []>} : vector<24x32xf32>, vector<24x32xf32>, vector<24x24xf32> -> vector<24x24xf32>
    %cst_60 = arith.constant 5.000000e-01 : f32
    %211 = vector.broadcast %cst_60 : f32 to vector<24x24xf32>
    %212 = arith.mulf %210, %211 : vector<24x24xf32>
    %213 = arith.addf %212, %128 : vector<24x24xf32>
    %cst_61 = arith.constant dense<0xFF800000> : vector<24xf32>
    %214 = vector.multi_reduction <maximumf>, %213, %cst_61 [1] : vector<24x24xf32> to vector<24xf32>
    %215 = vector.shape_cast %214 : vector<24xf32> to vector<24x1xf32>
    %216 = vector.broadcast %215 : vector<24x1xf32> to vector<24x24xf32>
    %217 = arith.subf %213, %216 : vector<24x24xf32>
    %218 = math.exp %217 : vector<24x24xf32>
    %cst_62 = arith.constant dense<0.000000e+00> : vector<24xf32>
    %219 = vector.multi_reduction <add>, %218, %cst_62 [1] : vector<24x24xf32> to vector<24xf32>
    %220 = vector.shape_cast %219 : vector<24xf32> to vector<24x1xf32>
    %221 = tpu.reciprocal %220 {approx = true} : vector<24x1xf32> -> vector<24x1xf32>
    %222 = vector.broadcast %221 : vector<24x1xf32> to vector<24x24xf32>
    %223 = arith.mulf %218, %222 : vector<24x24xf32>
    %cst_63 = arith.constant dense<0.000000e+00> : vector<24x32xf32>
    %224 = tpu.matmul %223, %209, %cst_63 {dimension_numbers = #tpu.dot_dimension_numbers<[1], [0], [0], [1], [0, 0, 1, 1], [], []>} : vector<24x24xf32>, vector<24x32xf32>, vector<24x32xf32> -> vector<24x32xf32>
    %225 = arith.addf %205, %224 : vector<24x32xf32>
    %226 = vector.broadcast %71 : vector<1x32xf32> to vector<24x32xf32>
    %227 = arith.mulf %161, %226 : vector<24x32xf32>
    %228 = vector.broadcast %71 : vector<1x32xf32> to vector<24x32xf32>
    %229 = arith.mulf %166, %228 : vector<24x32xf32>
    %cst_64 = arith.constant dense<0.000000e+00> : vector<24x24xf32>
    %230 = tpu.matmul %156, %227, %cst_64 {dimension_numbers = #tpu.dot_dimension_numbers<[1], [1], [0], [0], [0, 0, 1, 0], [], []>} : vector<24x32xf32>, vector<24x32xf32>, vector<24x24xf32> -> vector<24x24xf32>
    %cst_65 = arith.constant 5.000000e-01 : f32
    %231 = vector.broadcast %cst_65 : f32 to vector<24x24xf32>
    %232 = arith.mulf %230, %231 : vector<24x24xf32>
    %233 = arith.addf %232, %128 : vector<24x24xf32>
    %cst_66 = arith.constant dense<0xFF800000> : vector<24xf32>
    %234 = vector.multi_reduction <maximumf>, %233, %cst_66 [1] : vector<24x24xf32> to vector<24xf32>
    %235 = vector.shape_cast %234 : vector<24xf32> to vector<24x1xf32>
    %236 = vector.broadcast %235 : vector<24x1xf32> to vector<24x24xf32>
    %237 = arith.subf %233, %236 : vector<24x24xf32>
    %238 = math.exp %237 : vector<24x24xf32>
    %cst_67 = arith.constant dense<0.000000e+00> : vector<24xf32>
    %239 = vector.multi_reduction <add>, %238, %cst_67 [1] : vector<24x24xf32> to vector<24xf32>
    %240 = vector.shape_cast %239 : vector<24xf32> to vector<24x1xf32>
    %241 = tpu.reciprocal %240 {approx = true} : vector<24x1xf32> -> vector<24x1xf32>
    %242 = vector.broadcast %241 : vector<24x1xf32> to vector<24x24xf32>
    %243 = arith.mulf %238, %242 : vector<24x24xf32>
    %cst_68 = arith.constant dense<0.000000e+00> : vector<24x32xf32>
    %244 = tpu.matmul %243, %229, %cst_68 {dimension_numbers = #tpu.dot_dimension_numbers<[1], [0], [0], [1], [0, 0, 1, 1], [], []>} : vector<24x24xf32>, vector<24x32xf32>, vector<24x32xf32> -> vector<24x32xf32>
    %245 = arith.addf %225, %244 : vector<24x32xf32>
    %246 = vector.broadcast %78 : vector<1x32xf32> to vector<24x32xf32>
    %247 = arith.mulf %161, %246 : vector<24x32xf32>
    %248 = vector.broadcast %78 : vector<1x32xf32> to vector<24x32xf32>
    %249 = arith.mulf %166, %248 : vector<24x32xf32>
    %cst_69 = arith.constant dense<0.000000e+00> : vector<24x24xf32>
    %250 = tpu.matmul %156, %247, %cst_69 {dimension_numbers = #tpu.dot_dimension_numbers<[1], [1], [0], [0], [0, 0, 1, 0], [], []>} : vector<24x32xf32>, vector<24x32xf32>, vector<24x24xf32> -> vector<24x24xf32>
    %cst_70 = arith.constant 5.000000e-01 : f32
    %251 = vector.broadcast %cst_70 : f32 to vector<24x24xf32>
    %252 = arith.mulf %250, %251 : vector<24x24xf32>
    %253 = arith.addf %252, %128 : vector<24x24xf32>
    %cst_71 = arith.constant dense<0xFF800000> : vector<24xf32>
    %254 = vector.multi_reduction <maximumf>, %253, %cst_71 [1] : vector<24x24xf32> to vector<24xf32>
    %255 = vector.shape_cast %254 : vector<24xf32> to vector<24x1xf32>
    %256 = vector.broadcast %255 : vector<24x1xf32> to vector<24x24xf32>
    %257 = arith.subf %253, %256 : vector<24x24xf32>
    %258 = math.exp %257 : vector<24x24xf32>
    %cst_72 = arith.constant dense<0.000000e+00> : vector<24xf32>
    %259 = vector.multi_reduction <add>, %258, %cst_72 [1] : vector<24x24xf32> to vector<24xf32>
    %260 = vector.shape_cast %259 : vector<24xf32> to vector<24x1xf32>
    %261 = tpu.reciprocal %260 {approx = true} : vector<24x1xf32> -> vector<24x1xf32>
    %262 = vector.broadcast %261 : vector<24x1xf32> to vector<24x24xf32>
    %263 = arith.mulf %258, %262 : vector<24x24xf32>
    %cst_73 = arith.constant dense<0.000000e+00> : vector<24x32xf32>
    %264 = tpu.matmul %263, %249, %cst_73 {dimension_numbers = #tpu.dot_dimension_numbers<[1], [0], [0], [1], [0, 0, 1, 1], [], []>} : vector<24x24xf32>, vector<24x32xf32>, vector<24x32xf32> -> vector<24x32xf32>
    %265 = arith.addf %245, %264 : vector<24x32xf32>
    %266 = vector.broadcast %85 : vector<1x32xf32> to vector<24x32xf32>
    %267 = arith.mulf %161, %266 : vector<24x32xf32>
    %268 = vector.broadcast %85 : vector<1x32xf32> to vector<24x32xf32>
    %269 = arith.mulf %166, %268 : vector<24x32xf32>
    %cst_74 = arith.constant dense<0.000000e+00> : vector<24x24xf32>
    %270 = tpu.matmul %156, %267, %cst_74 {dimension_numbers = #tpu.dot_dimension_numbers<[1], [1], [0], [0], [0, 0, 1, 0], [], []>} : vector<24x32xf32>, vector<24x32xf32>, vector<24x24xf32> -> vector<24x24xf32>
    %cst_75 = arith.constant 5.000000e-01 : f32
    %271 = vector.broadcast %cst_75 : f32 to vector<24x24xf32>
    %272 = arith.mulf %270, %271 : vector<24x24xf32>
    %273 = arith.addf %272, %128 : vector<24x24xf32>
    %cst_76 = arith.constant dense<0xFF800000> : vector<24xf32>
    %274 = vector.multi_reduction <maximumf>, %273, %cst_76 [1] : vector<24x24xf32> to vector<24xf32>
    %275 = vector.shape_cast %274 : vector<24xf32> to vector<24x1xf32>
    %276 = vector.broadcast %275 : vector<24x1xf32> to vector<24x24xf32>
    %277 = arith.subf %273, %276 : vector<24x24xf32>
    %278 = math.exp %277 : vector<24x24xf32>
    %cst_77 = arith.constant dense<0.000000e+00> : vector<24xf32>
    %279 = vector.multi_reduction <add>, %278, %cst_77 [1] : vector<24x24xf32> to vector<24xf32>
    %280 = vector.shape_cast %279 : vector<24xf32> to vector<24x1xf32>
    %281 = tpu.reciprocal %280 {approx = true} : vector<24x1xf32> -> vector<24x1xf32>
    %282 = vector.broadcast %281 : vector<24x1xf32> to vector<24x24xf32>
    %283 = arith.mulf %278, %282 : vector<24x24xf32>
    %cst_78 = arith.constant dense<0.000000e+00> : vector<24x32xf32>
    %284 = tpu.matmul %283, %269, %cst_78 {dimension_numbers = #tpu.dot_dimension_numbers<[1], [0], [0], [1], [0, 0, 1, 1], [], []>} : vector<24x24xf32>, vector<24x32xf32>, vector<24x32xf32> -> vector<24x32xf32>
    %285 = arith.addf %265, %284 : vector<24x32xf32>
    %286 = vector.broadcast %92 : vector<1x32xf32> to vector<24x32xf32>
    %287 = arith.mulf %161, %286 : vector<24x32xf32>
    %288 = vector.broadcast %92 : vector<1x32xf32> to vector<24x32xf32>
    %289 = arith.mulf %166, %288 : vector<24x32xf32>
    %cst_79 = arith.constant dense<0.000000e+00> : vector<24x24xf32>
    %290 = tpu.matmul %156, %287, %cst_79 {dimension_numbers = #tpu.dot_dimension_numbers<[1], [1], [0], [0], [0, 0, 1, 0], [], []>} : vector<24x32xf32>, vector<24x32xf32>, vector<24x24xf32> -> vector<24x24xf32>
    %cst_80 = arith.constant 5.000000e-01 : f32
    %291 = vector.broadcast %cst_80 : f32 to vector<24x24xf32>
    %292 = arith.mulf %290, %291 : vector<24x24xf32>
    %293 = arith.addf %292, %128 : vector<24x24xf32>
    %cst_81 = arith.constant dense<0xFF800000> : vector<24xf32>
    %294 = vector.multi_reduction <maximumf>, %293, %cst_81 [1] : vector<24x24xf32> to vector<24xf32>
    %295 = vector.shape_cast %294 : vector<24xf32> to vector<24x1xf32>
    %296 = vector.broadcast %295 : vector<24x1xf32> to vector<24x24xf32>
    %297 = arith.subf %293, %296 : vector<24x24xf32>
    %298 = math.exp %297 : vector<24x24xf32>
    %cst_82 = arith.constant dense<0.000000e+00> : vector<24xf32>
    %299 = vector.multi_reduction <add>, %298, %cst_82 [1] : vector<24x24xf32> to vector<24xf32>
    %300 = vector.shape_cast %299 : vector<24xf32> to vector<24x1xf32>
    %301 = tpu.reciprocal %300 {approx = true} : vector<24x1xf32> -> vector<24x1xf32>
    %302 = vector.broadcast %301 : vector<24x1xf32> to vector<24x24xf32>
    %303 = arith.mulf %298, %302 : vector<24x24xf32>
    %cst_83 = arith.constant dense<0.000000e+00> : vector<24x32xf32>
    %304 = tpu.matmul %303, %289, %cst_83 {dimension_numbers = #tpu.dot_dimension_numbers<[1], [0], [0], [1], [0, 0, 1, 1], [], []>} : vector<24x24xf32>, vector<24x32xf32>, vector<24x32xf32> -> vector<24x32xf32>
    %305 = arith.addf %285, %304 : vector<24x32xf32>
    %306 = vector.broadcast %99 : vector<1x32xf32> to vector<24x32xf32>
    %307 = arith.mulf %161, %306 : vector<24x32xf32>
    %308 = vector.broadcast %99 : vector<1x32xf32> to vector<24x32xf32>
    %309 = arith.mulf %166, %308 : vector<24x32xf32>
    %cst_84 = arith.constant dense<0.000000e+00> : vector<24x24xf32>
    %310 = tpu.matmul %156, %307, %cst_84 {dimension_numbers = #tpu.dot_dimension_numbers<[1], [1], [0], [0], [0, 0, 1, 0], [], []>} : vector<24x32xf32>, vector<24x32xf32>, vector<24x24xf32> -> vector<24x24xf32>
    %cst_85 = arith.constant 5.000000e-01 : f32
    %311 = vector.broadcast %cst_85 : f32 to vector<24x24xf32>
    %312 = arith.mulf %310, %311 : vector<24x24xf32>
    %313 = arith.addf %312, %128 : vector<24x24xf32>
    %cst_86 = arith.constant dense<0xFF800000> : vector<24xf32>
    %314 = vector.multi_reduction <maximumf>, %313, %cst_86 [1] : vector<24x24xf32> to vector<24xf32>
    %315 = vector.shape_cast %314 : vector<24xf32> to vector<24x1xf32>
    %316 = vector.broadcast %315 : vector<24x1xf32> to vector<24x24xf32>
    %317 = arith.subf %313, %316 : vector<24x24xf32>
    %318 = math.exp %317 : vector<24x24xf32>
    %cst_87 = arith.constant dense<0.000000e+00> : vector<24xf32>
    %319 = vector.multi_reduction <add>, %318, %cst_87 [1] : vector<24x24xf32> to vector<24xf32>
    %320 = vector.shape_cast %319 : vector<24xf32> to vector<24x1xf32>
    %321 = tpu.reciprocal %320 {approx = true} : vector<24x1xf32> -> vector<24x1xf32>
    %322 = vector.broadcast %321 : vector<24x1xf32> to vector<24x24xf32>
    %323 = arith.mulf %318, %322 : vector<24x24xf32>
    %cst_88 = arith.constant dense<0.000000e+00> : vector<24x32xf32>
    %324 = tpu.matmul %323, %309, %cst_88 {dimension_numbers = #tpu.dot_dimension_numbers<[1], [0], [0], [1], [0, 0, 1, 1], [], []>} : vector<24x24xf32>, vector<24x32xf32>, vector<24x32xf32> -> vector<24x32xf32>
    %325 = arith.addf %305, %324 : vector<24x32xf32>
    %c96 = arith.constant 96 : index
    %c0_89 = arith.constant 0 : index
    %326 = vector.load %arg2[%c96, %c0_89] : memref<832x32xf32, #tpu.memory_space<vmem>>, vector<32x32xf32>
    %cst_90 = arith.constant dense<0.000000e+00> : vector<24x32xf32>
    %327 = tpu.matmul %325, %326, %cst_90 {dimension_numbers = #tpu.dot_dimension_numbers<[1], [0], [0], [1], [0, 0, 1, 1], [], []>} : vector<24x32xf32>, vector<32x32xf32>, vector<24x32xf32> -> vector<24x32xf32>
    %328 = arith.addf %42, %327 : vector<24x32xf32>
    %c197 = arith.constant 197 : index
    %c0_91 = arith.constant 0 : index
    %329 = vector.load %arg2[%c197, %c0_91] : memref<832x32xf32, #tpu.memory_space<vmem>>, vector<1x32xf32>
    %330 = vector.broadcast %329 : vector<1x32xf32> to vector<24x32xf32>
    %331 = arith.addf %328, %330 : vector<24x32xf32>
    %c198 = arith.constant 198 : index
    %c0_92 = arith.constant 0 : index
    %332 = vector.load %arg2[%c198, %c0_92] : memref<832x32xf32, #tpu.memory_space<vmem>>, vector<1x32xf32>
    %c199 = arith.constant 199 : index
    %c0_93 = arith.constant 0 : index
    %333 = vector.load %arg2[%c199, %c0_93] : memref<832x32xf32, #tpu.memory_space<vmem>>, vector<1x32xf32>
    %cst_94 = arith.constant dense<0.000000e+00> : vector<24xf32>
    %334 = vector.multi_reduction <add>, %331, %cst_94 [1] : vector<24x32xf32> to vector<24xf32>
    %335 = vector.shape_cast %334 : vector<24xf32> to vector<24x1xf32>
    %cst_95 = arith.constant 3.200000e+01 : f32
    %336 = vector.broadcast %cst_95 : f32 to vector<24x1xf32>
    %337 = arith.divf %335, %336 : vector<24x1xf32>
    %338 = vector.broadcast %337 : vector<24x1xf32> to vector<24x32xf32>
    %339 = arith.subf %331, %338 : vector<24x32xf32>
    %340 = arith.mulf %339, %339 : vector<24x32xf32>
    %cst_96 = arith.constant dense<0.000000e+00> : vector<24xf32>
    %341 = vector.multi_reduction <add>, %340, %cst_96 [1] : vector<24x32xf32> to vector<24xf32>
    %342 = vector.shape_cast %341 : vector<24xf32> to vector<24x1xf32>
    %cst_97 = arith.constant 0.0322580636 : f32
    %343 = vector.broadcast %cst_97 : f32 to vector<24x1xf32>
    %344 = arith.mulf %342, %343 : vector<24x1xf32>
    %345 = math.sqrt %344 : vector<24x1xf32>
    %cst_98 = arith.constant 9.99999997E-7 : f32
    %346 = vector.broadcast %cst_98 : f32 to vector<24x1xf32>
    %347 = arith.addf %345, %346 : vector<24x1xf32>
    %348 = tpu.reciprocal %347 {approx = true} : vector<24x1xf32> -> vector<24x1xf32>
    %349 = vector.broadcast %332 : vector<1x32xf32> to vector<24x32xf32>
    %350 = arith.mulf %349, %339 : vector<24x32xf32>
    %351 = vector.broadcast %348 : vector<24x1xf32> to vector<24x32xf32>
    %352 = arith.mulf %350, %351 : vector<24x32xf32>
    %353 = vector.broadcast %333 : vector<1x32xf32> to vector<24x32xf32>
    %354 = arith.addf %352, %353 : vector<24x32xf32>
    %c128 = arith.constant 128 : index
    %c0_99 = arith.constant 0 : index
    %355 = vector.load %arg2[%c128, %c0_99] : memref<832x32xf32, #tpu.memory_space<vmem>>, vector<32x32xf32>
    %cst_100 = arith.constant dense<0.000000e+00> : vector<24x32xf32>
    %356 = tpu.matmul %354, %355, %cst_100 {dimension_numbers = #tpu.dot_dimension_numbers<[1], [0], [0], [1], [0, 0, 1, 1], [], []>} : vector<24x32xf32>, vector<32x32xf32>, vector<24x32xf32> -> vector<24x32xf32>
    %c200 = arith.constant 200 : index
    %c0_101 = arith.constant 0 : index
    %357 = vector.load %arg2[%c200, %c0_101] : memref<832x32xf32, #tpu.memory_space<vmem>>, vector<1x32xf32>
    %358 = vector.broadcast %357 : vector<1x32xf32> to vector<24x32xf32>
    %359 = arith.addf %356, %358 : vector<24x32xf32>
    %cst_102 = arith.constant 0.000000e+00 : f32
    %360 = vector.broadcast %cst_102 : f32 to vector<24x32xf32>
    %361 = arith.maximumf %359, %360 : vector<24x32xf32>
    %c160 = arith.constant 160 : index
    %c0_103 = arith.constant 0 : index
    %362 = vector.load %arg2[%c160, %c0_103] : memref<832x32xf32, #tpu.memory_space<vmem>>, vector<32x32xf32>
    %cst_104 = arith.constant dense<0.000000e+00> : vector<24x32xf32>
    %363 = tpu.matmul %361, %362, %cst_104 {dimension_numbers = #tpu.dot_dimension_numbers<[1], [0], [0], [1], [0, 0, 1, 1], [], []>} : vector<24x32xf32>, vector<32x32xf32>, vector<24x32xf32> -> vector<24x32xf32>
    %364 = arith.addf %331, %363 : vector<24x32xf32>
    %c201 = arith.constant 201 : index
    %c0_105 = arith.constant 0 : index
    %365 = vector.load %arg2[%c201, %c0_105] : memref<832x32xf32, #tpu.memory_space<vmem>>, vector<1x32xf32>
    %366 = vector.broadcast %365 : vector<1x32xf32> to vector<24x32xf32>
    %367 = arith.addf %364, %366 : vector<24x32xf32>
    %c400 = arith.constant 400 : index
    %c0_106 = arith.constant 0 : index
    %368 = vector.load %arg2[%c400, %c0_106] : memref<832x32xf32, #tpu.memory_space<vmem>>, vector<1x32xf32>
    %c401 = arith.constant 401 : index
    %c0_107 = arith.constant 0 : index
    %369 = vector.load %arg2[%c401, %c0_107] : memref<832x32xf32, #tpu.memory_space<vmem>>, vector<1x32xf32>
    %cst_108 = arith.constant dense<0.000000e+00> : vector<24xf32>
    %370 = vector.multi_reduction <add>, %367, %cst_108 [1] : vector<24x32xf32> to vector<24xf32>
    %371 = vector.shape_cast %370 : vector<24xf32> to vector<24x1xf32>
    %cst_109 = arith.constant 3.200000e+01 : f32
    %372 = vector.broadcast %cst_109 : f32 to vector<24x1xf32>
    %373 = arith.divf %371, %372 : vector<24x1xf32>
    %374 = vector.broadcast %373 : vector<24x1xf32> to vector<24x32xf32>
    %375 = arith.subf %367, %374 : vector<24x32xf32>
    %376 = arith.mulf %375, %375 : vector<24x32xf32>
    %cst_110 = arith.constant dense<0.000000e+00> : vector<24xf32>
    %377 = vector.multi_reduction <add>, %376, %cst_110 [1] : vector<24x32xf32> to vector<24xf32>
    %378 = vector.shape_cast %377 : vector<24xf32> to vector<24x1xf32>
    %cst_111 = arith.constant 0.0322580636 : f32
    %379 = vector.broadcast %cst_111 : f32 to vector<24x1xf32>
    %380 = arith.mulf %378, %379 : vector<24x1xf32>
    %381 = math.sqrt %380 : vector<24x1xf32>
    %cst_112 = arith.constant 9.99999997E-7 : f32
    %382 = vector.broadcast %cst_112 : f32 to vector<24x1xf32>
    %383 = arith.addf %381, %382 : vector<24x1xf32>
    %384 = tpu.reciprocal %383 {approx = true} : vector<24x1xf32> -> vector<24x1xf32>
    %385 = vector.broadcast %368 : vector<1x32xf32> to vector<24x32xf32>
    %386 = arith.mulf %385, %375 : vector<24x32xf32>
    %387 = vector.broadcast %384 : vector<24x1xf32> to vector<24x32xf32>
    %388 = arith.mulf %386, %387 : vector<24x32xf32>
    %389 = vector.broadcast %369 : vector<1x32xf32> to vector<24x32xf32>
    %390 = arith.addf %388, %389 : vector<24x32xf32>
    %c208 = arith.constant 208 : index
    %c0_113 = arith.constant 0 : index
    %391 = vector.load %arg2[%c208, %c0_113] : memref<832x32xf32, #tpu.memory_space<vmem>>, vector<32x32xf32>
    %cst_114 = arith.constant dense<0.000000e+00> : vector<24x32xf32>
    %392 = tpu.matmul %390, %391, %cst_114 {dimension_numbers = #tpu.dot_dimension_numbers<[1], [0], [0], [1], [0, 0, 1, 1], [], []>} : vector<24x32xf32>, vector<32x32xf32>, vector<24x32xf32> -> vector<24x32xf32>
    %c402 = arith.constant 402 : index
    %c0_115 = arith.constant 0 : index
    %393 = vector.load %arg2[%c402, %c0_115] : memref<832x32xf32, #tpu.memory_space<vmem>>, vector<1x32xf32>
    %394 = vector.broadcast %393 : vector<1x32xf32> to vector<24x32xf32>
    %395 = arith.addf %392, %394 : vector<24x32xf32>
    %c240 = arith.constant 240 : index
    %c0_116 = arith.constant 0 : index
    %396 = vector.load %arg2[%c240, %c0_116] : memref<832x32xf32, #tpu.memory_space<vmem>>, vector<32x32xf32>
    %cst_117 = arith.constant dense<0.000000e+00> : vector<24x32xf32>
    %397 = tpu.matmul %367, %396, %cst_117 {dimension_numbers = #tpu.dot_dimension_numbers<[1], [0], [0], [1], [0, 0, 1, 1], [], []>} : vector<24x32xf32>, vector<32x32xf32>, vector<24x32xf32> -> vector<24x32xf32>
    %c403 = arith.constant 403 : index
    %c0_118 = arith.constant 0 : index
    %398 = vector.load %arg2[%c403, %c0_118] : memref<832x32xf32, #tpu.memory_space<vmem>>, vector<1x32xf32>
    %399 = vector.broadcast %398 : vector<1x32xf32> to vector<24x32xf32>
    %400 = arith.addf %397, %399 : vector<24x32xf32>
    %c272 = arith.constant 272 : index
    %c0_119 = arith.constant 0 : index
    %401 = vector.load %arg2[%c272, %c0_119] : memref<832x32xf32, #tpu.memory_space<vmem>>, vector<32x32xf32>
    %cst_120 = arith.constant dense<0.000000e+00> : vector<24x32xf32>
    %402 = tpu.matmul %367, %401, %cst_120 {dimension_numbers = #tpu.dot_dimension_numbers<[1], [0], [0], [1], [0, 0, 1, 1], [], []>} : vector<24x32xf32>, vector<32x32xf32>, vector<24x32xf32> -> vector<24x32xf32>
    %c404 = arith.constant 404 : index
    %c0_121 = arith.constant 0 : index
    %403 = vector.load %arg2[%c404, %c0_121] : memref<832x32xf32, #tpu.memory_space<vmem>>, vector<1x32xf32>
    %404 = vector.broadcast %403 : vector<1x32xf32> to vector<24x32xf32>
    %405 = arith.addf %402, %404 : vector<24x32xf32>
    %406 = vector.broadcast %50 : vector<1x32xf32> to vector<24x32xf32>
    %407 = arith.mulf %400, %406 : vector<24x32xf32>
    %408 = vector.broadcast %50 : vector<1x32xf32> to vector<24x32xf32>
    %409 = arith.mulf %405, %408 : vector<24x32xf32>
    %cst_122 = arith.constant dense<0.000000e+00> : vector<24x24xf32>
    %410 = tpu.matmul %395, %407, %cst_122 {dimension_numbers = #tpu.dot_dimension_numbers<[1], [1], [0], [0], [0, 0, 1, 0], [], []>} : vector<24x32xf32>, vector<24x32xf32>, vector<24x24xf32> -> vector<24x24xf32>
    %cst_123 = arith.constant 5.000000e-01 : f32
    %411 = vector.broadcast %cst_123 : f32 to vector<24x24xf32>
    %412 = arith.mulf %410, %411 : vector<24x24xf32>
    %413 = arith.addf %412, %128 : vector<24x24xf32>
    %cst_124 = arith.constant dense<0xFF800000> : vector<24xf32>
    %414 = vector.multi_reduction <maximumf>, %413, %cst_124 [1] : vector<24x24xf32> to vector<24xf32>
    %415 = vector.shape_cast %414 : vector<24xf32> to vector<24x1xf32>
    %416 = vector.broadcast %415 : vector<24x1xf32> to vector<24x24xf32>
    %417 = arith.subf %413, %416 : vector<24x24xf32>
    %418 = math.exp %417 : vector<24x24xf32>
    %cst_125 = arith.constant dense<0.000000e+00> : vector<24xf32>
    %419 = vector.multi_reduction <add>, %418, %cst_125 [1] : vector<24x24xf32> to vector<24xf32>
    %420 = vector.shape_cast %419 : vector<24xf32> to vector<24x1xf32>
    %421 = tpu.reciprocal %420 {approx = true} : vector<24x1xf32> -> vector<24x1xf32>
    %422 = vector.broadcast %421 : vector<24x1xf32> to vector<24x24xf32>
    %423 = arith.mulf %418, %422 : vector<24x24xf32>
    %cst_126 = arith.constant dense<0.000000e+00> : vector<24x32xf32>
    %424 = tpu.matmul %423, %409, %cst_126 {dimension_numbers = #tpu.dot_dimension_numbers<[1], [0], [0], [1], [0, 0, 1, 1], [], []>} : vector<24x24xf32>, vector<24x32xf32>, vector<24x32xf32> -> vector<24x32xf32>
    %425 = vector.broadcast %57 : vector<1x32xf32> to vector<24x32xf32>
    %426 = arith.mulf %400, %425 : vector<24x32xf32>
    %427 = vector.broadcast %57 : vector<1x32xf32> to vector<24x32xf32>
    %428 = arith.mulf %405, %427 : vector<24x32xf32>
    %cst_127 = arith.constant dense<0.000000e+00> : vector<24x24xf32>
    %429 = tpu.matmul %395, %426, %cst_127 {dimension_numbers = #tpu.dot_dimension_numbers<[1], [1], [0], [0], [0, 0, 1, 0], [], []>} : vector<24x32xf32>, vector<24x32xf32>, vector<24x24xf32> -> vector<24x24xf32>
    %cst_128 = arith.constant 5.000000e-01 : f32
    %430 = vector.broadcast %cst_128 : f32 to vector<24x24xf32>
    %431 = arith.mulf %429, %430 : vector<24x24xf32>
    %432 = arith.addf %431, %128 : vector<24x24xf32>
    %cst_129 = arith.constant dense<0xFF800000> : vector<24xf32>
    %433 = vector.multi_reduction <maximumf>, %432, %cst_129 [1] : vector<24x24xf32> to vector<24xf32>
    %434 = vector.shape_cast %433 : vector<24xf32> to vector<24x1xf32>
    %435 = vector.broadcast %434 : vector<24x1xf32> to vector<24x24xf32>
    %436 = arith.subf %432, %435 : vector<24x24xf32>
    %437 = math.exp %436 : vector<24x24xf32>
    %cst_130 = arith.constant dense<0.000000e+00> : vector<24xf32>
    %438 = vector.multi_reduction <add>, %437, %cst_130 [1] : vector<24x24xf32> to vector<24xf32>
    %439 = vector.shape_cast %438 : vector<24xf32> to vector<24x1xf32>
    %440 = tpu.reciprocal %439 {approx = true} : vector<24x1xf32> -> vector<24x1xf32>
    %441 = vector.broadcast %440 : vector<24x1xf32> to vector<24x24xf32>
    %442 = arith.mulf %437, %441 : vector<24x24xf32>
    %cst_131 = arith.constant dense<0.000000e+00> : vector<24x32xf32>
    %443 = tpu.matmul %442, %428, %cst_131 {dimension_numbers = #tpu.dot_dimension_numbers<[1], [0], [0], [1], [0, 0, 1, 1], [], []>} : vector<24x24xf32>, vector<24x32xf32>, vector<24x32xf32> -> vector<24x32xf32>
    %444 = arith.addf %424, %443 : vector<24x32xf32>
    %445 = vector.broadcast %64 : vector<1x32xf32> to vector<24x32xf32>
    %446 = arith.mulf %400, %445 : vector<24x32xf32>
    %447 = vector.broadcast %64 : vector<1x32xf32> to vector<24x32xf32>
    %448 = arith.mulf %405, %447 : vector<24x32xf32>
    %cst_132 = arith.constant dense<0.000000e+00> : vector<24x24xf32>
    %449 = tpu.matmul %395, %446, %cst_132 {dimension_numbers = #tpu.dot_dimension_numbers<[1], [1], [0], [0], [0, 0, 1, 0], [], []>} : vector<24x32xf32>, vector<24x32xf32>, vector<24x24xf32> -> vector<24x24xf32>
    %cst_133 = arith.constant 5.000000e-01 : f32
    %450 = vector.broadcast %cst_133 : f32 to vector<24x24xf32>
    %451 = arith.mulf %449, %450 : vector<24x24xf32>
    %452 = arith.addf %451, %128 : vector<24x24xf32>
    %cst_134 = arith.constant dense<0xFF800000> : vector<24xf32>
    %453 = vector.multi_reduction <maximumf>, %452, %cst_134 [1] : vector<24x24xf32> to vector<24xf32>
    %454 = vector.shape_cast %453 : vector<24xf32> to vector<24x1xf32>
    %455 = vector.broadcast %454 : vector<24x1xf32> to vector<24x24xf32>
    %456 = arith.subf %452, %455 : vector<24x24xf32>
    %457 = math.exp %456 : vector<24x24xf32>
    %cst_135 = arith.constant dense<0.000000e+00> : vector<24xf32>
    %458 = vector.multi_reduction <add>, %457, %cst_135 [1] : vector<24x24xf32> to vector<24xf32>
    %459 = vector.shape_cast %458 : vector<24xf32> to vector<24x1xf32>
    %460 = tpu.reciprocal %459 {approx = true} : vector<24x1xf32> -> vector<24x1xf32>
    %461 = vector.broadcast %460 : vector<24x1xf32> to vector<24x24xf32>
    %462 = arith.mulf %457, %461 : vector<24x24xf32>
    %cst_136 = arith.constant dense<0.000000e+00> : vector<24x32xf32>
    %463 = tpu.matmul %462, %448, %cst_136 {dimension_numbers = #tpu.dot_dimension_numbers<[1], [0], [0], [1], [0, 0, 1, 1], [], []>} : vector<24x24xf32>, vector<24x32xf32>, vector<24x32xf32> -> vector<24x32xf32>
    %464 = arith.addf %444, %463 : vector<24x32xf32>
    %465 = vector.broadcast %71 : vector<1x32xf32> to vector<24x32xf32>
    %466 = arith.mulf %400, %465 : vector<24x32xf32>
    %467 = vector.broadcast %71 : vector<1x32xf32> to vector<24x32xf32>
    %468 = arith.mulf %405, %467 : vector<24x32xf32>
    %cst_137 = arith.constant dense<0.000000e+00> : vector<24x24xf32>
    %469 = tpu.matmul %395, %466, %cst_137 {dimension_numbers = #tpu.dot_dimension_numbers<[1], [1], [0], [0], [0, 0, 1, 0], [], []>} : vector<24x32xf32>, vector<24x32xf32>, vector<24x24xf32> -> vector<24x24xf32>
    %cst_138 = arith.constant 5.000000e-01 : f32
    %470 = vector.broadcast %cst_138 : f32 to vector<24x24xf32>
    %471 = arith.mulf %469, %470 : vector<24x24xf32>
    %472 = arith.addf %471, %128 : vector<24x24xf32>
    %cst_139 = arith.constant dense<0xFF800000> : vector<24xf32>
    %473 = vector.multi_reduction <maximumf>, %472, %cst_139 [1] : vector<24x24xf32> to vector<24xf32>
    %474 = vector.shape_cast %473 : vector<24xf32> to vector<24x1xf32>
    %475 = vector.broadcast %474 : vector<24x1xf32> to vector<24x24xf32>
    %476 = arith.subf %472, %475 : vector<24x24xf32>
    %477 = math.exp %476 : vector<24x24xf32>
    %cst_140 = arith.constant dense<0.000000e+00> : vector<24xf32>
    %478 = vector.multi_reduction <add>, %477, %cst_140 [1] : vector<24x24xf32> to vector<24xf32>
    %479 = vector.shape_cast %478 : vector<24xf32> to vector<24x1xf32>
    %480 = tpu.reciprocal %479 {approx = true} : vector<24x1xf32> -> vector<24x1xf32>
    %481 = vector.broadcast %480 : vector<24x1xf32> to vector<24x24xf32>
    %482 = arith.mulf %477, %481 : vector<24x24xf32>
    %cst_141 = arith.constant dense<0.000000e+00> : vector<24x32xf32>
    %483 = tpu.matmul %482, %468, %cst_141 {dimension_numbers = #tpu.dot_dimension_numbers<[1], [0], [0], [1], [0, 0, 1, 1], [], []>} : vector<24x24xf32>, vector<24x32xf32>, vector<24x32xf32> -> vector<24x32xf32>
    %484 = arith.addf %464, %483 : vector<24x32xf32>
    %485 = vector.broadcast %78 : vector<1x32xf32> to vector<24x32xf32>
    %486 = arith.mulf %400, %485 : vector<24x32xf32>
    %487 = vector.broadcast %78 : vector<1x32xf32> to vector<24x32xf32>
    %488 = arith.mulf %405, %487 : vector<24x32xf32>
    %cst_142 = arith.constant dense<0.000000e+00> : vector<24x24xf32>
    %489 = tpu.matmul %395, %486, %cst_142 {dimension_numbers = #tpu.dot_dimension_numbers<[1], [1], [0], [0], [0, 0, 1, 0], [], []>} : vector<24x32xf32>, vector<24x32xf32>, vector<24x24xf32> -> vector<24x24xf32>
    %cst_143 = arith.constant 5.000000e-01 : f32
    %490 = vector.broadcast %cst_143 : f32 to vector<24x24xf32>
    %491 = arith.mulf %489, %490 : vector<24x24xf32>
    %492 = arith.addf %491, %128 : vector<24x24xf32>
    %cst_144 = arith.constant dense<0xFF800000> : vector<24xf32>
    %493 = vector.multi_reduction <maximumf>, %492, %cst_144 [1] : vector<24x24xf32> to vector<24xf32>
    %494 = vector.shape_cast %493 : vector<24xf32> to vector<24x1xf32>
    %495 = vector.broadcast %494 : vector<24x1xf32> to vector<24x24xf32>
    %496 = arith.subf %492, %495 : vector<24x24xf32>
    %497 = math.exp %496 : vector<24x24xf32>
    %cst_145 = arith.constant dense<0.000000e+00> : vector<24xf32>
    %498 = vector.multi_reduction <add>, %497, %cst_145 [1] : vector<24x24xf32> to vector<24xf32>
    %499 = vector.shape_cast %498 : vector<24xf32> to vector<24x1xf32>
    %500 = tpu.reciprocal %499 {approx = true} : vector<24x1xf32> -> vector<24x1xf32>
    %501 = vector.broadcast %500 : vector<24x1xf32> to vector<24x24xf32>
    %502 = arith.mulf %497, %501 : vector<24x24xf32>
    %cst_146 = arith.constant dense<0.000000e+00> : vector<24x32xf32>
    %503 = tpu.matmul %502, %488, %cst_146 {dimension_numbers = #tpu.dot_dimension_numbers<[1], [0], [0], [1], [0, 0, 1, 1], [], []>} : vector<24x24xf32>, vector<24x32xf32>, vector<24x32xf32> -> vector<24x32xf32>
    %504 = arith.addf %484, %503 : vector<24x32xf32>
    %505 = vector.broadcast %85 : vector<1x32xf32> to vector<24x32xf32>
    %506 = arith.mulf %400, %505 : vector<24x32xf32>
    %507 = vector.broadcast %85 : vector<1x32xf32> to vector<24x32xf32>
    %508 = arith.mulf %405, %507 : vector<24x32xf32>
    %cst_147 = arith.constant dense<0.000000e+00> : vector<24x24xf32>
    %509 = tpu.matmul %395, %506, %cst_147 {dimension_numbers = #tpu.dot_dimension_numbers<[1], [1], [0], [0], [0, 0, 1, 0], [], []>} : vector<24x32xf32>, vector<24x32xf32>, vector<24x24xf32> -> vector<24x24xf32>
    %cst_148 = arith.constant 5.000000e-01 : f32
    %510 = vector.broadcast %cst_148 : f32 to vector<24x24xf32>
    %511 = arith.mulf %509, %510 : vector<24x24xf32>
    %512 = arith.addf %511, %128 : vector<24x24xf32>
    %cst_149 = arith.constant dense<0xFF800000> : vector<24xf32>
    %513 = vector.multi_reduction <maximumf>, %512, %cst_149 [1] : vector<24x24xf32> to vector<24xf32>
    %514 = vector.shape_cast %513 : vector<24xf32> to vector<24x1xf32>
    %515 = vector.broadcast %514 : vector<24x1xf32> to vector<24x24xf32>
    %516 = arith.subf %512, %515 : vector<24x24xf32>
    %517 = math.exp %516 : vector<24x24xf32>
    %cst_150 = arith.constant dense<0.000000e+00> : vector<24xf32>
    %518 = vector.multi_reduction <add>, %517, %cst_150 [1] : vector<24x24xf32> to vector<24xf32>
    %519 = vector.shape_cast %518 : vector<24xf32> to vector<24x1xf32>
    %520 = tpu.reciprocal %519 {approx = true} : vector<24x1xf32> -> vector<24x1xf32>
    %521 = vector.broadcast %520 : vector<24x1xf32> to vector<24x24xf32>
    %522 = arith.mulf %517, %521 : vector<24x24xf32>
    %cst_151 = arith.constant dense<0.000000e+00> : vector<24x32xf32>
    %523 = tpu.matmul %522, %508, %cst_151 {dimension_numbers = #tpu.dot_dimension_numbers<[1], [0], [0], [1], [0, 0, 1, 1], [], []>} : vector<24x24xf32>, vector<24x32xf32>, vector<24x32xf32> -> vector<24x32xf32>
    %524 = arith.addf %504, %523 : vector<24x32xf32>
    %525 = vector.broadcast %92 : vector<1x32xf32> to vector<24x32xf32>
    %526 = arith.mulf %400, %525 : vector<24x32xf32>
    %527 = vector.broadcast %92 : vector<1x32xf32> to vector<24x32xf32>
    %528 = arith.mulf %405, %527 : vector<24x32xf32>
    %cst_152 = arith.constant dense<0.000000e+00> : vector<24x24xf32>
    %529 = tpu.matmul %395, %526, %cst_152 {dimension_numbers = #tpu.dot_dimension_numbers<[1], [1], [0], [0], [0, 0, 1, 0], [], []>} : vector<24x32xf32>, vector<24x32xf32>, vector<24x24xf32> -> vector<24x24xf32>
    %cst_153 = arith.constant 5.000000e-01 : f32
    %530 = vector.broadcast %cst_153 : f32 to vector<24x24xf32>
    %531 = arith.mulf %529, %530 : vector<24x24xf32>
    %532 = arith.addf %531, %128 : vector<24x24xf32>
    %cst_154 = arith.constant dense<0xFF800000> : vector<24xf32>
    %533 = vector.multi_reduction <maximumf>, %532, %cst_154 [1] : vector<24x24xf32> to vector<24xf32>
    %534 = vector.shape_cast %533 : vector<24xf32> to vector<24x1xf32>
    %535 = vector.broadcast %534 : vector<24x1xf32> to vector<24x24xf32>
    %536 = arith.subf %532, %535 : vector<24x24xf32>
    %537 = math.exp %536 : vector<24x24xf32>
    %cst_155 = arith.constant dense<0.000000e+00> : vector<24xf32>
    %538 = vector.multi_reduction <add>, %537, %cst_155 [1] : vector<24x24xf32> to vector<24xf32>
    %539 = vector.shape_cast %538 : vector<24xf32> to vector<24x1xf32>
    %540 = tpu.reciprocal %539 {approx = true} : vector<24x1xf32> -> vector<24x1xf32>
    %541 = vector.broadcast %540 : vector<24x1xf32> to vector<24x24xf32>
    %542 = arith.mulf %537, %541 : vector<24x24xf32>
    %cst_156 = arith.constant dense<0.000000e+00> : vector<24x32xf32>
    %543 = tpu.matmul %542, %528, %cst_156 {dimension_numbers = #tpu.dot_dimension_numbers<[1], [0], [0], [1], [0, 0, 1, 1], [], []>} : vector<24x24xf32>, vector<24x32xf32>, vector<24x32xf32> -> vector<24x32xf32>
    %544 = arith.addf %524, %543 : vector<24x32xf32>
    %545 = vector.broadcast %99 : vector<1x32xf32> to vector<24x32xf32>
    %546 = arith.mulf %400, %545 : vector<24x32xf32>
    %547 = vector.broadcast %99 : vector<1x32xf32> to vector<24x32xf32>
    %548 = arith.mulf %405, %547 : vector<24x32xf32>
    %cst_157 = arith.constant dense<0.000000e+00> : vector<24x24xf32>
    %549 = tpu.matmul %395, %546, %cst_157 {dimension_numbers = #tpu.dot_dimension_numbers<[1], [1], [0], [0], [0, 0, 1, 0], [], []>} : vector<24x32xf32>, vector<24x32xf32>, vector<24x24xf32> -> vector<24x24xf32>
    %cst_158 = arith.constant 5.000000e-01 : f32
    %550 = vector.broadcast %cst_158 : f32 to vector<24x24xf32>
    %551 = arith.mulf %549, %550 : vector<24x24xf32>
    %552 = arith.addf %551, %128 : vector<24x24xf32>
    %cst_159 = arith.constant dense<0xFF800000> : vector<24xf32>
    %553 = vector.multi_reduction <maximumf>, %552, %cst_159 [1] : vector<24x24xf32> to vector<24xf32>
    %554 = vector.shape_cast %553 : vector<24xf32> to vector<24x1xf32>
    %555 = vector.broadcast %554 : vector<24x1xf32> to vector<24x24xf32>
    %556 = arith.subf %552, %555 : vector<24x24xf32>
    %557 = math.exp %556 : vector<24x24xf32>
    %cst_160 = arith.constant dense<0.000000e+00> : vector<24xf32>
    %558 = vector.multi_reduction <add>, %557, %cst_160 [1] : vector<24x24xf32> to vector<24xf32>
    %559 = vector.shape_cast %558 : vector<24xf32> to vector<24x1xf32>
    %560 = tpu.reciprocal %559 {approx = true} : vector<24x1xf32> -> vector<24x1xf32>
    %561 = vector.broadcast %560 : vector<24x1xf32> to vector<24x24xf32>
    %562 = arith.mulf %557, %561 : vector<24x24xf32>
    %cst_161 = arith.constant dense<0.000000e+00> : vector<24x32xf32>
    %563 = tpu.matmul %562, %548, %cst_161 {dimension_numbers = #tpu.dot_dimension_numbers<[1], [0], [0], [1], [0, 0, 1, 1], [], []>} : vector<24x24xf32>, vector<24x32xf32>, vector<24x32xf32> -> vector<24x32xf32>
    %564 = arith.addf %544, %563 : vector<24x32xf32>
    %c304 = arith.constant 304 : index
    %c0_162 = arith.constant 0 : index
    %565 = vector.load %arg2[%c304, %c0_162] : memref<832x32xf32, #tpu.memory_space<vmem>>, vector<32x32xf32>
    %cst_163 = arith.constant dense<0.000000e+00> : vector<24x32xf32>
    %566 = tpu.matmul %564, %565, %cst_163 {dimension_numbers = #tpu.dot_dimension_numbers<[1], [0], [0], [1], [0, 0, 1, 1], [], []>} : vector<24x32xf32>, vector<32x32xf32>, vector<24x32xf32> -> vector<24x32xf32>
    %567 = arith.addf %367, %566 : vector<24x32xf32>
    %c405 = arith.constant 405 : index
    %c0_164 = arith.constant 0 : index
    %568 = vector.load %arg2[%c405, %c0_164] : memref<832x32xf32, #tpu.memory_space<vmem>>, vector<1x32xf32>
    %569 = vector.broadcast %568 : vector<1x32xf32> to vector<24x32xf32>
    %570 = arith.addf %567, %569 : vector<24x32xf32>
    %c406 = arith.constant 406 : index
    %c0_165 = arith.constant 0 : index
    %571 = vector.load %arg2[%c406, %c0_165] : memref<832x32xf32, #tpu.memory_space<vmem>>, vector<1x32xf32>
    %c407 = arith.constant 407 : index
    %c0_166 = arith.constant 0 : index
    %572 = vector.load %arg2[%c407, %c0_166] : memref<832x32xf32, #tpu.memory_space<vmem>>, vector<1x32xf32>
    %cst_167 = arith.constant dense<0.000000e+00> : vector<24xf32>
    %573 = vector.multi_reduction <add>, %570, %cst_167 [1] : vector<24x32xf32> to vector<24xf32>
    %574 = vector.shape_cast %573 : vector<24xf32> to vector<24x1xf32>
    %cst_168 = arith.constant 3.200000e+01 : f32
    %575 = vector.broadcast %cst_168 : f32 to vector<24x1xf32>
    %576 = arith.divf %574, %575 : vector<24x1xf32>
    %577 = vector.broadcast %576 : vector<24x1xf32> to vector<24x32xf32>
    %578 = arith.subf %570, %577 : vector<24x32xf32>
    %579 = arith.mulf %578, %578 : vector<24x32xf32>
    %cst_169 = arith.constant dense<0.000000e+00> : vector<24xf32>
    %580 = vector.multi_reduction <add>, %579, %cst_169 [1] : vector<24x32xf32> to vector<24xf32>
    %581 = vector.shape_cast %580 : vector<24xf32> to vector<24x1xf32>
    %cst_170 = arith.constant 0.0322580636 : f32
    %582 = vector.broadcast %cst_170 : f32 to vector<24x1xf32>
    %583 = arith.mulf %581, %582 : vector<24x1xf32>
    %584 = math.sqrt %583 : vector<24x1xf32>
    %cst_171 = arith.constant 9.99999997E-7 : f32
    %585 = vector.broadcast %cst_171 : f32 to vector<24x1xf32>
    %586 = arith.addf %584, %585 : vector<24x1xf32>
    %587 = tpu.reciprocal %586 {approx = true} : vector<24x1xf32> -> vector<24x1xf32>
    %588 = vector.broadcast %571 : vector<1x32xf32> to vector<24x32xf32>
    %589 = arith.mulf %588, %578 : vector<24x32xf32>
    %590 = vector.broadcast %587 : vector<24x1xf32> to vector<24x32xf32>
    %591 = arith.mulf %589, %590 : vector<24x32xf32>
    %592 = vector.broadcast %572 : vector<1x32xf32> to vector<24x32xf32>
    %593 = arith.addf %591, %592 : vector<24x32xf32>
    %c336 = arith.constant 336 : index
    %c0_172 = arith.constant 0 : index
    %594 = vector.load %arg2[%c336, %c0_172] : memref<832x32xf32, #tpu.memory_space<vmem>>, vector<32x32xf32>
    %cst_173 = arith.constant dense<0.000000e+00> : vector<24x32xf32>
    %595 = tpu.matmul %593, %594, %cst_173 {dimension_numbers = #tpu.dot_dimension_numbers<[1], [0], [0], [1], [0, 0, 1, 1], [], []>} : vector<24x32xf32>, vector<32x32xf32>, vector<24x32xf32> -> vector<24x32xf32>
    %c408 = arith.constant 408 : index
    %c0_174 = arith.constant 0 : index
    %596 = vector.load %arg2[%c408, %c0_174] : memref<832x32xf32, #tpu.memory_space<vmem>>, vector<1x32xf32>
    %597 = vector.broadcast %596 : vector<1x32xf32> to vector<24x32xf32>
    %598 = arith.addf %595, %597 : vector<24x32xf32>
    %cst_175 = arith.constant 0.000000e+00 : f32
    %599 = vector.broadcast %cst_175 : f32 to vector<24x32xf32>
    %600 = arith.maximumf %598, %599 : vector<24x32xf32>
    %c368 = arith.constant 368 : index
    %c0_176 = arith.constant 0 : index
    %601 = vector.load %arg2[%c368, %c0_176] : memref<832x32xf32, #tpu.memory_space<vmem>>, vector<32x32xf32>
    %cst_177 = arith.constant dense<0.000000e+00> : vector<24x32xf32>
    %602 = tpu.matmul %600, %601, %cst_177 {dimension_numbers = #tpu.dot_dimension_numbers<[1], [0], [0], [1], [0, 0, 1, 1], [], []>} : vector<24x32xf32>, vector<32x32xf32>, vector<24x32xf32> -> vector<24x32xf32>
    %603 = arith.addf %570, %602 : vector<24x32xf32>
    %c409 = arith.constant 409 : index
    %c0_178 = arith.constant 0 : index
    %604 = vector.load %arg2[%c409, %c0_178] : memref<832x32xf32, #tpu.memory_space<vmem>>, vector<1x32xf32>
    %605 = vector.broadcast %604 : vector<1x32xf32> to vector<24x32xf32>
    %606 = arith.addf %603, %605 : vector<24x32xf32>
    %c608 = arith.constant 608 : index
    %c0_179 = arith.constant 0 : index
    %607 = vector.load %arg2[%c608, %c0_179] : memref<832x32xf32, #tpu.memory_space<vmem>>, vector<1x32xf32>
    %c609 = arith.constant 609 : index
    %c0_180 = arith.constant 0 : index
    %608 = vector.load %arg2[%c609, %c0_180] : memref<832x32xf32, #tpu.memory_space<vmem>>, vector<1x32xf32>
    %cst_181 = arith.constant dense<0.000000e+00> : vector<24xf32>
    %609 = vector.multi_reduction <add>, %606, %cst_181 [1] : vector<24x32xf32> to vector<24xf32>
    %610 = vector.shape_cast %609 : vector<24xf32> to vector<24x1xf32>
    %cst_182 = arith.constant 3.200000e+01 : f32
    %611 = vector.broadcast %cst_182 : f32 to vector<24x1xf32>
    %612 = arith.divf %610, %611 : vector<24x1xf32>
    %613 = vector.broadcast %612 : vector<24x1xf32> to vector<24x32xf32>
    %614 = arith.subf %606, %613 : vector<24x32xf32>
    %615 = arith.mulf %614, %614 : vector<24x32xf32>
    %cst_183 = arith.constant dense<0.000000e+00> : vector<24xf32>
    %616 = vector.multi_reduction <add>, %615, %cst_183 [1] : vector<24x32xf32> to vector<24xf32>
    %617 = vector.shape_cast %616 : vector<24xf32> to vector<24x1xf32>
    %cst_184 = arith.constant 0.0322580636 : f32
    %618 = vector.broadcast %cst_184 : f32 to vector<24x1xf32>
    %619 = arith.mulf %617, %618 : vector<24x1xf32>
    %620 = math.sqrt %619 : vector<24x1xf32>
    %cst_185 = arith.constant 9.99999997E-7 : f32
    %621 = vector.broadcast %cst_185 : f32 to vector<24x1xf32>
    %622 = arith.addf %620, %621 : vector<24x1xf32>
    %623 = tpu.reciprocal %622 {approx = true} : vector<24x1xf32> -> vector<24x1xf32>
    %624 = vector.broadcast %607 : vector<1x32xf32> to vector<24x32xf32>
    %625 = arith.mulf %624, %614 : vector<24x32xf32>
    %626 = vector.broadcast %623 : vector<24x1xf32> to vector<24x32xf32>
    %627 = arith.mulf %625, %626 : vector<24x32xf32>
    %628 = vector.broadcast %608 : vector<1x32xf32> to vector<24x32xf32>
    %629 = arith.addf %627, %628 : vector<24x32xf32>
    %c416 = arith.constant 416 : index
    %c0_186 = arith.constant 0 : index
    %630 = vector.load %arg2[%c416, %c0_186] : memref<832x32xf32, #tpu.memory_space<vmem>>, vector<32x32xf32>
    %cst_187 = arith.constant dense<0.000000e+00> : vector<24x32xf32>
    %631 = tpu.matmul %629, %630, %cst_187 {dimension_numbers = #tpu.dot_dimension_numbers<[1], [0], [0], [1], [0, 0, 1, 1], [], []>} : vector<24x32xf32>, vector<32x32xf32>, vector<24x32xf32> -> vector<24x32xf32>
    %c610 = arith.constant 610 : index
    %c0_188 = arith.constant 0 : index
    %632 = vector.load %arg2[%c610, %c0_188] : memref<832x32xf32, #tpu.memory_space<vmem>>, vector<1x32xf32>
    %633 = vector.broadcast %632 : vector<1x32xf32> to vector<24x32xf32>
    %634 = arith.addf %631, %633 : vector<24x32xf32>
    %c448 = arith.constant 448 : index
    %c0_189 = arith.constant 0 : index
    %635 = vector.load %arg2[%c448, %c0_189] : memref<832x32xf32, #tpu.memory_space<vmem>>, vector<32x32xf32>
    %cst_190 = arith.constant dense<0.000000e+00> : vector<24x32xf32>
    %636 = tpu.matmul %606, %635, %cst_190 {dimension_numbers = #tpu.dot_dimension_numbers<[1], [0], [0], [1], [0, 0, 1, 1], [], []>} : vector<24x32xf32>, vector<32x32xf32>, vector<24x32xf32> -> vector<24x32xf32>
    %c611 = arith.constant 611 : index
    %c0_191 = arith.constant 0 : index
    %637 = vector.load %arg2[%c611, %c0_191] : memref<832x32xf32, #tpu.memory_space<vmem>>, vector<1x32xf32>
    %638 = vector.broadcast %637 : vector<1x32xf32> to vector<24x32xf32>
    %639 = arith.addf %636, %638 : vector<24x32xf32>
    %c480_192 = arith.constant 480 : index
    %c0_193 = arith.constant 0 : index
    %640 = vector.load %arg2[%c480_192, %c0_193] : memref<832x32xf32, #tpu.memory_space<vmem>>, vector<32x32xf32>
    %cst_194 = arith.constant dense<0.000000e+00> : vector<24x32xf32>
    %641 = tpu.matmul %606, %640, %cst_194 {dimension_numbers = #tpu.dot_dimension_numbers<[1], [0], [0], [1], [0, 0, 1, 1], [], []>} : vector<24x32xf32>, vector<32x32xf32>, vector<24x32xf32> -> vector<24x32xf32>
    %c612 = arith.constant 612 : index
    %c0_195 = arith.constant 0 : index
    %642 = vector.load %arg2[%c612, %c0_195] : memref<832x32xf32, #tpu.memory_space<vmem>>, vector<1x32xf32>
    %643 = vector.broadcast %642 : vector<1x32xf32> to vector<24x32xf32>
    %644 = arith.addf %641, %643 : vector<24x32xf32>
    %645 = vector.broadcast %50 : vector<1x32xf32> to vector<24x32xf32>
    %646 = arith.mulf %639, %645 : vector<24x32xf32>
    %647 = vector.broadcast %50 : vector<1x32xf32> to vector<24x32xf32>
    %648 = arith.mulf %644, %647 : vector<24x32xf32>
    %cst_196 = arith.constant dense<0.000000e+00> : vector<24x24xf32>
    %649 = tpu.matmul %634, %646, %cst_196 {dimension_numbers = #tpu.dot_dimension_numbers<[1], [1], [0], [0], [0, 0, 1, 0], [], []>} : vector<24x32xf32>, vector<24x32xf32>, vector<24x24xf32> -> vector<24x24xf32>
    %cst_197 = arith.constant 5.000000e-01 : f32
    %650 = vector.broadcast %cst_197 : f32 to vector<24x24xf32>
    %651 = arith.mulf %649, %650 : vector<24x24xf32>
    %652 = arith.addf %651, %128 : vector<24x24xf32>
    %cst_198 = arith.constant dense<0xFF800000> : vector<24xf32>
    %653 = vector.multi_reduction <maximumf>, %652, %cst_198 [1] : vector<24x24xf32> to vector<24xf32>
    %654 = vector.shape_cast %653 : vector<24xf32> to vector<24x1xf32>
    %655 = vector.broadcast %654 : vector<24x1xf32> to vector<24x24xf32>
    %656 = arith.subf %652, %655 : vector<24x24xf32>
    %657 = math.exp %656 : vector<24x24xf32>
    %cst_199 = arith.constant dense<0.000000e+00> : vector<24xf32>
    %658 = vector.multi_reduction <add>, %657, %cst_199 [1] : vector<24x24xf32> to vector<24xf32>
    %659 = vector.shape_cast %658 : vector<24xf32> to vector<24x1xf32>
    %660 = tpu.reciprocal %659 {approx = true} : vector<24x1xf32> -> vector<24x1xf32>
    %661 = vector.broadcast %660 : vector<24x1xf32> to vector<24x24xf32>
    %662 = arith.mulf %657, %661 : vector<24x24xf32>
    %cst_200 = arith.constant dense<0.000000e+00> : vector<24x32xf32>
    %663 = tpu.matmul %662, %648, %cst_200 {dimension_numbers = #tpu.dot_dimension_numbers<[1], [0], [0], [1], [0, 0, 1, 1], [], []>} : vector<24x24xf32>, vector<24x32xf32>, vector<24x32xf32> -> vector<24x32xf32>
    %664 = vector.broadcast %57 : vector<1x32xf32> to vector<24x32xf32>
    %665 = arith.mulf %639, %664 : vector<24x32xf32>
    %666 = vector.broadcast %57 : vector<1x32xf32> to vector<24x32xf32>
    %667 = arith.mulf %644, %666 : vector<24x32xf32>
    %cst_201 = arith.constant dense<0.000000e+00> : vector<24x24xf32>
    %668 = tpu.matmul %634, %665, %cst_201 {dimension_numbers = #tpu.dot_dimension_numbers<[1], [1], [0], [0], [0, 0, 1, 0], [], []>} : vector<24x32xf32>, vector<24x32xf32>, vector<24x24xf32> -> vector<24x24xf32>
    %cst_202 = arith.constant 5.000000e-01 : f32
    %669 = vector.broadcast %cst_202 : f32 to vector<24x24xf32>
    %670 = arith.mulf %668, %669 : vector<24x24xf32>
    %671 = arith.addf %670, %128 : vector<24x24xf32>
    %cst_203 = arith.constant dense<0xFF800000> : vector<24xf32>
    %672 = vector.multi_reduction <maximumf>, %671, %cst_203 [1] : vector<24x24xf32> to vector<24xf32>
    %673 = vector.shape_cast %672 : vector<24xf32> to vector<24x1xf32>
    %674 = vector.broadcast %673 : vector<24x1xf32> to vector<24x24xf32>
    %675 = arith.subf %671, %674 : vector<24x24xf32>
    %676 = math.exp %675 : vector<24x24xf32>
    %cst_204 = arith.constant dense<0.000000e+00> : vector<24xf32>
    %677 = vector.multi_reduction <add>, %676, %cst_204 [1] : vector<24x24xf32> to vector<24xf32>
    %678 = vector.shape_cast %677 : vector<24xf32> to vector<24x1xf32>
    %679 = tpu.reciprocal %678 {approx = true} : vector<24x1xf32> -> vector<24x1xf32>
    %680 = vector.broadcast %679 : vector<24x1xf32> to vector<24x24xf32>
    %681 = arith.mulf %676, %680 : vector<24x24xf32>
    %cst_205 = arith.constant dense<0.000000e+00> : vector<24x32xf32>
    %682 = tpu.matmul %681, %667, %cst_205 {dimension_numbers = #tpu.dot_dimension_numbers<[1], [0], [0], [1], [0, 0, 1, 1], [], []>} : vector<24x24xf32>, vector<24x32xf32>, vector<24x32xf32> -> vector<24x32xf32>
    %683 = arith.addf %663, %682 : vector<24x32xf32>
    %684 = vector.broadcast %64 : vector<1x32xf32> to vector<24x32xf32>
    %685 = arith.mulf %639, %684 : vector<24x32xf32>
    %686 = vector.broadcast %64 : vector<1x32xf32> to vector<24x32xf32>
    %687 = arith.mulf %644, %686 : vector<24x32xf32>
    %cst_206 = arith.constant dense<0.000000e+00> : vector<24x24xf32>
    %688 = tpu.matmul %634, %685, %cst_206 {dimension_numbers = #tpu.dot_dimension_numbers<[1], [1], [0], [0], [0, 0, 1, 0], [], []>} : vector<24x32xf32>, vector<24x32xf32>, vector<24x24xf32> -> vector<24x24xf32>
    %cst_207 = arith.constant 5.000000e-01 : f32
    %689 = vector.broadcast %cst_207 : f32 to vector<24x24xf32>
    %690 = arith.mulf %688, %689 : vector<24x24xf32>
    %691 = arith.addf %690, %128 : vector<24x24xf32>
    %cst_208 = arith.constant dense<0xFF800000> : vector<24xf32>
    %692 = vector.multi_reduction <maximumf>, %691, %cst_208 [1] : vector<24x24xf32> to vector<24xf32>
    %693 = vector.shape_cast %692 : vector<24xf32> to vector<24x1xf32>
    %694 = vector.broadcast %693 : vector<24x1xf32> to vector<24x24xf32>
    %695 = arith.subf %691, %694 : vector<24x24xf32>
    %696 = math.exp %695 : vector<24x24xf32>
    %cst_209 = arith.constant dense<0.000000e+00> : vector<24xf32>
    %697 = vector.multi_reduction <add>, %696, %cst_209 [1] : vector<24x24xf32> to vector<24xf32>
    %698 = vector.shape_cast %697 : vector<24xf32> to vector<24x1xf32>
    %699 = tpu.reciprocal %698 {approx = true} : vector<24x1xf32> -> vector<24x1xf32>
    %700 = vector.broadcast %699 : vector<24x1xf32> to vector<24x24xf32>
    %701 = arith.mulf %696, %700 : vector<24x24xf32>
    %cst_210 = arith.constant dense<0.000000e+00> : vector<24x32xf32>
    %702 = tpu.matmul %701, %687, %cst_210 {dimension_numbers = #tpu.dot_dimension_numbers<[1], [0], [0], [1], [0, 0, 1, 1], [], []>} : vector<24x24xf32>, vector<24x32xf32>, vector<24x32xf32> -> vector<24x32xf32>
    %703 = arith.addf %683, %702 : vector<24x32xf32>
    %704 = vector.broadcast %71 : vector<1x32xf32> to vector<24x32xf32>
    %705 = arith.mulf %639, %704 : vector<24x32xf32>
    %706 = vector.broadcast %71 : vector<1x32xf32> to vector<24x32xf32>
    %707 = arith.mulf %644, %706 : vector<24x32xf32>
    %cst_211 = arith.constant dense<0.000000e+00> : vector<24x24xf32>
    %708 = tpu.matmul %634, %705, %cst_211 {dimension_numbers = #tpu.dot_dimension_numbers<[1], [1], [0], [0], [0, 0, 1, 0], [], []>} : vector<24x32xf32>, vector<24x32xf32>, vector<24x24xf32> -> vector<24x24xf32>
    %cst_212 = arith.constant 5.000000e-01 : f32
    %709 = vector.broadcast %cst_212 : f32 to vector<24x24xf32>
    %710 = arith.mulf %708, %709 : vector<24x24xf32>
    %711 = arith.addf %710, %128 : vector<24x24xf32>
    %cst_213 = arith.constant dense<0xFF800000> : vector<24xf32>
    %712 = vector.multi_reduction <maximumf>, %711, %cst_213 [1] : vector<24x24xf32> to vector<24xf32>
    %713 = vector.shape_cast %712 : vector<24xf32> to vector<24x1xf32>
    %714 = vector.broadcast %713 : vector<24x1xf32> to vector<24x24xf32>
    %715 = arith.subf %711, %714 : vector<24x24xf32>
    %716 = math.exp %715 : vector<24x24xf32>
    %cst_214 = arith.constant dense<0.000000e+00> : vector<24xf32>
    %717 = vector.multi_reduction <add>, %716, %cst_214 [1] : vector<24x24xf32> to vector<24xf32>
    %718 = vector.shape_cast %717 : vector<24xf32> to vector<24x1xf32>
    %719 = tpu.reciprocal %718 {approx = true} : vector<24x1xf32> -> vector<24x1xf32>
    %720 = vector.broadcast %719 : vector<24x1xf32> to vector<24x24xf32>
    %721 = arith.mulf %716, %720 : vector<24x24xf32>
    %cst_215 = arith.constant dense<0.000000e+00> : vector<24x32xf32>
    %722 = tpu.matmul %721, %707, %cst_215 {dimension_numbers = #tpu.dot_dimension_numbers<[1], [0], [0], [1], [0, 0, 1, 1], [], []>} : vector<24x24xf32>, vector<24x32xf32>, vector<24x32xf32> -> vector<24x32xf32>
    %723 = arith.addf %703, %722 : vector<24x32xf32>
    %724 = vector.broadcast %78 : vector<1x32xf32> to vector<24x32xf32>
    %725 = arith.mulf %639, %724 : vector<24x32xf32>
    %726 = vector.broadcast %78 : vector<1x32xf32> to vector<24x32xf32>
    %727 = arith.mulf %644, %726 : vector<24x32xf32>
    %cst_216 = arith.constant dense<0.000000e+00> : vector<24x24xf32>
    %728 = tpu.matmul %634, %725, %cst_216 {dimension_numbers = #tpu.dot_dimension_numbers<[1], [1], [0], [0], [0, 0, 1, 0], [], []>} : vector<24x32xf32>, vector<24x32xf32>, vector<24x24xf32> -> vector<24x24xf32>
    %cst_217 = arith.constant 5.000000e-01 : f32
    %729 = vector.broadcast %cst_217 : f32 to vector<24x24xf32>
    %730 = arith.mulf %728, %729 : vector<24x24xf32>
    %731 = arith.addf %730, %128 : vector<24x24xf32>
    %cst_218 = arith.constant dense<0xFF800000> : vector<24xf32>
    %732 = vector.multi_reduction <maximumf>, %731, %cst_218 [1] : vector<24x24xf32> to vector<24xf32>
    %733 = vector.shape_cast %732 : vector<24xf32> to vector<24x1xf32>
    %734 = vector.broadcast %733 : vector<24x1xf32> to vector<24x24xf32>
    %735 = arith.subf %731, %734 : vector<24x24xf32>
    %736 = math.exp %735 : vector<24x24xf32>
    %cst_219 = arith.constant dense<0.000000e+00> : vector<24xf32>
    %737 = vector.multi_reduction <add>, %736, %cst_219 [1] : vector<24x24xf32> to vector<24xf32>
    %738 = vector.shape_cast %737 : vector<24xf32> to vector<24x1xf32>
    %739 = tpu.reciprocal %738 {approx = true} : vector<24x1xf32> -> vector<24x1xf32>
    %740 = vector.broadcast %739 : vector<24x1xf32> to vector<24x24xf32>
    %741 = arith.mulf %736, %740 : vector<24x24xf32>
    %cst_220 = arith.constant dense<0.000000e+00> : vector<24x32xf32>
    %742 = tpu.matmul %741, %727, %cst_220 {dimension_numbers = #tpu.dot_dimension_numbers<[1], [0], [0], [1], [0, 0, 1, 1], [], []>} : vector<24x24xf32>, vector<24x32xf32>, vector<24x32xf32> -> vector<24x32xf32>
    %743 = arith.addf %723, %742 : vector<24x32xf32>
    %744 = vector.broadcast %85 : vector<1x32xf32> to vector<24x32xf32>
    %745 = arith.mulf %639, %744 : vector<24x32xf32>
    %746 = vector.broadcast %85 : vector<1x32xf32> to vector<24x32xf32>
    %747 = arith.mulf %644, %746 : vector<24x32xf32>
    %cst_221 = arith.constant dense<0.000000e+00> : vector<24x24xf32>
    %748 = tpu.matmul %634, %745, %cst_221 {dimension_numbers = #tpu.dot_dimension_numbers<[1], [1], [0], [0], [0, 0, 1, 0], [], []>} : vector<24x32xf32>, vector<24x32xf32>, vector<24x24xf32> -> vector<24x24xf32>
    %cst_222 = arith.constant 5.000000e-01 : f32
    %749 = vector.broadcast %cst_222 : f32 to vector<24x24xf32>
    %750 = arith.mulf %748, %749 : vector<24x24xf32>
    %751 = arith.addf %750, %128 : vector<24x24xf32>
    %cst_223 = arith.constant dense<0xFF800000> : vector<24xf32>
    %752 = vector.multi_reduction <maximumf>, %751, %cst_223 [1] : vector<24x24xf32> to vector<24xf32>
    %753 = vector.shape_cast %752 : vector<24xf32> to vector<24x1xf32>
    %754 = vector.broadcast %753 : vector<24x1xf32> to vector<24x24xf32>
    %755 = arith.subf %751, %754 : vector<24x24xf32>
    %756 = math.exp %755 : vector<24x24xf32>
    %cst_224 = arith.constant dense<0.000000e+00> : vector<24xf32>
    %757 = vector.multi_reduction <add>, %756, %cst_224 [1] : vector<24x24xf32> to vector<24xf32>
    %758 = vector.shape_cast %757 : vector<24xf32> to vector<24x1xf32>
    %759 = tpu.reciprocal %758 {approx = true} : vector<24x1xf32> -> vector<24x1xf32>
    %760 = vector.broadcast %759 : vector<24x1xf32> to vector<24x24xf32>
    %761 = arith.mulf %756, %760 : vector<24x24xf32>
    %cst_225 = arith.constant dense<0.000000e+00> : vector<24x32xf32>
    %762 = tpu.matmul %761, %747, %cst_225 {dimension_numbers = #tpu.dot_dimension_numbers<[1], [0], [0], [1], [0, 0, 1, 1], [], []>} : vector<24x24xf32>, vector<24x32xf32>, vector<24x32xf32> -> vector<24x32xf32>
    %763 = arith.addf %743, %762 : vector<24x32xf32>
    %764 = vector.broadcast %92 : vector<1x32xf32> to vector<24x32xf32>
    %765 = arith.mulf %639, %764 : vector<24x32xf32>
    %766 = vector.broadcast %92 : vector<1x32xf32> to vector<24x32xf32>
    %767 = arith.mulf %644, %766 : vector<24x32xf32>
    %cst_226 = arith.constant dense<0.000000e+00> : vector<24x24xf32>
    %768 = tpu.matmul %634, %765, %cst_226 {dimension_numbers = #tpu.dot_dimension_numbers<[1], [1], [0], [0], [0, 0, 1, 0], [], []>} : vector<24x32xf32>, vector<24x32xf32>, vector<24x24xf32> -> vector<24x24xf32>
    %cst_227 = arith.constant 5.000000e-01 : f32
    %769 = vector.broadcast %cst_227 : f32 to vector<24x24xf32>
    %770 = arith.mulf %768, %769 : vector<24x24xf32>
    %771 = arith.addf %770, %128 : vector<24x24xf32>
    %cst_228 = arith.constant dense<0xFF800000> : vector<24xf32>
    %772 = vector.multi_reduction <maximumf>, %771, %cst_228 [1] : vector<24x24xf32> to vector<24xf32>
    %773 = vector.shape_cast %772 : vector<24xf32> to vector<24x1xf32>
    %774 = vector.broadcast %773 : vector<24x1xf32> to vector<24x24xf32>
    %775 = arith.subf %771, %774 : vector<24x24xf32>
    %776 = math.exp %775 : vector<24x24xf32>
    %cst_229 = arith.constant dense<0.000000e+00> : vector<24xf32>
    %777 = vector.multi_reduction <add>, %776, %cst_229 [1] : vector<24x24xf32> to vector<24xf32>
    %778 = vector.shape_cast %777 : vector<24xf32> to vector<24x1xf32>
    %779 = tpu.reciprocal %778 {approx = true} : vector<24x1xf32> -> vector<24x1xf32>
    %780 = vector.broadcast %779 : vector<24x1xf32> to vector<24x24xf32>
    %781 = arith.mulf %776, %780 : vector<24x24xf32>
    %cst_230 = arith.constant dense<0.000000e+00> : vector<24x32xf32>
    %782 = tpu.matmul %781, %767, %cst_230 {dimension_numbers = #tpu.dot_dimension_numbers<[1], [0], [0], [1], [0, 0, 1, 1], [], []>} : vector<24x24xf32>, vector<24x32xf32>, vector<24x32xf32> -> vector<24x32xf32>
    %783 = arith.addf %763, %782 : vector<24x32xf32>
    %784 = vector.broadcast %99 : vector<1x32xf32> to vector<24x32xf32>
    %785 = arith.mulf %639, %784 : vector<24x32xf32>
    %786 = vector.broadcast %99 : vector<1x32xf32> to vector<24x32xf32>
    %787 = arith.mulf %644, %786 : vector<24x32xf32>
    %cst_231 = arith.constant dense<0.000000e+00> : vector<24x24xf32>
    %788 = tpu.matmul %634, %785, %cst_231 {dimension_numbers = #tpu.dot_dimension_numbers<[1], [1], [0], [0], [0, 0, 1, 0], [], []>} : vector<24x32xf32>, vector<24x32xf32>, vector<24x24xf32> -> vector<24x24xf32>
    %cst_232 = arith.constant 5.000000e-01 : f32
    %789 = vector.broadcast %cst_232 : f32 to vector<24x24xf32>
    %790 = arith.mulf %788, %789 : vector<24x24xf32>
    %791 = arith.addf %790, %128 : vector<24x24xf32>
    %cst_233 = arith.constant dense<0xFF800000> : vector<24xf32>
    %792 = vector.multi_reduction <maximumf>, %791, %cst_233 [1] : vector<24x24xf32> to vector<24xf32>
    %793 = vector.shape_cast %792 : vector<24xf32> to vector<24x1xf32>
    %794 = vector.broadcast %793 : vector<24x1xf32> to vector<24x24xf32>
    %795 = arith.subf %791, %794 : vector<24x24xf32>
    %796 = math.exp %795 : vector<24x24xf32>
    %cst_234 = arith.constant dense<0.000000e+00> : vector<24xf32>
    %797 = vector.multi_reduction <add>, %796, %cst_234 [1] : vector<24x24xf32> to vector<24xf32>
    %798 = vector.shape_cast %797 : vector<24xf32> to vector<24x1xf32>
    %799 = tpu.reciprocal %798 {approx = true} : vector<24x1xf32> -> vector<24x1xf32>
    %800 = vector.broadcast %799 : vector<24x1xf32> to vector<24x24xf32>
    %801 = arith.mulf %796, %800 : vector<24x24xf32>
    %cst_235 = arith.constant dense<0.000000e+00> : vector<24x32xf32>
    %802 = tpu.matmul %801, %787, %cst_235 {dimension_numbers = #tpu.dot_dimension_numbers<[1], [0], [0], [1], [0, 0, 1, 1], [], []>} : vector<24x24xf32>, vector<24x32xf32>, vector<24x32xf32> -> vector<24x32xf32>
    %803 = arith.addf %783, %802 : vector<24x32xf32>
    %c512 = arith.constant 512 : index
    %c0_236 = arith.constant 0 : index
    %804 = vector.load %arg2[%c512, %c0_236] : memref<832x32xf32, #tpu.memory_space<vmem>>, vector<32x32xf32>
    %cst_237 = arith.constant dense<0.000000e+00> : vector<24x32xf32>
    %805 = tpu.matmul %803, %804, %cst_237 {dimension_numbers = #tpu.dot_dimension_numbers<[1], [0], [0], [1], [0, 0, 1, 1], [], []>} : vector<24x32xf32>, vector<32x32xf32>, vector<24x32xf32> -> vector<24x32xf32>
    %806 = arith.addf %606, %805 : vector<24x32xf32>
    %c613 = arith.constant 613 : index
    %c0_238 = arith.constant 0 : index
    %807 = vector.load %arg2[%c613, %c0_238] : memref<832x32xf32, #tpu.memory_space<vmem>>, vector<1x32xf32>
    %808 = vector.broadcast %807 : vector<1x32xf32> to vector<24x32xf32>
    %809 = arith.addf %806, %808 : vector<24x32xf32>
    %c614 = arith.constant 614 : index
    %c0_239 = arith.constant 0 : index
    %810 = vector.load %arg2[%c614, %c0_239] : memref<832x32xf32, #tpu.memory_space<vmem>>, vector<1x32xf32>
    %c615 = arith.constant 615 : index
    %c0_240 = arith.constant 0 : index
    %811 = vector.load %arg2[%c615, %c0_240] : memref<832x32xf32, #tpu.memory_space<vmem>>, vector<1x32xf32>
    %cst_241 = arith.constant dense<0.000000e+00> : vector<24xf32>
    %812 = vector.multi_reduction <add>, %809, %cst_241 [1] : vector<24x32xf32> to vector<24xf32>
    %813 = vector.shape_cast %812 : vector<24xf32> to vector<24x1xf32>
    %cst_242 = arith.constant 3.200000e+01 : f32
    %814 = vector.broadcast %cst_242 : f32 to vector<24x1xf32>
    %815 = arith.divf %813, %814 : vector<24x1xf32>
    %816 = vector.broadcast %815 : vector<24x1xf32> to vector<24x32xf32>
    %817 = arith.subf %809, %816 : vector<24x32xf32>
    %818 = arith.mulf %817, %817 : vector<24x32xf32>
    %cst_243 = arith.constant dense<0.000000e+00> : vector<24xf32>
    %819 = vector.multi_reduction <add>, %818, %cst_243 [1] : vector<24x32xf32> to vector<24xf32>
    %820 = vector.shape_cast %819 : vector<24xf32> to vector<24x1xf32>
    %cst_244 = arith.constant 0.0322580636 : f32
    %821 = vector.broadcast %cst_244 : f32 to vector<24x1xf32>
    %822 = arith.mulf %820, %821 : vector<24x1xf32>
    %823 = math.sqrt %822 : vector<24x1xf32>
    %cst_245 = arith.constant 9.99999997E-7 : f32
    %824 = vector.broadcast %cst_245 : f32 to vector<24x1xf32>
    %825 = arith.addf %823, %824 : vector<24x1xf32>
    %826 = tpu.reciprocal %825 {approx = true} : vector<24x1xf32> -> vector<24x1xf32>
    %827 = vector.broadcast %810 : vector<1x32xf32> to vector<24x32xf32>
    %828 = arith.mulf %827, %817 : vector<24x32xf32>
    %829 = vector.broadcast %826 : vector<24x1xf32> to vector<24x32xf32>
    %830 = arith.mulf %828, %829 : vector<24x32xf32>
    %831 = vector.broadcast %811 : vector<1x32xf32> to vector<24x32xf32>
    %832 = arith.addf %830, %831 : vector<24x32xf32>
    %c544 = arith.constant 544 : index
    %c0_246 = arith.constant 0 : index
    %833 = vector.load %arg2[%c544, %c0_246] : memref<832x32xf32, #tpu.memory_space<vmem>>, vector<32x32xf32>
    %cst_247 = arith.constant dense<0.000000e+00> : vector<24x32xf32>
    %834 = tpu.matmul %832, %833, %cst_247 {dimension_numbers = #tpu.dot_dimension_numbers<[1], [0], [0], [1], [0, 0, 1, 1], [], []>} : vector<24x32xf32>, vector<32x32xf32>, vector<24x32xf32> -> vector<24x32xf32>
    %c616 = arith.constant 616 : index
    %c0_248 = arith.constant 0 : index
    %835 = vector.load %arg2[%c616, %c0_248] : memref<832x32xf32, #tpu.memory_space<vmem>>, vector<1x32xf32>
    %836 = vector.broadcast %835 : vector<1x32xf32> to vector<24x32xf32>
    %837 = arith.addf %834, %836 : vector<24x32xf32>
    %cst_249 = arith.constant 0.000000e+00 : f32
    %838 = vector.broadcast %cst_249 : f32 to vector<24x32xf32>
    %839 = arith.maximumf %837, %838 : vector<24x32xf32>
    %c576 = arith.constant 576 : index
    %c0_250 = arith.constant 0 : index
    %840 = vector.load %arg2[%c576, %c0_250] : memref<832x32xf32, #tpu.memory_space<vmem>>, vector<32x32xf32>
    %cst_251 = arith.constant dense<0.000000e+00> : vector<24x32xf32>
    %841 = tpu.matmul %839, %840, %cst_251 {dimension_numbers = #tpu.dot_dimension_numbers<[1], [0], [0], [1], [0, 0, 1, 1], [], []>} : vector<24x32xf32>, vector<32x32xf32>, vector<24x32xf32> -> vector<24x32xf32>
    %842 = arith.addf %809, %841 : vector<24x32xf32>
    %c617 = arith.constant 617 : index
    %c0_252 = arith.constant 0 : index
    %843 = vector.load %arg2[%c617, %c0_252] : memref<832x32xf32, #tpu.memory_space<vmem>>, vector<1x32xf32>
    %844 = vector.broadcast %843 : vector<1x32xf32> to vector<24x32xf32>
    %845 = arith.addf %842, %844 : vector<24x32xf32>
    %c816 = arith.constant 816 : index
    %c0_253 = arith.constant 0 : index
    %846 = vector.load %arg2[%c816, %c0_253] : memref<832x32xf32, #tpu.memory_space<vmem>>, vector<1x32xf32>
    %c817 = arith.constant 817 : index
    %c0_254 = arith.constant 0 : index
    %847 = vector.load %arg2[%c817, %c0_254] : memref<832x32xf32, #tpu.memory_space<vmem>>, vector<1x32xf32>
    %cst_255 = arith.constant dense<0.000000e+00> : vector<24xf32>
    %848 = vector.multi_reduction <add>, %845, %cst_255 [1] : vector<24x32xf32> to vector<24xf32>
    %849 = vector.shape_cast %848 : vector<24xf32> to vector<24x1xf32>
    %cst_256 = arith.constant 3.200000e+01 : f32
    %850 = vector.broadcast %cst_256 : f32 to vector<24x1xf32>
    %851 = arith.divf %849, %850 : vector<24x1xf32>
    %852 = vector.broadcast %851 : vector<24x1xf32> to vector<24x32xf32>
    %853 = arith.subf %845, %852 : vector<24x32xf32>
    %854 = arith.mulf %853, %853 : vector<24x32xf32>
    %cst_257 = arith.constant dense<0.000000e+00> : vector<24xf32>
    %855 = vector.multi_reduction <add>, %854, %cst_257 [1] : vector<24x32xf32> to vector<24xf32>
    %856 = vector.shape_cast %855 : vector<24xf32> to vector<24x1xf32>
    %cst_258 = arith.constant 0.0322580636 : f32
    %857 = vector.broadcast %cst_258 : f32 to vector<24x1xf32>
    %858 = arith.mulf %856, %857 : vector<24x1xf32>
    %859 = math.sqrt %858 : vector<24x1xf32>
    %cst_259 = arith.constant 9.99999997E-7 : f32
    %860 = vector.broadcast %cst_259 : f32 to vector<24x1xf32>
    %861 = arith.addf %859, %860 : vector<24x1xf32>
    %862 = tpu.reciprocal %861 {approx = true} : vector<24x1xf32> -> vector<24x1xf32>
    %863 = vector.broadcast %846 : vector<1x32xf32> to vector<24x32xf32>
    %864 = arith.mulf %863, %853 : vector<24x32xf32>
    %865 = vector.broadcast %862 : vector<24x1xf32> to vector<24x32xf32>
    %866 = arith.mulf %864, %865 : vector<24x32xf32>
    %867 = vector.broadcast %847 : vector<1x32xf32> to vector<24x32xf32>
    %868 = arith.addf %866, %867 : vector<24x32xf32>
    %c624 = arith.constant 624 : index
    %c0_260 = arith.constant 0 : index
    %869 = vector.load %arg2[%c624, %c0_260] : memref<832x32xf32, #tpu.memory_space<vmem>>, vector<32x32xf32>
    %cst_261 = arith.constant dense<0.000000e+00> : vector<24x32xf32>
    %870 = tpu.matmul %868, %869, %cst_261 {dimension_numbers = #tpu.dot_dimension_numbers<[1], [0], [0], [1], [0, 0, 1, 1], [], []>} : vector<24x32xf32>, vector<32x32xf32>, vector<24x32xf32> -> vector<24x32xf32>
    %c818 = arith.constant 818 : index
    %c0_262 = arith.constant 0 : index
    %871 = vector.load %arg2[%c818, %c0_262] : memref<832x32xf32, #tpu.memory_space<vmem>>, vector<1x32xf32>
    %872 = vector.broadcast %871 : vector<1x32xf32> to vector<24x32xf32>
    %873 = arith.addf %870, %872 : vector<24x32xf32>
    %c656 = arith.constant 656 : index
    %c0_263 = arith.constant 0 : index
    %874 = vector.load %arg2[%c656, %c0_263] : memref<832x32xf32, #tpu.memory_space<vmem>>, vector<32x32xf32>
    %cst_264 = arith.constant dense<0.000000e+00> : vector<24x32xf32>
    %875 = tpu.matmul %845, %874, %cst_264 {dimension_numbers = #tpu.dot_dimension_numbers<[1], [0], [0], [1], [0, 0, 1, 1], [], []>} : vector<24x32xf32>, vector<32x32xf32>, vector<24x32xf32> -> vector<24x32xf32>
    %c819 = arith.constant 819 : index
    %c0_265 = arith.constant 0 : index
    %876 = vector.load %arg2[%c819, %c0_265] : memref<832x32xf32, #tpu.memory_space<vmem>>, vector<1x32xf32>
    %877 = vector.broadcast %876 : vector<1x32xf32> to vector<24x32xf32>
    %878 = arith.addf %875, %877 : vector<24x32xf32>
    %c688 = arith.constant 688 : index
    %c0_266 = arith.constant 0 : index
    %879 = vector.load %arg2[%c688, %c0_266] : memref<832x32xf32, #tpu.memory_space<vmem>>, vector<32x32xf32>
    %cst_267 = arith.constant dense<0.000000e+00> : vector<24x32xf32>
    %880 = tpu.matmul %845, %879, %cst_267 {dimension_numbers = #tpu.dot_dimension_numbers<[1], [0], [0], [1], [0, 0, 1, 1], [], []>} : vector<24x32xf32>, vector<32x32xf32>, vector<24x32xf32> -> vector<24x32xf32>
    %c820 = arith.constant 820 : index
    %c0_268 = arith.constant 0 : index
    %881 = vector.load %arg2[%c820, %c0_268] : memref<832x32xf32, #tpu.memory_space<vmem>>, vector<1x32xf32>
    %882 = vector.broadcast %881 : vector<1x32xf32> to vector<24x32xf32>
    %883 = arith.addf %880, %882 : vector<24x32xf32>
    %884 = vector.broadcast %50 : vector<1x32xf32> to vector<24x32xf32>
    %885 = arith.mulf %878, %884 : vector<24x32xf32>
    %886 = vector.broadcast %50 : vector<1x32xf32> to vector<24x32xf32>
    %887 = arith.mulf %883, %886 : vector<24x32xf32>
    %cst_269 = arith.constant dense<0.000000e+00> : vector<24x24xf32>
    %888 = tpu.matmul %873, %885, %cst_269 {dimension_numbers = #tpu.dot_dimension_numbers<[1], [1], [0], [0], [0, 0, 1, 0], [], []>} : vector<24x32xf32>, vector<24x32xf32>, vector<24x24xf32> -> vector<24x24xf32>
    %cst_270 = arith.constant 5.000000e-01 : f32
    %889 = vector.broadcast %cst_270 : f32 to vector<24x24xf32>
    %890 = arith.mulf %888, %889 : vector<24x24xf32>
    %891 = arith.addf %890, %128 : vector<24x24xf32>
    %cst_271 = arith.constant dense<0xFF800000> : vector<24xf32>
    %892 = vector.multi_reduction <maximumf>, %891, %cst_271 [1] : vector<24x24xf32> to vector<24xf32>
    %893 = vector.shape_cast %892 : vector<24xf32> to vector<24x1xf32>
    %894 = vector.broadcast %893 : vector<24x1xf32> to vector<24x24xf32>
    %895 = arith.subf %891, %894 : vector<24x24xf32>
    %896 = math.exp %895 : vector<24x24xf32>
    %cst_272 = arith.constant dense<0.000000e+00> : vector<24xf32>
    %897 = vector.multi_reduction <add>, %896, %cst_272 [1] : vector<24x24xf32> to vector<24xf32>
    %898 = vector.shape_cast %897 : vector<24xf32> to vector<24x1xf32>
    %899 = tpu.reciprocal %898 {approx = true} : vector<24x1xf32> -> vector<24x1xf32>
    %900 = vector.broadcast %899 : vector<24x1xf32> to vector<24x24xf32>
    %901 = arith.mulf %896, %900 : vector<24x24xf32>
    %cst_273 = arith.constant dense<0.000000e+00> : vector<24x32xf32>
    %902 = tpu.matmul %901, %887, %cst_273 {dimension_numbers = #tpu.dot_dimension_numbers<[1], [0], [0], [1], [0, 0, 1, 1], [], []>} : vector<24x24xf32>, vector<24x32xf32>, vector<24x32xf32> -> vector<24x32xf32>
    %903 = vector.broadcast %57 : vector<1x32xf32> to vector<24x32xf32>
    %904 = arith.mulf %878, %903 : vector<24x32xf32>
    %905 = vector.broadcast %57 : vector<1x32xf32> to vector<24x32xf32>
    %906 = arith.mulf %883, %905 : vector<24x32xf32>
    %cst_274 = arith.constant dense<0.000000e+00> : vector<24x24xf32>
    %907 = tpu.matmul %873, %904, %cst_274 {dimension_numbers = #tpu.dot_dimension_numbers<[1], [1], [0], [0], [0, 0, 1, 0], [], []>} : vector<24x32xf32>, vector<24x32xf32>, vector<24x24xf32> -> vector<24x24xf32>
    %cst_275 = arith.constant 5.000000e-01 : f32
    %908 = vector.broadcast %cst_275 : f32 to vector<24x24xf32>
    %909 = arith.mulf %907, %908 : vector<24x24xf32>
    %910 = arith.addf %909, %128 : vector<24x24xf32>
    %cst_276 = arith.constant dense<0xFF800000> : vector<24xf32>
    %911 = vector.multi_reduction <maximumf>, %910, %cst_276 [1] : vector<24x24xf32> to vector<24xf32>
    %912 = vector.shape_cast %911 : vector<24xf32> to vector<24x1xf32>
    %913 = vector.broadcast %912 : vector<24x1xf32> to vector<24x24xf32>
    %914 = arith.subf %910, %913 : vector<24x24xf32>
    %915 = math.exp %914 : vector<24x24xf32>
    %cst_277 = arith.constant dense<0.000000e+00> : vector<24xf32>
    %916 = vector.multi_reduction <add>, %915, %cst_277 [1] : vector<24x24xf32> to vector<24xf32>
    %917 = vector.shape_cast %916 : vector<24xf32> to vector<24x1xf32>
    %918 = tpu.reciprocal %917 {approx = true} : vector<24x1xf32> -> vector<24x1xf32>
    %919 = vector.broadcast %918 : vector<24x1xf32> to vector<24x24xf32>
    %920 = arith.mulf %915, %919 : vector<24x24xf32>
    %cst_278 = arith.constant dense<0.000000e+00> : vector<24x32xf32>
    %921 = tpu.matmul %920, %906, %cst_278 {dimension_numbers = #tpu.dot_dimension_numbers<[1], [0], [0], [1], [0, 0, 1, 1], [], []>} : vector<24x24xf32>, vector<24x32xf32>, vector<24x32xf32> -> vector<24x32xf32>
    %922 = arith.addf %902, %921 : vector<24x32xf32>
    %923 = vector.broadcast %64 : vector<1x32xf32> to vector<24x32xf32>
    %924 = arith.mulf %878, %923 : vector<24x32xf32>
    %925 = vector.broadcast %64 : vector<1x32xf32> to vector<24x32xf32>
    %926 = arith.mulf %883, %925 : vector<24x32xf32>
    %cst_279 = arith.constant dense<0.000000e+00> : vector<24x24xf32>
    %927 = tpu.matmul %873, %924, %cst_279 {dimension_numbers = #tpu.dot_dimension_numbers<[1], [1], [0], [0], [0, 0, 1, 0], [], []>} : vector<24x32xf32>, vector<24x32xf32>, vector<24x24xf32> -> vector<24x24xf32>
    %cst_280 = arith.constant 5.000000e-01 : f32
    %928 = vector.broadcast %cst_280 : f32 to vector<24x24xf32>
    %929 = arith.mulf %927, %928 : vector<24x24xf32>
    %930 = arith.addf %929, %128 : vector<24x24xf32>
    %cst_281 = arith.constant dense<0xFF800000> : vector<24xf32>
    %931 = vector.multi_reduction <maximumf>, %930, %cst_281 [1] : vector<24x24xf32> to vector<24xf32>
    %932 = vector.shape_cast %931 : vector<24xf32> to vector<24x1xf32>
    %933 = vector.broadcast %932 : vector<24x1xf32> to vector<24x24xf32>
    %934 = arith.subf %930, %933 : vector<24x24xf32>
    %935 = math.exp %934 : vector<24x24xf32>
    %cst_282 = arith.constant dense<0.000000e+00> : vector<24xf32>
    %936 = vector.multi_reduction <add>, %935, %cst_282 [1] : vector<24x24xf32> to vector<24xf32>
    %937 = vector.shape_cast %936 : vector<24xf32> to vector<24x1xf32>
    %938 = tpu.reciprocal %937 {approx = true} : vector<24x1xf32> -> vector<24x1xf32>
    %939 = vector.broadcast %938 : vector<24x1xf32> to vector<24x24xf32>
    %940 = arith.mulf %935, %939 : vector<24x24xf32>
    %cst_283 = arith.constant dense<0.000000e+00> : vector<24x32xf32>
    %941 = tpu.matmul %940, %926, %cst_283 {dimension_numbers = #tpu.dot_dimension_numbers<[1], [0], [0], [1], [0, 0, 1, 1], [], []>} : vector<24x24xf32>, vector<24x32xf32>, vector<24x32xf32> -> vector<24x32xf32>
    %942 = arith.addf %922, %941 : vector<24x32xf32>
    %943 = vector.broadcast %71 : vector<1x32xf32> to vector<24x32xf32>
    %944 = arith.mulf %878, %943 : vector<24x32xf32>
    %945 = vector.broadcast %71 : vector<1x32xf32> to vector<24x32xf32>
    %946 = arith.mulf %883, %945 : vector<24x32xf32>
    %cst_284 = arith.constant dense<0.000000e+00> : vector<24x24xf32>
    %947 = tpu.matmul %873, %944, %cst_284 {dimension_numbers = #tpu.dot_dimension_numbers<[1], [1], [0], [0], [0, 0, 1, 0], [], []>} : vector<24x32xf32>, vector<24x32xf32>, vector<24x24xf32> -> vector<24x24xf32>
    %cst_285 = arith.constant 5.000000e-01 : f32
    %948 = vector.broadcast %cst_285 : f32 to vector<24x24xf32>
    %949 = arith.mulf %947, %948 : vector<24x24xf32>
    %950 = arith.addf %949, %128 : vector<24x24xf32>
    %cst_286 = arith.constant dense<0xFF800000> : vector<24xf32>
    %951 = vector.multi_reduction <maximumf>, %950, %cst_286 [1] : vector<24x24xf32> to vector<24xf32>
    %952 = vector.shape_cast %951 : vector<24xf32> to vector<24x1xf32>
    %953 = vector.broadcast %952 : vector<24x1xf32> to vector<24x24xf32>
    %954 = arith.subf %950, %953 : vector<24x24xf32>
    %955 = math.exp %954 : vector<24x24xf32>
    %cst_287 = arith.constant dense<0.000000e+00> : vector<24xf32>
    %956 = vector.multi_reduction <add>, %955, %cst_287 [1] : vector<24x24xf32> to vector<24xf32>
    %957 = vector.shape_cast %956 : vector<24xf32> to vector<24x1xf32>
    %958 = tpu.reciprocal %957 {approx = true} : vector<24x1xf32> -> vector<24x1xf32>
    %959 = vector.broadcast %958 : vector<24x1xf32> to vector<24x24xf32>
    %960 = arith.mulf %955, %959 : vector<24x24xf32>
    %cst_288 = arith.constant dense<0.000000e+00> : vector<24x32xf32>
    %961 = tpu.matmul %960, %946, %cst_288 {dimension_numbers = #tpu.dot_dimension_numbers<[1], [0], [0], [1], [0, 0, 1, 1], [], []>} : vector<24x24xf32>, vector<24x32xf32>, vector<24x32xf32> -> vector<24x32xf32>
    %962 = arith.addf %942, %961 : vector<24x32xf32>
    %963 = vector.broadcast %78 : vector<1x32xf32> to vector<24x32xf32>
    %964 = arith.mulf %878, %963 : vector<24x32xf32>
    %965 = vector.broadcast %78 : vector<1x32xf32> to vector<24x32xf32>
    %966 = arith.mulf %883, %965 : vector<24x32xf32>
    %cst_289 = arith.constant dense<0.000000e+00> : vector<24x24xf32>
    %967 = tpu.matmul %873, %964, %cst_289 {dimension_numbers = #tpu.dot_dimension_numbers<[1], [1], [0], [0], [0, 0, 1, 0], [], []>} : vector<24x32xf32>, vector<24x32xf32>, vector<24x24xf32> -> vector<24x24xf32>
    %cst_290 = arith.constant 5.000000e-01 : f32
    %968 = vector.broadcast %cst_290 : f32 to vector<24x24xf32>
    %969 = arith.mulf %967, %968 : vector<24x24xf32>
    %970 = arith.addf %969, %128 : vector<24x24xf32>
    %cst_291 = arith.constant dense<0xFF800000> : vector<24xf32>
    %971 = vector.multi_reduction <maximumf>, %970, %cst_291 [1] : vector<24x24xf32> to vector<24xf32>
    %972 = vector.shape_cast %971 : vector<24xf32> to vector<24x1xf32>
    %973 = vector.broadcast %972 : vector<24x1xf32> to vector<24x24xf32>
    %974 = arith.subf %970, %973 : vector<24x24xf32>
    %975 = math.exp %974 : vector<24x24xf32>
    %cst_292 = arith.constant dense<0.000000e+00> : vector<24xf32>
    %976 = vector.multi_reduction <add>, %975, %cst_292 [1] : vector<24x24xf32> to vector<24xf32>
    %977 = vector.shape_cast %976 : vector<24xf32> to vector<24x1xf32>
    %978 = tpu.reciprocal %977 {approx = true} : vector<24x1xf32> -> vector<24x1xf32>
    %979 = vector.broadcast %978 : vector<24x1xf32> to vector<24x24xf32>
    %980 = arith.mulf %975, %979 : vector<24x24xf32>
    %cst_293 = arith.constant dense<0.000000e+00> : vector<24x32xf32>
    %981 = tpu.matmul %980, %966, %cst_293 {dimension_numbers = #tpu.dot_dimension_numbers<[1], [0], [0], [1], [0, 0, 1, 1], [], []>} : vector<24x24xf32>, vector<24x32xf32>, vector<24x32xf32> -> vector<24x32xf32>
    %982 = arith.addf %962, %981 : vector<24x32xf32>
    %983 = vector.broadcast %85 : vector<1x32xf32> to vector<24x32xf32>
    %984 = arith.mulf %878, %983 : vector<24x32xf32>
    %985 = vector.broadcast %85 : vector<1x32xf32> to vector<24x32xf32>
    %986 = arith.mulf %883, %985 : vector<24x32xf32>
    %cst_294 = arith.constant dense<0.000000e+00> : vector<24x24xf32>
    %987 = tpu.matmul %873, %984, %cst_294 {dimension_numbers = #tpu.dot_dimension_numbers<[1], [1], [0], [0], [0, 0, 1, 0], [], []>} : vector<24x32xf32>, vector<24x32xf32>, vector<24x24xf32> -> vector<24x24xf32>
    %cst_295 = arith.constant 5.000000e-01 : f32
    %988 = vector.broadcast %cst_295 : f32 to vector<24x24xf32>
    %989 = arith.mulf %987, %988 : vector<24x24xf32>
    %990 = arith.addf %989, %128 : vector<24x24xf32>
    %cst_296 = arith.constant dense<0xFF800000> : vector<24xf32>
    %991 = vector.multi_reduction <maximumf>, %990, %cst_296 [1] : vector<24x24xf32> to vector<24xf32>
    %992 = vector.shape_cast %991 : vector<24xf32> to vector<24x1xf32>
    %993 = vector.broadcast %992 : vector<24x1xf32> to vector<24x24xf32>
    %994 = arith.subf %990, %993 : vector<24x24xf32>
    %995 = math.exp %994 : vector<24x24xf32>
    %cst_297 = arith.constant dense<0.000000e+00> : vector<24xf32>
    %996 = vector.multi_reduction <add>, %995, %cst_297 [1] : vector<24x24xf32> to vector<24xf32>
    %997 = vector.shape_cast %996 : vector<24xf32> to vector<24x1xf32>
    %998 = tpu.reciprocal %997 {approx = true} : vector<24x1xf32> -> vector<24x1xf32>
    %999 = vector.broadcast %998 : vector<24x1xf32> to vector<24x24xf32>
    %1000 = arith.mulf %995, %999 : vector<24x24xf32>
    %cst_298 = arith.constant dense<0.000000e+00> : vector<24x32xf32>
    %1001 = tpu.matmul %1000, %986, %cst_298 {dimension_numbers = #tpu.dot_dimension_numbers<[1], [0], [0], [1], [0, 0, 1, 1], [], []>} : vector<24x24xf32>, vector<24x32xf32>, vector<24x32xf32> -> vector<24x32xf32>
    %1002 = arith.addf %982, %1001 : vector<24x32xf32>
    %1003 = vector.broadcast %92 : vector<1x32xf32> to vector<24x32xf32>
    %1004 = arith.mulf %878, %1003 : vector<24x32xf32>
    %1005 = vector.broadcast %92 : vector<1x32xf32> to vector<24x32xf32>
    %1006 = arith.mulf %883, %1005 : vector<24x32xf32>
    %cst_299 = arith.constant dense<0.000000e+00> : vector<24x24xf32>
    %1007 = tpu.matmul %873, %1004, %cst_299 {dimension_numbers = #tpu.dot_dimension_numbers<[1], [1], [0], [0], [0, 0, 1, 0], [], []>} : vector<24x32xf32>, vector<24x32xf32>, vector<24x24xf32> -> vector<24x24xf32>
    %cst_300 = arith.constant 5.000000e-01 : f32
    %1008 = vector.broadcast %cst_300 : f32 to vector<24x24xf32>
    %1009 = arith.mulf %1007, %1008 : vector<24x24xf32>
    %1010 = arith.addf %1009, %128 : vector<24x24xf32>
    %cst_301 = arith.constant dense<0xFF800000> : vector<24xf32>
    %1011 = vector.multi_reduction <maximumf>, %1010, %cst_301 [1] : vector<24x24xf32> to vector<24xf32>
    %1012 = vector.shape_cast %1011 : vector<24xf32> to vector<24x1xf32>
    %1013 = vector.broadcast %1012 : vector<24x1xf32> to vector<24x24xf32>
    %1014 = arith.subf %1010, %1013 : vector<24x24xf32>
    %1015 = math.exp %1014 : vector<24x24xf32>
    %cst_302 = arith.constant dense<0.000000e+00> : vector<24xf32>
    %1016 = vector.multi_reduction <add>, %1015, %cst_302 [1] : vector<24x24xf32> to vector<24xf32>
    %1017 = vector.shape_cast %1016 : vector<24xf32> to vector<24x1xf32>
    %1018 = tpu.reciprocal %1017 {approx = true} : vector<24x1xf32> -> vector<24x1xf32>
    %1019 = vector.broadcast %1018 : vector<24x1xf32> to vector<24x24xf32>
    %1020 = arith.mulf %1015, %1019 : vector<24x24xf32>
    %cst_303 = arith.constant dense<0.000000e+00> : vector<24x32xf32>
    %1021 = tpu.matmul %1020, %1006, %cst_303 {dimension_numbers = #tpu.dot_dimension_numbers<[1], [0], [0], [1], [0, 0, 1, 1], [], []>} : vector<24x24xf32>, vector<24x32xf32>, vector<24x32xf32> -> vector<24x32xf32>
    %1022 = arith.addf %1002, %1021 : vector<24x32xf32>
    %1023 = vector.broadcast %99 : vector<1x32xf32> to vector<24x32xf32>
    %1024 = arith.mulf %878, %1023 : vector<24x32xf32>
    %1025 = vector.broadcast %99 : vector<1x32xf32> to vector<24x32xf32>
    %1026 = arith.mulf %883, %1025 : vector<24x32xf32>
    %cst_304 = arith.constant dense<0.000000e+00> : vector<24x24xf32>
    %1027 = tpu.matmul %873, %1024, %cst_304 {dimension_numbers = #tpu.dot_dimension_numbers<[1], [1], [0], [0], [0, 0, 1, 0], [], []>} : vector<24x32xf32>, vector<24x32xf32>, vector<24x24xf32> -> vector<24x24xf32>
    %cst_305 = arith.constant 5.000000e-01 : f32
    %1028 = vector.broadcast %cst_305 : f32 to vector<24x24xf32>
    %1029 = arith.mulf %1027, %1028 : vector<24x24xf32>
    %1030 = arith.addf %1029, %128 : vector<24x24xf32>
    %cst_306 = arith.constant dense<0xFF800000> : vector<24xf32>
    %1031 = vector.multi_reduction <maximumf>, %1030, %cst_306 [1] : vector<24x24xf32> to vector<24xf32>
    %1032 = vector.shape_cast %1031 : vector<24xf32> to vector<24x1xf32>
    %1033 = vector.broadcast %1032 : vector<24x1xf32> to vector<24x24xf32>
    %1034 = arith.subf %1030, %1033 : vector<24x24xf32>
    %1035 = math.exp %1034 : vector<24x24xf32>
    %cst_307 = arith.constant dense<0.000000e+00> : vector<24xf32>
    %1036 = vector.multi_reduction <add>, %1035, %cst_307 [1] : vector<24x24xf32> to vector<24xf32>
    %1037 = vector.shape_cast %1036 : vector<24xf32> to vector<24x1xf32>
    %1038 = tpu.reciprocal %1037 {approx = true} : vector<24x1xf32> -> vector<24x1xf32>
    %1039 = vector.broadcast %1038 : vector<24x1xf32> to vector<24x24xf32>
    %1040 = arith.mulf %1035, %1039 : vector<24x24xf32>
    %cst_308 = arith.constant dense<0.000000e+00> : vector<24x32xf32>
    %1041 = tpu.matmul %1040, %1026, %cst_308 {dimension_numbers = #tpu.dot_dimension_numbers<[1], [0], [0], [1], [0, 0, 1, 1], [], []>} : vector<24x24xf32>, vector<24x32xf32>, vector<24x32xf32> -> vector<24x32xf32>
    %1042 = arith.addf %1022, %1041 : vector<24x32xf32>
    %c720 = arith.constant 720 : index
    %c0_309 = arith.constant 0 : index
    %1043 = vector.load %arg2[%c720, %c0_309] : memref<832x32xf32, #tpu.memory_space<vmem>>, vector<32x32xf32>
    %cst_310 = arith.constant dense<0.000000e+00> : vector<24x32xf32>
    %1044 = tpu.matmul %1042, %1043, %cst_310 {dimension_numbers = #tpu.dot_dimension_numbers<[1], [0], [0], [1], [0, 0, 1, 1], [], []>} : vector<24x32xf32>, vector<32x32xf32>, vector<24x32xf32> -> vector<24x32xf32>
    %1045 = arith.addf %845, %1044 : vector<24x32xf32>
    %c821 = arith.constant 821 : index
    %c0_311 = arith.constant 0 : index
    %1046 = vector.load %arg2[%c821, %c0_311] : memref<832x32xf32, #tpu.memory_space<vmem>>, vector<1x32xf32>
    %1047 = vector.broadcast %1046 : vector<1x32xf32> to vector<24x32xf32>
    %1048 = arith.addf %1045, %1047 : vector<24x32xf32>
    %c822 = arith.constant 822 : index
    %c0_312 = arith.constant 0 : index
    %1049 = vector.load %arg2[%c822, %c0_312] : memref<832x32xf32, #tpu.memory_space<vmem>>, vector<1x32xf32>
    %c823 = arith.constant 823 : index
    %c0_313 = arith.constant 0 : index
    %1050 = vector.load %arg2[%c823, %c0_313] : memref<832x32xf32, #tpu.memory_space<vmem>>, vector<1x32xf32>
    %cst_314 = arith.constant dense<0.000000e+00> : vector<24xf32>
    %1051 = vector.multi_reduction <add>, %1048, %cst_314 [1] : vector<24x32xf32> to vector<24xf32>
    %1052 = vector.shape_cast %1051 : vector<24xf32> to vector<24x1xf32>
    %cst_315 = arith.constant 3.200000e+01 : f32
    %1053 = vector.broadcast %cst_315 : f32 to vector<24x1xf32>
    %1054 = arith.divf %1052, %1053 : vector<24x1xf32>
    %1055 = vector.broadcast %1054 : vector<24x1xf32> to vector<24x32xf32>
    %1056 = arith.subf %1048, %1055 : vector<24x32xf32>
    %1057 = arith.mulf %1056, %1056 : vector<24x32xf32>
    %cst_316 = arith.constant dense<0.000000e+00> : vector<24xf32>
    %1058 = vector.multi_reduction <add>, %1057, %cst_316 [1] : vector<24x32xf32> to vector<24xf32>
    %1059 = vector.shape_cast %1058 : vector<24xf32> to vector<24x1xf32>
    %cst_317 = arith.constant 0.0322580636 : f32
    %1060 = vector.broadcast %cst_317 : f32 to vector<24x1xf32>
    %1061 = arith.mulf %1059, %1060 : vector<24x1xf32>
    %1062 = math.sqrt %1061 : vector<24x1xf32>
    %cst_318 = arith.constant 9.99999997E-7 : f32
    %1063 = vector.broadcast %cst_318 : f32 to vector<24x1xf32>
    %1064 = arith.addf %1062, %1063 : vector<24x1xf32>
    %1065 = tpu.reciprocal %1064 {approx = true} : vector<24x1xf32> -> vector<24x1xf32>
    %1066 = vector.broadcast %1049 : vector<1x32xf32> to vector<24x32xf32>
    %1067 = arith.mulf %1066, %1056 : vector<24x32xf32>
    %1068 = vector.broadcast %1065 : vector<24x1xf32> to vector<24x32xf32>
    %1069 = arith.mulf %1067, %1068 : vector<24x32xf32>
    %1070 = vector.broadcast %1050 : vector<1x32xf32> to vector<24x32xf32>
    %1071 = arith.addf %1069, %1070 : vector<24x32xf32>
    %c752 = arith.constant 752 : index
    %c0_319 = arith.constant 0 : index
    %1072 = vector.load %arg2[%c752, %c0_319] : memref<832x32xf32, #tpu.memory_space<vmem>>, vector<32x32xf32>
    %cst_320 = arith.constant dense<0.000000e+00> : vector<24x32xf32>
    %1073 = tpu.matmul %1071, %1072, %cst_320 {dimension_numbers = #tpu.dot_dimension_numbers<[1], [0], [0], [1], [0, 0, 1, 1], [], []>} : vector<24x32xf32>, vector<32x32xf32>, vector<24x32xf32> -> vector<24x32xf32>
    %c824 = arith.constant 824 : index
    %c0_321 = arith.constant 0 : index
    %1074 = vector.load %arg2[%c824, %c0_321] : memref<832x32xf32, #tpu.memory_space<vmem>>, vector<1x32xf32>
    %1075 = vector.broadcast %1074 : vector<1x32xf32> to vector<24x32xf32>
    %1076 = arith.addf %1073, %1075 : vector<24x32xf32>
    %cst_322 = arith.constant 0.000000e+00 : f32
    %1077 = vector.broadcast %cst_322 : f32 to vector<24x32xf32>
    %1078 = arith.maximumf %1076, %1077 : vector<24x32xf32>
    %c784 = arith.constant 784 : index
    %c0_323 = arith.constant 0 : index
    %1079 = vector.load %arg2[%c784, %c0_323] : memref<832x32xf32, #tpu.memory_space<vmem>>, vector<32x32xf32>
    %cst_324 = arith.constant dense<0.000000e+00> : vector<24x32xf32>
    %1080 = tpu.matmul %1078, %1079, %cst_324 {dimension_numbers = #tpu.dot_dimension_numbers<[1], [0], [0], [1], [0, 0, 1, 1], [], []>} : vector<24x32xf32>, vector<32x32xf32>, vector<24x32xf32> -> vector<24x32xf32>
    %1081 = arith.addf %1048, %1080 : vector<24x32xf32>
    %c825 = arith.constant 825 : index
    %c0_325 = arith.constant 0 : index
    %1082 = vector.load %arg2[%c825, %c0_325] : memref<832x32xf32, #tpu.memory_space<vmem>>, vector<1x32xf32>
    %1083 = vector.broadcast %1082 : vector<1x32xf32> to vector<24x32xf32>
    %1084 = arith.addf %1081, %1083 : vector<24x32xf32>
    %1085 = tpu.iota {dimensions = array<i32: 0>} : vector<2x24xi32>
    %1086 = tpu.iota {dimensions = array<i32: 1>} : vector<2x24xi32>
    %c10_i32_326 = arith.constant 10 : i32
    %1087 = vector.broadcast %c10_i32_326 : i32 to vector<2x24xi32>
    %1088 = arith.muli %1085, %1087 : vector<2x24xi32>
    %1089 = arith.cmpi sge, %1086, %1088 : vector<2x24xi32>
    %c1_i32 = arith.constant 1 : i32
    %1090 = vector.broadcast %c1_i32 : i32 to vector<2x24xi32>
    %1091 = arith.addi %1085, %1090 : vector<2x24xi32>
    %c10_i32_327 = arith.constant 10 : i32
    %1092 = vector.broadcast %c10_i32_327 : i32 to vector<2x24xi32>
    %1093 = arith.muli %1091, %1092 : vector<2x24xi32>
    %1094 = arith.cmpi slt, %1086, %1093 : vector<2x24xi32>
    %1095 = arith.andi %1089, %1094 : vector<2x24xi1>
    %cst_328 = arith.constant 1.000000e-01 : f32
    %cst_329 = arith.constant 0.000000e+00 : f32
    %1096 = vector.broadcast %cst_328 : f32 to vector<2x24xf32>
    %1097 = vector.broadcast %cst_329 : f32 to vector<2x24xf32>
    %1098 = arith.select %1095, %1096, %1097 : vector<2x24xi1>, vector<2x24xf32>
    %cst_330 = arith.constant dense<0.000000e+00> : vector<2x32xf32>
    %1099 = tpu.matmul %1098, %1084, %cst_330 {dimension_numbers = #tpu.dot_dimension_numbers<[1], [0], [0], [1], [0, 0, 1, 1], [], []>} : vector<2x24xf32>, vector<24x32xf32>, vector<2x32xf32> -> vector<2x32xf32>
    %c32_331 = arith.constant 32 : index
    %c0_332 = arith.constant 0 : index
    %1100 = vector.load %arg3[%c32_331, %c0_332] : memref<488x32xf32, #tpu.memory_space<vmem>>, vector<32x32xf32>
    %cst_333 = arith.constant dense<0.000000e+00> : vector<16x32xf32>
    %1101 = tpu.matmul %9, %1100, %cst_333 {dimension_numbers = #tpu.dot_dimension_numbers<[1], [0], [0], [1], [0, 0, 1, 1], [], []>} : vector<16x32xf32>, vector<32x32xf32>, vector<16x32xf32> -> vector<16x32xf32>
    %c64_334 = arith.constant 64 : index
    %c0_335 = arith.constant 0 : index
    %1102 = vector.load %arg3[%c64_334, %c0_335] : memref<488x32xf32, #tpu.memory_space<vmem>>, vector<32x32xf32>
    %cst_336 = arith.constant dense<0.000000e+00> : vector<16x32xf32>
    %1103 = tpu.matmul %9, %1102, %cst_336 {dimension_numbers = #tpu.dot_dimension_numbers<[1], [0], [0], [1], [0, 0, 1, 1], [], []>} : vector<16x32xf32>, vector<32x32xf32>, vector<16x32xf32> -> vector<16x32xf32>
    %c96_337 = arith.constant 96 : index
    %c0_338 = arith.constant 0 : index
    %1104 = vector.load %arg3[%c96_337, %c0_338] : memref<488x32xf32, #tpu.memory_space<vmem>>, vector<32x32xf32>
    %cst_339 = arith.constant dense<0.000000e+00> : vector<16x32xf32>
    %1105 = tpu.matmul %9, %1104, %cst_339 {dimension_numbers = #tpu.dot_dimension_numbers<[1], [0], [0], [1], [0, 0, 1, 1], [], []>} : vector<16x32xf32>, vector<32x32xf32>, vector<16x32xf32> -> vector<16x32xf32>
    %c128_340 = arith.constant 128 : index
    %c0_341 = arith.constant 0 : index
    %1106 = vector.load %arg3[%c128_340, %c0_341] : memref<488x32xf32, #tpu.memory_space<vmem>>, vector<32x32xf32>
    %c160_342 = arith.constant 160 : index
    %c0_343 = arith.constant 0 : index
    %1107 = vector.load %arg3[%c160_342, %c0_343] : memref<488x32xf32, #tpu.memory_space<vmem>>, vector<32x32xf32>
    %c192_344 = arith.constant 192 : index
    %c0_345 = arith.constant 0 : index
    %1108 = vector.load %arg3[%c192_344, %c0_345] : memref<488x32xf32, #tpu.memory_space<vmem>>, vector<32x32xf32>
    %c224 = arith.constant 224 : index
    %c0_346 = arith.constant 0 : index
    %1109 = vector.load %arg3[%c224, %c0_346] : memref<488x32xf32, #tpu.memory_space<vmem>>, vector<32x32xf32>
    %c256 = arith.constant 256 : index
    %c0_347 = arith.constant 0 : index
    %1110 = vector.load %arg3[%c256, %c0_347] : memref<488x32xf32, #tpu.memory_space<vmem>>, vector<32x32xf32>
    %c288 = arith.constant 288 : index
    %c0_348 = arith.constant 0 : index
    %1111 = vector.load %arg3[%c288, %c0_348] : memref<488x32xf32, #tpu.memory_space<vmem>>, vector<32x32xf32>
    %c320 = arith.constant 320 : index
    %c0_349 = arith.constant 0 : index
    %1112 = vector.load %arg3[%c320, %c0_349] : memref<488x32xf32, #tpu.memory_space<vmem>>, vector<32x32xf32>
    %c352 = arith.constant 352 : index
    %c0_350 = arith.constant 0 : index
    %1113 = vector.load %arg3[%c352, %c0_350] : memref<488x32xf32, #tpu.memory_space<vmem>>, vector<32x32xf32>
    %c384 = arith.constant 384 : index
    %c0_351 = arith.constant 0 : index
    %1114 = vector.load %arg3[%c384, %c0_351] : memref<488x32xf32, #tpu.memory_space<vmem>>, vector<32x32xf32>
    %c416_352 = arith.constant 416 : index
    %c0_353 = arith.constant 0 : index
    %1115 = vector.load %arg3[%c416_352, %c0_353] : memref<488x32xf32, #tpu.memory_space<vmem>>, vector<32x32xf32>
    %c448_354 = arith.constant 448 : index
    %c0_355 = arith.constant 0 : index
    %1116 = vector.load %arg3[%c448_354, %c0_355] : memref<488x32xf32, #tpu.memory_space<vmem>>, vector<32x32xf32>
    %cst_356 = arith.constant 0.000000e+00 : f32
    %1117 = vector.broadcast %cst_356 : f32 to vector<16x32xf32>
    %c0_357 = arith.constant 0 : index
    %c0_358 = arith.constant 0 : index
    %1118 = vector.load %arg6[%c0_357, %c0_358] : memref<16x32xf32, #tpu.memory_space<vmem>>, vector<16x32xf32>
    tpu.vector_store %arg6[%c0_357, %c0_358], %1117 {strides = array<i32>} : memref<16x32xf32, #tpu.memory_space<vmem>>, vector<16x32xf32>,
    %1119 = vector.extract_strided_slice %1101 {offsets = [0, 0], sizes = [2, 32], strides = [1, 1]} : vector<16x32xf32> to vector<2x32xf32>
    %cst_359 = arith.constant dense<0.000000e+00> : vector<2x32xf32>
    %1120 = tpu.matmul %1099, %1106, %cst_359 {dimension_numbers = #tpu.dot_dimension_numbers<[1], [0], [0], [1], [0, 0, 1, 1], [], []>} : vector<2x32xf32>, vector<32x32xf32>, vector<2x32xf32> -> vector<2x32xf32>
    %1121 = arith.addf %1119, %1120 : vector<2x32xf32>
    %1122 = arith.negf %1121 : vector<2x32xf32>
    %1123 = math.exp %1122 : vector<2x32xf32>
    %cst_360 = arith.constant 1.000000e+00 : f32
    %1124 = vector.broadcast %cst_360 : f32 to vector<2x32xf32>
    %1125 = arith.addf %1124, %1123 : vector<2x32xf32>
    %1126 = arith.divf %1124, %1125 : vector<2x32xf32>
    %1127 = vector.extract_strided_slice %1103 {offsets = [0, 0], sizes = [2, 32], strides = [1, 1]} : vector<16x32xf32> to vector<2x32xf32>
    %cst_361 = arith.constant dense<0.000000e+00> : vector<2x32xf32>
    %1128 = tpu.matmul %1099, %1107, %cst_361 {dimension_numbers = #tpu.dot_dimension_numbers<[1], [0], [0], [1], [0, 0, 1, 1], [], []>} : vector<2x32xf32>, vector<32x32xf32>, vector<2x32xf32> -> vector<2x32xf32>
    %1129 = arith.addf %1127, %1128 : vector<2x32xf32>
    %1130 = arith.negf %1129 : vector<2x32xf32>
    %1131 = math.exp %1130 : vector<2x32xf32>
    %cst_362 = arith.constant 1.000000e+00 : f32
    %1132 = vector.broadcast %cst_362 : f32 to vector<2x32xf32>
    %1133 = arith.addf %1132, %1131 : vector<2x32xf32>
    %1134 = arith.divf %1132, %1133 : vector<2x32xf32>
    %1135 = vector.extract_strided_slice %1105 {offsets = [0, 0], sizes = [2, 32], strides = [1, 1]} : vector<16x32xf32> to vector<2x32xf32>
    %cst_363 = arith.constant dense<0.000000e+00> : vector<2x32xf32>
    %1136 = tpu.matmul %1099, %1108, %cst_363 {dimension_numbers = #tpu.dot_dimension_numbers<[1], [0], [0], [1], [0, 0, 1, 1], [], []>} : vector<2x32xf32>, vector<32x32xf32>, vector<2x32xf32> -> vector<2x32xf32>
    %1137 = arith.mulf %1126, %1136 : vector<2x32xf32>
    %1138 = arith.addf %1135, %1137 : vector<2x32xf32>
    %1139 = math.tanh %1138 : vector<2x32xf32>
    %cst_364 = arith.constant 1.000000e+00 : f32
    %1140 = vector.broadcast %cst_364 : f32 to vector<2x32xf32>
    %1141 = arith.subf %1140, %1134 : vector<2x32xf32>
    %1142 = arith.mulf %1141, %1139 : vector<2x32xf32>
    %1143 = arith.mulf %1134, %1099 : vector<2x32xf32>
    %1144 = arith.addf %1142, %1143 : vector<2x32xf32>
    %cst_365 = arith.constant dense<0.000000e+00> : vector<2x32xf32>
    %1145 = tpu.matmul %1144, %1109, %cst_365 {dimension_numbers = #tpu.dot_dimension_numbers<[1], [0], [0], [1], [0, 0, 1, 1], [], []>} : vector<2x32xf32>, vector<32x32xf32>, vector<2x32xf32> -> vector<2x32xf32>
    %cst_366 = arith.constant dense<0.000000e+00> : vector<2x32xf32>
    %1146 = tpu.matmul %1099, %1112, %cst_366 {dimension_numbers = #tpu.dot_dimension_numbers<[1], [0], [0], [1], [0, 0, 1, 1], [], []>} : vector<2x32xf32>, vector<32x32xf32>, vector<2x32xf32> -> vector<2x32xf32>
    %1147 = arith.addf %1145, %1146 : vector<2x32xf32>
    %1148 = arith.negf %1147 : vector<2x32xf32>
    %1149 = math.exp %1148 : vector<2x32xf32>
    %cst_367 = arith.constant 1.000000e+00 : f32
    %1150 = vector.broadcast %cst_367 : f32 to vector<2x32xf32>
    %1151 = arith.addf %1150, %1149 : vector<2x32xf32>
    %1152 = arith.divf %1150, %1151 : vector<2x32xf32>
    %cst_368 = arith.constant dense<0.000000e+00> : vector<2x32xf32>
    %1153 = tpu.matmul %1144, %1110, %cst_368 {dimension_numbers = #tpu.dot_dimension_numbers<[1], [0], [0], [1], [0, 0, 1, 1], [], []>} : vector<2x32xf32>, vector<32x32xf32>, vector<2x32xf32> -> vector<2x32xf32>
    %cst_369 = arith.constant dense<0.000000e+00> : vector<2x32xf32>
    %1154 = tpu.matmul %1099, %1113, %cst_369 {dimension_numbers = #tpu.dot_dimension_numbers<[1], [0], [0], [1], [0, 0, 1, 1], [], []>} : vector<2x32xf32>, vector<32x32xf32>, vector<2x32xf32> -> vector<2x32xf32>
    %1155 = arith.addf %1153, %1154 : vector<2x32xf32>
    %1156 = arith.negf %1155 : vector<2x32xf32>
    %1157 = math.exp %1156 : vector<2x32xf32>
    %cst_370 = arith.constant 1.000000e+00 : f32
    %1158 = vector.broadcast %cst_370 : f32 to vector<2x32xf32>
    %1159 = arith.addf %1158, %1157 : vector<2x32xf32>
    %1160 = arith.divf %1158, %1159 : vector<2x32xf32>
    %cst_371 = arith.constant dense<0.000000e+00> : vector<2x32xf32>
    %1161 = tpu.matmul %1144, %1111, %cst_371 {dimension_numbers = #tpu.dot_dimension_numbers<[1], [0], [0], [1], [0, 0, 1, 1], [], []>} : vector<2x32xf32>, vector<32x32xf32>, vector<2x32xf32> -> vector<2x32xf32>
    %cst_372 = arith.constant dense<0.000000e+00> : vector<2x32xf32>
    %1162 = tpu.matmul %1099, %1114, %cst_372 {dimension_numbers = #tpu.dot_dimension_numbers<[1], [0], [0], [1], [0, 0, 1, 1], [], []>} : vector<2x32xf32>, vector<32x32xf32>, vector<2x32xf32> -> vector<2x32xf32>
    %1163 = arith.mulf %1152, %1162 : vector<2x32xf32>
    %1164 = arith.addf %1161, %1163 : vector<2x32xf32>
    %1165 = math.tanh %1164 : vector<2x32xf32>
    %cst_373 = arith.constant 1.000000e+00 : f32
    %1166 = vector.broadcast %cst_373 : f32 to vector<2x32xf32>
    %1167 = arith.subf %1166, %1160 : vector<2x32xf32>
    %1168 = arith.mulf %1167, %1165 : vector<2x32xf32>
    %1169 = arith.mulf %1160, %1099 : vector<2x32xf32>
    %1170 = arith.addf %1168, %1169 : vector<2x32xf32>
    %cst_374 = arith.constant dense<0.000000e+00> : vector<2x32xf32>
    %1171 = tpu.matmul %1099, %1115, %cst_374 {dimension_numbers = #tpu.dot_dimension_numbers<[1], [0], [0], [1], [0, 0, 1, 1], [], []>} : vector<2x32xf32>, vector<32x32xf32>, vector<2x32xf32> -> vector<2x32xf32>
    %cst_375 = arith.constant dense<0.000000e+00> : vector<2x32xf32>
    %1172 = tpu.matmul %1170, %1116, %cst_375 {dimension_numbers = #tpu.dot_dimension_numbers<[1], [0], [0], [1], [0, 0, 1, 1], [], []>} : vector<2x32xf32>, vector<32x32xf32>, vector<2x32xf32> -> vector<2x32xf32>
    %1173 = arith.addf %1171, %1172 : vector<2x32xf32>
    %1174 = math.tanh %1173 : vector<2x32xf32>
    %c0_376 = arith.constant 0 : index
    %c0_377 = arith.constant 0 : index
    %1175 = vector.load %arg6[%c0_376, %c0_377] : memref<16x32xf32, #tpu.memory_space<vmem>>, vector<2x32xf32>
    tpu.vector_store %arg6[%c0_376, %c0_377], %1174 {strides = array<i32>} : memref<16x32xf32, #tpu.memory_space<vmem>>, vector<2x32xf32>,
    %1176 = vector.extract_strided_slice %1101 {offsets = [2, 0], sizes = [2, 32], strides = [1, 1]} : vector<16x32xf32> to vector<2x32xf32>
    %cst_378 = arith.constant dense<0.000000e+00> : vector<2x32xf32>
    %1177 = tpu.matmul %1174, %1106, %cst_378 {dimension_numbers = #tpu.dot_dimension_numbers<[1], [0], [0], [1], [0, 0, 1, 1], [], []>} : vector<2x32xf32>, vector<32x32xf32>, vector<2x32xf32> -> vector<2x32xf32>
    %1178 = arith.addf %1176, %1177 : vector<2x32xf32>
    %1179 = arith.negf %1178 : vector<2x32xf32>
    %1180 = math.exp %1179 : vector<2x32xf32>
    %cst_379 = arith.constant 1.000000e+00 : f32
    %1181 = vector.broadcast %cst_379 : f32 to vector<2x32xf32>
    %1182 = arith.addf %1181, %1180 : vector<2x32xf32>
    %1183 = arith.divf %1181, %1182 : vector<2x32xf32>
    %1184 = vector.extract_strided_slice %1103 {offsets = [2, 0], sizes = [2, 32], strides = [1, 1]} : vector<16x32xf32> to vector<2x32xf32>
    %cst_380 = arith.constant dense<0.000000e+00> : vector<2x32xf32>
    %1185 = tpu.matmul %1174, %1107, %cst_380 {dimension_numbers = #tpu.dot_dimension_numbers<[1], [0], [0], [1], [0, 0, 1, 1], [], []>} : vector<2x32xf32>, vector<32x32xf32>, vector<2x32xf32> -> vector<2x32xf32>
    %1186 = arith.addf %1184, %1185 : vector<2x32xf32>
    %1187 = arith.negf %1186 : vector<2x32xf32>
    %1188 = math.exp %1187 : vector<2x32xf32>
    %cst_381 = arith.constant 1.000000e+00 : f32
    %1189 = vector.broadcast %cst_381 : f32 to vector<2x32xf32>
    %1190 = arith.addf %1189, %1188 : vector<2x32xf32>
    %1191 = arith.divf %1189, %1190 : vector<2x32xf32>
    %1192 = vector.extract_strided_slice %1105 {offsets = [2, 0], sizes = [2, 32], strides = [1, 1]} : vector<16x32xf32> to vector<2x32xf32>
    %cst_382 = arith.constant dense<0.000000e+00> : vector<2x32xf32>
    %1193 = tpu.matmul %1174, %1108, %cst_382 {dimension_numbers = #tpu.dot_dimension_numbers<[1], [0], [0], [1], [0, 0, 1, 1], [], []>} : vector<2x32xf32>, vector<32x32xf32>, vector<2x32xf32> -> vector<2x32xf32>
    %1194 = arith.mulf %1183, %1193 : vector<2x32xf32>
    %1195 = arith.addf %1192, %1194 : vector<2x32xf32>
    %1196 = math.tanh %1195 : vector<2x32xf32>
    %cst_383 = arith.constant 1.000000e+00 : f32
    %1197 = vector.broadcast %cst_383 : f32 to vector<2x32xf32>
    %1198 = arith.subf %1197, %1191 : vector<2x32xf32>
    %1199 = arith.mulf %1198, %1196 : vector<2x32xf32>
    %1200 = arith.mulf %1191, %1174 : vector<2x32xf32>
    %1201 = arith.addf %1199, %1200 : vector<2x32xf32>
    %cst_384 = arith.constant dense<0.000000e+00> : vector<2x32xf32>
    %1202 = tpu.matmul %1201, %1109, %cst_384 {dimension_numbers = #tpu.dot_dimension_numbers<[1], [0], [0], [1], [0, 0, 1, 1], [], []>} : vector<2x32xf32>, vector<32x32xf32>, vector<2x32xf32> -> vector<2x32xf32>
    %cst_385 = arith.constant dense<0.000000e+00> : vector<2x32xf32>
    %1203 = tpu.matmul %1170, %1112, %cst_385 {dimension_numbers = #tpu.dot_dimension_numbers<[1], [0], [0], [1], [0, 0, 1, 1], [], []>} : vector<2x32xf32>, vector<32x32xf32>, vector<2x32xf32> -> vector<2x32xf32>
    %1204 = arith.addf %1202, %1203 : vector<2x32xf32>
    %1205 = arith.negf %1204 : vector<2x32xf32>
    %1206 = math.exp %1205 : vector<2x32xf32>
    %cst_386 = arith.constant 1.000000e+00 : f32
    %1207 = vector.broadcast %cst_386 : f32 to vector<2x32xf32>
    %1208 = arith.addf %1207, %1206 : vector<2x32xf32>
    %1209 = arith.divf %1207, %1208 : vector<2x32xf32>
    %cst_387 = arith.constant dense<0.000000e+00> : vector<2x32xf32>
    %1210 = tpu.matmul %1201, %1110, %cst_387 {dimension_numbers = #tpu.dot_dimension_numbers<[1], [0], [0], [1], [0, 0, 1, 1], [], []>} : vector<2x32xf32>, vector<32x32xf32>, vector<2x32xf32> -> vector<2x32xf32>
    %cst_388 = arith.constant dense<0.000000e+00> : vector<2x32xf32>
    %1211 = tpu.matmul %1170, %1113, %cst_388 {dimension_numbers = #tpu.dot_dimension_numbers<[1], [0], [0], [1], [0, 0, 1, 1], [], []>} : vector<2x32xf32>, vector<32x32xf32>, vector<2x32xf32> -> vector<2x32xf32>
    %1212 = arith.addf %1210, %1211 : vector<2x32xf32>
    %1213 = arith.negf %1212 : vector<2x32xf32>
    %1214 = math.exp %1213 : vector<2x32xf32>
    %cst_389 = arith.constant 1.000000e+00 : f32
    %1215 = vector.broadcast %cst_389 : f32 to vector<2x32xf32>
    %1216 = arith.addf %1215, %1214 : vector<2x32xf32>
    %1217 = arith.divf %1215, %1216 : vector<2x32xf32>
    %cst_390 = arith.constant dense<0.000000e+00> : vector<2x32xf32>
    %1218 = tpu.matmul %1201, %1111, %cst_390 {dimension_numbers = #tpu.dot_dimension_numbers<[1], [0], [0], [1], [0, 0, 1, 1], [], []>} : vector<2x32xf32>, vector<32x32xf32>, vector<2x32xf32> -> vector<2x32xf32>
    %cst_391 = arith.constant dense<0.000000e+00> : vector<2x32xf32>
    %1219 = tpu.matmul %1170, %1114, %cst_391 {dimension_numbers = #tpu.dot_dimension_numbers<[1], [0], [0], [1], [0, 0, 1, 1], [], []>} : vector<2x32xf32>, vector<32x32xf32>, vector<2x32xf32> -> vector<2x32xf32>
    %1220 = arith.mulf %1209, %1219 : vector<2x32xf32>
    %1221 = arith.addf %1218, %1220 : vector<2x32xf32>
    %1222 = math.tanh %1221 : vector<2x32xf32>
    %cst_392 = arith.constant 1.000000e+00 : f32
    %1223 = vector.broadcast %cst_392 : f32 to vector<2x32xf32>
    %1224 = arith.subf %1223, %1217 : vector<2x32xf32>
    %1225 = arith.mulf %1224, %1222 : vector<2x32xf32>
    %1226 = arith.mulf %1217, %1170 : vector<2x32xf32>
    %1227 = arith.addf %1225, %1226 : vector<2x32xf32>
    %cst_393 = arith.constant dense<0.000000e+00> : vector<2x32xf32>
    %1228 = tpu.matmul %1174, %1115, %cst_393 {dimension_numbers = #tpu.dot_dimension_numbers<[1], [0], [0], [1], [0, 0, 1, 1], [], []>} : vector<2x32xf32>, vector<32x32xf32>, vector<2x32xf32> -> vector<2x32xf32>
    %cst_394 = arith.constant dense<0.000000e+00> : vector<2x32xf32>
    %1229 = tpu.matmul %1227, %1116, %cst_394 {dimension_numbers = #tpu.dot_dimension_numbers<[1], [0], [0], [1], [0, 0, 1, 1], [], []>} : vector<2x32xf32>, vector<32x32xf32>, vector<2x32xf32> -> vector<2x32xf32>
    %1230 = arith.addf %1228, %1229 : vector<2x32xf32>
    %1231 = math.tanh %1230 : vector<2x32xf32>
    %c2 = arith.constant 2 : index
    %c0_395 = arith.constant 0 : index
    %1232 = vector.load %arg6[%c2, %c0_395] : memref<16x32xf32, #tpu.memory_space<vmem>>, vector<2x32xf32>
    tpu.vector_store %arg6[%c2, %c0_395], %1231 {strides = array<i32>} : memref<16x32xf32, #tpu.memory_space<vmem>>, vector<2x32xf32>,
    %1233 = vector.extract_strided_slice %1101 {offsets = [4, 0], sizes = [2, 32], strides = [1, 1]} : vector<16x32xf32> to vector<2x32xf32>
    %cst_396 = arith.constant dense<0.000000e+00> : vector<2x32xf32>
    %1234 = tpu.matmul %1231, %1106, %cst_396 {dimension_numbers = #tpu.dot_dimension_numbers<[1], [0], [0], [1], [0, 0, 1, 1], [], []>} : vector<2x32xf32>, vector<32x32xf32>, vector<2x32xf32> -> vector<2x32xf32>
    %1235 = arith.addf %1233, %1234 : vector<2x32xf32>
    %1236 = arith.negf %1235 : vector<2x32xf32>
    %1237 = math.exp %1236 : vector<2x32xf32>
    %cst_397 = arith.constant 1.000000e+00 : f32
    %1238 = vector.broadcast %cst_397 : f32 to vector<2x32xf32>
    %1239 = arith.addf %1238, %1237 : vector<2x32xf32>
    %1240 = arith.divf %1238, %1239 : vector<2x32xf32>
    %1241 = vector.extract_strided_slice %1103 {offsets = [4, 0], sizes = [2, 32], strides = [1, 1]} : vector<16x32xf32> to vector<2x32xf32>
    %cst_398 = arith.constant dense<0.000000e+00> : vector<2x32xf32>
    %1242 = tpu.matmul %1231, %1107, %cst_398 {dimension_numbers = #tpu.dot_dimension_numbers<[1], [0], [0], [1], [0, 0, 1, 1], [], []>} : vector<2x32xf32>, vector<32x32xf32>, vector<2x32xf32> -> vector<2x32xf32>
    %1243 = arith.addf %1241, %1242 : vector<2x32xf32>
    %1244 = arith.negf %1243 : vector<2x32xf32>
    %1245 = math.exp %1244 : vector<2x32xf32>
    %cst_399 = arith.constant 1.000000e+00 : f32
    %1246 = vector.broadcast %cst_399 : f32 to vector<2x32xf32>
    %1247 = arith.addf %1246, %1245 : vector<2x32xf32>
    %1248 = arith.divf %1246, %1247 : vector<2x32xf32>
    %1249 = vector.extract_strided_slice %1105 {offsets = [4, 0], sizes = [2, 32], strides = [1, 1]} : vector<16x32xf32> to vector<2x32xf32>
    %cst_400 = arith.constant dense<0.000000e+00> : vector<2x32xf32>
    %1250 = tpu.matmul %1231, %1108, %cst_400 {dimension_numbers = #tpu.dot_dimension_numbers<[1], [0], [0], [1], [0, 0, 1, 1], [], []>} : vector<2x32xf32>, vector<32x32xf32>, vector<2x32xf32> -> vector<2x32xf32>
    %1251 = arith.mulf %1240, %1250 : vector<2x32xf32>
    %1252 = arith.addf %1249, %1251 : vector<2x32xf32>
    %1253 = math.tanh %1252 : vector<2x32xf32>
    %cst_401 = arith.constant 1.000000e+00 : f32
    %1254 = vector.broadcast %cst_401 : f32 to vector<2x32xf32>
    %1255 = arith.subf %1254, %1248 : vector<2x32xf32>
    %1256 = arith.mulf %1255, %1253 : vector<2x32xf32>
    %1257 = arith.mulf %1248, %1231 : vector<2x32xf32>
    %1258 = arith.addf %1256, %1257 : vector<2x32xf32>
    %cst_402 = arith.constant dense<0.000000e+00> : vector<2x32xf32>
    %1259 = tpu.matmul %1258, %1109, %cst_402 {dimension_numbers = #tpu.dot_dimension_numbers<[1], [0], [0], [1], [0, 0, 1, 1], [], []>} : vector<2x32xf32>, vector<32x32xf32>, vector<2x32xf32> -> vector<2x32xf32>
    %cst_403 = arith.constant dense<0.000000e+00> : vector<2x32xf32>
    %1260 = tpu.matmul %1227, %1112, %cst_403 {dimension_numbers = #tpu.dot_dimension_numbers<[1], [0], [0], [1], [0, 0, 1, 1], [], []>} : vector<2x32xf32>, vector<32x32xf32>, vector<2x32xf32> -> vector<2x32xf32>
    %1261 = arith.addf %1259, %1260 : vector<2x32xf32>
    %1262 = arith.negf %1261 : vector<2x32xf32>
    %1263 = math.exp %1262 : vector<2x32xf32>
    %cst_404 = arith.constant 1.000000e+00 : f32
    %1264 = vector.broadcast %cst_404 : f32 to vector<2x32xf32>
    %1265 = arith.addf %1264, %1263 : vector<2x32xf32>
    %1266 = arith.divf %1264, %1265 : vector<2x32xf32>
    %cst_405 = arith.constant dense<0.000000e+00> : vector<2x32xf32>
    %1267 = tpu.matmul %1258, %1110, %cst_405 {dimension_numbers = #tpu.dot_dimension_numbers<[1], [0], [0], [1], [0, 0, 1, 1], [], []>} : vector<2x32xf32>, vector<32x32xf32>, vector<2x32xf32> -> vector<2x32xf32>
    %cst_406 = arith.constant dense<0.000000e+00> : vector<2x32xf32>
    %1268 = tpu.matmul %1227, %1113, %cst_406 {dimension_numbers = #tpu.dot_dimension_numbers<[1], [0], [0], [1], [0, 0, 1, 1], [], []>} : vector<2x32xf32>, vector<32x32xf32>, vector<2x32xf32> -> vector<2x32xf32>
    %1269 = arith.addf %1267, %1268 : vector<2x32xf32>
    %1270 = arith.negf %1269 : vector<2x32xf32>
    %1271 = math.exp %1270 : vector<2x32xf32>
    %cst_407 = arith.constant 1.000000e+00 : f32
    %1272 = vector.broadcast %cst_407 : f32 to vector<2x32xf32>
    %1273 = arith.addf %1272, %1271 : vector<2x32xf32>
    %1274 = arith.divf %1272, %1273 : vector<2x32xf32>
    %cst_408 = arith.constant dense<0.000000e+00> : vector<2x32xf32>
    %1275 = tpu.matmul %1258, %1111, %cst_408 {dimension_numbers = #tpu.dot_dimension_numbers<[1], [0], [0], [1], [0, 0, 1, 1], [], []>} : vector<2x32xf32>, vector<32x32xf32>, vector<2x32xf32> -> vector<2x32xf32>
    %cst_409 = arith.constant dense<0.000000e+00> : vector<2x32xf32>
    %1276 = tpu.matmul %1227, %1114, %cst_409 {dimension_numbers = #tpu.dot_dimension_numbers<[1], [0], [0], [1], [0, 0, 1, 1], [], []>} : vector<2x32xf32>, vector<32x32xf32>, vector<2x32xf32> -> vector<2x32xf32>
    %1277 = arith.mulf %1266, %1276 : vector<2x32xf32>
    %1278 = arith.addf %1275, %1277 : vector<2x32xf32>
    %1279 = math.tanh %1278 : vector<2x32xf32>
    %cst_410 = arith.constant 1.000000e+00 : f32
    %1280 = vector.broadcast %cst_410 : f32 to vector<2x32xf32>
    %1281 = arith.subf %1280, %1274 : vector<2x32xf32>
    %1282 = arith.mulf %1281, %1279 : vector<2x32xf32>
    %1283 = arith.mulf %1274, %1227 : vector<2x32xf32>
    %1284 = arith.addf %1282, %1283 : vector<2x32xf32>
    %cst_411 = arith.constant dense<0.000000e+00> : vector<2x32xf32>
    %1285 = tpu.matmul %1231, %1115, %cst_411 {dimension_numbers = #tpu.dot_dimension_numbers<[1], [0], [0], [1], [0, 0, 1, 1], [], []>} : vector<2x32xf32>, vector<32x32xf32>, vector<2x32xf32> -> vector<2x32xf32>
    %cst_412 = arith.constant dense<0.000000e+00> : vector<2x32xf32>
    %1286 = tpu.matmul %1284, %1116, %cst_412 {dimension_numbers = #tpu.dot_dimension_numbers<[1], [0], [0], [1], [0, 0, 1, 1], [], []>} : vector<2x32xf32>, vector<32x32xf32>, vector<2x32xf32> -> vector<2x32xf32>
    %1287 = arith.addf %1285, %1286 : vector<2x32xf32>
    %1288 = math.tanh %1287 : vector<2x32xf32>
    %c4 = arith.constant 4 : index
    %c0_413 = arith.constant 0 : index
    %1289 = vector.load %arg6[%c4, %c0_413] : memref<16x32xf32, #tpu.memory_space<vmem>>, vector<2x32xf32>
    tpu.vector_store %arg6[%c4, %c0_413], %1288 {strides = array<i32>} : memref<16x32xf32, #tpu.memory_space<vmem>>, vector<2x32xf32>,
    %1290 = vector.extract_strided_slice %1101 {offsets = [6, 0], sizes = [2, 32], strides = [1, 1]} : vector<16x32xf32> to vector<2x32xf32>
    %cst_414 = arith.constant dense<0.000000e+00> : vector<2x32xf32>
    %1291 = tpu.matmul %1288, %1106, %cst_414 {dimension_numbers = #tpu.dot_dimension_numbers<[1], [0], [0], [1], [0, 0, 1, 1], [], []>} : vector<2x32xf32>, vector<32x32xf32>, vector<2x32xf32> -> vector<2x32xf32>
    %1292 = arith.addf %1290, %1291 : vector<2x32xf32>
    %1293 = arith.negf %1292 : vector<2x32xf32>
    %1294 = math.exp %1293 : vector<2x32xf32>
    %cst_415 = arith.constant 1.000000e+00 : f32
    %1295 = vector.broadcast %cst_415 : f32 to vector<2x32xf32>
    %1296 = arith.addf %1295, %1294 : vector<2x32xf32>
    %1297 = arith.divf %1295, %1296 : vector<2x32xf32>
    %1298 = vector.extract_strided_slice %1103 {offsets = [6, 0], sizes = [2, 32], strides = [1, 1]} : vector<16x32xf32> to vector<2x32xf32>
    %cst_416 = arith.constant dense<0.000000e+00> : vector<2x32xf32>
    %1299 = tpu.matmul %1288, %1107, %cst_416 {dimension_numbers = #tpu.dot_dimension_numbers<[1], [0], [0], [1], [0, 0, 1, 1], [], []>} : vector<2x32xf32>, vector<32x32xf32>, vector<2x32xf32> -> vector<2x32xf32>
    %1300 = arith.addf %1298, %1299 : vector<2x32xf32>
    %1301 = arith.negf %1300 : vector<2x32xf32>
    %1302 = math.exp %1301 : vector<2x32xf32>
    %cst_417 = arith.constant 1.000000e+00 : f32
    %1303 = vector.broadcast %cst_417 : f32 to vector<2x32xf32>
    %1304 = arith.addf %1303, %1302 : vector<2x32xf32>
    %1305 = arith.divf %1303, %1304 : vector<2x32xf32>
    %1306 = vector.extract_strided_slice %1105 {offsets = [6, 0], sizes = [2, 32], strides = [1, 1]} : vector<16x32xf32> to vector<2x32xf32>
    %cst_418 = arith.constant dense<0.000000e+00> : vector<2x32xf32>
    %1307 = tpu.matmul %1288, %1108, %cst_418 {dimension_numbers = #tpu.dot_dimension_numbers<[1], [0], [0], [1], [0, 0, 1, 1], [], []>} : vector<2x32xf32>, vector<32x32xf32>, vector<2x32xf32> -> vector<2x32xf32>
    %1308 = arith.mulf %1297, %1307 : vector<2x32xf32>
    %1309 = arith.addf %1306, %1308 : vector<2x32xf32>
    %1310 = math.tanh %1309 : vector<2x32xf32>
    %cst_419 = arith.constant 1.000000e+00 : f32
    %1311 = vector.broadcast %cst_419 : f32 to vector<2x32xf32>
    %1312 = arith.subf %1311, %1305 : vector<2x32xf32>
    %1313 = arith.mulf %1312, %1310 : vector<2x32xf32>
    %1314 = arith.mulf %1305, %1288 : vector<2x32xf32>
    %1315 = arith.addf %1313, %1314 : vector<2x32xf32>
    %cst_420 = arith.constant dense<0.000000e+00> : vector<2x32xf32>
    %1316 = tpu.matmul %1315, %1109, %cst_420 {dimension_numbers = #tpu.dot_dimension_numbers<[1], [0], [0], [1], [0, 0, 1, 1], [], []>} : vector<2x32xf32>, vector<32x32xf32>, vector<2x32xf32> -> vector<2x32xf32>
    %cst_421 = arith.constant dense<0.000000e+00> : vector<2x32xf32>
    %1317 = tpu.matmul %1284, %1112, %cst_421 {dimension_numbers = #tpu.dot_dimension_numbers<[1], [0], [0], [1], [0, 0, 1, 1], [], []>} : vector<2x32xf32>, vector<32x32xf32>, vector<2x32xf32> -> vector<2x32xf32>
    %1318 = arith.addf %1316, %1317 : vector<2x32xf32>
    %1319 = arith.negf %1318 : vector<2x32xf32>
    %1320 = math.exp %1319 : vector<2x32xf32>
    %cst_422 = arith.constant 1.000000e+00 : f32
    %1321 = vector.broadcast %cst_422 : f32 to vector<2x32xf32>
    %1322 = arith.addf %1321, %1320 : vector<2x32xf32>
    %1323 = arith.divf %1321, %1322 : vector<2x32xf32>
    %cst_423 = arith.constant dense<0.000000e+00> : vector<2x32xf32>
    %1324 = tpu.matmul %1315, %1110, %cst_423 {dimension_numbers = #tpu.dot_dimension_numbers<[1], [0], [0], [1], [0, 0, 1, 1], [], []>} : vector<2x32xf32>, vector<32x32xf32>, vector<2x32xf32> -> vector<2x32xf32>
    %cst_424 = arith.constant dense<0.000000e+00> : vector<2x32xf32>
    %1325 = tpu.matmul %1284, %1113, %cst_424 {dimension_numbers = #tpu.dot_dimension_numbers<[1], [0], [0], [1], [0, 0, 1, 1], [], []>} : vector<2x32xf32>, vector<32x32xf32>, vector<2x32xf32> -> vector<2x32xf32>
    %1326 = arith.addf %1324, %1325 : vector<2x32xf32>
    %1327 = arith.negf %1326 : vector<2x32xf32>
    %1328 = math.exp %1327 : vector<2x32xf32>
    %cst_425 = arith.constant 1.000000e+00 : f32
    %1329 = vector.broadcast %cst_425 : f32 to vector<2x32xf32>
    %1330 = arith.addf %1329, %1328 : vector<2x32xf32>
    %1331 = arith.divf %1329, %1330 : vector<2x32xf32>
    %cst_426 = arith.constant dense<0.000000e+00> : vector<2x32xf32>
    %1332 = tpu.matmul %1315, %1111, %cst_426 {dimension_numbers = #tpu.dot_dimension_numbers<[1], [0], [0], [1], [0, 0, 1, 1], [], []>} : vector<2x32xf32>, vector<32x32xf32>, vector<2x32xf32> -> vector<2x32xf32>
    %cst_427 = arith.constant dense<0.000000e+00> : vector<2x32xf32>
    %1333 = tpu.matmul %1284, %1114, %cst_427 {dimension_numbers = #tpu.dot_dimension_numbers<[1], [0], [0], [1], [0, 0, 1, 1], [], []>} : vector<2x32xf32>, vector<32x32xf32>, vector<2x32xf32> -> vector<2x32xf32>
    %1334 = arith.mulf %1323, %1333 : vector<2x32xf32>
    %1335 = arith.addf %1332, %1334 : vector<2x32xf32>
    %1336 = math.tanh %1335 : vector<2x32xf32>
    %cst_428 = arith.constant 1.000000e+00 : f32
    %1337 = vector.broadcast %cst_428 : f32 to vector<2x32xf32>
    %1338 = arith.subf %1337, %1331 : vector<2x32xf32>
    %1339 = arith.mulf %1338, %1336 : vector<2x32xf32>
    %1340 = arith.mulf %1331, %1284 : vector<2x32xf32>
    %1341 = arith.addf %1339, %1340 : vector<2x32xf32>
    %cst_429 = arith.constant dense<0.000000e+00> : vector<2x32xf32>
    %1342 = tpu.matmul %1288, %1115, %cst_429 {dimension_numbers = #tpu.dot_dimension_numbers<[1], [0], [0], [1], [0, 0, 1, 1], [], []>} : vector<2x32xf32>, vector<32x32xf32>, vector<2x32xf32> -> vector<2x32xf32>
    %cst_430 = arith.constant dense<0.000000e+00> : vector<2x32xf32>
    %1343 = tpu.matmul %1341, %1116, %cst_430 {dimension_numbers = #tpu.dot_dimension_numbers<[1], [0], [0], [1], [0, 0, 1, 1], [], []>} : vector<2x32xf32>, vector<32x32xf32>, vector<2x32xf32> -> vector<2x32xf32>
    %1344 = arith.addf %1342, %1343 : vector<2x32xf32>
    %1345 = math.tanh %1344 : vector<2x32xf32>
    %c6 = arith.constant 6 : index
    %c0_431 = arith.constant 0 : index
    %1346 = vector.load %arg6[%c6, %c0_431] : memref<16x32xf32, #tpu.memory_space<vmem>>, vector<2x32xf32>
    tpu.vector_store %arg6[%c6, %c0_431], %1345 {strides = array<i32>} : memref<16x32xf32, #tpu.memory_space<vmem>>, vector<2x32xf32>,
    %1347 = vector.extract_strided_slice %1101 {offsets = [8, 0], sizes = [2, 32], strides = [1, 1]} : vector<16x32xf32> to vector<2x32xf32>
    %cst_432 = arith.constant dense<0.000000e+00> : vector<2x32xf32>
    %1348 = tpu.matmul %1345, %1106, %cst_432 {dimension_numbers = #tpu.dot_dimension_numbers<[1], [0], [0], [1], [0, 0, 1, 1], [], []>} : vector<2x32xf32>, vector<32x32xf32>, vector<2x32xf32> -> vector<2x32xf32>
    %1349 = arith.addf %1347, %1348 : vector<2x32xf32>
    %1350 = arith.negf %1349 : vector<2x32xf32>
    %1351 = math.exp %1350 : vector<2x32xf32>
    %cst_433 = arith.constant 1.000000e+00 : f32
    %1352 = vector.broadcast %cst_433 : f32 to vector<2x32xf32>
    %1353 = arith.addf %1352, %1351 : vector<2x32xf32>
    %1354 = arith.divf %1352, %1353 : vector<2x32xf32>
    %1355 = vector.extract_strided_slice %1103 {offsets = [8, 0], sizes = [2, 32], strides = [1, 1]} : vector<16x32xf32> to vector<2x32xf32>
    %cst_434 = arith.constant dense<0.000000e+00> : vector<2x32xf32>
    %1356 = tpu.matmul %1345, %1107, %cst_434 {dimension_numbers = #tpu.dot_dimension_numbers<[1], [0], [0], [1], [0, 0, 1, 1], [], []>} : vector<2x32xf32>, vector<32x32xf32>, vector<2x32xf32> -> vector<2x32xf32>
    %1357 = arith.addf %1355, %1356 : vector<2x32xf32>
    %1358 = arith.negf %1357 : vector<2x32xf32>
    %1359 = math.exp %1358 : vector<2x32xf32>
    %cst_435 = arith.constant 1.000000e+00 : f32
    %1360 = vector.broadcast %cst_435 : f32 to vector<2x32xf32>
    %1361 = arith.addf %1360, %1359 : vector<2x32xf32>
    %1362 = arith.divf %1360, %1361 : vector<2x32xf32>
    %1363 = vector.extract_strided_slice %1105 {offsets = [8, 0], sizes = [2, 32], strides = [1, 1]} : vector<16x32xf32> to vector<2x32xf32>
    %cst_436 = arith.constant dense<0.000000e+00> : vector<2x32xf32>
    %1364 = tpu.matmul %1345, %1108, %cst_436 {dimension_numbers = #tpu.dot_dimension_numbers<[1], [0], [0], [1], [0, 0, 1, 1], [], []>} : vector<2x32xf32>, vector<32x32xf32>, vector<2x32xf32> -> vector<2x32xf32>
    %1365 = arith.mulf %1354, %1364 : vector<2x32xf32>
    %1366 = arith.addf %1363, %1365 : vector<2x32xf32>
    %1367 = math.tanh %1366 : vector<2x32xf32>
    %cst_437 = arith.constant 1.000000e+00 : f32
    %1368 = vector.broadcast %cst_437 : f32 to vector<2x32xf32>
    %1369 = arith.subf %1368, %1362 : vector<2x32xf32>
    %1370 = arith.mulf %1369, %1367 : vector<2x32xf32>
    %1371 = arith.mulf %1362, %1345 : vector<2x32xf32>
    %1372 = arith.addf %1370, %1371 : vector<2x32xf32>
    %cst_438 = arith.constant dense<0.000000e+00> : vector<2x32xf32>
    %1373 = tpu.matmul %1372, %1109, %cst_438 {dimension_numbers = #tpu.dot_dimension_numbers<[1], [0], [0], [1], [0, 0, 1, 1], [], []>} : vector<2x32xf32>, vector<32x32xf32>, vector<2x32xf32> -> vector<2x32xf32>
    %cst_439 = arith.constant dense<0.000000e+00> : vector<2x32xf32>
    %1374 = tpu.matmul %1341, %1112, %cst_439 {dimension_numbers = #tpu.dot_dimension_numbers<[1], [0], [0], [1], [0, 0, 1, 1], [], []>} : vector<2x32xf32>, vector<32x32xf32>, vector<2x32xf32> -> vector<2x32xf32>
    %1375 = arith.addf %1373, %1374 : vector<2x32xf32>
    %1376 = arith.negf %1375 : vector<2x32xf32>
    %1377 = math.exp %1376 : vector<2x32xf32>
    %cst_440 = arith.constant 1.000000e+00 : f32
    %1378 = vector.broadcast %cst_440 : f32 to vector<2x32xf32>
    %1379 = arith.addf %1378, %1377 : vector<2x32xf32>
    %1380 = arith.divf %1378, %1379 : vector<2x32xf32>
    %cst_441 = arith.constant dense<0.000000e+00> : vector<2x32xf32>
    %1381 = tpu.matmul %1372, %1110, %cst_441 {dimension_numbers = #tpu.dot_dimension_numbers<[1], [0], [0], [1], [0, 0, 1, 1], [], []>} : vector<2x32xf32>, vector<32x32xf32>, vector<2x32xf32> -> vector<2x32xf32>
    %cst_442 = arith.constant dense<0.000000e+00> : vector<2x32xf32>
    %1382 = tpu.matmul %1341, %1113, %cst_442 {dimension_numbers = #tpu.dot_dimension_numbers<[1], [0], [0], [1], [0, 0, 1, 1], [], []>} : vector<2x32xf32>, vector<32x32xf32>, vector<2x32xf32> -> vector<2x32xf32>
    %1383 = arith.addf %1381, %1382 : vector<2x32xf32>
    %1384 = arith.negf %1383 : vector<2x32xf32>
    %1385 = math.exp %1384 : vector<2x32xf32>
    %cst_443 = arith.constant 1.000000e+00 : f32
    %1386 = vector.broadcast %cst_443 : f32 to vector<2x32xf32>
    %1387 = arith.addf %1386, %1385 : vector<2x32xf32>
    %1388 = arith.divf %1386, %1387 : vector<2x32xf32>
    %cst_444 = arith.constant dense<0.000000e+00> : vector<2x32xf32>
    %1389 = tpu.matmul %1372, %1111, %cst_444 {dimension_numbers = #tpu.dot_dimension_numbers<[1], [0], [0], [1], [0, 0, 1, 1], [], []>} : vector<2x32xf32>, vector<32x32xf32>, vector<2x32xf32> -> vector<2x32xf32>
    %cst_445 = arith.constant dense<0.000000e+00> : vector<2x32xf32>
    %1390 = tpu.matmul %1341, %1114, %cst_445 {dimension_numbers = #tpu.dot_dimension_numbers<[1], [0], [0], [1], [0, 0, 1, 1], [], []>} : vector<2x32xf32>, vector<32x32xf32>, vector<2x32xf32> -> vector<2x32xf32>
    %1391 = arith.mulf %1380, %1390 : vector<2x32xf32>
    %1392 = arith.addf %1389, %1391 : vector<2x32xf32>
    %1393 = math.tanh %1392 : vector<2x32xf32>
    %cst_446 = arith.constant 1.000000e+00 : f32
    %1394 = vector.broadcast %cst_446 : f32 to vector<2x32xf32>
    %1395 = arith.subf %1394, %1388 : vector<2x32xf32>
    %1396 = arith.mulf %1395, %1393 : vector<2x32xf32>
    %1397 = arith.mulf %1388, %1341 : vector<2x32xf32>
    %1398 = arith.addf %1396, %1397 : vector<2x32xf32>
    %cst_447 = arith.constant dense<0.000000e+00> : vector<2x32xf32>
    %1399 = tpu.matmul %1345, %1115, %cst_447 {dimension_numbers = #tpu.dot_dimension_numbers<[1], [0], [0], [1], [0, 0, 1, 1], [], []>} : vector<2x32xf32>, vector<32x32xf32>, vector<2x32xf32> -> vector<2x32xf32>
    %cst_448 = arith.constant dense<0.000000e+00> : vector<2x32xf32>
    %1400 = tpu.matmul %1398, %1116, %cst_448 {dimension_numbers = #tpu.dot_dimension_numbers<[1], [0], [0], [1], [0, 0, 1, 1], [], []>} : vector<2x32xf32>, vector<32x32xf32>, vector<2x32xf32> -> vector<2x32xf32>
    %1401 = arith.addf %1399, %1400 : vector<2x32xf32>
    %1402 = math.tanh %1401 : vector<2x32xf32>
    %c8 = arith.constant 8 : index
    %c0_449 = arith.constant 0 : index
    %1403 = vector.load %arg6[%c8, %c0_449] : memref<16x32xf32, #tpu.memory_space<vmem>>, vector<2x32xf32>
    tpu.vector_store %arg6[%c8, %c0_449], %1402 {strides = array<i32>} : memref<16x32xf32, #tpu.memory_space<vmem>>, vector<2x32xf32>,
    %1404 = vector.extract_strided_slice %1101 {offsets = [10, 0], sizes = [2, 32], strides = [1, 1]} : vector<16x32xf32> to vector<2x32xf32>
    %cst_450 = arith.constant dense<0.000000e+00> : vector<2x32xf32>
    %1405 = tpu.matmul %1402, %1106, %cst_450 {dimension_numbers = #tpu.dot_dimension_numbers<[1], [0], [0], [1], [0, 0, 1, 1], [], []>} : vector<2x32xf32>, vector<32x32xf32>, vector<2x32xf32> -> vector<2x32xf32>
    %1406 = arith.addf %1404, %1405 : vector<2x32xf32>
    %1407 = arith.negf %1406 : vector<2x32xf32>
    %1408 = math.exp %1407 : vector<2x32xf32>
    %cst_451 = arith.constant 1.000000e+00 : f32
    %1409 = vector.broadcast %cst_451 : f32 to vector<2x32xf32>
    %1410 = arith.addf %1409, %1408 : vector<2x32xf32>
    %1411 = arith.divf %1409, %1410 : vector<2x32xf32>
    %1412 = vector.extract_strided_slice %1103 {offsets = [10, 0], sizes = [2, 32], strides = [1, 1]} : vector<16x32xf32> to vector<2x32xf32>
    %cst_452 = arith.constant dense<0.000000e+00> : vector<2x32xf32>
    %1413 = tpu.matmul %1402, %1107, %cst_452 {dimension_numbers = #tpu.dot_dimension_numbers<[1], [0], [0], [1], [0, 0, 1, 1], [], []>} : vector<2x32xf32>, vector<32x32xf32>, vector<2x32xf32> -> vector<2x32xf32>
    %1414 = arith.addf %1412, %1413 : vector<2x32xf32>
    %1415 = arith.negf %1414 : vector<2x32xf32>
    %1416 = math.exp %1415 : vector<2x32xf32>
    %cst_453 = arith.constant 1.000000e+00 : f32
    %1417 = vector.broadcast %cst_453 : f32 to vector<2x32xf32>
    %1418 = arith.addf %1417, %1416 : vector<2x32xf32>
    %1419 = arith.divf %1417, %1418 : vector<2x32xf32>
    %1420 = vector.extract_strided_slice %1105 {offsets = [10, 0], sizes = [2, 32], strides = [1, 1]} : vector<16x32xf32> to vector<2x32xf32>
    %cst_454 = arith.constant dense<0.000000e+00> : vector<2x32xf32>
    %1421 = tpu.matmul %1402, %1108, %cst_454 {dimension_numbers = #tpu.dot_dimension_numbers<[1], [0], [0], [1], [0, 0, 1, 1], [], []>} : vector<2x32xf32>, vector<32x32xf32>, vector<2x32xf32> -> vector<2x32xf32>
    %1422 = arith.mulf %1411, %1421 : vector<2x32xf32>
    %1423 = arith.addf %1420, %1422 : vector<2x32xf32>
    %1424 = math.tanh %1423 : vector<2x32xf32>
    %cst_455 = arith.constant 1.000000e+00 : f32
    %1425 = vector.broadcast %cst_455 : f32 to vector<2x32xf32>
    %1426 = arith.subf %1425, %1419 : vector<2x32xf32>
    %1427 = arith.mulf %1426, %1424 : vector<2x32xf32>
    %1428 = arith.mulf %1419, %1402 : vector<2x32xf32>
    %1429 = arith.addf %1427, %1428 : vector<2x32xf32>
    %cst_456 = arith.constant dense<0.000000e+00> : vector<2x32xf32>
    %1430 = tpu.matmul %1429, %1109, %cst_456 {dimension_numbers = #tpu.dot_dimension_numbers<[1], [0], [0], [1], [0, 0, 1, 1], [], []>} : vector<2x32xf32>, vector<32x32xf32>, vector<2x32xf32> -> vector<2x32xf32>
    %cst_457 = arith.constant dense<0.000000e+00> : vector<2x32xf32>
    %1431 = tpu.matmul %1398, %1112, %cst_457 {dimension_numbers = #tpu.dot_dimension_numbers<[1], [0], [0], [1], [0, 0, 1, 1], [], []>} : vector<2x32xf32>, vector<32x32xf32>, vector<2x32xf32> -> vector<2x32xf32>
    %1432 = arith.addf %1430, %1431 : vector<2x32xf32>
    %1433 = arith.negf %1432 : vector<2x32xf32>
    %1434 = math.exp %1433 : vector<2x32xf32>
    %cst_458 = arith.constant 1.000000e+00 : f32
    %1435 = vector.broadcast %cst_458 : f32 to vector<2x32xf32>
    %1436 = arith.addf %1435, %1434 : vector<2x32xf32>
    %1437 = arith.divf %1435, %1436 : vector<2x32xf32>
    %cst_459 = arith.constant dense<0.000000e+00> : vector<2x32xf32>
    %1438 = tpu.matmul %1429, %1110, %cst_459 {dimension_numbers = #tpu.dot_dimension_numbers<[1], [0], [0], [1], [0, 0, 1, 1], [], []>} : vector<2x32xf32>, vector<32x32xf32>, vector<2x32xf32> -> vector<2x32xf32>
    %cst_460 = arith.constant dense<0.000000e+00> : vector<2x32xf32>
    %1439 = tpu.matmul %1398, %1113, %cst_460 {dimension_numbers = #tpu.dot_dimension_numbers<[1], [0], [0], [1], [0, 0, 1, 1], [], []>} : vector<2x32xf32>, vector<32x32xf32>, vector<2x32xf32> -> vector<2x32xf32>
    %1440 = arith.addf %1438, %1439 : vector<2x32xf32>
    %1441 = arith.negf %1440 : vector<2x32xf32>
    %1442 = math.exp %1441 : vector<2x32xf32>
    %cst_461 = arith.constant 1.000000e+00 : f32
    %1443 = vector.broadcast %cst_461 : f32 to vector<2x32xf32>
    %1444 = arith.addf %1443, %1442 : vector<2x32xf32>
    %1445 = arith.divf %1443, %1444 : vector<2x32xf32>
    %cst_462 = arith.constant dense<0.000000e+00> : vector<2x32xf32>
    %1446 = tpu.matmul %1429, %1111, %cst_462 {dimension_numbers = #tpu.dot_dimension_numbers<[1], [0], [0], [1], [0, 0, 1, 1], [], []>} : vector<2x32xf32>, vector<32x32xf32>, vector<2x32xf32> -> vector<2x32xf32>
    %cst_463 = arith.constant dense<0.000000e+00> : vector<2x32xf32>
    %1447 = tpu.matmul %1398, %1114, %cst_463 {dimension_numbers = #tpu.dot_dimension_numbers<[1], [0], [0], [1], [0, 0, 1, 1], [], []>} : vector<2x32xf32>, vector<32x32xf32>, vector<2x32xf32> -> vector<2x32xf32>
    %1448 = arith.mulf %1437, %1447 : vector<2x32xf32>
    %1449 = arith.addf %1446, %1448 : vector<2x32xf32>
    %1450 = math.tanh %1449 : vector<2x32xf32>
    %cst_464 = arith.constant 1.000000e+00 : f32
    %1451 = vector.broadcast %cst_464 : f32 to vector<2x32xf32>
    %1452 = arith.subf %1451, %1445 : vector<2x32xf32>
    %1453 = arith.mulf %1452, %1450 : vector<2x32xf32>
    %1454 = arith.mulf %1445, %1398 : vector<2x32xf32>
    %1455 = arith.addf %1453, %1454 : vector<2x32xf32>
    %cst_465 = arith.constant dense<0.000000e+00> : vector<2x32xf32>
    %1456 = tpu.matmul %1402, %1115, %cst_465 {dimension_numbers = #tpu.dot_dimension_numbers<[1], [0], [0], [1], [0, 0, 1, 1], [], []>} : vector<2x32xf32>, vector<32x32xf32>, vector<2x32xf32> -> vector<2x32xf32>
    %cst_466 = arith.constant dense<0.000000e+00> : vector<2x32xf32>
    %1457 = tpu.matmul %1455, %1116, %cst_466 {dimension_numbers = #tpu.dot_dimension_numbers<[1], [0], [0], [1], [0, 0, 1, 1], [], []>} : vector<2x32xf32>, vector<32x32xf32>, vector<2x32xf32> -> vector<2x32xf32>
    %1458 = arith.addf %1456, %1457 : vector<2x32xf32>
    %1459 = math.tanh %1458 : vector<2x32xf32>
    %c10 = arith.constant 10 : index
    %c0_467 = arith.constant 0 : index
    %1460 = vector.load %arg6[%c10, %c0_467] : memref<16x32xf32, #tpu.memory_space<vmem>>, vector<2x32xf32>
    tpu.vector_store %arg6[%c10, %c0_467], %1459 {strides = array<i32>} : memref<16x32xf32, #tpu.memory_space<vmem>>, vector<2x32xf32>,
    %1461 = vector.extract_strided_slice %1101 {offsets = [12, 0], sizes = [2, 32], strides = [1, 1]} : vector<16x32xf32> to vector<2x32xf32>
    %cst_468 = arith.constant dense<0.000000e+00> : vector<2x32xf32>
    %1462 = tpu.matmul %1459, %1106, %cst_468 {dimension_numbers = #tpu.dot_dimension_numbers<[1], [0], [0], [1], [0, 0, 1, 1], [], []>} : vector<2x32xf32>, vector<32x32xf32>, vector<2x32xf32> -> vector<2x32xf32>
    %1463 = arith.addf %1461, %1462 : vector<2x32xf32>
    %1464 = arith.negf %1463 : vector<2x32xf32>
    %1465 = math.exp %1464 : vector<2x32xf32>
    %cst_469 = arith.constant 1.000000e+00 : f32
    %1466 = vector.broadcast %cst_469 : f32 to vector<2x32xf32>
    %1467 = arith.addf %1466, %1465 : vector<2x32xf32>
    %1468 = arith.divf %1466, %1467 : vector<2x32xf32>
    %1469 = vector.extract_strided_slice %1103 {offsets = [12, 0], sizes = [2, 32], strides = [1, 1]} : vector<16x32xf32> to vector<2x32xf32>
    %cst_470 = arith.constant dense<0.000000e+00> : vector<2x32xf32>
    %1470 = tpu.matmul %1459, %1107, %cst_470 {dimension_numbers = #tpu.dot_dimension_numbers<[1], [0], [0], [1], [0, 0, 1, 1], [], []>} : vector<2x32xf32>, vector<32x32xf32>, vector<2x32xf32> -> vector<2x32xf32>
    %1471 = arith.addf %1469, %1470 : vector<2x32xf32>
    %1472 = arith.negf %1471 : vector<2x32xf32>
    %1473 = math.exp %1472 : vector<2x32xf32>
    %cst_471 = arith.constant 1.000000e+00 : f32
    %1474 = vector.broadcast %cst_471 : f32 to vector<2x32xf32>
    %1475 = arith.addf %1474, %1473 : vector<2x32xf32>
    %1476 = arith.divf %1474, %1475 : vector<2x32xf32>
    %1477 = vector.extract_strided_slice %1105 {offsets = [12, 0], sizes = [2, 32], strides = [1, 1]} : vector<16x32xf32> to vector<2x32xf32>
    %cst_472 = arith.constant dense<0.000000e+00> : vector<2x32xf32>
    %1478 = tpu.matmul %1459, %1108, %cst_472 {dimension_numbers = #tpu.dot_dimension_numbers<[1], [0], [0], [1], [0, 0, 1, 1], [], []>} : vector<2x32xf32>, vector<32x32xf32>, vector<2x32xf32> -> vector<2x32xf32>
    %1479 = arith.mulf %1468, %1478 : vector<2x32xf32>
    %1480 = arith.addf %1477, %1479 : vector<2x32xf32>
    %1481 = math.tanh %1480 : vector<2x32xf32>
    %cst_473 = arith.constant 1.000000e+00 : f32
    %1482 = vector.broadcast %cst_473 : f32 to vector<2x32xf32>
    %1483 = arith.subf %1482, %1476 : vector<2x32xf32>
    %1484 = arith.mulf %1483, %1481 : vector<2x32xf32>
    %1485 = arith.mulf %1476, %1459 : vector<2x32xf32>
    %1486 = arith.addf %1484, %1485 : vector<2x32xf32>
    %cst_474 = arith.constant dense<0.000000e+00> : vector<2x32xf32>
    %1487 = tpu.matmul %1486, %1109, %cst_474 {dimension_numbers = #tpu.dot_dimension_numbers<[1], [0], [0], [1], [0, 0, 1, 1], [], []>} : vector<2x32xf32>, vector<32x32xf32>, vector<2x32xf32> -> vector<2x32xf32>
    %cst_475 = arith.constant dense<0.000000e+00> : vector<2x32xf32>
    %1488 = tpu.matmul %1455, %1112, %cst_475 {dimension_numbers = #tpu.dot_dimension_numbers<[1], [0], [0], [1], [0, 0, 1, 1], [], []>} : vector<2x32xf32>, vector<32x32xf32>, vector<2x32xf32> -> vector<2x32xf32>
    %1489 = arith.addf %1487, %1488 : vector<2x32xf32>
    %1490 = arith.negf %1489 : vector<2x32xf32>
    %1491 = math.exp %1490 : vector<2x32xf32>
    %cst_476 = arith.constant 1.000000e+00 : f32
    %1492 = vector.broadcast %cst_476 : f32 to vector<2x32xf32>
    %1493 = arith.addf %1492, %1491 : vector<2x32xf32>
    %1494 = arith.divf %1492, %1493 : vector<2x32xf32>
    %cst_477 = arith.constant dense<0.000000e+00> : vector<2x32xf32>
    %1495 = tpu.matmul %1486, %1110, %cst_477 {dimension_numbers = #tpu.dot_dimension_numbers<[1], [0], [0], [1], [0, 0, 1, 1], [], []>} : vector<2x32xf32>, vector<32x32xf32>, vector<2x32xf32> -> vector<2x32xf32>
    %cst_478 = arith.constant dense<0.000000e+00> : vector<2x32xf32>
    %1496 = tpu.matmul %1455, %1113, %cst_478 {dimension_numbers = #tpu.dot_dimension_numbers<[1], [0], [0], [1], [0, 0, 1, 1], [], []>} : vector<2x32xf32>, vector<32x32xf32>, vector<2x32xf32> -> vector<2x32xf32>
    %1497 = arith.addf %1495, %1496 : vector<2x32xf32>
    %1498 = arith.negf %1497 : vector<2x32xf32>
    %1499 = math.exp %1498 : vector<2x32xf32>
    %cst_479 = arith.constant 1.000000e+00 : f32
    %1500 = vector.broadcast %cst_479 : f32 to vector<2x32xf32>
    %1501 = arith.addf %1500, %1499 : vector<2x32xf32>
    %1502 = arith.divf %1500, %1501 : vector<2x32xf32>
    %cst_480 = arith.constant dense<0.000000e+00> : vector<2x32xf32>
    %1503 = tpu.matmul %1486, %1111, %cst_480 {dimension_numbers = #tpu.dot_dimension_numbers<[1], [0], [0], [1], [0, 0, 1, 1], [], []>} : vector<2x32xf32>, vector<32x32xf32>, vector<2x32xf32> -> vector<2x32xf32>
    %cst_481 = arith.constant dense<0.000000e+00> : vector<2x32xf32>
    %1504 = tpu.matmul %1455, %1114, %cst_481 {dimension_numbers = #tpu.dot_dimension_numbers<[1], [0], [0], [1], [0, 0, 1, 1], [], []>} : vector<2x32xf32>, vector<32x32xf32>, vector<2x32xf32> -> vector<2x32xf32>
    %1505 = arith.mulf %1494, %1504 : vector<2x32xf32>
    %1506 = arith.addf %1503, %1505 : vector<2x32xf32>
    %1507 = math.tanh %1506 : vector<2x32xf32>
    %cst_482 = arith.constant 1.000000e+00 : f32
    %1508 = vector.broadcast %cst_482 : f32 to vector<2x32xf32>
    %1509 = arith.subf %1508, %1502 : vector<2x32xf32>
    %1510 = arith.mulf %1509, %1507 : vector<2x32xf32>
    %1511 = arith.mulf %1502, %1455 : vector<2x32xf32>
    %1512 = arith.addf %1510, %1511 : vector<2x32xf32>
    %cst_483 = arith.constant dense<0.000000e+00> : vector<2x32xf32>
    %1513 = tpu.matmul %1459, %1115, %cst_483 {dimension_numbers = #tpu.dot_dimension_numbers<[1], [0], [0], [1], [0, 0, 1, 1], [], []>} : vector<2x32xf32>, vector<32x32xf32>, vector<2x32xf32> -> vector<2x32xf32>
    %cst_484 = arith.constant dense<0.000000e+00> : vector<2x32xf32>
    %1514 = tpu.matmul %1512, %1116, %cst_484 {dimension_numbers = #tpu.dot_dimension_numbers<[1], [0], [0], [1], [0, 0, 1, 1], [], []>} : vector<2x32xf32>, vector<32x32xf32>, vector<2x32xf32> -> vector<2x32xf32>
    %1515 = arith.addf %1513, %1514 : vector<2x32xf32>
    %1516 = math.tanh %1515 : vector<2x32xf32>
    %c12 = arith.constant 12 : index
    %c0_485 = arith.constant 0 : index
    %1517 = vector.load %arg6[%c12, %c0_485] : memref<16x32xf32, #tpu.memory_space<vmem>>, vector<2x32xf32>
    tpu.vector_store %arg6[%c12, %c0_485], %1516 {strides = array<i32>} : memref<16x32xf32, #tpu.memory_space<vmem>>, vector<2x32xf32>,
    %c0_486 = arith.constant 0 : index
    %c0_487 = arith.constant 0 : index
    %1518 = vector.load %arg6[%c0_486, %c0_487] : memref<16x32xf32, #tpu.memory_space<vmem>>, vector<16x32xf32>
    %c483 = arith.constant 483 : index
    %c0_488 = arith.constant 0 : index
    %1519 = vector.load %arg3[%c483, %c0_488] : memref<488x32xf32, #tpu.memory_space<vmem>>, vector<1x32xf32>
    %c484 = arith.constant 484 : index
    %c0_489 = arith.constant 0 : index
    %1520 = vector.load %arg3[%c484, %c0_489] : memref<488x32xf32, #tpu.memory_space<vmem>>, vector<1x32xf32>
    %cst_490 = arith.constant dense<0.000000e+00> : vector<16xf32>
    %1521 = vector.multi_reduction <add>, %1518, %cst_490 [1] : vector<16x32xf32> to vector<16xf32>
    %1522 = vector.shape_cast %1521 : vector<16xf32> to vector<16x1xf32>
    %cst_491 = arith.constant 3.200000e+01 : f32
    %1523 = vector.broadcast %cst_491 : f32 to vector<16x1xf32>
    %1524 = arith.divf %1522, %1523 : vector<16x1xf32>
    %1525 = vector.broadcast %1524 : vector<16x1xf32> to vector<16x32xf32>
    %1526 = arith.subf %1518, %1525 : vector<16x32xf32>
    %1527 = arith.mulf %1526, %1526 : vector<16x32xf32>
    %cst_492 = arith.constant dense<0.000000e+00> : vector<16xf32>
    %1528 = vector.multi_reduction <add>, %1527, %cst_492 [1] : vector<16x32xf32> to vector<16xf32>
    %1529 = vector.shape_cast %1528 : vector<16xf32> to vector<16x1xf32>
    %cst_493 = arith.constant 0.0322580636 : f32
    %1530 = vector.broadcast %cst_493 : f32 to vector<16x1xf32>
    %1531 = arith.mulf %1529, %1530 : vector<16x1xf32>
    %1532 = math.sqrt %1531 : vector<16x1xf32>
    %cst_494 = arith.constant 9.99999997E-7 : f32
    %1533 = vector.broadcast %cst_494 : f32 to vector<16x1xf32>
    %1534 = arith.addf %1532, %1533 : vector<16x1xf32>
    %1535 = tpu.reciprocal %1534 {approx = true} : vector<16x1xf32> -> vector<16x1xf32>
    %1536 = vector.broadcast %1519 : vector<1x32xf32> to vector<16x32xf32>
    %1537 = arith.mulf %1536, %1526 : vector<16x32xf32>
    %1538 = vector.broadcast %1535 : vector<16x1xf32> to vector<16x32xf32>
    %1539 = arith.mulf %1537, %1538 : vector<16x32xf32>
    %1540 = vector.broadcast %1520 : vector<1x32xf32> to vector<16x32xf32>
    %1541 = arith.addf %1539, %1540 : vector<16x32xf32>
    %c0_495 = arith.constant 0 : index
    %c0_496 = arith.constant 0 : index
    %1542 = vector.load %arg4[%c0_495, %c0_496] : memref<40x128xf32, #tpu.memory_space<vmem>>, vector<32x128xf32>
    %cst_497 = arith.constant dense<0.000000e+00> : vector<16x128xf32>
    %1543 = tpu.matmul %1541, %1542, %cst_497 {dimension_numbers = #tpu.dot_dimension_numbers<[1], [0], [0], [1], [0, 0, 1, 1], [], []>} : vector<16x32xf32>, vector<32x128xf32>, vector<16x128xf32> -> vector<16x128xf32>
    %c32_498 = arith.constant 32 : index
    %c0_499 = arith.constant 0 : index
    %1544 = vector.load %arg4[%c32_498, %c0_499] : memref<40x128xf32, #tpu.memory_space<vmem>>, vector<1x128xf32>
    %1545 = vector.broadcast %1544 : vector<1x128xf32> to vector<16x128xf32>
    %1546 = arith.addf %1543, %1545 : vector<16x128xf32>
    %c40 = arith.constant 40 : index
    %c0_500 = arith.constant 0 : index
    %1547 = vector.load %arg0[%c40, %c0_500] : memref<56x1xi32, #tpu.memory_space<vmem>>, vector<16x1xi32>
    %cst_501 = arith.constant dense<0xFF800000> : vector<16xf32>
    %1548 = vector.multi_reduction <maximumf>, %1546, %cst_501 [1] : vector<16x128xf32> to vector<16xf32>
    %1549 = vector.shape_cast %1548 : vector<16xf32> to vector<16x1xf32>
    %1550 = vector.broadcast %1549 : vector<16x1xf32> to vector<16x128xf32>
    %1551 = arith.subf %1546, %1550 : vector<16x128xf32>
    %1552 = math.exp %1551 : vector<16x128xf32>
    %cst_502 = arith.constant dense<0.000000e+00> : vector<16xf32>
    %1553 = vector.multi_reduction <add>, %1552, %cst_502 [1] : vector<16x128xf32> to vector<16xf32>
    %1554 = vector.shape_cast %1553 : vector<16xf32> to vector<16x1xf32>
    %1555 = math.log %1554 : vector<16x1xf32>
    %1556 = arith.addf %1555, %1549 : vector<16x1xf32>
    %1557 = tpu.iota {dimensions = array<i32: 1>} : vector<16x128xi32>
    %1558 = vector.broadcast %1547 : vector<16x1xi32> to vector<16x128xi32>
    %1559 = arith.cmpi eq, %1558, %1557 : vector<16x128xi32>
    %1560 = arith.extui %1559 : vector<16x128xi1> to vector<16x128xi32>
    %1561 = arith.sitofp %1560 : vector<16x128xi32> to vector<16x128xf32>
    %1562 = arith.mulf %1546, %1561 : vector<16x128xf32>
    %cst_503 = arith.constant dense<0.000000e+00> : vector<16xf32>
    %1563 = vector.multi_reduction <add>, %1562, %cst_503 [1] : vector<16x128xf32> to vector<16xf32>
    %1564 = vector.shape_cast %1563 : vector<16xf32> to vector<16x1xf32>
    %c0_i32_504 = arith.constant 0 : i32
    %1565 = vector.broadcast %c0_i32_504 : i32 to vector<16x1xi32>
    %1566 = arith.cmpi ne, %1547, %1565 : vector<16x1xi32>
    %1567 = arith.extui %1566 : vector<16x1xi1> to vector<16x1xi32>
    %1568 = arith.sitofp %1567 : vector<16x1xi32> to vector<16x1xf32>
    %1569 = arith.subf %1556, %1564 : vector<16x1xf32>
    %1570 = arith.mulf %1569, %1568 : vector<16x1xf32>
    %cst_505 = arith.constant 0.0714285746 : f32
    %1571 = vector.broadcast %cst_505 : f32 to vector<1x16xf32>
    %cst_506 = arith.constant dense<0.000000e+00> : vector<1x1xf32>
    %1572 = tpu.matmul %1571, %1570, %cst_506 {dimension_numbers = #tpu.dot_dimension_numbers<[1], [0], [0], [1], [0, 0, 1, 1], [], []>} : vector<1x16xf32>, vector<16x1xf32>, vector<1x1xf32> -> vector<1x1xf32>
    %c0_507 = arith.constant 0 : index
    %c0_508 = arith.constant 0 : index
    %1573 = vector.load %arg5[%c0_507, %c0_508] : memref<1x1xf32, #tpu.memory_space<vmem>>, vector<1x1xf32>
    tpu.vector_store %arg5[%c0_507, %c0_508], %1572 {strides = array<i32>} : memref<1x1xf32, #tpu.memory_space<vmem>>, vector<1x1xf32>,
    return
  }
}

</mosaic_0001>

<llo_original>
// kernel: model_forward.1
$region0: #{model_forward.1}
  #allocation0 [shape = 'u32[]', space=smem, size = 0x4, offset = 0x4, fixed_abs, tag = 'smem constant byte address 0x4 - core index']
  #allocation1 [shape = 'u32[72,128]{1,0:T(1,128)}', space=vmem, size = 0x9000, scoped, tag = 'internal scratch']
  #allocation2 [shape = 'f32[16,32]{1,0:T(8,128)}', space=vmem, size = 0x2000, scoped, tag = 'scratch operand']
  %s0 = inlined_call_operand.vmem [shape: s32[56,1], index: 0, kind: input, shape index: {}]
  %s1 = inlined_call_operand.vmem [shape: f32[128,32], index: 1, kind: input, shape index: {}]
  %s2 = inlined_call_operand.vmem [shape: f32[832,32], index: 2, kind: input, shape index: {}]
  %s3 = inlined_call_operand.vmem [shape: f32[488,32], index: 3, kind: input, shape index: {}]
  %s4 = inlined_call_operand.vmem [shape: f32[40,128], index: 4, kind: input, shape index: {}]
  %s5 = inlined_call_operand.hbm [shape: f32[1,1], index: 5, kind: output, shape index: {}]
  %s6 = sld [smem:[#allocation0]]
  $region30: #{model_forward.1} parent=0
    _
  %s8 = ssub.s32 1, %s6
  %s9 = scalar_select 0, %s8, %s6
  $region1: #{model_forward.1} parent=0
    #allocation3 [shape = 'u8[512]{0}', space=vmem, size = 0x400, scoped, tag = 'output window, operand 0, single buffered']
    #allocation4 [shape = 's32[1]{0}', space=sflag, size = 0x4, scoped, tag = 'scoped memory for model_forward.1']
    %10 = vsyncpa [#allocation4], 0
    // Predicated region
    $region2: #{model_forward.1} parent=1 // pred_check
      _
    $region3: #{model_forward.1} parent=1 // pred_check_branch
      %12 = sbr.rel (0) target = $region5
    $region4: #{model_forward.1} parent=1 // pred_region
      _
    $region5: #{model_forward.1} parent=1 // pred_fallthru
      _
    // Predicated region
    $region6: #{model_forward.1} parent=1 // pred_check
      _
    $region7: #{model_forward.1} parent=1 // pred_check_branch
      %14 = sbr.rel (0) target = $region9
    $region8: #{model_forward.1} parent=1 // pred_region
      _
    $region9: #{model_forward.1} parent=1 // pred_fallthru
      _
    // Predicated region
    $region10: #{model_forward.1} parent=1 // pred_check
      _
    $region11: #{model_forward.1} parent=1 // pred_check_branch
      %16 = sbr.rel (0) target = $region13
    $region12: #{model_forward.1} parent=1 // pred_region
      _
    $region13: #{model_forward.1} parent=1 // pred_fallthru
      _
    // Predicated region
    $region14: #{model_forward.1} parent=1 // pred_check
      _
    $region15: #{model_forward.1} parent=1 // pred_check_branch
      %18 = sbr.rel (0) target = $region17
    $region16: #{model_forward.1} parent=1 // pred_region
      _
    $region17: #{model_forward.1} parent=1 // pred_fallthru
      _
    // Predicated region
    $region18: #{model_forward.1} parent=1 // pred_check
      _
    $region19: #{model_forward.1} parent=1 // pred_check_branch
      %20 = sbr.rel (0) target = $region21
    $region20: #{model_forward.1} parent=1 // pred_region
      _
    $region21: #{model_forward.1} parent=1 // pred_fallthru
      _
    %v21 = vld [vmem:[%s0] sm:$0xff]
    %v22 = vld [vmem:[%s0 + $0x8] sm:$0xff]
    %v23 = vld [vmem:[%s0 + $0x10] sm:$0xff]
    %v24 = vld [vmem:[%s0 + $0x18] sm:$0xff]
    %v25 = vld [vmem:[%s0 + $0x20] sm:$0xff]
    %v26 = vld [vmem:[%s0 + $0x28] sm:$0xff]
    %v27 = vld [vmem:[%s0 + $0x30] sm:$0xff]
    %v28 = vlaneseq
    %v29 = vand.u32 %v28, 127
    %30 = vset.pattern.permute.xlu0 0
    %31 = vperm.xlu0 %30, %v21
    %v32 = vpop.permute.xlu0 %31
    %33 = vset.pattern.permute.xlu0 0
    %34 = vperm.xlu0 %33, %v22
    %v35 = vpop.permute.xlu0 %34
    %36 = vset.pattern.permute.xlu0 0
    %37 = vperm.xlu0 %36, %v23
    %v38 = vpop.permute.xlu0 %37
    %39 = vset.pattern.permute.xlu0 0
    %40 = vperm.xlu0 %39, %v24
    %v41 = vpop.permute.xlu0 %40
    %42 = vset.pattern.permute.xlu0 0
    %43 = vperm.xlu0 %42, %v25
    %v44 = vpop.permute.xlu0 %43
    %45 = vset.pattern.permute.xlu0 0
    %46 = vperm.xlu0 %45, %v26
    %v47 = vpop.permute.xlu0 %46
    %48 = vset.pattern.permute.xlu0 0
    %49 = vperm.xlu0 %48, %v27
    %v50 = vpop.permute.xlu0 %49
    %vm51 = vcmp.eq.s32.totalorder %v32, %v29
    %vm52 = vcmp.eq.s32.totalorder %v35, %v29
    %vm53 = vcmp.eq.s32.totalorder %v38, %v29
    %vm54 = vcmp.eq.s32.totalorder %v41, %v29
    %vm55 = vcmp.eq.s32.totalorder %v44, %v29
    %vm56 = vcmp.eq.s32.totalorder %v47, %v29
    %vm57 = vcmp.eq.s32.totalorder %v50, %v29
    %v58 = vsel %vm51, 1, 0
    %v59 = vsel %vm52, 1, 0
    %v60 = vsel %vm53, 1, 0
    %v61 = vsel %vm54, 1, 0
    %v62 = vsel %vm55, 1, 0
    %v63 = vsel %vm56, 1, 0
    %v64 = vsel %vm57, 1, 0
    %v65 = vcvt.s32.f32 %v58
    %v66 = vcvt.s32.f32 %v59
    %v67 = vcvt.s32.f32 %v60
    %v68 = vcvt.s32.f32 %v61
    %v69 = vcvt.s32.f32 %v62
    %v70 = vcvt.s32.f32 %v63
    %v71 = vcvt.s32.f32 %v64
    %v72 = vld [vmem:[%s1] sm:$0xff]
    %v73 = vld [vmem:[%s1 + $0x8] sm:$0xff]
    %v74 = vld [vmem:[%s1 + $0x10] sm:$0xff]
    %v75 = vld [vmem:[%s1 + $0x18] sm:$0xff]
    %v76 = vld [vmem:[%s1 + $0x20] sm:$0xff]
    %v77 = vld [vmem:[%s1 + $0x28] sm:$0xff]
    %v78 = vld [vmem:[%s1 + $0x30] sm:$0xff]
    %v79 = vld [vmem:[%s1 + $0x38] sm:$0xff]
    %v80 = vld [vmem:[%s1 + $0x40] sm:$0xff]
    %v81 = vld [vmem:[%s1 + $0x48] sm:$0xff]
    %v82 = vld [vmem:[%s1 + $0x50] sm:$0xff]
    %v83 = vld [vmem:[%s1 + $0x58] sm:$0xff]
    %v84 = vld [vmem:[%s1 + $0x60] sm:$0xff]
    %v85 = vld [vmem:[%s1 + $0x68] sm:$0xff]
    %v86 = vld [vmem:[%s1 + $0x70] sm:$0xff]
    %v87 = vld [vmem:[%s1 + $0x78] sm:$0xff]
    %88 = vmatpush.msra.mxu0 %v87
    %89 = vmatpush.msra.mxu0 %v86
    %90 = vmatpush.msra.mxu0 %v85
    %91 = vmatpush.msra.mxu0 %v84
    %92 = vmatpush.msra.mxu0 %v83
    %93 = vmatpush.msra.mxu0 %v82
    %94 = vmatpush.msra.mxu0 %v81
    %95 = vmatpush.msra.mxu0 %v80
    %96 = vmatpush.msra.mxu0 %v79
    %97 = vmatpush.msra.mxu0 %v78
    %98 = vmatpush.msra.mxu0 %v77
    %99 = vmatpush.msra.mxu0 %v76
    %100 = vmatpush.msra.mxu0 %v75
    %101 = vmatpush.msra.mxu0 %v74
    %102 = vmatpush.msra.mxu0 %v73
    %103 = vmatpush.msra.mxu0 %v72
    %104 = vmatmul.f32.gmra.mxu0 %v65
    %v105 = vpop.f32.mrf.mxu0
    %v106 = vadd.f32 0.0, %v105
    %107 = vmatmul.f32.gmra.mxu0 %v66
    %v108 = vpop.f32.mrf.mxu0
    %v109 = vadd.f32 0.0, %v108
    %110 = vmatmul.f32.gmra.mxu0 %v67
    %v111 = vpop.f32.mrf.mxu0
    %v112 = vadd.f32 0.0, %v111
    %113 = vmatmul.f32.gmra.mxu0 %v68
    %v114 = vpop.f32.mrf.mxu0
    %v115 = vadd.f32 0.0, %v114
    %116 = vmatmul.f32.gmra.mxu0 %v69
    %v117 = vpop.f32.mrf.mxu0
    %v118 = vadd.f32 0.0, %v117
    %119 = vmatmul.f32.gmra.mxu0 %v70
    %v120 = vpop.f32.mrf.mxu0
    %121 = vmatmul.f32.gmra.mxu0 %v71
    %v122 = vpop.f32.mrf.mxu0
    %123 = vdwg.mxu0
    %v124 = vld [vmem:[%s3] sm:$0xff]
    %v125 = vld [vmem:[%s3 + $0x8] sm:$0xff]
    %v126 = vld [vmem:[%s3 + $0x10] sm:$0xff]
    %v127 = vld [vmem:[%s3 + $0x18] sm:$0xff]
    %v128 = vld [vmem:[%s3 + $0x1e0] sm:$0x1]
    %v129 = vperm.slane %v128, 0
    %vm130 = vcmask 261120
    %v132 = vsel %vm130, %v106, 0
    %v135 = vsel %vm130, %v109, 0
    %v138 = vsel %vm130, %v112, 0
    %140 = vmatpush.msra.mxu0 0.0
    %141 = vmatpush.msra.mxu0 0.0
    %142 = vmatpush.msra.mxu0 0.0
    %143 = vmatpush.msra.mxu0 0.0
    %144 = vmatpush.msra.mxu0 0.0
    %145 = vmatpush.msra.mxu0 0.0
    %146 = vmatpush.msra.mxu0 0.0
    %147 = vmatpush.msra.mxu0 0.0
    %148 = vmatpush.msra.mxu0 0.0
    %149 = vmatpush.msra.mxu0 0.0
    %150 = vmatpush.msra.mxu0 0.0
    %151 = vmatpush.msra.mxu0 0.0
    %152 = vmatpush.msra.mxu0 %v127
    %153 = vmatpush.msra.mxu0 %v126
    %154 = vmatpush.msra.mxu0 %v125
    %155 = vmatpush.msra.mxu0 %v124
    %156 = vmatmul.f32.gmra.mxu0 %v132
    %v157 = vpop.f32.mrf.mxu0
    %v158 = vadd.f32 %v129, %v157
    %159 = vmatmul.f32.gmra.mxu0 %v135
    %v160 = vpop.f32.mrf.mxu0
    %v161 = vadd.f32 %v129, %v160
    %162 = vmatmul.f32.gmra.mxu0 %v138
    %v163 = vpop.f32.mrf.mxu0
    %v164 = vadd.f32 %v129, %v163
    %165 = vdwg.mxu0
    %v166 = vxor.u32 %v158, 2147483648
    %v167 = vxor.u32 %v161, 2147483648
    %v168 = vxor.u32 %v164, 2147483648
    %v169 = vmul.f32 %v166, 1.442695
    %v170 = vpow.pop %v169
    %v171 = vmul.f32 %v167, 1.442695
    %v172 = vpow.pop %v171
    %v173 = vmul.f32 %v168, 1.442695
    %v174 = vpow.pop %v173
    %v175 = vadd.f32 %v170, 1.0
    %v176 = vadd.f32 %v172, 1.0
    %v177 = vadd.f32 %v174, 1.0
    %v178 = vrcp.pop %v175
    %v179 = vmul.f32 %v175, %v178
    %v180 = vsub.f32 1.0, %v179
    %v181 = vmul.f32 %v178, %v180
    %v182 = vadd.f32 %v178, %v181
    %vm183 = vweird.f32 %v175
    %vm184 = vweird.f32 %v178
    %vm185 = vmor %vm183, %vm184
    %v186 = vsel %vm185, %v178, %v182
    %v187 = vand.u32 2147483647, %v175
    %vm188 = vcmp.eq.f32.partialorder %v187, 8.507059e+37
    %v189 = vand.u32 %v175, 2147483648
    %v190 = vor.u32 1.1754944e-38, %v189
    %v191 = vsel %vm188, %v190, %v186
    %v192 = vmul.f32 1.0, %v191
    %v193 = vrcp.pop %v176
    %v194 = vmul.f32 %v176, %v193
    %v195 = vsub.f32 1.0, %v194
    %v196 = vmul.f32 %v193, %v195
    %v197 = vadd.f32 %v193, %v196
    %vm198 = vweird.f32 %v176
    %vm199 = vweird.f32 %v193
    %vm200 = vmor %vm198, %vm199
    %v201 = vsel %vm200, %v193, %v197
    %v202 = vand.u32 2147483647, %v176
    %vm203 = vcmp.eq.f32.partialorder %v202, 8.507059e+37
    %v204 = vand.u32 %v176, 2147483648
    %v205 = vor.u32 1.1754944e-38, %v204
    %v206 = vsel %vm203, %v205, %v201
    %v207 = vmul.f32 1.0, %v206
    %v208 = vrcp.pop %v177
    %v209 = vmul.f32 %v177, %v208
    %v210 = vsub.f32 1.0, %v209
    %v211 = vmul.f32 %v208, %v210
    %v212 = vadd.f32 %v208, %v211
    %vm213 = vweird.f32 %v177
    %vm214 = vweird.f32 %v208
    %vm215 = vmor %vm213, %vm214
    %v216 = vsel %vm215, %v208, %v212
    %v217 = vand.u32 2147483647, %v177
    %vm218 = vcmp.eq.f32.partialorder %v217, 8.507059e+37
    %v219 = vand.u32 %v177, 2147483648
    %v220 = vor.u32 1.1754944e-38, %v219
    %v221 = vsel %vm218, %v220, %v216
    %v222 = vmul.f32 1.0, %v221
    %v223 = vld [vmem:[%s3 + $0x1e1] sm:$0x1]
    %v224 = vld [vmem:[%s3 + $0x1e2] sm:$0x1]
    %v225 = vsel %vm130, %v192, 0.0
    %226 = vadd.xlane.f32.xlu0 %v225
    %v227 = vpop.xlane.xlu0 %226
    %v228 = vsel %vm130, %v207, 0.0
    %229 = vadd.xlane.f32.xlu0 %v228
    %v230 = vpop.xlane.xlu0 %229
    %v231 = vsel %vm130, %v222, 0.0
    %232 = vadd.xlane.f32.xlu0 %v231
    %v233 = vpop.xlane.xlu0 %232
    %v234 = vrcp.pop 32.0
    %v235 = vmul.f32 32.0, %v234
    %v236 = vsub.f32 1.0, %v235
    %v237 = vmul.f32 %v234, %v236
    %v238 = vadd.f32 %v234, %v237
    %vm239 = vweird.f32 %v234
    %v240 = vsel %vm239, %v234, %v238
    %v241 = vmul.f32 %v227, %v240
    %v242 = vmul.f32 %v230, %v240
    %v243 = vmul.f32 %v233, %v240
    %v244 = vsub.f32 %v192, %v241
    %v245 = vsub.f32 %v207, %v242
    %v246 = vsub.f32 %v222, %v243
    %v247 = vmul.f32 %v244, %v244
    %v248 = vmul.f32 %v245, %v245
    %v249 = vmul.f32 %v246, %v246
    %v250 = vsel %vm130, %v247, 0.0
    %251 = vadd.xlane.f32.xlu0 %v250
    %v252 = vpop.xlane.xlu0 %251
    %v253 = vsel %vm130, %v248, 0.0
    %254 = vadd.xlane.f32.xlu0 %v253
    %v255 = vpop.xlane.xlu0 %254
    %v256 = vsel %vm130, %v249, 0.0
    %257 = vadd.xlane.f32.xlu0 %v256
    %v258 = vpop.xlane.xlu0 %257
    %v259 = vmul.f32 %v252, 0.032258064
    %v260 = vmul.f32 %v255, 0.032258064
    %v261 = vmul.f32 %v258, 0.032258064
    %v262 = vrsqrt.pop %v259
    %v263 = vmul.f32 %v262, %v259
    %v264 = vmul.f32 %v263, %v262
    %v265 = vmul.f32 0.5, %v264
    %v266 = vsub.f32 1.5, %v265
    %v267 = vmul.f32 %v262, %v266
    %v268 = vmul.f32 %v259, %v267
    %vm269 = vcmp.eq.f32.partialorder %v259, inf
    %v270 = vsel %vm269, %v259, %v268
    %vm271 = vcmp.eq.f32.partialorder %v259, 0.0
    %v272 = vand.u32 %v259, 2147483648
    %v273 = vsel %vm271, %v272, %v270
    %v274 = vrsqrt.pop %v260
    %v275 = vmul.f32 %v274, %v260
    %v276 = vmul.f32 %v275, %v274
    %v277 = vmul.f32 0.5, %v276
    %v278 = vsub.f32 1.5, %v277
    %v279 = vmul.f32 %v274, %v278
    %v280 = vmul.f32 %v260, %v279
    %vm281 = vcmp.eq.f32.partialorder %v260, inf
    %v282 = vsel %vm281, %v260, %v280
    %vm283 = vcmp.eq.f32.partialorder %v260, 0.0
    %v284 = vand.u32 %v260, 2147483648
    %v285 = vsel %vm283, %v284, %v282
    %v286 = vrsqrt.pop %v261
    %v287 = vmul.f32 %v286, %v261
    %v288 = vmul.f32 %v287, %v286
    %v289 = vmul.f32 0.5, %v288
    %v290 = vsub.f32 1.5, %v289
    %v291 = vmul.f32 %v286, %v290
    %v292 = vmul.f32 %v261, %v291
    %vm293 = vcmp.eq.f32.partialorder %v261, inf
    %v294 = vsel %vm293, %v261, %v292
    %vm295 = vcmp.eq.f32.partialorder %v261, 0.0
    %v296 = vand.u32 %v261, 2147483648
    %v297 = vsel %vm295, %v296, %v294
    %v298 = vadd.f32 %v273, 1e-06
    %v299 = vadd.f32 %v285, 1e-06
    %v300 = vadd.f32 %v297, 1e-06
    %v301 = vrcp.pop %v298
    %v302 = vrcp.pop %v299
    %v303 = vrcp.pop %v300
    %v304 = vperm.slane %v223, 0
    %v305 = vmul.f32 %v304, %v244
    %v306 = vmul.f32 %v304, %v245
    %v307 = vmul.f32 %v304, %v246
    %v308 = vmul.f32 %v305, %v301
    %v309 = vmul.f32 %v306, %v302
    %v310 = vmul.f32 %v307, %v303
    %v311 = vperm.slane %v224, 0
    %v312 = vadd.f32 %v308, %v311
    %v313 = vadd.f32 %v309, %v311
    %v314 = vadd.f32 %v310, %v311
    %vm315 = vcmp.ge.s32.totalorder %v29, 0
    %vm316 = vcmp.lt.s32.totalorder %v29, 4
    %vm317 = vmand %vm315, %vm316
    %v318 = vsel %vm317, 1, 0
    %v319 = vcvt.s32.f32 %v318
    %vm320 = vcmp.ge.s32.totalorder %v29, 4
    %vm321 = vcmp.lt.s32.totalorder %v29, 8
    %vm322 = vmand %vm320, %vm321
    %v323 = vsel %vm322, 1, 0
    %v324 = vcvt.s32.f32 %v323
    %vm325 = vcmp.ge.s32.totalorder %v29, 8
    %vm326 = vcmp.lt.s32.totalorder %v29, 12
    %vm327 = vmand %vm325, %vm326
    %v328 = vsel %vm327, 1, 0
    %v329 = vcvt.s32.f32 %v328
    %vm330 = vcmp.ge.s32.totalorder %v29, 12
    %vm331 = vcmp.lt.s32.totalorder %v29, 16
    %vm332 = vmand %vm330, %vm331
    %v333 = vsel %vm332, 1, 0
    %v334 = vcvt.s32.f32 %v333
    %vm335 = vcmp.ge.s32.totalorder %v29, 16
    %vm336 = vcmp.lt.s32.totalorder %v29, 20
    %vm337 = vmand %vm335, %vm336
    %v338 = vsel %vm337, 1, 0
    %v339 = vcvt.s32.f32 %v338
    %vm340 = vcmp.ge.s32.totalorder %v29, 20
    %vm341 = vcmp.lt.s32.totalorder %v29, 24
    %vm342 = vmand %vm340, %vm341
    %v343 = vsel %vm342, 1, 0
    %v344 = vcvt.s32.f32 %v343
    %vm345 = vcmp.ge.s32.totalorder %v29, 24
    %vm346 = vcmp.lt.s32.totalorder %v29, 28
    %vm347 = vmand %vm345, %vm346
    %v348 = vsel %vm347, 1, 0
    %v349 = vcvt.s32.f32 %v348
    %vm350 = vcmp.ge.s32.totalorder %v29, 28
    %vm351 = vcmp.lt.s32.totalorder %v29, 32
    %vm352 = vmand %vm350, %vm351
    %v353 = vsel %vm352, 1, 0
    %v354 = vcvt.s32.f32 %v353
    %v355 = vlaneseq
    %v356 = vshrl.u32 %v355, 7
    %v357 = vadd.s32 %v356, 8
    %v358 = vadd.s32 %v356, 16
    %vm359 = vcmp.ge.s32.totalorder %v356, 0
    %vm360 = vcmp.ge.s32.totalorder %v357, 0
    %vm361 = vcmp.ge.s32.totalorder %v358, 0
    %vm362 = vcmp.lt.s32.totalorder %v356, 10
    %vm363 = vcmp.lt.s32.totalorder %v357, 10
    %vm364 = vcmp.lt.s32.totalorder %v358, 10
    %vm365 = vmand %vm359, %vm362
    %vm366 = vmand %vm360, %vm363
    %vm367 = vmand %vm361, %vm364
    %vm368 = vmand %vm365, %vm315
    %vm369 = vmand %vm366, %vm315
    %vm370 = vmand %vm367, %vm315
    %vm371 = vcmp.lt.s32.totalorder %v29, 10
    %vm372 = vmand %vm368, %vm371
    %vm373 = vmand %vm369, %vm371
    %vm374 = vmand %vm370, %vm371
    %v375 = vsel %vm372, 0.0, -1e+09
    %v376 = vsel %vm373, 0.0, -1e+09
    %v377 = vsel %vm374, 0.0, -1e+09
    %vm378 = vcmp.ge.s32.totalorder %v356, 10
    %vm379 = vcmp.ge.s32.totalorder %v357, 10
    %vm380 = vcmp.ge.s32.totalorder %v358, 10
    %vm381 = vcmp.lt.s32.totalorder %v356, 20
    %vm382 = vcmp.lt.s32.totalorder %v357, 20
    %vm383 = vcmp.lt.s32.totalorder %v358, 20
    %vm384 = vmand %vm378, %vm381
    %vm385 = vmand %vm379, %vm382
    %vm386 = vmand %vm380, %vm383
    %vm387 = vcmp.ge.s32.totalorder %v29, 10
    %vm388 = vmand %vm384, %vm387
    %vm389 = vmand %vm385, %vm387
    %vm390 = vmand %vm386, %vm387
    %vm391 = vmand %vm388, %vm336
    %vm392 = vmand %vm389, %vm336
    %vm393 = vmand %vm390, %vm336
    %v394 = vsel %vm391, 0.0, %v375
    %v395 = vsel %vm392, 0.0, %v376
    %v396 = vsel %vm393, 0.0, %v377
    %v397 = vld [vmem:[%s2 + $0xc0] sm:$0x1]
    %v398 = vld [vmem:[%s2 + $0xc1] sm:$0x1]
    %v399 = vsel %vm130, %v312, 0.0
    %400 = vadd.xlane.f32.xlu0 %v399
    %v401 = vpop.xlane.xlu0 %400
    %v402 = vsel %vm130, %v313, 0.0
    %403 = vadd.xlane.f32.xlu0 %v402
    %v404 = vpop.xlane.xlu0 %403
    %v405 = vsel %vm130, %v314, 0.0
    %406 = vadd.xlane.f32.xlu0 %v405
    %v407 = vpop.xlane.xlu0 %406
    %v408 = vmul.f32 %v401, %v240
    %v409 = vmul.f32 %v404, %v240
    %v410 = vmul.f32 %v407, %v240
    %v411 = vsub.f32 %v312, %v408
    %v412 = vsub.f32 %v313, %v409
    %v413 = vsub.f32 %v314, %v410
    %v414 = vmul.f32 %v411, %v411
    %v415 = vmul.f32 %v412, %v412
    %v416 = vmul.f32 %v413, %v413
    %v417 = vsel %vm130, %v414, 0.0
    %418 = vadd.xlane.f32.xlu0 %v417
    %v419 = vpop.xlane.xlu0 %418
    %v420 = vsel %vm130, %v415, 0.0
    %421 = vadd.xlane.f32.xlu0 %v420
    %v422 = vpop.xlane.xlu0 %421
    %v423 = vsel %vm130, %v416, 0.0
    %424 = vadd.xlane.f32.xlu0 %v423
    %v425 = vpop.xlane.xlu0 %424
    %v426 = vmul.f32 %v419, 0.032258064
    %v427 = vmul.f32 %v422, 0.032258064
    %v428 = vmul.f32 %v425, 0.032258064
    %v429 = vrsqrt.pop %v426
    %v430 = vmul.f32 %v429, %v426
    %v431 = vmul.f32 %v430, %v429
    %v432 = vmul.f32 0.5, %v431
    %v433 = vsub.f32 1.5, %v432
    %v434 = vmul.f32 %v429, %v433
    %v435 = vmul.f32 %v426, %v434
    %vm436 = vcmp.eq.f32.partialorder %v426, inf
    %v437 = vsel %vm436, %v426, %v435
    %vm438 = vcmp.eq.f32.partialorder %v426, 0.0
    %v439 = vand.u32 %v426, 2147483648
    %v440 = vsel %vm438, %v439, %v437
    %v441 = vrsqrt.pop %v427
    %v442 = vmul.f32 %v441, %v427
    %v443 = vmul.f32 %v442, %v441
    %v444 = vmul.f32 0.5, %v443
    %v445 = vsub.f32 1.5, %v444
    %v446 = vmul.f32 %v441, %v445
    %v447 = vmul.f32 %v427, %v446
    %vm448 = vcmp.eq.f32.partialorder %v427, inf
    %v449 = vsel %vm448, %v427, %v447
    %vm450 = vcmp.eq.f32.partialorder %v427, 0.0
    %v451 = vand.u32 %v427, 2147483648
    %v452 = vsel %vm450, %v451, %v449
    %v453 = vrsqrt.pop %v428
    %v454 = vmul.f32 %v453, %v428
    %v455 = vmul.f32 %v454, %v453
    %v456 = vmul.f32 0.5, %v455
    %v457 = vsub.f32 1.5, %v456
    %v458 = vmul.f32 %v453, %v457
    %v459 = vmul.f32 %v428, %v458
    %vm460 = vcmp.eq.f32.partialorder %v428, inf
    %v461 = vsel %vm460, %v428, %v459
    %vm462 = vcmp.eq.f32.partialorder %v428, 0.0
    %v463 = vand.u32 %v428, 2147483648
    %v464 = vsel %vm462, %v463, %v461
    %v465 = vadd.f32 %v440, 1e-06
    %v466 = vadd.f32 %v452, 1e-06
    %v467 = vadd.f32 %v464, 1e-06
    %v468 = vrcp.pop %v465
    %v469 = vrcp.pop %v466
    %v470 = vrcp.pop %v467
    %v471 = vperm.slane %v397, 0
    %v472 = vmul.f32 %v471, %v411
    %v473 = vmul.f32 %v471, %v412
    %v474 = vmul.f32 %v471, %v413
    %v475 = vmul.f32 %v472, %v468
    %v476 = vmul.f32 %v473, %v469
    %v477 = vmul.f32 %v474, %v470
    %v478 = vperm.slane %v398, 0
    %v479 = vadd.f32 %v475, %v478
    %v480 = vadd.f32 %v476, %v478
    %v481 = vadd.f32 %v477, %v478
    %v482 = vld [vmem:[%s2] sm:$0xff]
    %v483 = vld [vmem:[%s2 + $0x8] sm:$0xff]
    %v484 = vld [vmem:[%s2 + $0x10] sm:$0xff]
    %v485 = vld [vmem:[%s2 + $0x18] sm:$0xff]
    %v486 = vld [vmem:[%s2 + $0xc2] sm:$0x1]
    %v487 = vperm.slane %v486, 0
    %v489 = vsel %vm130, %v479, 0
    %v492 = vsel %vm130, %v480, 0
    %v495 = vsel %vm130, %v481, 0
    %497 = vmatpush.msra.mxu0 0.0
    %498 = vmatpush.msra.mxu0 0.0
    %499 = vmatpush.msra.mxu0 0.0
    %500 = vmatpush.msra.mxu0 0.0
    %501 = vmatpush.msra.mxu0 0.0
    %502 = vmatpush.msra.mxu0 0.0
    %503 = vmatpush.msra.mxu0 0.0
    %504 = vmatpush.msra.mxu0 0.0
    %505 = vmatpush.msra.mxu0 0.0
    %506 = vmatpush.msra.mxu0 0.0
    %507 = vmatpush.msra.mxu0 0.0
    %508 = vmatpush.msra.mxu0 0.0
    %509 = vmatpush.msra.mxu0 %v485
    %510 = vmatpush.msra.mxu0 %v484
    %511 = vmatpush.msra.mxu0 %v483
    %512 = vmatpush.msra.mxu0 %v482
    %513 = vmatmul.f32.gmra.mxu0 %v489
    %v514 = vpop.f32.mrf.mxu0
    %v515 = vadd.f32 %v487, %v514
    %516 = vmatmul.f32.gmra.mxu0 %v492
    %v517 = vpop.f32.mrf.mxu0
    %v518 = vadd.f32 %v487, %v517
    %519 = vmatmul.f32.gmra.mxu0 %v495
    %v520 = vpop.f32.mrf.mxu0
    %v521 = vadd.f32 %v487, %v520
    %522 = vdwg.mxu0
    %v523 = vld [vmem:[%s2 + $0x20] sm:$0xff]
    %v524 = vld [vmem:[%s2 + $0x28] sm:$0xff]
    %v525 = vld [vmem:[%s2 + $0x30] sm:$0xff]
    %v526 = vld [vmem:[%s2 + $0x38] sm:$0xff]
    %v527 = vld [vmem:[%s2 + $0xc3] sm:$0x1]
    %v528 = vperm.slane %v527, 0
    %v530 = vsel %vm130, %v312, 0
    %v533 = vsel %vm130, %v313, 0
    %v536 = vsel %vm130, %v314, 0
    %538 = vmatpush.msra.mxu0 0.0
    %539 = vmatpush.msra.mxu0 0.0
    %540 = vmatpush.msra.mxu0 0.0
    %541 = vmatpush.msra.mxu0 0.0
    %542 = vmatpush.msra.mxu0 0.0
    %543 = vmatpush.msra.mxu0 0.0
    %544 = vmatpush.msra.mxu0 0.0
    %545 = vmatpush.msra.mxu0 0.0
    %546 = vmatpush.msra.mxu0 0.0
    %547 = vmatpush.msra.mxu0 0.0
    %548 = vmatpush.msra.mxu0 0.0
    %549 = vmatpush.msra.mxu0 0.0
    %550 = vmatpush.msra.mxu0 %v526
    %551 = vmatpush.msra.mxu0 %v525
    %552 = vmatpush.msra.mxu0 %v524
    %553 = vmatpush.msra.mxu0 %v523
    %554 = vmatmul.f32.gmra.mxu0 %v530
    %v555 = vpop.f32.mrf.mxu0
    %v556 = vadd.f32 %v528, %v555
    %557 = vmatmul.f32.gmra.mxu0 %v533
    %v558 = vpop.f32.mrf.mxu0
    %v559 = vadd.f32 %v528, %v558
    %560 = vmatmul.f32.gmra.mxu0 %v536
    %v561 = vpop.f32.mrf.mxu0
    %v562 = vadd.f32 %v528, %v561
    %563 = vdwg.mxu0
    %v564 = vld [vmem:[%s2 + $0x40] sm:$0xff]
    %v565 = vld [vmem:[%s2 + $0x48] sm:$0xff]
    %v566 = vld [vmem:[%s2 + $0x50] sm:$0xff]
    %v567 = vld [vmem:[%s2 + $0x58] sm:$0xff]
    %v568 = vld [vmem:[%s2 + $0xc4] sm:$0x1]
    %v569 = vperm.slane %v568, 0
    %570 = vmatpush.msra.mxu0 0.0
    %571 = vmatpush.msra.mxu0 0.0
    %572 = vmatpush.msra.mxu0 0.0
    %573 = vmatpush.msra.mxu0 0.0
    %574 = vmatpush.msra.mxu0 0.0
    %575 = vmatpush.msra.mxu0 0.0
    %576 = vmatpush.msra.mxu0 0.0
    %577 = vmatpush.msra.mxu0 0.0
    %578 = vmatpush.msra.mxu0 0.0
    %579 = vmatpush.msra.mxu0 0.0
    %580 = vmatpush.msra.mxu0 0.0
    %581 = vmatpush.msra.mxu0 0.0
    %582 = vmatpush.msra.mxu0 %v567
    %583 = vmatpush.msra.mxu0 %v566
    %584 = vmatpush.msra.mxu0 %v565
    %585 = vmatpush.msra.mxu0 %v564
    %586 = vmatmul.f32.gmra.mxu0 %v530
    %v587 = vpop.f32.mrf.mxu0
    %v588 = vadd.f32 %v569, %v587
    %589 = vmatmul.f32.gmra.mxu0 %v533
    %v590 = vpop.f32.mrf.mxu0
    %v591 = vadd.f32 %v569, %v590
    %592 = vmatmul.f32.gmra.mxu0 %v536
    %v593 = vpop.f32.mrf.mxu0
    %v594 = vadd.f32 %v569, %v593
    %595 = vdwg.mxu0
    %v596 = vmul.f32 %v556, %v319
    %v597 = vmul.f32 %v559, %v319
    %v598 = vmul.f32 %v562, %v319
    %v599 = vmul.f32 %v588, %v319
    %v600 = vmul.f32 %v591, %v319
    %v601 = vmul.f32 %v594, %v319
    %v603 = vsel %vm130, %v515, 0
    %v606 = vsel %vm130, %v518, 0
    %v609 = vsel %vm130, %v521, 0
    %v612 = vsel %vm130, %v596, 0
    %v615 = vsel %vm130, %v597, 0
    %v618 = vsel %vm130, %v598, 0
    %620 = vmatpush.xpose.msra.mxu0 0.0
    %621 = vmatpush.xpose.msra.mxu0 0.0
    %622 = vmatpush.xpose.msra.mxu0 0.0
    %623 = vmatpush.xpose.msra.mxu0 0.0
    %624 = vmatpush.xpose.msra.mxu0 0.0
    %625 = vmatpush.xpose.msra.mxu0 0.0
    %626 = vmatpush.xpose.msra.mxu0 0.0
    %627 = vmatpush.xpose.msra.mxu0 0.0
    %628 = vmatpush.xpose.msra.mxu0 0.0
    %629 = vmatpush.xpose.msra.mxu0 0.0
    %630 = vmatpush.xpose.msra.mxu0 0.0
    %631 = vmatpush.xpose.msra.mxu0 0.0
    %632 = vmatpush.xpose.msra.mxu0 0.0
    %633 = vmatpush.xpose.msra.mxu0 %v618
    %634 = vmatpush.xpose.msra.mxu0 %v615
    %635 = vmatpush.xpose.msra.mxu0 %v612
    %636 = vmatmul.f32.gmra.mxu0 %v603
    %v637 = vpop.f32.mrf.mxu0
    %v638 = vadd.f32 0.0, %v637
    %639 = vmatmul.f32.gmra.mxu0 %v606
    %v640 = vpop.f32.mrf.mxu0
    %v641 = vadd.f32 0.0, %v640
    %642 = vmatmul.f32.gmra.mxu0 %v609
    %v643 = vpop.f32.mrf.mxu0
    %v644 = vadd.f32 0.0, %v643
    %645 = vdwg.mxu0
    %v646 = vmul.f32 %v638, 0.5
    %v647 = vmul.f32 %v641, 0.5
    %v648 = vmul.f32 %v644, 0.5
    %v649 = vadd.f32 %v646, %v394
    %v650 = vadd.f32 %v647, %v395
    %v651 = vadd.f32 %v648, %v396
    %vm652 = vcmask 195584
    %v653 = vsel %vm652, %v649, -inf
    %654 = vmax.xlane.f32.xlu0 %v653
    %v655 = vpop.xlane.xlu0 %654
    %v656 = vsel %vm652, %v650, -inf
    %657 = vmax.xlane.f32.xlu0 %v656
    %v658 = vpop.xlane.xlu0 %657
    %v659 = vsel %vm652, %v651, -inf
    %660 = vmax.xlane.f32.xlu0 %v659
    %v661 = vpop.xlane.xlu0 %660
    %v662 = vsub.f32 %v649, %v655
    %v663 = vsub.f32 %v650, %v658
    %v664 = vsub.f32 %v651, %v661
    %v665 = vmul.f32 %v662, 1.442695
    %v666 = vpow.pop %v665
    %v667 = vmul.f32 %v663, 1.442695
    %v668 = vpow.pop %v667
    %v669 = vmul.f32 %v664, 1.442695
    %v670 = vpow.pop %v669
    %v671 = vsel %vm652, %v666, 0.0
    %672 = vadd.xlane.f32.xlu0 %v671
    %v673 = vpop.xlane.xlu0 %672
    %v674 = vsel %vm652, %v668, 0.0
    %675 = vadd.xlane.f32.xlu0 %v674
    %v676 = vpop.xlane.xlu0 %675
    %v677 = vsel %vm652, %v670, 0.0
    %678 = vadd.xlane.f32.xlu0 %v677
    %v679 = vpop.xlane.xlu0 %678
    %v680 = vrcp.pop %v673
    %v681 = vrcp.pop %v676
    %v682 = vrcp.pop %v679
    %v683 = vmul.f32 %v666, %v680
    %v684 = vmul.f32 %v668, %v681
    %v685 = vmul.f32 %v670, %v682
    %v686 = vmul.f32 %v556, %v324
    %v687 = vmul.f32 %v559, %v324
    %v688 = vmul.f32 %v562, %v324
    %v689 = vmul.f32 %v588, %v324
    %v690 = vmul.f32 %v591, %v324
    %v691 = vmul.f32 %v594, %v324
    %v693 = vsel %vm130, %v686, 0
    %v696 = vsel %vm130, %v687, 0
    %v699 = vsel %vm130, %v688, 0
    %701 = vmatpush.xpose.msra.mxu0 0.0
    %702 = vmatpush.xpose.msra.mxu0 0.0
    %703 = vmatpush.xpose.msra.mxu0 0.0
    %704 = vmatpush.xpose.msra.mxu0 0.0
    %705 = vmatpush.xpose.msra.mxu0 0.0
    %706 = vmatpush.xpose.msra.mxu0 0.0
    %707 = vmatpush.xpose.msra.mxu0 0.0
    %708 = vmatpush.xpose.msra.mxu0 0.0
    %709 = vmatpush.xpose.msra.mxu0 0.0
    %710 = vmatpush.xpose.msra.mxu0 0.0
    %711 = vmatpush.xpose.msra.mxu0 0.0
    %712 = vmatpush.xpose.msra.mxu0 0.0
    %713 = vmatpush.xpose.msra.mxu0 0.0
    %714 = vmatpush.xpose.msra.mxu0 %v699
    %715 = vmatpush.xpose.msra.mxu0 %v696
    %716 = vmatpush.xpose.msra.mxu0 %v693
    %717 = vmatmul.f32.gmra.mxu0 %v603
    %v718 = vpop.f32.mrf.mxu0
    %v719 = vadd.f32 0.0, %v718
    %720 = vmatmul.f32.gmra.mxu0 %v606
    %v721 = vpop.f32.mrf.mxu0
    %v722 = vadd.f32 0.0, %v721
    %723 = vmatmul.f32.gmra.mxu0 %v609
    %v724 = vpop.f32.mrf.mxu0
    %v725 = vadd.f32 0.0, %v724
    %726 = vdwg.mxu0
    %v727 = vmul.f32 %v719, 0.5
    %v728 = vmul.f32 %v722, 0.5
    %v729 = vmul.f32 %v725, 0.5
    %v730 = vadd.f32 %v727, %v394
    %v731 = vadd.f32 %v728, %v395
    %v732 = vadd.f32 %v729, %v396
    %v733 = vsel %vm652, %v730, -inf
    %734 = vmax.xlane.f32.xlu0 %v733
    %v735 = vpop.xlane.xlu0 %734
    %v736 = vsel %vm652, %v731, -inf
    %737 = vmax.xlane.f32.xlu0 %v736
    %v738 = vpop.xlane.xlu0 %737
    %v739 = vsel %vm652, %v732, -inf
    %740 = vmax.xlane.f32.xlu0 %v739
    %v741 = vpop.xlane.xlu0 %740
    %v742 = vsub.f32 %v730, %v735
    %v743 = vsub.f32 %v731, %v738
    %v744 = vsub.f32 %v732, %v741
    %v745 = vmul.f32 %v742, 1.442695
    %v746 = vpow.pop %v745
    %v747 = vmul.f32 %v743, 1.442695
    %v748 = vpow.pop %v747
    %v749 = vmul.f32 %v744, 1.442695
    %v750 = vpow.pop %v749
    %v751 = vsel %vm652, %v746, 0.0
    %752 = vadd.xlane.f32.xlu0 %v751
    %v753 = vpop.xlane.xlu0 %752
    %v754 = vsel %vm652, %v748, 0.0
    %755 = vadd.xlane.f32.xlu0 %v754
    %v756 = vpop.xlane.xlu0 %755
    %v757 = vsel %vm652, %v750, 0.0
    %758 = vadd.xlane.f32.xlu0 %v757
    %v759 = vpop.xlane.xlu0 %758
    %v760 = vrcp.pop %v753
    %v761 = vrcp.pop %v756
    %v762 = vrcp.pop %v759
    %v763 = vmul.f32 %v746, %v760
    %v764 = vmul.f32 %v748, %v761
    %v765 = vmul.f32 %v750, %v762
    %v767 = vsel %vm652, %v763, 0
    %v770 = vsel %vm652, %v764, 0
    %v773 = vsel %vm652, %v765, 0
    %775 = vmatpush.msra.mxu0 0.0
    %776 = vmatpush.msra.mxu0 0.0
    %777 = vmatpush.msra.mxu0 0.0
    %778 = vmatpush.msra.mxu0 0.0
    %779 = vmatpush.msra.mxu0 0.0
    %780 = vmatpush.msra.mxu0 0.0
    %781 = vmatpush.msra.mxu0 0.0
    %782 = vmatpush.msra.mxu0 0.0
    %783 = vmatpush.msra.mxu0 0.0
    %784 = vmatpush.msra.mxu0 0.0
    %785 = vmatpush.msra.mxu0 0.0
    %786 = vmatpush.msra.mxu0 0.0
    %787 = vmatpush.msra.mxu0 0.0
    %788 = vmatpush.msra.mxu0 %v691
    %789 = vmatpush.msra.mxu0 %v690
    %790 = vmatpush.msra.mxu0 %v689
    %791 = vmatmul.f32.gmra.mxu0 %v767
    %v792 = vpop.f32.mrf.mxu0
    %v793 = vadd.f32 0.0, %v792
    %794 = vmatmul.f32.gmra.mxu0 %v770
    %v795 = vpop.f32.mrf.mxu0
    %v796 = vadd.f32 0.0, %v795
    %797 = vmatmul.f32.gmra.mxu0 %v773
    %v798 = vpop.f32.mrf.mxu0
    %v799 = vadd.f32 0.0, %v798
    %800 = vdwg.mxu0
    %v802 = vsel %vm652, %v683, 0
    %v805 = vsel %vm652, %v684, 0
    %v808 = vsel %vm652, %v685, 0
    %810 = vmatpush.msra.mxu0 0.0
    %811 = vmatpush.msra.mxu0 0.0
    %812 = vmatpush.msra.mxu0 0.0
    %813 = vmatpush.msra.mxu0 0.0
    %814 = vmatpush.msra.mxu0 0.0
    %815 = vmatpush.msra.mxu0 0.0
    %816 = vmatpush.msra.mxu0 0.0
    %817 = vmatpush.msra.mxu0 0.0
    %818 = vmatpush.msra.mxu0 0.0
    %819 = vmatpush.msra.mxu0 0.0
    %820 = vmatpush.msra.mxu0 0.0
    %821 = vmatpush.msra.mxu0 0.0
    %822 = vmatpush.msra.mxu0 0.0
    %823 = vmatpush.msra.mxu0 %v601
    %824 = vmatpush.msra.mxu0 %v600
    %825 = vmatpush.msra.mxu0 %v599
    %826 = vmatmul.f32.gmra.mxu0 %v802
    %v827 = vpop.f32.mrf.mxu0
    %v828 = vadd.f32 %v793, %v827
    %829 = vmatmul.f32.gmra.mxu0 %v805
    %v830 = vpop.f32.mrf.mxu0
    %v831 = vadd.f32 %v796, %v830
    %832 = vmatmul.f32.gmra.mxu0 %v808
    %v833 = vpop.f32.mrf.mxu0
    %v834 = vadd.f32 %v799, %v833
    %835 = vdwg.mxu0
    %v836 = vmul.f32 %v556, %v329
    %v837 = vmul.f32 %v559, %v329
    %v838 = vmul.f32 %v562, %v329
    %v839 = vmul.f32 %v588, %v329
    %v840 = vmul.f32 %v591, %v329
    %v841 = vmul.f32 %v594, %v329
    %v843 = vsel %vm130, %v836, 0
    %v846 = vsel %vm130, %v837, 0
    %v849 = vsel %vm130, %v838, 0
    %851 = vmatpush.xpose.msra.mxu0 0.0
    %852 = vmatpush.xpose.msra.mxu0 0.0
    %853 = vmatpush.xpose.msra.mxu0 0.0
    %854 = vmatpush.xpose.msra.mxu0 0.0
    %855 = vmatpush.xpose.msra.mxu0 0.0
    %856 = vmatpush.xpose.msra.mxu0 0.0
    %857 = vmatpush.xpose.msra.mxu0 0.0
    %858 = vmatpush.xpose.msra.mxu0 0.0
    %859 = vmatpush.xpose.msra.mxu0 0.0
    %860 = vmatpush.xpose.msra.mxu0 0.0
    %861 = vmatpush.xpose.msra.mxu0 0.0
    %862 = vmatpush.xpose.msra.mxu0 0.0
    %863 = vmatpush.xpose.msra.mxu0 0.0
    %864 = vmatpush.xpose.msra.mxu0 %v849
    %865 = vmatpush.xpose.msra.mxu0 %v846
    %866 = vmatpush.xpose.msra.mxu0 %v843
    %867 = vmatmul.f32.gmra.mxu0 %v603
    %v868 = vpop.f32.mrf.mxu0
    %v869 = vadd.f32 0.0, %v868
    %870 = vmatmul.f32.gmra.mxu0 %v606
    %v871 = vpop.f32.mrf.mxu0
    %v872 = vadd.f32 0.0, %v871
    %873 = vmatmul.f32.gmra.mxu0 %v609
    %v874 = vpop.f32.mrf.mxu0
    %v875 = vadd.f32 0.0, %v874
    %876 = vdwg.mxu0
    %v877 = vmul.f32 %v869, 0.5
    %v878 = vmul.f32 %v872, 0.5
    %v879 = vmul.f32 %v875, 0.5
    %v880 = vadd.f32 %v877, %v394
    %v881 = vadd.f32 %v878, %v395
    %v882 = vadd.f32 %v879, %v396
    %v883 = vsel %vm652, %v880, -inf
    %884 = vmax.xlane.f32.xlu0 %v883
    %v885 = vpop.xlane.xlu0 %884
    %v886 = vsel %vm652, %v881, -inf
    %887 = vmax.xlane.f32.xlu0 %v886
    %v888 = vpop.xlane.xlu0 %887
    %v889 = vsel %vm652, %v882, -inf
    %890 = vmax.xlane.f32.xlu0 %v889
    %v891 = vpop.xlane.xlu0 %890
    %v892 = vsub.f32 %v880, %v885
    %v893 = vsub.f32 %v881, %v888
    %v894 = vsub.f32 %v882, %v891
    %v895 = vmul.f32 %v892, 1.442695
    %v896 = vpow.pop %v895
    %v897 = vmul.f32 %v893, 1.442695
    %v898 = vpow.pop %v897
    %v899 = vmul.f32 %v894, 1.442695
    %v900 = vpow.pop %v899
    %v901 = vsel %vm652, %v896, 0.0
    %902 = vadd.xlane.f32.xlu0 %v901
    %v903 = vpop.xlane.xlu0 %902
    %v904 = vsel %vm652, %v898, 0.0
    %905 = vadd.xlane.f32.xlu0 %v904
    %v906 = vpop.xlane.xlu0 %905
    %v907 = vsel %vm652, %v900, 0.0
    %908 = vadd.xlane.f32.xlu0 %v907
    %v909 = vpop.xlane.xlu0 %908
    %v910 = vrcp.pop %v903
    %v911 = vrcp.pop %v906
    %v912 = vrcp.pop %v909
    %v913 = vmul.f32 %v896, %v910
    %v914 = vmul.f32 %v898, %v911
    %v915 = vmul.f32 %v900, %v912
    %v917 = vsel %vm652, %v913, 0
    %v920 = vsel %vm652, %v914, 0
    %v923 = vsel %vm652, %v915, 0
    %925 = vmatpush.msra.mxu0 0.0
    %926 = vmatpush.msra.mxu0 0.0
    %927 = vmatpush.msra.mxu0 0.0
    %928 = vmatpush.msra.mxu0 0.0
    %929 = vmatpush.msra.mxu0 0.0
    %930 = vmatpush.msra.mxu0 0.0
    %931 = vmatpush.msra.mxu0 0.0
    %932 = vmatpush.msra.mxu0 0.0
    %933 = vmatpush.msra.mxu0 0.0
    %934 = vmatpush.msra.mxu0 0.0
    %935 = vmatpush.msra.mxu0 0.0
    %936 = vmatpush.msra.mxu0 0.0
    %937 = vmatpush.msra.mxu0 0.0
    %938 = vmatpush.msra.mxu0 %v841
    %939 = vmatpush.msra.mxu0 %v840
    %940 = vmatpush.msra.mxu0 %v839
    %941 = vmatmul.f32.gmra.mxu0 %v917
    %v942 = vpop.f32.mrf.mxu0
    %v943 = vadd.f32 0.0, %v942
    %944 = vmatmul.f32.gmra.mxu0 %v920
    %v945 = vpop.f32.mrf.mxu0
    %v946 = vadd.f32 0.0, %v945
    %947 = vmatmul.f32.gmra.mxu0 %v923
    %v948 = vpop.f32.mrf.mxu0
    %v949 = vadd.f32 0.0, %v948
    %950 = vdwg.mxu0
    %v951 = vadd.f32 %v828, %v943
    %v952 = vadd.f32 %v831, %v946
    %v953 = vadd.f32 %v834, %v949
    %v954 = vmul.f32 %v556, %v334
    %v955 = vmul.f32 %v559, %v334
    %v956 = vmul.f32 %v562, %v334
    %v957 = vmul.f32 %v588, %v334
    %v958 = vmul.f32 %v591, %v334
    %v959 = vmul.f32 %v594, %v334
    %v961 = vsel %vm130, %v954, 0
    %v964 = vsel %vm130, %v955, 0
    %v967 = vsel %vm130, %v956, 0
    %969 = vmatpush.xpose.msra.mxu0 0.0
    %970 = vmatpush.xpose.msra.mxu0 0.0
    %971 = vmatpush.xpose.msra.mxu0 0.0
    %972 = vmatpush.xpose.msra.mxu0 0.0
    %973 = vmatpush.xpose.msra.mxu0 0.0
    %974 = vmatpush.xpose.msra.mxu0 0.0
    %975 = vmatpush.xpose.msra.mxu0 0.0
    %976 = vmatpush.xpose.msra.mxu0 0.0
    %977 = vmatpush.xpose.msra.mxu0 0.0
    %978 = vmatpush.xpose.msra.mxu0 0.0
    %979 = vmatpush.xpose.msra.mxu0 0.0
    %980 = vmatpush.xpose.msra.mxu0 0.0
    %981 = vmatpush.xpose.msra.mxu0 0.0
    %982 = vmatpush.xpose.msra.mxu0 %v967
    %983 = vmatpush.xpose.msra.mxu0 %v964
    %984 = vmatpush.xpose.msra.mxu0 %v961
    %985 = vmatmul.f32.gmra.mxu0 %v603
    %v986 = vpop.f32.mrf.mxu0
    %v987 = vadd.f32 0.0, %v986
    %988 = vmatmul.f32.gmra.mxu0 %v606
    %v989 = vpop.f32.mrf.mxu0
    %v990 = vadd.f32 0.0, %v989
    %991 = vmatmul.f32.gmra.mxu0 %v609
    %v992 = vpop.f32.mrf.mxu0
    %v993 = vadd.f32 0.0, %v992
    %994 = vdwg.mxu0
    %v995 = vmul.f32 %v987, 0.5
    %v996 = vmul.f32 %v990, 0.5
    %v997 = vmul.f32 %v993, 0.5
    %v998 = vadd.f32 %v995, %v394
    %v999 = vadd.f32 %v996, %v395
    %v1000 = vadd.f32 %v997, %v396
    %v1001 = vsel %vm652, %v998, -inf
    %1002 = vmax.xlane.f32.xlu0 %v1001
    %v1003 = vpop.xlane.xlu0 %1002
    %v1004 = vsel %vm652, %v999, -inf
    %1005 = vmax.xlane.f32.xlu0 %v1004
    %v1006 = vpop.xlane.xlu0 %1005
    %v1007 = vsel %vm652, %v1000, -inf
    %1008 = vmax.xlane.f32.xlu0 %v1007
    %v1009 = vpop.xlane.xlu0 %1008
    %v1010 = vsub.f32 %v998, %v1003
    %v1011 = vsub.f32 %v999, %v1006
    %v1012 = vsub.f32 %v1000, %v1009
    %v1013 = vmul.f32 %v1010, 1.442695
    %v1014 = vpow.pop %v1013
    %v1015 = vmul.f32 %v1011, 1.442695
    %v1016 = vpow.pop %v1015
    %v1017 = vmul.f32 %v1012, 1.442695
    %v1018 = vpow.pop %v1017
    %v1019 = vsel %vm652, %v1014, 0.0
    %1020 = vadd.xlane.f32.xlu0 %v1019
    %v1021 = vpop.xlane.xlu0 %1020
    %v1022 = vsel %vm652, %v1016, 0.0
    %1023 = vadd.xlane.f32.xlu0 %v1022
    %v1024 = vpop.xlane.xlu0 %1023
    %v1025 = vsel %vm652, %v1018, 0.0
    %1026 = vadd.xlane.f32.xlu0 %v1025
    %v1027 = vpop.xlane.xlu0 %1026
    %v1028 = vrcp.pop %v1021
    %v1029 = vrcp.pop %v1024
    %v1030 = vrcp.pop %v1027
    %v1031 = vmul.f32 %v1014, %v1028
    %v1032 = vmul.f32 %v1016, %v1029
    %v1033 = vmul.f32 %v1018, %v1030
    %v1035 = vsel %vm652, %v1031, 0
    %v1038 = vsel %vm652, %v1032, 0
    %v1041 = vsel %vm652, %v1033, 0
    %1043 = vmatpush.msra.mxu0 0.0
    %1044 = vmatpush.msra.mxu0 0.0
    %1045 = vmatpush.msra.mxu0 0.0
    %1046 = vmatpush.msra.mxu0 0.0
    %1047 = vmatpush.msra.mxu0 0.0
    %1048 = vmatpush.msra.mxu0 0.0
    %1049 = vmatpush.msra.mxu0 0.0
    %1050 = vmatpush.msra.mxu0 0.0
    %1051 = vmatpush.msra.mxu0 0.0
    %1052 = vmatpush.msra.mxu0 0.0
    %1053 = vmatpush.msra.mxu0 0.0
    %1054 = vmatpush.msra.mxu0 0.0
    %1055 = vmatpush.msra.mxu0 0.0
    %1056 = vmatpush.msra.mxu0 %v959
    %1057 = vmatpush.msra.mxu0 %v958
    %1058 = vmatpush.msra.mxu0 %v957
    %1059 = vmatmul.f32.gmra.mxu0 %v1035
    %v1060 = vpop.f32.mrf.mxu0
    %v1061 = vadd.f32 0.0, %v1060
    %1062 = vmatmul.f32.gmra.mxu0 %v1038
    %v1063 = vpop.f32.mrf.mxu0
    %v1064 = vadd.f32 0.0, %v1063
    %1065 = vmatmul.f32.gmra.mxu0 %v1041
    %v1066 = vpop.f32.mrf.mxu0
    %v1067 = vadd.f32 0.0, %v1066
    %1068 = vdwg.mxu0
    %v1069 = vadd.f32 %v951, %v1061
    %v1070 = vadd.f32 %v952, %v1064
    %v1071 = vadd.f32 %v953, %v1067
    %v1072 = vmul.f32 %v556, %v339
    %v1073 = vmul.f32 %v559, %v339
    %v1074 = vmul.f32 %v562, %v339
    %v1075 = vmul.f32 %v588, %v339
    %v1076 = vmul.f32 %v591, %v339
    %v1077 = vmul.f32 %v594, %v339
    %v1079 = vsel %vm130, %v1072, 0
    %v1082 = vsel %vm130, %v1073, 0
    %v1085 = vsel %vm130, %v1074, 0
    %1087 = vmatpush.xpose.msra.mxu0 0.0
    %1088 = vmatpush.xpose.msra.mxu0 0.0
    %1089 = vmatpush.xpose.msra.mxu0 0.0
    %1090 = vmatpush.xpose.msra.mxu0 0.0
    %1091 = vmatpush.xpose.msra.mxu0 0.0
    %1092 = vmatpush.xpose.msra.mxu0 0.0
    %1093 = vmatpush.xpose.msra.mxu0 0.0
    %1094 = vmatpush.xpose.msra.mxu0 0.0
    %1095 = vmatpush.xpose.msra.mxu0 0.0
    %1096 = vmatpush.xpose.msra.mxu0 0.0
    %1097 = vmatpush.xpose.msra.mxu0 0.0
    %1098 = vmatpush.xpose.msra.mxu0 0.0
    %1099 = vmatpush.xpose.msra.mxu0 0.0
    %1100 = vmatpush.xpose.msra.mxu0 %v1085
    %1101 = vmatpush.xpose.msra.mxu0 %v1082
    %1102 = vmatpush.xpose.msra.mxu0 %v1079
    %1103 = vmatmul.f32.gmra.mxu0 %v603
    %v1104 = vpop.f32.mrf.mxu0
    %v1105 = vadd.f32 0.0, %v1104
    %1106 = vmatmul.f32.gmra.mxu0 %v606
    %v1107 = vpop.f32.mrf.mxu0
    %v1108 = vadd.f32 0.0, %v1107
    %1109 = vmatmul.f32.gmra.mxu0 %v609
    %v1110 = vpop.f32.mrf.mxu0
    %v1111 = vadd.f32 0.0, %v1110
    %1112 = vdwg.mxu0
    %v1113 = vmul.f32 %v1105, 0.5
    %v1114 = vmul.f32 %v1108, 0.5
    %v1115 = vmul.f32 %v1111, 0.5
    %v1116 = vadd.f32 %v1113, %v394
    %v1117 = vadd.f32 %v1114, %v395
    %v1118 = vadd.f32 %v1115, %v396
    %v1119 = vsel %vm652, %v1116, -inf
    %1120 = vmax.xlane.f32.xlu0 %v1119
    %v1121 = vpop.xlane.xlu0 %1120
    %v1122 = vsel %vm652, %v1117, -inf
    %1123 = vmax.xlane.f32.xlu0 %v1122
    %v1124 = vpop.xlane.xlu0 %1123
    %v1125 = vsel %vm652, %v1118, -inf
    %1126 = vmax.xlane.f32.xlu0 %v1125
    %v1127 = vpop.xlane.xlu0 %1126
    %v1128 = vsub.f32 %v1116, %v1121
    %v1129 = vsub.f32 %v1117, %v1124
    %v1130 = vsub.f32 %v1118, %v1127
    %v1131 = vmul.f32 %v1128, 1.442695
    %v1132 = vpow.pop %v1131
    %v1133 = vmul.f32 %v1129, 1.442695
    %v1134 = vpow.pop %v1133
    %v1135 = vmul.f32 %v1130, 1.442695
    %v1136 = vpow.pop %v1135
    %v1137 = vsel %vm652, %v1132, 0.0
    %1138 = vadd.xlane.f32.xlu0 %v1137
    %v1139 = vpop.xlane.xlu0 %1138
    %v1140 = vsel %vm652, %v1134, 0.0
    %1141 = vadd.xlane.f32.xlu0 %v1140
    %v1142 = vpop.xlane.xlu0 %1141
    %v1143 = vsel %vm652, %v1136, 0.0
    %1144 = vadd.xlane.f32.xlu0 %v1143
    %v1145 = vpop.xlane.xlu0 %1144
    %v1146 = vrcp.pop %v1139
    %v1147 = vrcp.pop %v1142
    %v1148 = vrcp.pop %v1145
    %v1149 = vmul.f32 %v1132, %v1146
    %v1150 = vmul.f32 %v1134, %v1147
    %v1151 = vmul.f32 %v1136, %v1148
    %v1153 = vsel %vm652, %v1149, 0
    %v1156 = vsel %vm652, %v1150, 0
    %v1159 = vsel %vm652, %v1151, 0
    %1161 = vmatpush.msra.mxu0 0.0
    %1162 = vmatpush.msra.mxu0 0.0
    %1163 = vmatpush.msra.mxu0 0.0
    %1164 = vmatpush.msra.mxu0 0.0
    %1165 = vmatpush.msra.mxu0 0.0
    %1166 = vmatpush.msra.mxu0 0.0
    %1167 = vmatpush.msra.mxu0 0.0
    %1168 = vmatpush.msra.mxu0 0.0
    %1169 = vmatpush.msra.mxu0 0.0
    %1170 = vmatpush.msra.mxu0 0.0
    %1171 = vmatpush.msra.mxu0 0.0
    %1172 = vmatpush.msra.mxu0 0.0
    %1173 = vmatpush.msra.mxu0 0.0
    %1174 = vmatpush.msra.mxu0 %v1077
    %1175 = vmatpush.msra.mxu0 %v1076
    %1176 = vmatpush.msra.mxu0 %v1075
    %1177 = vmatmul.f32.gmra.mxu0 %v1153
    %v1178 = vpop.f32.mrf.mxu0
    %v1179 = vadd.f32 0.0, %v1178
    %1180 = vmatmul.f32.gmra.mxu0 %v1156
    %v1181 = vpop.f32.mrf.mxu0
    %v1182 = vadd.f32 0.0, %v1181
    %1183 = vmatmul.f32.gmra.mxu0 %v1159
    %v1184 = vpop.f32.mrf.mxu0
    %v1185 = vadd.f32 0.0, %v1184
    %1186 = vdwg.mxu0
    %v1187 = vadd.f32 %v1069, %v1179
    %v1188 = vadd.f32 %v1070, %v1182
    %v1189 = vadd.f32 %v1071, %v1185
    %v1190 = vmul.f32 %v556, %v344
    %v1191 = vmul.f32 %v559, %v344
    %v1192 = vmul.f32 %v562, %v344
    %v1193 = vmul.f32 %v588, %v344
    %v1194 = vmul.f32 %v591, %v344
    %v1195 = vmul.f32 %v594, %v344
    %v1197 = vsel %vm130, %v1190, 0
    %v1200 = vsel %vm130, %v1191, 0
    %v1203 = vsel %vm130, %v1192, 0
    %1205 = vmatpush.xpose.msra.mxu0 0.0
    %1206 = vmatpush.xpose.msra.mxu0 0.0
    %1207 = vmatpush.xpose.msra.mxu0 0.0
    %1208 = vmatpush.xpose.msra.mxu0 0.0
    %1209 = vmatpush.xpose.msra.mxu0 0.0
    %1210 = vmatpush.xpose.msra.mxu0 0.0
    %1211 = vmatpush.xpose.msra.mxu0 0.0
    %1212 = vmatpush.xpose.msra.mxu0 0.0
    %1213 = vmatpush.xpose.msra.mxu0 0.0
    %1214 = vmatpush.xpose.msra.mxu0 0.0
    %1215 = vmatpush.xpose.msra.mxu0 0.0
    %1216 = vmatpush.xpose.msra.mxu0 0.0
    %1217 = vmatpush.xpose.msra.mxu0 0.0
    %1218 = vmatpush.xpose.msra.mxu0 %v1203
    %1219 = vmatpush.xpose.msra.mxu0 %v1200
    %1220 = vmatpush.xpose.msra.mxu0 %v1197
    %1221 = vmatmul.f32.gmra.mxu0 %v603
    %v1222 = vpop.f32.mrf.mxu0
    %v1223 = vadd.f32 0.0, %v1222
    %1224 = vmatmul.f32.gmra.mxu0 %v606
    %v1225 = vpop.f32.mrf.mxu0
    %v1226 = vadd.f32 0.0, %v1225
    %1227 = vmatmul.f32.gmra.mxu0 %v609
    %v1228 = vpop.f32.mrf.mxu0
    %v1229 = vadd.f32 0.0, %v1228
    %1230 = vdwg.mxu0
    %v1231 = vmul.f32 %v1223, 0.5
    %v1232 = vmul.f32 %v1226, 0.5
    %v1233 = vmul.f32 %v1229, 0.5
    %v1234 = vadd.f32 %v1231, %v394
    %v1235 = vadd.f32 %v1232, %v395
    %v1236 = vadd.f32 %v1233, %v396
    %v1237 = vsel %vm652, %v1234, -inf
    %1238 = vmax.xlane.f32.xlu0 %v1237
    %v1239 = vpop.xlane.xlu0 %1238
    %v1240 = vsel %vm652, %v1235, -inf
    %1241 = vmax.xlane.f32.xlu0 %v1240
    %v1242 = vpop.xlane.xlu0 %1241
    %v1243 = vsel %vm652, %v1236, -inf
    %1244 = vmax.xlane.f32.xlu0 %v1243
    %v1245 = vpop.xlane.xlu0 %1244
    %v1246 = vsub.f32 %v1234, %v1239
    %v1247 = vsub.f32 %v1235, %v1242
    %v1248 = vsub.f32 %v1236, %v1245
    %v1249 = vmul.f32 %v1246, 1.442695
    %v1250 = vpow.pop %v1249
    %v1251 = vmul.f32 %v1247, 1.442695
    %v1252 = vpow.pop %v1251
    %v1253 = vmul.f32 %v1248, 1.442695
    %v1254 = vpow.pop %v1253
    %v1255 = vsel %vm652, %v1250, 0.0
    %1256 = vadd.xlane.f32.xlu0 %v1255
    %v1257 = vpop.xlane.xlu0 %1256
    %v1258 = vsel %vm652, %v1252, 0.0
    %1259 = vadd.xlane.f32.xlu0 %v1258
    %v1260 = vpop.xlane.xlu0 %1259
    %v1261 = vsel %vm652, %v1254, 0.0
    %1262 = vadd.xlane.f32.xlu0 %v1261
    %v1263 = vpop.xlane.xlu0 %1262
    %v1264 = vrcp.pop %v1257
    %v1265 = vrcp.pop %v1260
    %v1266 = vrcp.pop %v1263
    %v1267 = vmul.f32 %v1250, %v1264
    %v1268 = vmul.f32 %v1252, %v1265
    %v1269 = vmul.f32 %v1254, %v1266
    %v1271 = vsel %vm652, %v1267, 0
    %v1274 = vsel %vm652, %v1268, 0
    %v1277 = vsel %vm652, %v1269, 0
    %1279 = vmatpush.msra.mxu0 0.0
    %1280 = vmatpush.msra.mxu0 0.0
    %1281 = vmatpush.msra.mxu0 0.0
    %1282 = vmatpush.msra.mxu0 0.0
    %1283 = vmatpush.msra.mxu0 0.0
    %1284 = vmatpush.msra.mxu0 0.0
    %1285 = vmatpush.msra.mxu0 0.0
    %1286 = vmatpush.msra.mxu0 0.0
    %1287 = vmatpush.msra.mxu0 0.0
    %1288 = vmatpush.msra.mxu0 0.0
    %1289 = vmatpush.msra.mxu0 0.0
    %1290 = vmatpush.msra.mxu0 0.0
    %1291 = vmatpush.msra.mxu0 0.0
    %1292 = vmatpush.msra.mxu0 %v1195
    %1293 = vmatpush.msra.mxu0 %v1194
    %1294 = vmatpush.msra.mxu0 %v1193
    %1295 = vmatmul.f32.gmra.mxu0 %v1271
    %v1296 = vpop.f32.mrf.mxu0
    %v1297 = vadd.f32 0.0, %v1296
    %1298 = vmatmul.f32.gmra.mxu0 %v1274
    %v1299 = vpop.f32.mrf.mxu0
    %v1300 = vadd.f32 0.0, %v1299
    %1301 = vmatmul.f32.gmra.mxu0 %v1277
    %v1302 = vpop.f32.mrf.mxu0
    %v1303 = vadd.f32 0.0, %v1302
    %1304 = vdwg.mxu0
    %v1305 = vadd.f32 %v1187, %v1297
    %v1306 = vadd.f32 %v1188, %v1300
    %v1307 = vadd.f32 %v1189, %v1303
    %v1308 = vmul.f32 %v556, %v349
    %v1309 = vmul.f32 %v559, %v349
    %v1310 = vmul.f32 %v562, %v349
    %v1311 = vmul.f32 %v588, %v349
    %v1312 = vmul.f32 %v591, %v349
    %v1313 = vmul.f32 %v594, %v349
    %v1315 = vsel %vm130, %v1308, 0
    %v1318 = vsel %vm130, %v1309, 0
    %v1321 = vsel %vm130, %v1310, 0
    %1323 = vmatpush.xpose.msra.mxu0 0.0
    %1324 = vmatpush.xpose.msra.mxu0 0.0
    %1325 = vmatpush.xpose.msra.mxu0 0.0
    %1326 = vmatpush.xpose.msra.mxu0 0.0
    %1327 = vmatpush.xpose.msra.mxu0 0.0
    %1328 = vmatpush.xpose.msra.mxu0 0.0
    %1329 = vmatpush.xpose.msra.mxu0 0.0
    %1330 = vmatpush.xpose.msra.mxu0 0.0
    %1331 = vmatpush.xpose.msra.mxu0 0.0
    %1332 = vmatpush.xpose.msra.mxu0 0.0
    %1333 = vmatpush.xpose.msra.mxu0 0.0
    %1334 = vmatpush.xpose.msra.mxu0 0.0
    %1335 = vmatpush.xpose.msra.mxu0 0.0
    %1336 = vmatpush.xpose.msra.mxu0 %v1321
    %1337 = vmatpush.xpose.msra.mxu0 %v1318
    %1338 = vmatpush.xpose.msra.mxu0 %v1315
    %1339 = vmatmul.f32.gmra.mxu0 %v603
    %v1340 = vpop.f32.mrf.mxu0
    %v1341 = vadd.f32 0.0, %v1340
    %1342 = vmatmul.f32.gmra.mxu0 %v606
    %v1343 = vpop.f32.mrf.mxu0
    %v1344 = vadd.f32 0.0, %v1343
    %1345 = vmatmul.f32.gmra.mxu0 %v609
    %v1346 = vpop.f32.mrf.mxu0
    %v1347 = vadd.f32 0.0, %v1346
    %1348 = vdwg.mxu0
    %v1349 = vmul.f32 %v1341, 0.5
    %v1350 = vmul.f32 %v1344, 0.5
    %v1351 = vmul.f32 %v1347, 0.5
    %v1352 = vadd.f32 %v1349, %v394
    %v1353 = vadd.f32 %v1350, %v395
    %v1354 = vadd.f32 %v1351, %v396
    %v1355 = vsel %vm652, %v1352, -inf
    %1356 = vmax.xlane.f32.xlu0 %v1355
    %v1357 = vpop.xlane.xlu0 %1356
    %v1358 = vsel %vm652, %v1353, -inf
    %1359 = vmax.xlane.f32.xlu0 %v1358
    %v1360 = vpop.xlane.xlu0 %1359
    %v1361 = vsel %vm652, %v1354, -inf
    %1362 = vmax.xlane.f32.xlu0 %v1361
    %v1363 = vpop.xlane.xlu0 %1362
    %v1364 = vsub.f32 %v1352, %v1357
    %v1365 = vsub.f32 %v1353, %v1360
    %v1366 = vsub.f32 %v1354, %v1363
    %v1367 = vmul.f32 %v1364, 1.442695
    %v1368 = vpow.pop %v1367
    %v1369 = vmul.f32 %v1365, 1.442695
    %v1370 = vpow.pop %v1369
    %v1371 = vmul.f32 %v1366, 1.442695
    %v1372 = vpow.pop %v1371
    %v1373 = vsel %vm652, %v1368, 0.0
    %1374 = vadd.xlane.f32.xlu0 %v1373
    %v1375 = vpop.xlane.xlu0 %1374
    %v1376 = vsel %vm652, %v1370, 0.0
    %1377 = vadd.xlane.f32.xlu0 %v1376
    %v1378 = vpop.xlane.xlu0 %1377
    %v1379 = vsel %vm652, %v1372, 0.0
    %1380 = vadd.xlane.f32.xlu0 %v1379
    %v1381 = vpop.xlane.xlu0 %1380
    %v1382 = vrcp.pop %v1375
    %v1383 = vrcp.pop %v1378
    %v1384 = vrcp.pop %v1381
    %v1385 = vmul.f32 %v1368, %v1382
    %v1386 = vmul.f32 %v1370, %v1383
    %v1387 = vmul.f32 %v1372, %v1384
    %v1389 = vsel %vm652, %v1385, 0
    %v1392 = vsel %vm652, %v1386, 0
    %v1395 = vsel %vm652, %v1387, 0
    %1397 = vmatpush.msra.mxu0 0.0
    %1398 = vmatpush.msra.mxu0 0.0
    %1399 = vmatpush.msra.mxu0 0.0
    %1400 = vmatpush.msra.mxu0 0.0
    %1401 = vmatpush.msra.mxu0 0.0
    %1402 = vmatpush.msra.mxu0 0.0
    %1403 = vmatpush.msra.mxu0 0.0
    %1404 = vmatpush.msra.mxu0 0.0
    %1405 = vmatpush.msra.mxu0 0.0
    %1406 = vmatpush.msra.mxu0 0.0
    %1407 = vmatpush.msra.mxu0 0.0
    %1408 = vmatpush.msra.mxu0 0.0
    %1409 = vmatpush.msra.mxu0 0.0
    %1410 = vmatpush.msra.mxu0 %v1313
    %1411 = vmatpush.msra.mxu0 %v1312
    %1412 = vmatpush.msra.mxu0 %v1311
    %1413 = vmatmul.f32.gmra.mxu0 %v1389
    %v1414 = vpop.f32.mrf.mxu0
    %v1415 = vadd.f32 0.0, %v1414
    %1416 = vmatmul.f32.gmra.mxu0 %v1392
    %v1417 = vpop.f32.mrf.mxu0
    %v1418 = vadd.f32 0.0, %v1417
    %1419 = vmatmul.f32.gmra.mxu0 %v1395
    %v1420 = vpop.f32.mrf.mxu0
    %v1421 = vadd.f32 0.0, %v1420
    %1422 = vdwg.mxu0
    %v1423 = vadd.f32 %v1305, %v1415
    %v1424 = vadd.f32 %v1306, %v1418
    %v1425 = vadd.f32 %v1307, %v1421
    %v1426 = vmul.f32 %v556, %v354
    %v1427 = vmul.f32 %v559, %v354
    %v1428 = vmul.f32 %v562, %v354
    %v1429 = vmul.f32 %v588, %v354
    %v1430 = vmul.f32 %v591, %v354
    %v1431 = vmul.f32 %v594, %v354
    %v1433 = vsel %vm130, %v1426, 0
    %v1436 = vsel %vm130, %v1427, 0
    %v1439 = vsel %vm130, %v1428, 0
    %1441 = vmatpush.xpose.msra.mxu0 0.0
    %1442 = vmatpush.xpose.msra.mxu0 0.0
    %1443 = vmatpush.xpose.msra.mxu0 0.0
    %1444 = vmatpush.xpose.msra.mxu0 0.0
    %1445 = vmatpush.xpose.msra.mxu0 0.0
    %1446 = vmatpush.xpose.msra.mxu0 0.0
    %1447 = vmatpush.xpose.msra.mxu0 0.0
    %1448 = vmatpush.xpose.msra.mxu0 0.0
    %1449 = vmatpush.xpose.msra.mxu0 0.0
    %1450 = vmatpush.xpose.msra.mxu0 0.0
    %1451 = vmatpush.xpose.msra.mxu0 0.0
    %1452 = vmatpush.xpose.msra.mxu0 0.0
    %1453 = vmatpush.xpose.msra.mxu0 0.0
    %1454 = vmatpush.xpose.msra.mxu0 %v1439
    %1455 = vmatpush.xpose.msra.mxu0 %v1436
    %1456 = vmatpush.xpose.msra.mxu0 %v1433
    %1457 = vmatmul.f32.gmra.mxu0 %v603
    %v1458 = vpop.f32.mrf.mxu0
    %v1459 = vadd.f32 0.0, %v1458
    %1460 = vmatmul.f32.gmra.mxu0 %v606
    %v1461 = vpop.f32.mrf.mxu0
    %v1462 = vadd.f32 0.0, %v1461
    %1463 = vmatmul.f32.gmra.mxu0 %v609
    %v1464 = vpop.f32.mrf.mxu0
    %v1465 = vadd.f32 0.0, %v1464
    %1466 = vdwg.mxu0
    %v1467 = vmul.f32 %v1459, 0.5
    %v1468 = vmul.f32 %v1462, 0.5
    %v1469 = vmul.f32 %v1465, 0.5
    %v1470 = vadd.f32 %v1467, %v394
    %v1471 = vadd.f32 %v1468, %v395
    %v1472 = vadd.f32 %v1469, %v396
    %v1473 = vsel %vm652, %v1470, -inf
    %1474 = vmax.xlane.f32.xlu0 %v1473
    %v1475 = vpop.xlane.xlu0 %1474
    %v1476 = vsel %vm652, %v1471, -inf
    %1477 = vmax.xlane.f32.xlu0 %v1476
    %v1478 = vpop.xlane.xlu0 %1477
    %v1479 = vsel %vm652, %v1472, -inf
    %1480 = vmax.xlane.f32.xlu0 %v1479
    %v1481 = vpop.xlane.xlu0 %1480
    %v1482 = vsub.f32 %v1470, %v1475
    %v1483 = vsub.f32 %v1471, %v1478
    %v1484 = vsub.f32 %v1472, %v1481
    %v1485 = vmul.f32 %v1482, 1.442695
    %v1486 = vpow.pop %v1485
    %v1487 = vmul.f32 %v1483, 1.442695
    %v1488 = vpow.pop %v1487
    %v1489 = vmul.f32 %v1484, 1.442695
    %v1490 = vpow.pop %v1489
    %v1491 = vsel %vm652, %v1486, 0.0
    %1492 = vadd.xlane.f32.xlu0 %v1491
    %v1493 = vpop.xlane.xlu0 %1492
    %v1494 = vsel %vm652, %v1488, 0.0
    %1495 = vadd.xlane.f32.xlu0 %v1494
    %v1496 = vpop.xlane.xlu0 %1495
    %v1497 = vsel %vm652, %v1490, 0.0
    %1498 = vadd.xlane.f32.xlu0 %v1497
    %v1499 = vpop.xlane.xlu0 %1498
    %v1500 = vrcp.pop %v1493
    %v1501 = vrcp.pop %v1496
    %v1502 = vrcp.pop %v1499
    %v1503 = vmul.f32 %v1486, %v1500
    %v1504 = vmul.f32 %v1488, %v1501
    %v1505 = vmul.f32 %v1490, %v1502
    %v1507 = vsel %vm652, %v1503, 0
    %v1510 = vsel %vm652, %v1504, 0
    %v1513 = vsel %vm652, %v1505, 0
    %1515 = vmatpush.msra.mxu0 0.0
    %1516 = vmatpush.msra.mxu0 0.0
    %1517 = vmatpush.msra.mxu0 0.0
    %1518 = vmatpush.msra.mxu0 0.0
    %1519 = vmatpush.msra.mxu0 0.0
    %1520 = vmatpush.msra.mxu0 0.0
    %1521 = vmatpush.msra.mxu0 0.0
    %1522 = vmatpush.msra.mxu0 0.0
    %1523 = vmatpush.msra.mxu0 0.0
    %1524 = vmatpush.msra.mxu0 0.0
    %1525 = vmatpush.msra.mxu0 0.0
    %1526 = vmatpush.msra.mxu0 0.0
    %1527 = vmatpush.msra.mxu0 0.0
    %1528 = vmatpush.msra.mxu0 %v1431
    %1529 = vmatpush.msra.mxu0 %v1430
    %1530 = vmatpush.msra.mxu0 %v1429
    %1531 = vmatmul.f32.gmra.mxu0 %v1507
    %v1532 = vpop.f32.mrf.mxu0
    %v1533 = vadd.f32 0.0, %v1532
    %1534 = vmatmul.f32.gmra.mxu0 %v1510
    %v1535 = vpop.f32.mrf.mxu0
    %v1536 = vadd.f32 0.0, %v1535
    %1537 = vmatmul.f32.gmra.mxu0 %v1513
    %v1538 = vpop.f32.mrf.mxu0
    %v1539 = vadd.f32 0.0, %v1538
    %1540 = vdwg.mxu0
    %v1541 = vadd.f32 %v1423, %v1533
    %v1542 = vadd.f32 %v1424, %v1536
    %v1543 = vadd.f32 %v1425, %v1539
    %v1544 = vld [vmem:[%s2 + $0x60] sm:$0xff]
    %v1545 = vld [vmem:[%s2 + $0x68] sm:$0xff]
    %v1546 = vld [vmem:[%s2 + $0x70] sm:$0xff]
    %v1547 = vld [vmem:[%s2 + $0x78] sm:$0xff]
    %v1549 = vsel %vm130, %v1541, 0
    %v1552 = vsel %vm130, %v1542, 0
    %v1555 = vsel %vm130, %v1543, 0
    %1557 = vmatpush.msra.mxu0 0.0
    %1558 = vmatpush.msra.mxu0 0.0
    %1559 = vmatpush.msra.mxu0 0.0
    %1560 = vmatpush.msra.mxu0 0.0
    %1561 = vmatpush.msra.mxu0 0.0
    %1562 = vmatpush.msra.mxu0 0.0
    %1563 = vmatpush.msra.mxu0 0.0
    %1564 = vmatpush.msra.mxu0 0.0
    %1565 = vmatpush.msra.mxu0 0.0
    %1566 = vmatpush.msra.mxu0 0.0
    %1567 = vmatpush.msra.mxu0 0.0
    %1568 = vmatpush.msra.mxu0 0.0
    %1569 = vmatpush.msra.mxu0 %v1547
    %1570 = vmatpush.msra.mxu0 %v1546
    %1571 = vmatpush.msra.mxu0 %v1545
    %1572 = vmatpush.msra.mxu0 %v1544
    %1573 = vmatmul.f32.gmra.mxu0 %v1549
    %v1574 = vpop.f32.mrf.mxu0
    %v1575 = vadd.f32 0.0, %v1574
    %1576 = vmatmul.f32.gmra.mxu0 %v1552
    %v1577 = vpop.f32.mrf.mxu0
    %v1578 = vadd.f32 0.0, %v1577
    %1579 = vmatmul.f32.gmra.mxu0 %v1555
    %v1580 = vpop.f32.mrf.mxu0
    %v1581 = vadd.f32 0.0, %v1580
    %1582 = vdwg.mxu0
    %v1583 = vadd.f32 %v312, %v1575
    %v1584 = vadd.f32 %v313, %v1578
    %v1585 = vadd.f32 %v314, %v1581
    %v1586 = vld [vmem:[%s2 + $0xc5] sm:$0x1]
    %v1587 = vperm.slane %v1586, 0
    %v1588 = vadd.f32 %v1583, %v1587
    %v1589 = vadd.f32 %v1584, %v1587
    %v1590 = vadd.f32 %v1585, %v1587
    %v1591 = vld [vmem:[%s2 + $0xc6] sm:$0x1]
    %v1592 = vld [vmem:[%s2 + $0xc7] sm:$0x1]
    %v1593 = vsel %vm130, %v1588, 0.0
    %1594 = vadd.xlane.f32.xlu0 %v1593
    %v1595 = vpop.xlane.xlu0 %1594
    %v1596 = vsel %vm130, %v1589, 0.0
    %1597 = vadd.xlane.f32.xlu0 %v1596
    %v1598 = vpop.xlane.xlu0 %1597
    %v1599 = vsel %vm130, %v1590, 0.0
    %1600 = vadd.xlane.f32.xlu0 %v1599
    %v1601 = vpop.xlane.xlu0 %1600
    %v1602 = vmul.f32 %v1595, %v240
    %v1603 = vmul.f32 %v1598, %v240
    %v1604 = vmul.f32 %v1601, %v240
    %v1605 = vsub.f32 %v1588, %v1602
    %v1606 = vsub.f32 %v1589, %v1603
    %v1607 = vsub.f32 %v1590, %v1604
    %v1608 = vmul.f32 %v1605, %v1605
    %v1609 = vmul.f32 %v1606, %v1606
    %v1610 = vmul.f32 %v1607, %v1607
    %v1611 = vsel %vm130, %v1608, 0.0
    %1612 = vadd.xlane.f32.xlu0 %v1611
    %v1613 = vpop.xlane.xlu0 %1612
    %v1614 = vsel %vm130, %v1609, 0.0
    %1615 = vadd.xlane.f32.xlu0 %v1614
    %v1616 = vpop.xlane.xlu0 %1615
    %v1617 = vsel %vm130, %v1610, 0.0
    %1618 = vadd.xlane.f32.xlu0 %v1617
    %v1619 = vpop.xlane.xlu0 %1618
    %v1620 = vmul.f32 %v1613, 0.032258064
    %v1621 = vmul.f32 %v1616, 0.032258064
    %v1622 = vmul.f32 %v1619, 0.032258064
    %v1623 = vrsqrt.pop %v1620
    %v1624 = vmul.f32 %v1623, %v1620
    %v1625 = vmul.f32 %v1624, %v1623
    %v1626 = vmul.f32 0.5, %v1625
    %v1627 = vsub.f32 1.5, %v1626
    %v1628 = vmul.f32 %v1623, %v1627
    %v1629 = vmul.f32 %v1620, %v1628
    %vm1630 = vcmp.eq.f32.partialorder %v1620, inf
    %v1631 = vsel %vm1630, %v1620, %v1629
    %vm1632 = vcmp.eq.f32.partialorder %v1620, 0.0
    %v1633 = vand.u32 %v1620, 2147483648
    %v1634 = vsel %vm1632, %v1633, %v1631
    %v1635 = vrsqrt.pop %v1621
    %v1636 = vmul.f32 %v1635, %v1621
    %v1637 = vmul.f32 %v1636, %v1635
    %v1638 = vmul.f32 0.5, %v1637
    %v1639 = vsub.f32 1.5, %v1638
    %v1640 = vmul.f32 %v1635, %v1639
    %v1641 = vmul.f32 %v1621, %v1640
    %vm1642 = vcmp.eq.f32.partialorder %v1621, inf
    %v1643 = vsel %vm1642, %v1621, %v1641
    %vm1644 = vcmp.eq.f32.partialorder %v1621, 0.0
    %v1645 = vand.u32 %v1621, 2147483648
    %v1646 = vsel %vm1644, %v1645, %v1643
    %v1647 = vrsqrt.pop %v1622
    %v1648 = vmul.f32 %v1647, %v1622
    %v1649 = vmul.f32 %v1648, %v1647
    %v1650 = vmul.f32 0.5, %v1649
    %v1651 = vsub.f32 1.5, %v1650
    %v1652 = vmul.f32 %v1647, %v1651
    %v1653 = vmul.f32 %v1622, %v1652
    %vm1654 = vcmp.eq.f32.partialorder %v1622, inf
    %v1655 = vsel %vm1654, %v1622, %v1653
    %vm1656 = vcmp.eq.f32.partialorder %v1622, 0.0
    %v1657 = vand.u32 %v1622, 2147483648
    %v1658 = vsel %vm1656, %v1657, %v1655
    %v1659 = vadd.f32 %v1634, 1e-06
    %v1660 = vadd.f32 %v1646, 1e-06
    %v1661 = vadd.f32 %v1658, 1e-06
    %v1662 = vrcp.pop %v1659
    %v1663 = vrcp.pop %v1660
    %v1664 = vrcp.pop %v1661
    %v1665 = vperm.slane %v1591, 0
    %v1666 = vmul.f32 %v1665, %v1605
    %v1667 = vmul.f32 %v1665, %v1606
    %v1668 = vmul.f32 %v1665, %v1607
    %v1669 = vmul.f32 %v1666, %v1662
    %v1670 = vmul.f32 %v1667, %v1663
    %v1671 = vmul.f32 %v1668, %v1664
    %v1672 = vperm.slane %v1592, 0
    %v1673 = vadd.f32 %v1669, %v1672
    %v1674 = vadd.f32 %v1670, %v1672
    %v1675 = vadd.f32 %v1671, %v1672
    %v1676 = vld [vmem:[%s2 + $0x80] sm:$0xff]
    %v1677 = vld [vmem:[%s2 + $0x88] sm:$0xff]
    %v1678 = vld [vmem:[%s2 + $0x90] sm:$0xff]
    %v1679 = vld [vmem:[%s2 + $0x98] sm:$0xff]
    %v1680 = vld [vmem:[%s2 + $0xc8] sm:$0x1]
    %v1681 = vperm.slane %v1680, 0
    %v1683 = vsel %vm130, %v1673, 0
    %v1686 = vsel %vm130, %v1674, 0
    %v1689 = vsel %vm130, %v1675, 0
    %1691 = vmatpush.msra.mxu0 0.0
    %1692 = vmatpush.msra.mxu0 0.0
    %1693 = vmatpush.msra.mxu0 0.0
    %1694 = vmatpush.msra.mxu0 0.0
    %1695 = vmatpush.msra.mxu0 0.0
    %1696 = vmatpush.msra.mxu0 0.0
    %1697 = vmatpush.msra.mxu0 0.0
    %1698 = vmatpush.msra.mxu0 0.0
    %1699 = vmatpush.msra.mxu0 0.0
    %1700 = vmatpush.msra.mxu0 0.0
    %1701 = vmatpush.msra.mxu0 0.0
    %1702 = vmatpush.msra.mxu0 0.0
    %1703 = vmatpush.msra.mxu0 %v1679
    %1704 = vmatpush.msra.mxu0 %v1678
    %1705 = vmatpush.msra.mxu0 %v1677
    %1706 = vmatpush.msra.mxu0 %v1676
    %1707 = vmatmul.f32.gmra.mxu0 %v1683
    %v1708 = vpop.f32.mrf.mxu0
    %v1709 = vadd.f32 %v1681, %v1708
    %1710 = vmatmul.f32.gmra.mxu0 %v1686
    %v1711 = vpop.f32.mrf.mxu0
    %v1712 = vadd.f32 %v1681, %v1711
    %1713 = vmatmul.f32.gmra.mxu0 %v1689
    %v1714 = vpop.f32.mrf.mxu0
    %v1715 = vadd.f32 %v1681, %v1714
    %1716 = vdwg.mxu0
    %v1717 = vmax.f32 %v1709, 0.0
    %v1718 = vmax.f32 %v1712, 0.0
    %v1719 = vmax.f32 %v1715, 0.0
    %v1720 = vld [vmem:[%s2 + $0xa0] sm:$0xff]
    %v1721 = vld [vmem:[%s2 + $0xa8] sm:$0xff]
    %v1722 = vld [vmem:[%s2 + $0xb0] sm:$0xff]
    %v1723 = vld [vmem:[%s2 + $0xb8] sm:$0xff]
    %v1725 = vsel %vm130, %v1717, 0
    %v1728 = vsel %vm130, %v1718, 0
    %v1731 = vsel %vm130, %v1719, 0
    %1733 = vmatpush.msra.mxu0 0.0
    %1734 = vmatpush.msra.mxu0 0.0
    %1735 = vmatpush.msra.mxu0 0.0
    %1736 = vmatpush.msra.mxu0 0.0
    %1737 = vmatpush.msra.mxu0 0.0
    %1738 = vmatpush.msra.mxu0 0.0
    %1739 = vmatpush.msra.mxu0 0.0
    %1740 = vmatpush.msra.mxu0 0.0
    %1741 = vmatpush.msra.mxu0 0.0
    %1742 = vmatpush.msra.mxu0 0.0
    %1743 = vmatpush.msra.mxu0 0.0
    %1744 = vmatpush.msra.mxu0 0.0
    %1745 = vmatpush.msra.mxu0 %v1723
    %1746 = vmatpush.msra.mxu0 %v1722
    %1747 = vmatpush.msra.mxu0 %v1721
    %1748 = vmatpush.msra.mxu0 %v1720
    %1749 = vmatmul.f32.gmra.mxu0 %v1725
    %v1750 = vpop.f32.mrf.mxu0
    %v1751 = vadd.f32 0.0, %v1750
    %1752 = vmatmul.f32.gmra.mxu0 %v1728
    %v1753 = vpop.f32.mrf.mxu0
    %v1754 = vadd.f32 0.0, %v1753
    %1755 = vmatmul.f32.gmra.mxu0 %v1731
    %v1756 = vpop.f32.mrf.mxu0
    %v1757 = vadd.f32 0.0, %v1756
    %1758 = vdwg.mxu0
    %v1759 = vadd.f32 %v1588, %v1751
    %v1760 = vadd.f32 %v1589, %v1754
    %v1761 = vadd.f32 %v1590, %v1757
    %v1762 = vld [vmem:[%s2 + $0xc9] sm:$0x1]
    %v1763 = vperm.slane %v1762, 0
    %v1764 = vadd.f32 %v1759, %v1763
    %v1765 = vadd.f32 %v1760, %v1763
    %v1766 = vadd.f32 %v1761, %v1763
    %v1767 = vld [vmem:[%s2 + $0x190] sm:$0x1]
    %v1768 = vld [vmem:[%s2 + $0x191] sm:$0x1]
    %v1769 = vsel %vm130, %v1764, 0.0
    %1770 = vadd.xlane.f32.xlu0 %v1769
    %v1771 = vpop.xlane.xlu0 %1770
    %v1772 = vsel %vm130, %v1765, 0.0
    %1773 = vadd.xlane.f32.xlu0 %v1772
    %v1774 = vpop.xlane.xlu0 %1773
    %v1775 = vsel %vm130, %v1766, 0.0
    %1776 = vadd.xlane.f32.xlu0 %v1775
    %v1777 = vpop.xlane.xlu0 %1776
    %v1778 = vmul.f32 %v1771, %v240
    %v1779 = vmul.f32 %v1774, %v240
    %v1780 = vmul.f32 %v1777, %v240
    %v1781 = vsub.f32 %v1764, %v1778
    %v1782 = vsub.f32 %v1765, %v1779
    %v1783 = vsub.f32 %v1766, %v1780
    %v1784 = vmul.f32 %v1781, %v1781
    %v1785 = vmul.f32 %v1782, %v1782
    %v1786 = vmul.f32 %v1783, %v1783
    %v1787 = vsel %vm130, %v1784, 0.0
    %1788 = vadd.xlane.f32.xlu0 %v1787
    %v1789 = vpop.xlane.xlu0 %1788
    %v1790 = vsel %vm130, %v1785, 0.0
    %1791 = vadd.xlane.f32.xlu0 %v1790
    %v1792 = vpop.xlane.xlu0 %1791
    %v1793 = vsel %vm130, %v1786, 0.0
    %1794 = vadd.xlane.f32.xlu0 %v1793
    %v1795 = vpop.xlane.xlu0 %1794
    %v1796 = vmul.f32 %v1789, 0.032258064
    %v1797 = vmul.f32 %v1792, 0.032258064
    %v1798 = vmul.f32 %v1795, 0.032258064
    %v1799 = vrsqrt.pop %v1796
    %v1800 = vmul.f32 %v1799, %v1796
    %v1801 = vmul.f32 %v1800, %v1799
    %v1802 = vmul.f32 0.5, %v1801
    %v1803 = vsub.f32 1.5, %v1802
    %v1804 = vmul.f32 %v1799, %v1803
    %v1805 = vmul.f32 %v1796, %v1804
    %vm1806 = vcmp.eq.f32.partialorder %v1796, inf
    %v1807 = vsel %vm1806, %v1796, %v1805
    %vm1808 = vcmp.eq.f32.partialorder %v1796, 0.0
    %v1809 = vand.u32 %v1796, 2147483648
    %v1810 = vsel %vm1808, %v1809, %v1807
    %v1811 = vrsqrt.pop %v1797
    %v1812 = vmul.f32 %v1811, %v1797
    %v1813 = vmul.f32 %v1812, %v1811
    %v1814 = vmul.f32 0.5, %v1813
    %v1815 = vsub.f32 1.5, %v1814
    %v1816 = vmul.f32 %v1811, %v1815
    %v1817 = vmul.f32 %v1797, %v1816
    %vm1818 = vcmp.eq.f32.partialorder %v1797, inf
    %v1819 = vsel %vm1818, %v1797, %v1817
    %vm1820 = vcmp.eq.f32.partialorder %v1797, 0.0
    %v1821 = vand.u32 %v1797, 2147483648
    %v1822 = vsel %vm1820, %v1821, %v1819
    %v1823 = vrsqrt.pop %v1798
    %v1824 = vmul.f32 %v1823, %v1798
    %v1825 = vmul.f32 %v1824, %v1823
    %v1826 = vmul.f32 0.5, %v1825
    %v1827 = vsub.f32 1.5, %v1826
    %v1828 = vmul.f32 %v1823, %v1827
    %v1829 = vmul.f32 %v1798, %v1828
    %vm1830 = vcmp.eq.f32.partialorder %v1798, inf
    %v1831 = vsel %vm1830, %v1798, %v1829
    %vm1832 = vcmp.eq.f32.partialorder %v1798, 0.0
    %v1833 = vand.u32 %v1798, 2147483648
    %v1834 = vsel %vm1832, %v1833, %v1831
    %v1835 = vadd.f32 %v1810, 1e-06
    %v1836 = vadd.f32 %v1822, 1e-06
    %v1837 = vadd.f32 %v1834, 1e-06
    %v1838 = vrcp.pop %v1835
    %v1839 = vrcp.pop %v1836
    %v1840 = vrcp.pop %v1837
    %v1841 = vperm.slane %v1767, 0
    %v1842 = vmul.f32 %v1841, %v1781
    %v1843 = vmul.f32 %v1841, %v1782
    %v1844 = vmul.f32 %v1841, %v1783
    %v1845 = vmul.f32 %v1842, %v1838
    %v1846 = vmul.f32 %v1843, %v1839
    %v1847 = vmul.f32 %v1844, %v1840
    %v1848 = vperm.slane %v1768, 0
    %v1849 = vadd.f32 %v1845, %v1848
    %v1850 = vadd.f32 %v1846, %v1848
    %v1851 = vadd.f32 %v1847, %v1848
    %v1852 = vld [vmem:[%s2 + $0xd0] sm:$0xff]
    %v1853 = vld [vmem:[%s2 + $0xd8] sm:$0xff]
    %v1854 = vld [vmem:[%s2 + $0xe0] sm:$0xff]
    %v1855 = vld [vmem:[%s2 + $0xe8] sm:$0xff]
    %v1856 = vld [vmem:[%s2 + $0x192] sm:$0x1]
    %v1857 = vperm.slane %v1856, 0
    %v1859 = vsel %vm130, %v1849, 0
    %v1862 = vsel %vm130, %v1850, 0
    %v1865 = vsel %vm130, %v1851, 0
    %1867 = vmatpush.msra.mxu0 0.0
    %1868 = vmatpush.msra.mxu0 0.0
    %1869 = vmatpush.msra.mxu0 0.0
    %1870 = vmatpush.msra.mxu0 0.0
    %1871 = vmatpush.msra.mxu0 0.0
    %1872 = vmatpush.msra.mxu0 0.0
    %1873 = vmatpush.msra.mxu0 0.0
    %1874 = vmatpush.msra.mxu0 0.0
    %1875 = vmatpush.msra.mxu0 0.0
    %1876 = vmatpush.msra.mxu0 0.0
    %1877 = vmatpush.msra.mxu0 0.0
    %1878 = vmatpush.msra.mxu0 0.0
    %1879 = vmatpush.msra.mxu0 %v1855
    %1880 = vmatpush.msra.mxu0 %v1854
    %1881 = vmatpush.msra.mxu0 %v1853
    %1882 = vmatpush.msra.mxu0 %v1852
    %1883 = vmatmul.f32.gmra.mxu0 %v1859
    %v1884 = vpop.f32.mrf.mxu0
    %v1885 = vadd.f32 %v1857, %v1884
    %1886 = vmatmul.f32.gmra.mxu0 %v1862
    %v1887 = vpop.f32.mrf.mxu0
    %v1888 = vadd.f32 %v1857, %v1887
    %1889 = vmatmul.f32.gmra.mxu0 %v1865
    %v1890 = vpop.f32.mrf.mxu0
    %v1891 = vadd.f32 %v1857, %v1890
    %1892 = vdwg.mxu0
    %v1893 = vld [vmem:[%s2 + $0xf0] sm:$0xff]
    %v1894 = vld [vmem:[%s2 + $0xf8] sm:$0xff]
    %v1895 = vld [vmem:[%s2 + $0x100] sm:$0xff]
    %v1896 = vld [vmem:[%s2 + $0x108] sm:$0xff]
    %v1897 = vld [vmem:[%s2 + $0x193] sm:$0x1]
    %v1898 = vperm.slane %v1897, 0
    %v1900 = vsel %vm130, %v1764, 0
    %v1903 = vsel %vm130, %v1765, 0
    %v1906 = vsel %vm130, %v1766, 0
    %1908 = vmatpush.msra.mxu0 0.0
    %1909 = vmatpush.msra.mxu0 0.0
    %1910 = vmatpush.msra.mxu0 0.0
    %1911 = vmatpush.msra.mxu0 0.0
    %1912 = vmatpush.msra.mxu0 0.0
    %1913 = vmatpush.msra.mxu0 0.0
    %1914 = vmatpush.msra.mxu0 0.0
    %1915 = vmatpush.msra.mxu0 0.0
    %1916 = vmatpush.msra.mxu0 0.0
    %1917 = vmatpush.msra.mxu0 0.0
    %1918 = vmatpush.msra.mxu0 0.0
    %1919 = vmatpush.msra.mxu0 0.0
    %1920 = vmatpush.msra.mxu0 %v1896
    %1921 = vmatpush.msra.mxu0 %v1895
    %1922 = vmatpush.msra.mxu0 %v1894
    %1923 = vmatpush.msra.mxu0 %v1893
    %1924 = vmatmul.f32.gmra.mxu0 %v1900
    %v1925 = vpop.f32.mrf.mxu0
    %v1926 = vadd.f32 %v1898, %v1925
    %1927 = vmatmul.f32.gmra.mxu0 %v1903
    %v1928 = vpop.f32.mrf.mxu0
    %v1929 = vadd.f32 %v1898, %v1928
    %1930 = vmatmul.f32.gmra.mxu0 %v1906
    %v1931 = vpop.f32.mrf.mxu0
    %v1932 = vadd.f32 %v1898, %v1931
    %1933 = vdwg.mxu0
    %v1934 = vld [vmem:[%s2 + $0x110] sm:$0xff]
    %v1935 = vld [vmem:[%s2 + $0x118] sm:$0xff]
    %v1936 = vld [vmem:[%s2 + $0x120] sm:$0xff]
    %v1937 = vld [vmem:[%s2 + $0x128] sm:$0xff]
    %v1938 = vld [vmem:[%s2 + $0x194] sm:$0x1]
    %v1939 = vperm.slane %v1938, 0
    %1940 = vmatpush.msra.mxu0 0.0
    %1941 = vmatpush.msra.mxu0 0.0
    %1942 = vmatpush.msra.mxu0 0.0
    %1943 = vmatpush.msra.mxu0 0.0
    %1944 = vmatpush.msra.mxu0 0.0
    %1945 = vmatpush.msra.mxu0 0.0
    %1946 = vmatpush.msra.mxu0 0.0
    %1947 = vmatpush.msra.mxu0 0.0
    %1948 = vmatpush.msra.mxu0 0.0
    %1949 = vmatpush.msra.mxu0 0.0
    %1950 = vmatpush.msra.mxu0 0.0
    %1951 = vmatpush.msra.mxu0 0.0
    %1952 = vmatpush.msra.mxu0 %v1937
    %1953 = vmatpush.msra.mxu0 %v1936
    %1954 = vmatpush.msra.mxu0 %v1935
    %1955 = vmatpush.msra.mxu0 %v1934
    %1956 = vmatmul.f32.gmra.mxu0 %v1900
    %v1957 = vpop.f32.mrf.mxu0
    %v1958 = vadd.f32 %v1939, %v1957
    %1959 = vmatmul.f32.gmra.mxu0 %v1903
    %v1960 = vpop.f32.mrf.mxu0
    %v1961 = vadd.f32 %v1939, %v1960
    %1962 = vmatmul.f32.gmra.mxu0 %v1906
    %v1963 = vpop.f32.mrf.mxu0
    %v1964 = vadd.f32 %v1939, %v1963
    %1965 = vdwg.mxu0
    %v1966 = vmul.f32 %v1926, %v319
    %v1967 = vmul.f32 %v1929, %v319
    %v1968 = vmul.f32 %v1932, %v319
    %v1969 = vmul.f32 %v1958, %v319
    %v1970 = vmul.f32 %v1961, %v319
    %v1971 = vmul.f32 %v1964, %v319
    %v1973 = vsel %vm130, %v1885, 0
    %v1976 = vsel %vm130, %v1888, 0
    %v1979 = vsel %vm130, %v1891, 0
    %v1982 = vsel %vm130, %v1966, 0
    %v1985 = vsel %vm130, %v1967, 0
    %v1988 = vsel %vm130, %v1968, 0
    %1990 = vmatpush.xpose.msra.mxu0 0.0
    %1991 = vmatpush.xpose.msra.mxu0 0.0
    %1992 = vmatpush.xpose.msra.mxu0 0.0
    %1993 = vmatpush.xpose.msra.mxu0 0.0
    %1994 = vmatpush.xpose.msra.mxu0 0.0
    %1995 = vmatpush.xpose.msra.mxu0 0.0
    %1996 = vmatpush.xpose.msra.mxu0 0.0
    %1997 = vmatpush.xpose.msra.mxu0 0.0
    %1998 = vmatpush.xpose.msra.mxu0 0.0
    %1999 = vmatpush.xpose.msra.mxu0 0.0
    %2000 = vmatpush.xpose.msra.mxu0 0.0
    %2001 = vmatpush.xpose.msra.mxu0 0.0
    %2002 = vmatpush.xpose.msra.mxu0 0.0
    %2003 = vmatpush.xpose.msra.mxu0 %v1988
    %2004 = vmatpush.xpose.msra.mxu0 %v1985
    %2005 = vmatpush.xpose.msra.mxu0 %v1982
    %2006 = vmatmul.f32.gmra.mxu0 %v1973
    %v2007 = vpop.f32.mrf.mxu0
    %v2008 = vadd.f32 0.0, %v2007
    %2009 = vmatmul.f32.gmra.mxu0 %v1976
    %v2010 = vpop.f32.mrf.mxu0
    %v2011 = vadd.f32 0.0, %v2010
    %2012 = vmatmul.f32.gmra.mxu0 %v1979
    %v2013 = vpop.f32.mrf.mxu0
    %v2014 = vadd.f32 0.0, %v2013
    %2015 = vdwg.mxu0
    %v2016 = vmul.f32 %v2008, 0.5
    %v2017 = vmul.f32 %v2011, 0.5
    %v2018 = vmul.f32 %v2014, 0.5
    %v2019 = vadd.f32 %v2016, %v394
    %v2020 = vadd.f32 %v2017, %v395
    %v2021 = vadd.f32 %v2018, %v396
    %v2022 = vsel %vm652, %v2019, -inf
    %2023 = vmax.xlane.f32.xlu0 %v2022
    %v2024 = vpop.xlane.xlu0 %2023
    %v2025 = vsel %vm652, %v2020, -inf
    %2026 = vmax.xlane.f32.xlu0 %v2025
    %v2027 = vpop.xlane.xlu0 %2026
    %v2028 = vsel %vm652, %v2021, -inf
    %2029 = vmax.xlane.f32.xlu0 %v2028
    %v2030 = vpop.xlane.xlu0 %2029
    %v2031 = vsub.f32 %v2019, %v2024
    %v2032 = vsub.f32 %v2020, %v2027
    %v2033 = vsub.f32 %v2021, %v2030
    %v2034 = vmul.f32 %v2031, 1.442695
    %v2035 = vpow.pop %v2034
    %v2036 = vmul.f32 %v2032, 1.442695
    %v2037 = vpow.pop %v2036
    %v2038 = vmul.f32 %v2033, 1.442695
    %v2039 = vpow.pop %v2038
    %v2040 = vsel %vm652, %v2035, 0.0
    %2041 = vadd.xlane.f32.xlu0 %v2040
    %v2042 = vpop.xlane.xlu0 %2041
    %v2043 = vsel %vm652, %v2037, 0.0
    %2044 = vadd.xlane.f32.xlu0 %v2043
    %v2045 = vpop.xlane.xlu0 %2044
    %v2046 = vsel %vm652, %v2039, 0.0
    %2047 = vadd.xlane.f32.xlu0 %v2046
    %v2048 = vpop.xlane.xlu0 %2047
    %v2049 = vrcp.pop %v2042
    %v2050 = vrcp.pop %v2045
    %v2051 = vrcp.pop %v2048
    %v2052 = vmul.f32 %v2035, %v2049
    %v2053 = vmul.f32 %v2037, %v2050
    %v2054 = vmul.f32 %v2039, %v2051
    %v2055 = vmul.f32 %v1926, %v324
    %v2056 = vmul.f32 %v1929, %v324
    %v2057 = vmul.f32 %v1932, %v324
    %v2058 = vmul.f32 %v1958, %v324
    %v2059 = vmul.f32 %v1961, %v324
    %v2060 = vmul.f32 %v1964, %v324
    %v2062 = vsel %vm130, %v2055, 0
    %v2065 = vsel %vm130, %v2056, 0
    %v2068 = vsel %vm130, %v2057, 0
    %2070 = vmatpush.xpose.msra.mxu0 0.0
    %2071 = vmatpush.xpose.msra.mxu0 0.0
    %2072 = vmatpush.xpose.msra.mxu0 0.0
    %2073 = vmatpush.xpose.msra.mxu0 0.0
    %2074 = vmatpush.xpose.msra.mxu0 0.0
    %2075 = vmatpush.xpose.msra.mxu0 0.0
    %2076 = vmatpush.xpose.msra.mxu0 0.0
    %2077 = vmatpush.xpose.msra.mxu0 0.0
    %2078 = vmatpush.xpose.msra.mxu0 0.0
    %2079 = vmatpush.xpose.msra.mxu0 0.0
    %2080 = vmatpush.xpose.msra.mxu0 0.0
    %2081 = vmatpush.xpose.msra.mxu0 0.0
    %2082 = vmatpush.xpose.msra.mxu0 0.0
    %2083 = vmatpush.xpose.msra.mxu0 %v2068
    %2084 = vmatpush.xpose.msra.mxu0 %v2065
    %2085 = vmatpush.xpose.msra.mxu0 %v2062
    %2086 = vmatmul.f32.gmra.mxu0 %v1973
    %v2087 = vpop.f32.mrf.mxu0
    %v2088 = vadd.f32 0.0, %v2087
    %2089 = vmatmul.f32.gmra.mxu0 %v1976
    %v2090 = vpop.f32.mrf.mxu0
    %v2091 = vadd.f32 0.0, %v2090
    %2092 = vmatmul.f32.gmra.mxu0 %v1979
    %v2093 = vpop.f32.mrf.mxu0
    %v2094 = vadd.f32 0.0, %v2093
    %2095 = vdwg.mxu0
    %v2096 = vmul.f32 %v2088, 0.5
    %v2097 = vmul.f32 %v2091, 0.5
    %v2098 = vmul.f32 %v2094, 0.5
    %v2099 = vadd.f32 %v2096, %v394
    %v2100 = vadd.f32 %v2097, %v395
    %v2101 = vadd.f32 %v2098, %v396
    %v2102 = vsel %vm652, %v2099, -inf
    %2103 = vmax.xlane.f32.xlu0 %v2102
    %v2104 = vpop.xlane.xlu0 %2103
    %v2105 = vsel %vm652, %v2100, -inf
    %2106 = vmax.xlane.f32.xlu0 %v2105
    %v2107 = vpop.xlane.xlu0 %2106
    %v2108 = vsel %vm652, %v2101, -inf
    %2109 = vmax.xlane.f32.xlu0 %v2108
    %v2110 = vpop.xlane.xlu0 %2109
    %v2111 = vsub.f32 %v2099, %v2104
    %v2112 = vsub.f32 %v2100, %v2107
    %v2113 = vsub.f32 %v2101, %v2110
    %v2114 = vmul.f32 %v2111, 1.442695
    %v2115 = vpow.pop %v2114
    %v2116 = vmul.f32 %v2112, 1.442695
    %v2117 = vpow.pop %v2116
    %v2118 = vmul.f32 %v2113, 1.442695
    %v2119 = vpow.pop %v2118
    %v2120 = vsel %vm652, %v2115, 0.0
    %2121 = vadd.xlane.f32.xlu0 %v2120
    %v2122 = vpop.xlane.xlu0 %2121
    %v2123 = vsel %vm652, %v2117, 0.0
    %2124 = vadd.xlane.f32.xlu0 %v2123
    %v2125 = vpop.xlane.xlu0 %2124
    %v2126 = vsel %vm652, %v2119, 0.0
    %2127 = vadd.xlane.f32.xlu0 %v2126
    %v2128 = vpop.xlane.xlu0 %2127
    %v2129 = vrcp.pop %v2122
    %v2130 = vrcp.pop %v2125
    %v2131 = vrcp.pop %v2128
    %v2132 = vmul.f32 %v2115, %v2129
    %v2133 = vmul.f32 %v2117, %v2130
    %v2134 = vmul.f32 %v2119, %v2131
    %v2136 = vsel %vm652, %v2132, 0
    %v2139 = vsel %vm652, %v2133, 0
    %v2142 = vsel %vm652, %v2134, 0
    %2144 = vmatpush.msra.mxu0 0.0
    %2145 = vmatpush.msra.mxu0 0.0
    %2146 = vmatpush.msra.mxu0 0.0
    %2147 = vmatpush.msra.mxu0 0.0
    %2148 = vmatpush.msra.mxu0 0.0
    %2149 = vmatpush.msra.mxu0 0.0
    %2150 = vmatpush.msra.mxu0 0.0
    %2151 = vmatpush.msra.mxu0 0.0
    %2152 = vmatpush.msra.mxu0 0.0
    %2153 = vmatpush.msra.mxu0 0.0
    %2154 = vmatpush.msra.mxu0 0.0
    %2155 = vmatpush.msra.mxu0 0.0
    %2156 = vmatpush.msra.mxu0 0.0
    %2157 = vmatpush.msra.mxu0 %v2060
    %2158 = vmatpush.msra.mxu0 %v2059
    %2159 = vmatpush.msra.mxu0 %v2058
    %2160 = vmatmul.f32.gmra.mxu0 %v2136
    %v2161 = vpop.f32.mrf.mxu0
    %v2162 = vadd.f32 0.0, %v2161
    %2163 = vmatmul.f32.gmra.mxu0 %v2139
    %v2164 = vpop.f32.mrf.mxu0
    %v2165 = vadd.f32 0.0, %v2164
    %2166 = vmatmul.f32.gmra.mxu0 %v2142
    %v2167 = vpop.f32.mrf.mxu0
    %v2168 = vadd.f32 0.0, %v2167
    %2169 = vdwg.mxu0
    %v2171 = vsel %vm652, %v2052, 0
    %v2174 = vsel %vm652, %v2053, 0
    %v2177 = vsel %vm652, %v2054, 0
    %2179 = vmatpush.msra.mxu0 0.0
    %2180 = vmatpush.msra.mxu0 0.0
    %2181 = vmatpush.msra.mxu0 0.0
    %2182 = vmatpush.msra.mxu0 0.0
    %2183 = vmatpush.msra.mxu0 0.0
    %2184 = vmatpush.msra.mxu0 0.0
    %2185 = vmatpush.msra.mxu0 0.0
    %2186 = vmatpush.msra.mxu0 0.0
    %2187 = vmatpush.msra.mxu0 0.0
    %2188 = vmatpush.msra.mxu0 0.0
    %2189 = vmatpush.msra.mxu0 0.0
    %2190 = vmatpush.msra.mxu0 0.0
    %2191 = vmatpush.msra.mxu0 0.0
    %2192 = vmatpush.msra.mxu0 %v1971
    %2193 = vmatpush.msra.mxu0 %v1970
    %2194 = vmatpush.msra.mxu0 %v1969
    %2195 = vmatmul.f32.gmra.mxu0 %v2171
    %v2196 = vpop.f32.mrf.mxu0
    %v2197 = vadd.f32 %v2162, %v2196
    %2198 = vmatmul.f32.gmra.mxu0 %v2174
    %v2199 = vpop.f32.mrf.mxu0
    %v2200 = vadd.f32 %v2165, %v2199
    %2201 = vmatmul.f32.gmra.mxu0 %v2177
    %v2202 = vpop.f32.mrf.mxu0
    %v2203 = vadd.f32 %v2168, %v2202
    %2204 = vdwg.mxu0
    %v2205 = vmul.f32 %v1926, %v329
    %v2206 = vmul.f32 %v1929, %v329
    %v2207 = vmul.f32 %v1932, %v329
    %v2208 = vmul.f32 %v1958, %v329
    %v2209 = vmul.f32 %v1961, %v329
    %v2210 = vmul.f32 %v1964, %v329
    %v2212 = vsel %vm130, %v2205, 0
    %v2215 = vsel %vm130, %v2206, 0
    %v2218 = vsel %vm130, %v2207, 0
    %2220 = vmatpush.xpose.msra.mxu0 0.0
    %2221 = vmatpush.xpose.msra.mxu0 0.0
    %2222 = vmatpush.xpose.msra.mxu0 0.0
    %2223 = vmatpush.xpose.msra.mxu0 0.0
    %2224 = vmatpush.xpose.msra.mxu0 0.0
    %2225 = vmatpush.xpose.msra.mxu0 0.0
    %2226 = vmatpush.xpose.msra.mxu0 0.0
    %2227 = vmatpush.xpose.msra.mxu0 0.0
    %2228 = vmatpush.xpose.msra.mxu0 0.0
    %2229 = vmatpush.xpose.msra.mxu0 0.0
    %2230 = vmatpush.xpose.msra.mxu0 0.0
    %2231 = vmatpush.xpose.msra.mxu0 0.0
    %2232 = vmatpush.xpose.msra.mxu0 0.0
    %2233 = vmatpush.xpose.msra.mxu0 %v2218
    %2234 = vmatpush.xpose.msra.mxu0 %v2215
    %2235 = vmatpush.xpose.msra.mxu0 %v2212
    %2236 = vmatmul.f32.gmra.mxu0 %v1973
    %v2237 = vpop.f32.mrf.mxu0
    %v2238 = vadd.f32 0.0, %v2237
    %2239 = vmatmul.f32.gmra.mxu0 %v1976
    %v2240 = vpop.f32.mrf.mxu0
    %v2241 = vadd.f32 0.0, %v2240
    %2242 = vmatmul.f32.gmra.mxu0 %v1979
    %v2243 = vpop.f32.mrf.mxu0
    %v2244 = vadd.f32 0.0, %v2243
    %2245 = vdwg.mxu0
    %v2246 = vmul.f32 %v2238, 0.5
    %v2247 = vmul.f32 %v2241, 0.5
    %v2248 = vmul.f32 %v2244, 0.5
    %v2249 = vadd.f32 %v2246, %v394
    %v2250 = vadd.f32 %v2247, %v395
    %v2251 = vadd.f32 %v2248, %v396
    %v2252 = vsel %vm652, %v2249, -inf
    %2253 = vmax.xlane.f32.xlu0 %v2252
    %v2254 = vpop.xlane.xlu0 %2253
    %v2255 = vsel %vm652, %v2250, -inf
    %2256 = vmax.xlane.f32.xlu0 %v2255
    %v2257 = vpop.xlane.xlu0 %2256
    %v2258 = vsel %vm652, %v2251, -inf
    %2259 = vmax.xlane.f32.xlu0 %v2258
    %v2260 = vpop.xlane.xlu0 %2259
    %v2261 = vsub.f32 %v2249, %v2254
    %v2262 = vsub.f32 %v2250, %v2257
    %v2263 = vsub.f32 %v2251, %v2260
    %v2264 = vmul.f32 %v2261, 1.442695
    %v2265 = vpow.pop %v2264
    %v2266 = vmul.f32 %v2262, 1.442695
    %v2267 = vpow.pop %v2266
    %v2268 = vmul.f32 %v2263, 1.442695
    %v2269 = vpow.pop %v2268
    %v2270 = vsel %vm652, %v2265, 0.0
    %2271 = vadd.xlane.f32.xlu0 %v2270
    %v2272 = vpop.xlane.xlu0 %2271
    %v2273 = vsel %vm652, %v2267, 0.0
    %2274 = vadd.xlane.f32.xlu0 %v2273
    %v2275 = vpop.xlane.xlu0 %2274
    %v2276 = vsel %vm652, %v2269, 0.0
    %2277 = vadd.xlane.f32.xlu0 %v2276
    %v2278 = vpop.xlane.xlu0 %2277
    %v2279 = vrcp.pop %v2272
    %v2280 = vrcp.pop %v2275
    %v2281 = vrcp.pop %v2278
    %v2282 = vmul.f32 %v2265, %v2279
    %v2283 = vmul.f32 %v2267, %v2280
    %v2284 = vmul.f32 %v2269, %v2281
    %v2286 = vsel %vm652, %v2282, 0
    %v2289 = vsel %vm652, %v2283, 0
    %v2292 = vsel %vm652, %v2284, 0
    %2294 = vmatpush.msra.mxu0 0.0
    %2295 = vmatpush.msra.mxu0 0.0
    %2296 = vmatpush.msra.mxu0 0.0
    %2297 = vmatpush.msra.mxu0 0.0
    %2298 = vmatpush.msra.mxu0 0.0
    %2299 = vmatpush.msra.mxu0 0.0
    %2300 = vmatpush.msra.mxu0 0.0
    %2301 = vmatpush.msra.mxu0 0.0
    %2302 = vmatpush.msra.mxu0 0.0
    %2303 = vmatpush.msra.mxu0 0.0
    %2304 = vmatpush.msra.mxu0 0.0
    %2305 = vmatpush.msra.mxu0 0.0
    %2306 = vmatpush.msra.mxu0 0.0
    %2307 = vmatpush.msra.mxu0 %v2210
    %2308 = vmatpush.msra.mxu0 %v2209
    %2309 = vmatpush.msra.mxu0 %v2208
    %2310 = vmatmul.f32.gmra.mxu0 %v2286
    %v2311 = vpop.f32.mrf.mxu0
    %v2312 = vadd.f32 0.0, %v2311
    %2313 = vmatmul.f32.gmra.mxu0 %v2289
    %v2314 = vpop.f32.mrf.mxu0
    %v2315 = vadd.f32 0.0, %v2314
    %2316 = vmatmul.f32.gmra.mxu0 %v2292
    %v2317 = vpop.f32.mrf.mxu0
    %v2318 = vadd.f32 0.0, %v2317
    %2319 = vdwg.mxu0
    %v2320 = vadd.f32 %v2197, %v2312
    %v2321 = vadd.f32 %v2200, %v2315
    %v2322 = vadd.f32 %v2203, %v2318
    %v2323 = vmul.f32 %v1926, %v334
    %v2324 = vmul.f32 %v1929, %v334
    %v2325 = vmul.f32 %v1932, %v334
    %v2326 = vmul.f32 %v1958, %v334
    %v2327 = vmul.f32 %v1961, %v334
    %v2328 = vmul.f32 %v1964, %v334
    %v2330 = vsel %vm130, %v2323, 0
    %v2333 = vsel %vm130, %v2324, 0
    %v2336 = vsel %vm130, %v2325, 0
    %2338 = vmatpush.xpose.msra.mxu0 0.0
    %2339 = vmatpush.xpose.msra.mxu0 0.0
    %2340 = vmatpush.xpose.msra.mxu0 0.0
    %2341 = vmatpush.xpose.msra.mxu0 0.0
    %2342 = vmatpush.xpose.msra.mxu0 0.0
    %2343 = vmatpush.xpose.msra.mxu0 0.0
    %2344 = vmatpush.xpose.msra.mxu0 0.0
    %2345 = vmatpush.xpose.msra.mxu0 0.0
    %2346 = vmatpush.xpose.msra.mxu0 0.0
    %2347 = vmatpush.xpose.msra.mxu0 0.0
    %2348 = vmatpush.xpose.msra.mxu0 0.0
    %2349 = vmatpush.xpose.msra.mxu0 0.0
    %2350 = vmatpush.xpose.msra.mxu0 0.0
    %2351 = vmatpush.xpose.msra.mxu0 %v2336
    %2352 = vmatpush.xpose.msra.mxu0 %v2333
    %2353 = vmatpush.xpose.msra.mxu0 %v2330
    %2354 = vmatmul.f32.gmra.mxu0 %v1973
    %v2355 = vpop.f32.mrf.mxu0
    %v2356 = vadd.f32 0.0, %v2355
    %2357 = vmatmul.f32.gmra.mxu0 %v1976
    %v2358 = vpop.f32.mrf.mxu0
    %v2359 = vadd.f32 0.0, %v2358
    %2360 = vmatmul.f32.gmra.mxu0 %v1979
    %v2361 = vpop.f32.mrf.mxu0
    %v2362 = vadd.f32 0.0, %v2361
    %2363 = vdwg.mxu0
    %v2364 = vmul.f32 %v2356, 0.5
    %v2365 = vmul.f32 %v2359, 0.5
    %v2366 = vmul.f32 %v2362, 0.5
    %v2367 = vadd.f32 %v2364, %v394
    %v2368 = vadd.f32 %v2365, %v395
    %v2369 = vadd.f32 %v2366, %v396
    %v2370 = vsel %vm652, %v2367, -inf
    %2371 = vmax.xlane.f32.xlu0 %v2370
    %v2372 = vpop.xlane.xlu0 %2371
    %v2373 = vsel %vm652, %v2368, -inf
    %2374 = vmax.xlane.f32.xlu0 %v2373
    %v2375 = vpop.xlane.xlu0 %2374
    %v2376 = vsel %vm652, %v2369, -inf
    %2377 = vmax.xlane.f32.xlu0 %v2376
    %v2378 = vpop.xlane.xlu0 %2377
    %v2379 = vsub.f32 %v2367, %v2372
    %v2380 = vsub.f32 %v2368, %v2375
    %v2381 = vsub.f32 %v2369, %v2378
    %v2382 = vmul.f32 %v2379, 1.442695
    %v2383 = vpow.pop %v2382
    %v2384 = vmul.f32 %v2380, 1.442695
    %v2385 = vpow.pop %v2384
    %v2386 = vmul.f32 %v2381, 1.442695
    %v2387 = vpow.pop %v2386
    %v2388 = vsel %vm652, %v2383, 0.0
    %2389 = vadd.xlane.f32.xlu0 %v2388
    %v2390 = vpop.xlane.xlu0 %2389
    %v2391 = vsel %vm652, %v2385, 0.0
    %2392 = vadd.xlane.f32.xlu0 %v2391
    %v2393 = vpop.xlane.xlu0 %2392
    %v2394 = vsel %vm652, %v2387, 0.0
    %2395 = vadd.xlane.f32.xlu0 %v2394
    %v2396 = vpop.xlane.xlu0 %2395
    %v2397 = vrcp.pop %v2390
    %v2398 = vrcp.pop %v2393
    %v2399 = vrcp.pop %v2396
    %v2400 = vmul.f32 %v2383, %v2397
    %v2401 = vmul.f32 %v2385, %v2398
    %v2402 = vmul.f32 %v2387, %v2399
    %v2404 = vsel %vm652, %v2400, 0
    %v2407 = vsel %vm652, %v2401, 0
    %v2410 = vsel %vm652, %v2402, 0
    %2412 = vmatpush.msra.mxu0 0.0
    %2413 = vmatpush.msra.mxu0 0.0
    %2414 = vmatpush.msra.mxu0 0.0
    %2415 = vmatpush.msra.mxu0 0.0
    %2416 = vmatpush.msra.mxu0 0.0
    %2417 = vmatpush.msra.mxu0 0.0
    %2418 = vmatpush.msra.mxu0 0.0
    %2419 = vmatpush.msra.mxu0 0.0
    %2420 = vmatpush.msra.mxu0 0.0
    %2421 = vmatpush.msra.mxu0 0.0
    %2422 = vmatpush.msra.mxu0 0.0
    %2423 = vmatpush.msra.mxu0 0.0
    %2424 = vmatpush.msra.mxu0 0.0
    %2425 = vmatpush.msra.mxu0 %v2328
    %2426 = vmatpush.msra.mxu0 %v2327
    %2427 = vmatpush.msra.mxu0 %v2326
    %2428 = vmatmul.f32.gmra.mxu0 %v2404
    %v2429 = vpop.f32.mrf.mxu0
    %v2430 = vadd.f32 0.0, %v2429
    %2431 = vmatmul.f32.gmra.mxu0 %v2407
    %v2432 = vpop.f32.mrf.mxu0
    %v2433 = vadd.f32 0.0, %v2432
    %2434 = vmatmul.f32.gmra.mxu0 %v2410
    %v2435 = vpop.f32.mrf.mxu0
    %v2436 = vadd.f32 0.0, %v2435
    %2437 = vdwg.mxu0
    %v2438 = vadd.f32 %v2320, %v2430
    %v2439 = vadd.f32 %v2321, %v2433
    %v2440 = vadd.f32 %v2322, %v2436
    %v2441 = vmul.f32 %v1926, %v339
    %v2442 = vmul.f32 %v1929, %v339
    %v2443 = vmul.f32 %v1932, %v339
    %v2444 = vmul.f32 %v1958, %v339
    %v2445 = vmul.f32 %v1961, %v339
    %v2446 = vmul.f32 %v1964, %v339
    %v2448 = vsel %vm130, %v2441, 0
    %v2451 = vsel %vm130, %v2442, 0
    %v2454 = vsel %vm130, %v2443, 0
    %2456 = vmatpush.xpose.msra.mxu0 0.0
    %2457 = vmatpush.xpose.msra.mxu0 0.0
    %2458 = vmatpush.xpose.msra.mxu0 0.0
    %2459 = vmatpush.xpose.msra.mxu0 0.0
    %2460 = vmatpush.xpose.msra.mxu0 0.0
    %2461 = vmatpush.xpose.msra.mxu0 0.0
    %2462 = vmatpush.xpose.msra.mxu0 0.0
    %2463 = vmatpush.xpose.msra.mxu0 0.0
    %2464 = vmatpush.xpose.msra.mxu0 0.0
    %2465 = vmatpush.xpose.msra.mxu0 0.0
    %2466 = vmatpush.xpose.msra.mxu0 0.0
    %2467 = vmatpush.xpose.msra.mxu0 0.0
    %2468 = vmatpush.xpose.msra.mxu0 0.0
    %2469 = vmatpush.xpose.msra.mxu0 %v2454
    %2470 = vmatpush.xpose.msra.mxu0 %v2451
    %2471 = vmatpush.xpose.msra.mxu0 %v2448
    %2472 = vmatmul.f32.gmra.mxu0 %v1973
    %v2473 = vpop.f32.mrf.mxu0
    %v2474 = vadd.f32 0.0, %v2473
    %2475 = vmatmul.f32.gmra.mxu0 %v1976
    %v2476 = vpop.f32.mrf.mxu0
    %v2477 = vadd.f32 0.0, %v2476
    %2478 = vmatmul.f32.gmra.mxu0 %v1979
    %v2479 = vpop.f32.mrf.mxu0
    %v2480 = vadd.f32 0.0, %v2479
    %2481 = vdwg.mxu0
    %v2482 = vmul.f32 %v2474, 0.5
    %v2483 = vmul.f32 %v2477, 0.5
    %v2484 = vmul.f32 %v2480, 0.5
    %v2485 = vadd.f32 %v2482, %v394
    %v2486 = vadd.f32 %v2483, %v395
    %v2487 = vadd.f32 %v2484, %v396
    %v2488 = vsel %vm652, %v2485, -inf
    %2489 = vmax.xlane.f32.xlu0 %v2488
    %v2490 = vpop.xlane.xlu0 %2489
    %v2491 = vsel %vm652, %v2486, -inf
    %2492 = vmax.xlane.f32.xlu0 %v2491
    %v2493 = vpop.xlane.xlu0 %2492
    %v2494 = vsel %vm652, %v2487, -inf
    %2495 = vmax.xlane.f32.xlu0 %v2494
    %v2496 = vpop.xlane.xlu0 %2495
    %v2497 = vsub.f32 %v2485, %v2490
    %v2498 = vsub.f32 %v2486, %v2493
    %v2499 = vsub.f32 %v2487, %v2496
    %v2500 = vmul.f32 %v2497, 1.442695
    %v2501 = vpow.pop %v2500
    %v2502 = vmul.f32 %v2498, 1.442695
    %v2503 = vpow.pop %v2502
    %v2504 = vmul.f32 %v2499, 1.442695
    %v2505 = vpow.pop %v2504
    %v2506 = vsel %vm652, %v2501, 0.0
    %2507 = vadd.xlane.f32.xlu0 %v2506
    %v2508 = vpop.xlane.xlu0 %2507
    %v2509 = vsel %vm652, %v2503, 0.0
    %2510 = vadd.xlane.f32.xlu0 %v2509
    %v2511 = vpop.xlane.xlu0 %2510
    %v2512 = vsel %vm652, %v2505, 0.0
    %2513 = vadd.xlane.f32.xlu0 %v2512
    %v2514 = vpop.xlane.xlu0 %2513
    %v2515 = vrcp.pop %v2508
    %v2516 = vrcp.pop %v2511
    %v2517 = vrcp.pop %v2514
    %v2518 = vmul.f32 %v2501, %v2515
    %v2519 = vmul.f32 %v2503, %v2516
    %v2520 = vmul.f32 %v2505, %v2517
    %v2522 = vsel %vm652, %v2518, 0
    %v2525 = vsel %vm652, %v2519, 0
    %v2528 = vsel %vm652, %v2520, 0
    %2530 = vmatpush.msra.mxu0 0.0
    %2531 = vmatpush.msra.mxu0 0.0
    %2532 = vmatpush.msra.mxu0 0.0
    %2533 = vmatpush.msra.mxu0 0.0
    %2534 = vmatpush.msra.mxu0 0.0
    %2535 = vmatpush.msra.mxu0 0.0
    %2536 = vmatpush.msra.mxu0 0.0
    %2537 = vmatpush.msra.mxu0 0.0
    %2538 = vmatpush.msra.mxu0 0.0
    %2539 = vmatpush.msra.mxu0 0.0
    %2540 = vmatpush.msra.mxu0 0.0
    %2541 = vmatpush.msra.mxu0 0.0
    %2542 = vmatpush.msra.mxu0 0.0
    %2543 = vmatpush.msra.mxu0 %v2446
    %2544 = vmatpush.msra.mxu0 %v2445
    %2545 = vmatpush.msra.mxu0 %v2444
    %2546 = vmatmul.f32.gmra.mxu0 %v2522
    %v2547 = vpop.f32.mrf.mxu0
    %v2548 = vadd.f32 0.0, %v2547
    %2549 = vmatmul.f32.gmra.mxu0 %v2525
    %v2550 = vpop.f32.mrf.mxu0
    %v2551 = vadd.f32 0.0, %v2550
    %2552 = vmatmul.f32.gmra.mxu0 %v2528
    %v2553 = vpop.f32.mrf.mxu0
    %v2554 = vadd.f32 0.0, %v2553
    %2555 = vdwg.mxu0
    %v2556 = vadd.f32 %v2438, %v2548
    %v2557 = vadd.f32 %v2439, %v2551
    %v2558 = vadd.f32 %v2440, %v2554
    %v2559 = vmul.f32 %v1926, %v344
    %v2560 = vmul.f32 %v1929, %v344
    %v2561 = vmul.f32 %v1932, %v344
    %v2562 = vmul.f32 %v1958, %v344
    %v2563 = vmul.f32 %v1961, %v344
    %v2564 = vmul.f32 %v1964, %v344
    %v2566 = vsel %vm130, %v2559, 0
    %v2569 = vsel %vm130, %v2560, 0
    %v2572 = vsel %vm130, %v2561, 0
    %2574 = vmatpush.xpose.msra.mxu0 0.0
    %2575 = vmatpush.xpose.msra.mxu0 0.0
    %2576 = vmatpush.xpose.msra.mxu0 0.0
    %2577 = vmatpush.xpose.msra.mxu0 0.0
    %2578 = vmatpush.xpose.msra.mxu0 0.0
    %2579 = vmatpush.xpose.msra.mxu0 0.0
    %2580 = vmatpush.xpose.msra.mxu0 0.0
    %2581 = vmatpush.xpose.msra.mxu0 0.0
    %2582 = vmatpush.xpose.msra.mxu0 0.0
    %2583 = vmatpush.xpose.msra.mxu0 0.0
    %2584 = vmatpush.xpose.msra.mxu0 0.0
    %2585 = vmatpush.xpose.msra.mxu0 0.0
    %2586 = vmatpush.xpose.msra.mxu0 0.0
    %2587 = vmatpush.xpose.msra.mxu0 %v2572
    %2588 = vmatpush.xpose.msra.mxu0 %v2569
    %2589 = vmatpush.xpose.msra.mxu0 %v2566
    %2590 = vmatmul.f32.gmra.mxu0 %v1973
    %v2591 = vpop.f32.mrf.mxu0
    %v2592 = vadd.f32 0.0, %v2591
    %2593 = vmatmul.f32.gmra.mxu0 %v1976
    %v2594 = vpop.f32.mrf.mxu0
    %v2595 = vadd.f32 0.0, %v2594
    %2596 = vmatmul.f32.gmra.mxu0 %v1979
    %v2597 = vpop.f32.mrf.mxu0
    %v2598 = vadd.f32 0.0, %v2597
    %2599 = vdwg.mxu0
    %v2600 = vmul.f32 %v2592, 0.5
    %v2601 = vmul.f32 %v2595, 0.5
    %v2602 = vmul.f32 %v2598, 0.5
    %v2603 = vadd.f32 %v2600, %v394
    %v2604 = vadd.f32 %v2601, %v395
    %v2605 = vadd.f32 %v2602, %v396
    %v2606 = vsel %vm652, %v2603, -inf
    %2607 = vmax.xlane.f32.xlu0 %v2606
    %v2608 = vpop.xlane.xlu0 %2607
    %v2609 = vsel %vm652, %v2604, -inf
    %2610 = vmax.xlane.f32.xlu0 %v2609
    %v2611 = vpop.xlane.xlu0 %2610
    %v2612 = vsel %vm652, %v2605, -inf
    %2613 = vmax.xlane.f32.xlu0 %v2612
    %v2614 = vpop.xlane.xlu0 %2613
    %v2615 = vsub.f32 %v2603, %v2608
    %v2616 = vsub.f32 %v2604, %v2611
    %v2617 = vsub.f32 %v2605, %v2614
    %v2618 = vmul.f32 %v2615, 1.442695
    %v2619 = vpow.pop %v2618
    %v2620 = vmul.f32 %v2616, 1.442695
    %v2621 = vpow.pop %v2620
    %v2622 = vmul.f32 %v2617, 1.442695
    %v2623 = vpow.pop %v2622
    %v2624 = vsel %vm652, %v2619, 0.0
    %2625 = vadd.xlane.f32.xlu0 %v2624
    %v2626 = vpop.xlane.xlu0 %2625
    %v2627 = vsel %vm652, %v2621, 0.0
    %2628 = vadd.xlane.f32.xlu0 %v2627
    %v2629 = vpop.xlane.xlu0 %2628
    %v2630 = vsel %vm652, %v2623, 0.0
    %2631 = vadd.xlane.f32.xlu0 %v2630
    %v2632 = vpop.xlane.xlu0 %2631
    %v2633 = vrcp.pop %v2626
    %v2634 = vrcp.pop %v2629
    %v2635 = vrcp.pop %v2632
    %v2636 = vmul.f32 %v2619, %v2633
    %v2637 = vmul.f32 %v2621, %v2634
    %v2638 = vmul.f32 %v2623, %v2635
    %v2640 = vsel %vm652, %v2636, 0
    %v2643 = vsel %vm652, %v2637, 0
    %v2646 = vsel %vm652, %v2638, 0
    %2648 = vmatpush.msra.mxu0 0.0
    %2649 = vmatpush.msra.mxu0 0.0
    %2650 = vmatpush.msra.mxu0 0.0
    %2651 = vmatpush.msra.mxu0 0.0
    %2652 = vmatpush.msra.mxu0 0.0
    %2653 = vmatpush.msra.mxu0 0.0
    %2654 = vmatpush.msra.mxu0 0.0
    %2655 = vmatpush.msra.mxu0 0.0
    %2656 = vmatpush.msra.mxu0 0.0
    %2657 = vmatpush.msra.mxu0 0.0
    %2658 = vmatpush.msra.mxu0 0.0
    %2659 = vmatpush.msra.mxu0 0.0
    %2660 = vmatpush.msra.mxu0 0.0
    %2661 = vmatpush.msra.mxu0 %v2564
    %2662 = vmatpush.msra.mxu0 %v2563
    %2663 = vmatpush.msra.mxu0 %v2562
    %2664 = vmatmul.f32.gmra.mxu0 %v2640
    %v2665 = vpop.f32.mrf.mxu0
    %v2666 = vadd.f32 0.0, %v2665
    %2667 = vmatmul.f32.gmra.mxu0 %v2643
    %v2668 = vpop.f32.mrf.mxu0
    %v2669 = vadd.f32 0.0, %v2668
    %2670 = vmatmul.f32.gmra.mxu0 %v2646
    %v2671 = vpop.f32.mrf.mxu0
    %v2672 = vadd.f32 0.0, %v2671
    %2673 = vdwg.mxu0
    %v2674 = vadd.f32 %v2556, %v2666
    %v2675 = vadd.f32 %v2557, %v2669
    %v2676 = vadd.f32 %v2558, %v2672
    %v2677 = vmul.f32 %v1926, %v349
    %v2678 = vmul.f32 %v1929, %v349
    %v2679 = vmul.f32 %v1932, %v349
    %v2680 = vmul.f32 %v1958, %v349
    %v2681 = vmul.f32 %v1961, %v349
    %v2682 = vmul.f32 %v1964, %v349
    %v2684 = vsel %vm130, %v2677, 0
    %v2687 = vsel %vm130, %v2678, 0
    %v2690 = vsel %vm130, %v2679, 0
    %2692 = vmatpush.xpose.msra.mxu0 0.0
    %2693 = vmatpush.xpose.msra.mxu0 0.0
    %2694 = vmatpush.xpose.msra.mxu0 0.0
    %2695 = vmatpush.xpose.msra.mxu0 0.0
    %2696 = vmatpush.xpose.msra.mxu0 0.0
    %2697 = vmatpush.xpose.msra.mxu0 0.0
    %2698 = vmatpush.xpose.msra.mxu0 0.0
    %2699 = vmatpush.xpose.msra.mxu0 0.0
    %2700 = vmatpush.xpose.msra.mxu0 0.0
    %2701 = vmatpush.xpose.msra.mxu0 0.0
    %2702 = vmatpush.xpose.msra.mxu0 0.0
    %2703 = vmatpush.xpose.msra.mxu0 0.0
    %2704 = vmatpush.xpose.msra.mxu0 0.0
    %2705 = vmatpush.xpose.msra.mxu0 %v2690
    %2706 = vmatpush.xpose.msra.mxu0 %v2687
    %2707 = vmatpush.xpose.msra.mxu0 %v2684
    %2708 = vmatmul.f32.gmra.mxu0 %v1973
    %v2709 = vpop.f32.mrf.mxu0
    %v2710 = vadd.f32 0.0, %v2709
    %2711 = vmatmul.f32.gmra.mxu0 %v1976
    %v2712 = vpop.f32.mrf.mxu0
    %v2713 = vadd.f32 0.0, %v2712
    %2714 = vmatmul.f32.gmra.mxu0 %v1979
    %v2715 = vpop.f32.mrf.mxu0
    %v2716 = vadd.f32 0.0, %v2715
    %2717 = vdwg.mxu0
    %v2718 = vmul.f32 %v2710, 0.5
    %v2719 = vmul.f32 %v2713, 0.5
    %v2720 = vmul.f32 %v2716, 0.5
    %v2721 = vadd.f32 %v2718, %v394
    %v2722 = vadd.f32 %v2719, %v395
    %v2723 = vadd.f32 %v2720, %v396
    %v2724 = vsel %vm652, %v2721, -inf
    %2725 = vmax.xlane.f32.xlu0 %v2724
    %v2726 = vpop.xlane.xlu0 %2725
    %v2727 = vsel %vm652, %v2722, -inf
    %2728 = vmax.xlane.f32.xlu0 %v2727
    %v2729 = vpop.xlane.xlu0 %2728
    %v2730 = vsel %vm652, %v2723, -inf
    %2731 = vmax.xlane.f32.xlu0 %v2730
    %v2732 = vpop.xlane.xlu0 %2731
    %v2733 = vsub.f32 %v2721, %v2726
    %v2734 = vsub.f32 %v2722, %v2729
    %v2735 = vsub.f32 %v2723, %v2732
    %v2736 = vmul.f32 %v2733, 1.442695
    %v2737 = vpow.pop %v2736
    %v2738 = vmul.f32 %v2734, 1.442695
    %v2739 = vpow.pop %v2738
    %v2740 = vmul.f32 %v2735, 1.442695
    %v2741 = vpow.pop %v2740
    %v2742 = vsel %vm652, %v2737, 0.0
    %2743 = vadd.xlane.f32.xlu0 %v2742
    %v2744 = vpop.xlane.xlu0 %2743
    %v2745 = vsel %vm652, %v2739, 0.0
    %2746 = vadd.xlane.f32.xlu0 %v2745
    %v2747 = vpop.xlane.xlu0 %2746
    %v2748 = vsel %vm652, %v2741, 0.0
    %2749 = vadd.xlane.f32.xlu0 %v2748
    %v2750 = vpop.xlane.xlu0 %2749
    %v2751 = vrcp.pop %v2744
    %v2752 = vrcp.pop %v2747
    %v2753 = vrcp.pop %v2750
    %v2754 = vmul.f32 %v2737, %v2751
    %v2755 = vmul.f32 %v2739, %v2752
    %v2756 = vmul.f32 %v2741, %v2753
    %v2758 = vsel %vm652, %v2754, 0
    %v2761 = vsel %vm652, %v2755, 0
    %v2764 = vsel %vm652, %v2756, 0
    %2766 = vmatpush.msra.mxu0 0.0
    %2767 = vmatpush.msra.mxu0 0.0
    %2768 = vmatpush.msra.mxu0 0.0
    %2769 = vmatpush.msra.mxu0 0.0
    %2770 = vmatpush.msra.mxu0 0.0
    %2771 = vmatpush.msra.mxu0 0.0
    %2772 = vmatpush.msra.mxu0 0.0
    %2773 = vmatpush.msra.mxu0 0.0
    %2774 = vmatpush.msra.mxu0 0.0
    %2775 = vmatpush.msra.mxu0 0.0
    %2776 = vmatpush.msra.mxu0 0.0
    %2777 = vmatpush.msra.mxu0 0.0
    %2778 = vmatpush.msra.mxu0 0.0
    %2779 = vmatpush.msra.mxu0 %v2682
    %2780 = vmatpush.msra.mxu0 %v2681
    %2781 = vmatpush.msra.mxu0 %v2680
    %2782 = vmatmul.f32.gmra.mxu0 %v2758
    %v2783 = vpop.f32.mrf.mxu0
    %v2784 = vadd.f32 0.0, %v2783
    %2785 = vmatmul.f32.gmra.mxu0 %v2761
    %v2786 = vpop.f32.mrf.mxu0
    %v2787 = vadd.f32 0.0, %v2786
    %2788 = vmatmul.f32.gmra.mxu0 %v2764
    %v2789 = vpop.f32.mrf.mxu0
    %v2790 = vadd.f32 0.0, %v2789
    %2791 = vdwg.mxu0
    %v2792 = vadd.f32 %v2674, %v2784
    %v2793 = vadd.f32 %v2675, %v2787
    %v2794 = vadd.f32 %v2676, %v2790
    %v2795 = vmul.f32 %v1926, %v354
    %v2796 = vmul.f32 %v1929, %v354
    %v2797 = vmul.f32 %v1932, %v354
    %v2798 = vmul.f32 %v1958, %v354
    %v2799 = vmul.f32 %v1961, %v354
    %v2800 = vmul.f32 %v1964, %v354
    %v2802 = vsel %vm130, %v2795, 0
    %v2805 = vsel %vm130, %v2796, 0
    %v2808 = vsel %vm130, %v2797, 0
    %2810 = vmatpush.xpose.msra.mxu0 0.0
    %2811 = vmatpush.xpose.msra.mxu0 0.0
    %2812 = vmatpush.xpose.msra.mxu0 0.0
    %2813 = vmatpush.xpose.msra.mxu0 0.0
    %2814 = vmatpush.xpose.msra.mxu0 0.0
    %2815 = vmatpush.xpose.msra.mxu0 0.0
    %2816 = vmatpush.xpose.msra.mxu0 0.0
    %2817 = vmatpush.xpose.msra.mxu0 0.0
    %2818 = vmatpush.xpose.msra.mxu0 0.0
    %2819 = vmatpush.xpose.msra.mxu0 0.0
    %2820 = vmatpush.xpose.msra.mxu0 0.0
    %2821 = vmatpush.xpose.msra.mxu0 0.0
    %2822 = vmatpush.xpose.msra.mxu0 0.0
    %2823 = vmatpush.xpose.msra.mxu0 %v2808
    %2824 = vmatpush.xpose.msra.mxu0 %v2805
    %2825 = vmatpush.xpose.msra.mxu0 %v2802
    %2826 = vmatmul.f32.gmra.mxu0 %v1973
    %v2827 = vpop.f32.mrf.mxu0
    %v2828 = vadd.f32 0.0, %v2827
    %2829 = vmatmul.f32.gmra.mxu0 %v1976
    %v2830 = vpop.f32.mrf.mxu0
    %v2831 = vadd.f32 0.0, %v2830
    %2832 = vmatmul.f32.gmra.mxu0 %v1979
    %v2833 = vpop.f32.mrf.mxu0
    %v2834 = vadd.f32 0.0, %v2833
    %2835 = vdwg.mxu0
    %v2836 = vmul.f32 %v2828, 0.5
    %v2837 = vmul.f32 %v2831, 0.5
    %v2838 = vmul.f32 %v2834, 0.5
    %v2839 = vadd.f32 %v2836, %v394
    %v2840 = vadd.f32 %v2837, %v395
    %v2841 = vadd.f32 %v2838, %v396
    %v2842 = vsel %vm652, %v2839, -inf
    %2843 = vmax.xlane.f32.xlu0 %v2842
    %v2844 = vpop.xlane.xlu0 %2843
    %v2845 = vsel %vm652, %v2840, -inf
    %2846 = vmax.xlane.f32.xlu0 %v2845
    %v2847 = vpop.xlane.xlu0 %2846
    %v2848 = vsel %vm652, %v2841, -inf
    %2849 = vmax.xlane.f32.xlu0 %v2848
    %v2850 = vpop.xlane.xlu0 %2849
    %v2851 = vsub.f32 %v2839, %v2844
    %v2852 = vsub.f32 %v2840, %v2847
    %v2853 = vsub.f32 %v2841, %v2850
    %v2854 = vmul.f32 %v2851, 1.442695
    %v2855 = vpow.pop %v2854
    %v2856 = vmul.f32 %v2852, 1.442695
    %v2857 = vpow.pop %v2856
    %v2858 = vmul.f32 %v2853, 1.442695
    %v2859 = vpow.pop %v2858
    %v2860 = vsel %vm652, %v2855, 0.0
    %2861 = vadd.xlane.f32.xlu0 %v2860
    %v2862 = vpop.xlane.xlu0 %2861
    %v2863 = vsel %vm652, %v2857, 0.0
    %2864 = vadd.xlane.f32.xlu0 %v2863
    %v2865 = vpop.xlane.xlu0 %2864
    %v2866 = vsel %vm652, %v2859, 0.0
    %2867 = vadd.xlane.f32.xlu0 %v2866
    %v2868 = vpop.xlane.xlu0 %2867
    %v2869 = vrcp.pop %v2862
    %v2870 = vrcp.pop %v2865
    %v2871 = vrcp.pop %v2868
    %v2872 = vmul.f32 %v2855, %v2869
    %v2873 = vmul.f32 %v2857, %v2870
    %v2874 = vmul.f32 %v2859, %v2871
    %v2876 = vsel %vm652, %v2872, 0
    %v2879 = vsel %vm652, %v2873, 0
    %v2882 = vsel %vm652, %v2874, 0
    %2884 = vmatpush.msra.mxu0 0.0
    %2885 = vmatpush.msra.mxu0 0.0
    %2886 = vmatpush.msra.mxu0 0.0
    %2887 = vmatpush.msra.mxu0 0.0
    %2888 = vmatpush.msra.mxu0 0.0
    %2889 = vmatpush.msra.mxu0 0.0
    %2890 = vmatpush.msra.mxu0 0.0
    %2891 = vmatpush.msra.mxu0 0.0
    %2892 = vmatpush.msra.mxu0 0.0
    %2893 = vmatpush.msra.mxu0 0.0
    %2894 = vmatpush.msra.mxu0 0.0
    %2895 = vmatpush.msra.mxu0 0.0
    %2896 = vmatpush.msra.mxu0 0.0
    %2897 = vmatpush.msra.mxu0 %v2800
    %2898 = vmatpush.msra.mxu0 %v2799
    %2899 = vmatpush.msra.mxu0 %v2798
    %2900 = vmatmul.f32.gmra.mxu0 %v2876
    %v2901 = vpop.f32.mrf.mxu0
    %v2902 = vadd.f32 0.0, %v2901
    %2903 = vmatmul.f32.gmra.mxu0 %v2879
    %v2904 = vpop.f32.mrf.mxu0
    %v2905 = vadd.f32 0.0, %v2904
    %2906 = vmatmul.f32.gmra.mxu0 %v2882
    %v2907 = vpop.f32.mrf.mxu0
    %v2908 = vadd.f32 0.0, %v2907
    %2909 = vdwg.mxu0
    %v2910 = vadd.f32 %v2792, %v2902
    %v2911 = vadd.f32 %v2793, %v2905
    %v2912 = vadd.f32 %v2794, %v2908
    %v2913 = vld [vmem:[%s2 + $0x130] sm:$0xff]
    %v2914 = vld [vmem:[%s2 + $0x138] sm:$0xff]
    %v2915 = vld [vmem:[%s2 + $0x140] sm:$0xff]
    %v2916 = vld [vmem:[%s2 + $0x148] sm:$0xff]
    %v2918 = vsel %vm130, %v2910, 0
    %v2921 = vsel %vm130, %v2911, 0
    %v2924 = vsel %vm130, %v2912, 0
    %2926 = vmatpush.msra.mxu0 0.0
    %2927 = vmatpush.msra.mxu0 0.0
    %2928 = vmatpush.msra.mxu0 0.0
    %2929 = vmatpush.msra.mxu0 0.0
    %2930 = vmatpush.msra.mxu0 0.0
    %2931 = vmatpush.msra.mxu0 0.0
    %2932 = vmatpush.msra.mxu0 0.0
    %2933 = vmatpush.msra.mxu0 0.0
    %2934 = vmatpush.msra.mxu0 0.0
    %2935 = vmatpush.msra.mxu0 0.0
    %2936 = vmatpush.msra.mxu0 0.0
    %2937 = vmatpush.msra.mxu0 0.0
    %2938 = vmatpush.msra.mxu0 %v2916
    %2939 = vmatpush.msra.mxu0 %v2915
    %2940 = vmatpush.msra.mxu0 %v2914
    %2941 = vmatpush.msra.mxu0 %v2913
    %2942 = vmatmul.f32.gmra.mxu0 %v2918
    %v2943 = vpop.f32.mrf.mxu0
    %v2944 = vadd.f32 0.0, %v2943
    %2945 = vmatmul.f32.gmra.mxu0 %v2921
    %v2946 = vpop.f32.mrf.mxu0
    %v2947 = vadd.f32 0.0, %v2946
    %2948 = vmatmul.f32.gmra.mxu0 %v2924
    %v2949 = vpop.f32.mrf.mxu0
    %v2950 = vadd.f32 0.0, %v2949
    %2951 = vdwg.mxu0
    %v2952 = vadd.f32 %v1764, %v2944
    %v2953 = vadd.f32 %v1765, %v2947
    %v2954 = vadd.f32 %v1766, %v2950
    %v2955 = vld [vmem:[%s2 + $0x195] sm:$0x1]
    %v2956 = vperm.slane %v2955, 0
    %v2957 = vadd.f32 %v2952, %v2956
    %v2958 = vadd.f32 %v2953, %v2956
    %v2959 = vadd.f32 %v2954, %v2956
    %v2960 = vld [vmem:[%s2 + $0x196] sm:$0x1]
    %v2961 = vld [vmem:[%s2 + $0x197] sm:$0x1]
    %v2962 = vsel %vm130, %v2957, 0.0
    %2963 = vadd.xlane.f32.xlu0 %v2962
    %v2964 = vpop.xlane.xlu0 %2963
    %v2965 = vsel %vm130, %v2958, 0.0
    %2966 = vadd.xlane.f32.xlu0 %v2965
    %v2967 = vpop.xlane.xlu0 %2966
    %v2968 = vsel %vm130, %v2959, 0.0
    %2969 = vadd.xlane.f32.xlu0 %v2968
    %v2970 = vpop.xlane.xlu0 %2969
    %v2971 = vmul.f32 %v2964, %v240
    %v2972 = vmul.f32 %v2967, %v240
    %v2973 = vmul.f32 %v2970, %v240
    %v2974 = vsub.f32 %v2957, %v2971
    %v2975 = vsub.f32 %v2958, %v2972
    %v2976 = vsub.f32 %v2959, %v2973
    %v2977 = vmul.f32 %v2974, %v2974
    %v2978 = vmul.f32 %v2975, %v2975
    %v2979 = vmul.f32 %v2976, %v2976
    %v2980 = vsel %vm130, %v2977, 0.0
    %2981 = vadd.xlane.f32.xlu0 %v2980
    %v2982 = vpop.xlane.xlu0 %2981
    %v2983 = vsel %vm130, %v2978, 0.0
    %2984 = vadd.xlane.f32.xlu0 %v2983
    %v2985 = vpop.xlane.xlu0 %2984
    %v2986 = vsel %vm130, %v2979, 0.0
    %2987 = vadd.xlane.f32.xlu0 %v2986
    %v2988 = vpop.xlane.xlu0 %2987
    %v2989 = vmul.f32 %v2982, 0.032258064
    %v2990 = vmul.f32 %v2985, 0.032258064
    %v2991 = vmul.f32 %v2988, 0.032258064
    %v2992 = vrsqrt.pop %v2989
    %v2993 = vmul.f32 %v2992, %v2989
    %v2994 = vmul.f32 %v2993, %v2992
    %v2995 = vmul.f32 0.5, %v2994
    %v2996 = vsub.f32 1.5, %v2995
    %v2997 = vmul.f32 %v2992, %v2996
    %v2998 = vmul.f32 %v2989, %v2997
    %vm2999 = vcmp.eq.f32.partialorder %v2989, inf
    %v3000 = vsel %vm2999, %v2989, %v2998
    %vm3001 = vcmp.eq.f32.partialorder %v2989, 0.0
    %v3002 = vand.u32 %v2989, 2147483648
    %v3003 = vsel %vm3001, %v3002, %v3000
    %v3004 = vrsqrt.pop %v2990
    %v3005 = vmul.f32 %v3004, %v2990
    %v3006 = vmul.f32 %v3005, %v3004
    %v3007 = vmul.f32 0.5, %v3006
    %v3008 = vsub.f32 1.5, %v3007
    %v3009 = vmul.f32 %v3004, %v3008
    %v3010 = vmul.f32 %v2990, %v3009
    %vm3011 = vcmp.eq.f32.partialorder %v2990, inf
    %v3012 = vsel %vm3011, %v2990, %v3010
    %vm3013 = vcmp.eq.f32.partialorder %v2990, 0.0
    %v3014 = vand.u32 %v2990, 2147483648
    %v3015 = vsel %vm3013, %v3014, %v3012
    %v3016 = vrsqrt.pop %v2991
    %v3017 = vmul.f32 %v3016, %v2991
    %v3018 = vmul.f32 %v3017, %v3016
    %v3019 = vmul.f32 0.5, %v3018
    %v3020 = vsub.f32 1.5, %v3019
    %v3021 = vmul.f32 %v3016, %v3020
    %v3022 = vmul.f32 %v2991, %v3021
    %vm3023 = vcmp.eq.f32.partialorder %v2991, inf
    %v3024 = vsel %vm3023, %v2991, %v3022
    %vm3025 = vcmp.eq.f32.partialorder %v2991, 0.0
    %v3026 = vand.u32 %v2991, 2147483648
    %v3027 = vsel %vm3025, %v3026, %v3024
    %v3028 = vadd.f32 %v3003, 1e-06
    %v3029 = vadd.f32 %v3015, 1e-06
    %v3030 = vadd.f32 %v3027, 1e-06
    %v3031 = vrcp.pop %v3028
    %v3032 = vrcp.pop %v3029
    %v3033 = vrcp.pop %v3030
    %v3034 = vperm.slane %v2960, 0
    %v3035 = vmul.f32 %v3034, %v2974
    %v3036 = vmul.f32 %v3034, %v2975
    %v3037 = vmul.f32 %v3034, %v2976
    %v3038 = vmul.f32 %v3035, %v3031
    %v3039 = vmul.f32 %v3036, %v3032
    %v3040 = vmul.f32 %v3037, %v3033
    %v3041 = vperm.slane %v2961, 0
    %v3042 = vadd.f32 %v3038, %v3041
    %v3043 = vadd.f32 %v3039, %v3041
    %v3044 = vadd.f32 %v3040, %v3041
    %v3045 = vld [vmem:[%s2 + $0x150] sm:$0xff]
    %v3046 = vld [vmem:[%s2 + $0x158] sm:$0xff]
    %v3047 = vld [vmem:[%s2 + $0x160] sm:$0xff]
    %v3048 = vld [vmem:[%s2 + $0x168] sm:$0xff]
    %v3049 = vld [vmem:[%s2 + $0x198] sm:$0x1]
    %v3050 = vperm.slane %v3049, 0
    %v3052 = vsel %vm130, %v3042, 0
    %v3055 = vsel %vm130, %v3043, 0
    %v3058 = vsel %vm130, %v3044, 0
    %3060 = vmatpush.msra.mxu0 0.0
    %3061 = vmatpush.msra.mxu0 0.0
    %3062 = vmatpush.msra.mxu0 0.0
    %3063 = vmatpush.msra.mxu0 0.0
    %3064 = vmatpush.msra.mxu0 0.0
    %3065 = vmatpush.msra.mxu0 0.0
    %3066 = vmatpush.msra.mxu0 0.0
    %3067 = vmatpush.msra.mxu0 0.0
    %3068 = vmatpush.msra.mxu0 0.0
    %3069 = vmatpush.msra.mxu0 0.0
    %3070 = vmatpush.msra.mxu0 0.0
    %3071 = vmatpush.msra.mxu0 0.0
    %3072 = vmatpush.msra.mxu0 %v3048
    %3073 = vmatpush.msra.mxu0 %v3047
    %3074 = vmatpush.msra.mxu0 %v3046
    %3075 = vmatpush.msra.mxu0 %v3045
    %3076 = vmatmul.f32.gmra.mxu0 %v3052
    %v3077 = vpop.f32.mrf.mxu0
    %v3078 = vadd.f32 %v3050, %v3077
    %3079 = vmatmul.f32.gmra.mxu0 %v3055
    %v3080 = vpop.f32.mrf.mxu0
    %v3081 = vadd.f32 %v3050, %v3080
    %3082 = vmatmul.f32.gmra.mxu0 %v3058
    %v3083 = vpop.f32.mrf.mxu0
    %v3084 = vadd.f32 %v3050, %v3083
    %3085 = vdwg.mxu0
    %v3086 = vmax.f32 %v3078, 0.0
    %v3087 = vmax.f32 %v3081, 0.0
    %v3088 = vmax.f32 %v3084, 0.0
    %v3089 = vld [vmem:[%s2 + $0x170] sm:$0xff]
    %v3090 = vld [vmem:[%s2 + $0x178] sm:$0xff]
    %v3091 = vld [vmem:[%s2 + $0x180] sm:$0xff]
    %v3092 = vld [vmem:[%s2 + $0x188] sm:$0xff]
    %v3094 = vsel %vm130, %v3086, 0
    %v3097 = vsel %vm130, %v3087, 0
    %v3100 = vsel %vm130, %v3088, 0
    %3102 = vmatpush.msra.mxu0 0.0
    %3103 = vmatpush.msra.mxu0 0.0
    %3104 = vmatpush.msra.mxu0 0.0
    %3105 = vmatpush.msra.mxu0 0.0
    %3106 = vmatpush.msra.mxu0 0.0
    %3107 = vmatpush.msra.mxu0 0.0
    %3108 = vmatpush.msra.mxu0 0.0
    %3109 = vmatpush.msra.mxu0 0.0
    %3110 = vmatpush.msra.mxu0 0.0
    %3111 = vmatpush.msra.mxu0 0.0
    %3112 = vmatpush.msra.mxu0 0.0
    %3113 = vmatpush.msra.mxu0 0.0
    %3114 = vmatpush.msra.mxu0 %v3092
    %3115 = vmatpush.msra.mxu0 %v3091
    %3116 = vmatpush.msra.mxu0 %v3090
    %3117 = vmatpush.msra.mxu0 %v3089
    %3118 = vmatmul.f32.gmra.mxu0 %v3094
    %v3119 = vpop.f32.mrf.mxu0
    %v3120 = vadd.f32 0.0, %v3119
    %3121 = vmatmul.f32.gmra.mxu0 %v3097
    %v3122 = vpop.f32.mrf.mxu0
    %v3123 = vadd.f32 0.0, %v3122
    %3124 = vmatmul.f32.gmra.mxu0 %v3100
    %v3125 = vpop.f32.mrf.mxu0
    %v3126 = vadd.f32 0.0, %v3125
    %3127 = vdwg.mxu0
    %v3128 = vadd.f32 %v2957, %v3120
    %v3129 = vadd.f32 %v2958, %v3123
    %v3130 = vadd.f32 %v2959, %v3126
    %v3131 = vld [vmem:[%s2 + $0x199] sm:$0x1]
    %v3132 = vperm.slane %v3131, 0
    %v3133 = vadd.f32 %v3128, %v3132
    %v3134 = vadd.f32 %v3129, %v3132
    %v3135 = vadd.f32 %v3130, %v3132
    %v3136 = vld [vmem:[%s2 + $0x260] sm:$0x1]
    %v3137 = vld [vmem:[%s2 + $0x261] sm:$0x1]
    %v3138 = vsel %vm130, %v3133, 0.0
    %3139 = vadd.xlane.f32.xlu0 %v3138
    %v3140 = vpop.xlane.xlu0 %3139
    %v3141 = vsel %vm130, %v3134, 0.0
    %3142 = vadd.xlane.f32.xlu0 %v3141
    %v3143 = vpop.xlane.xlu0 %3142
    %v3144 = vsel %vm130, %v3135, 0.0
    %3145 = vadd.xlane.f32.xlu0 %v3144
    %v3146 = vpop.xlane.xlu0 %3145
    %v3147 = vmul.f32 %v3140, %v240
    %v3148 = vmul.f32 %v3143, %v240
    %v3149 = vmul.f32 %v3146, %v240
    %v3150 = vsub.f32 %v3133, %v3147
    %v3151 = vsub.f32 %v3134, %v3148
    %v3152 = vsub.f32 %v3135, %v3149
    %v3153 = vmul.f32 %v3150, %v3150
    %v3154 = vmul.f32 %v3151, %v3151
    %v3155 = vmul.f32 %v3152, %v3152
    %v3156 = vsel %vm130, %v3153, 0.0
    %3157 = vadd.xlane.f32.xlu0 %v3156
    %v3158 = vpop.xlane.xlu0 %3157
    %v3159 = vsel %vm130, %v3154, 0.0
    %3160 = vadd.xlane.f32.xlu0 %v3159
    %v3161 = vpop.xlane.xlu0 %3160
    %v3162 = vsel %vm130, %v3155, 0.0
    %3163 = vadd.xlane.f32.xlu0 %v3162
    %v3164 = vpop.xlane.xlu0 %3163
    %v3165 = vmul.f32 %v3158, 0.032258064
    %v3166 = vmul.f32 %v3161, 0.032258064
    %v3167 = vmul.f32 %v3164, 0.032258064
    %v3168 = vrsqrt.pop %v3165
    %v3169 = vmul.f32 %v3168, %v3165
    %v3170 = vmul.f32 %v3169, %v3168
    %v3171 = vmul.f32 0.5, %v3170
    %v3172 = vsub.f32 1.5, %v3171
    %v3173 = vmul.f32 %v3168, %v3172
    %v3174 = vmul.f32 %v3165, %v3173
    %vm3175 = vcmp.eq.f32.partialorder %v3165, inf
    %v3176 = vsel %vm3175, %v3165, %v3174
    %vm3177 = vcmp.eq.f32.partialorder %v3165, 0.0
    %v3178 = vand.u32 %v3165, 2147483648
    %v3179 = vsel %vm3177, %v3178, %v3176
    %v3180 = vrsqrt.pop %v3166
    %v3181 = vmul.f32 %v3180, %v3166
    %v3182 = vmul.f32 %v3181, %v3180
    %v3183 = vmul.f32 0.5, %v3182
    %v3184 = vsub.f32 1.5, %v3183
    %v3185 = vmul.f32 %v3180, %v3184
    %v3186 = vmul.f32 %v3166, %v3185
    %vm3187 = vcmp.eq.f32.partialorder %v3166, inf
    %v3188 = vsel %vm3187, %v3166, %v3186
    %vm3189 = vcmp.eq.f32.partialorder %v3166, 0.0
    %v3190 = vand.u32 %v3166, 2147483648
    %v3191 = vsel %vm3189, %v3190, %v3188
    %v3192 = vrsqrt.pop %v3167
    %v3193 = vmul.f32 %v3192, %v3167
    %v3194 = vmul.f32 %v3193, %v3192
    %v3195 = vmul.f32 0.5, %v3194
    %v3196 = vsub.f32 1.5, %v3195
    %v3197 = vmul.f32 %v3192, %v3196
    %v3198 = vmul.f32 %v3167, %v3197
    %vm3199 = vcmp.eq.f32.partialorder %v3167, inf
    %v3200 = vsel %vm3199, %v3167, %v3198
    %vm3201 = vcmp.eq.f32.partialorder %v3167, 0.0
    %v3202 = vand.u32 %v3167, 2147483648
    %v3203 = vsel %vm3201, %v3202, %v3200
    %v3204 = vadd.f32 %v3179, 1e-06
    %v3205 = vadd.f32 %v3191, 1e-06
    %v3206 = vadd.f32 %v3203, 1e-06
    %v3207 = vrcp.pop %v3204
    %v3208 = vrcp.pop %v3205
    %v3209 = vrcp.pop %v3206
    %v3210 = vperm.slane %v3136, 0
    %v3211 = vmul.f32 %v3210, %v3150
    %v3212 = vmul.f32 %v3210, %v3151
    %v3213 = vmul.f32 %v3210, %v3152
    %v3214 = vmul.f32 %v3211, %v3207
    %v3215 = vmul.f32 %v3212, %v3208
    %v3216 = vmul.f32 %v3213, %v3209
    %v3217 = vperm.slane %v3137, 0
    %v3218 = vadd.f32 %v3214, %v3217
    %v3219 = vadd.f32 %v3215, %v3217
    %v3220 = vadd.f32 %v3216, %v3217
    %v3221 = vld [vmem:[%s2 + $0x1a0] sm:$0xff]
    %v3222 = vld [vmem:[%s2 + $0x1a8] sm:$0xff]
    %v3223 = vld [vmem:[%s2 + $0x1b0] sm:$0xff]
    %v3224 = vld [vmem:[%s2 + $0x1b8] sm:$0xff]
    %v3225 = vld [vmem:[%s2 + $0x262] sm:$0x1]
    %v3226 = vperm.slane %v3225, 0
    %v3228 = vsel %vm130, %v3218, 0
    %v3231 = vsel %vm130, %v3219, 0
    %v3234 = vsel %vm130, %v3220, 0
    %3236 = vmatpush.msra.mxu0 0.0
    %3237 = vmatpush.msra.mxu0 0.0
    %3238 = vmatpush.msra.mxu0 0.0
    %3239 = vmatpush.msra.mxu0 0.0
    %3240 = vmatpush.msra.mxu0 0.0
    %3241 = vmatpush.msra.mxu0 0.0
    %3242 = vmatpush.msra.mxu0 0.0
    %3243 = vmatpush.msra.mxu0 0.0
    %3244 = vmatpush.msra.mxu0 0.0
    %3245 = vmatpush.msra.mxu0 0.0
    %3246 = vmatpush.msra.mxu0 0.0
    %3247 = vmatpush.msra.mxu0 0.0
    %3248 = vmatpush.msra.mxu0 %v3224
    %3249 = vmatpush.msra.mxu0 %v3223
    %3250 = vmatpush.msra.mxu0 %v3222
    %3251 = vmatpush.msra.mxu0 %v3221
    %3252 = vmatmul.f32.gmra.mxu0 %v3228
    %v3253 = vpop.f32.mrf.mxu0
    %v3254 = vadd.f32 %v3226, %v3253
    %3255 = vmatmul.f32.gmra.mxu0 %v3231
    %v3256 = vpop.f32.mrf.mxu0
    %v3257 = vadd.f32 %v3226, %v3256
    %3258 = vmatmul.f32.gmra.mxu0 %v3234
    %v3259 = vpop.f32.mrf.mxu0
    %v3260 = vadd.f32 %v3226, %v3259
    %3261 = vdwg.mxu0
    %v3262 = vld [vmem:[%s2 + $0x1c0] sm:$0xff]
    %v3263 = vld [vmem:[%s2 + $0x1c8] sm:$0xff]
    %v3264 = vld [vmem:[%s2 + $0x1d0] sm:$0xff]
    %v3265 = vld [vmem:[%s2 + $0x1d8] sm:$0xff]
    %v3266 = vld [vmem:[%s2 + $0x263] sm:$0x1]
    %v3267 = vperm.slane %v3266, 0
    %v3269 = vsel %vm130, %v3133, 0
    %v3272 = vsel %vm130, %v3134, 0
    %v3275 = vsel %vm130, %v3135, 0
    %3277 = vmatpush.msra.mxu0 0.0
    %3278 = vmatpush.msra.mxu0 0.0
    %3279 = vmatpush.msra.mxu0 0.0
    %3280 = vmatpush.msra.mxu0 0.0
    %3281 = vmatpush.msra.mxu0 0.0
    %3282 = vmatpush.msra.mxu0 0.0
    %3283 = vmatpush.msra.mxu0 0.0
    %3284 = vmatpush.msra.mxu0 0.0
    %3285 = vmatpush.msra.mxu0 0.0
    %3286 = vmatpush.msra.mxu0 0.0
    %3287 = vmatpush.msra.mxu0 0.0
    %3288 = vmatpush.msra.mxu0 0.0
    %3289 = vmatpush.msra.mxu0 %v3265
    %3290 = vmatpush.msra.mxu0 %v3264
    %3291 = vmatpush.msra.mxu0 %v3263
    %3292 = vmatpush.msra.mxu0 %v3262
    %3293 = vmatmul.f32.gmra.mxu0 %v3269
    %v3294 = vpop.f32.mrf.mxu0
    %v3295 = vadd.f32 %v3267, %v3294
    %3296 = vmatmul.f32.gmra.mxu0 %v3272
    %v3297 = vpop.f32.mrf.mxu0
    %v3298 = vadd.f32 %v3267, %v3297
    %3299 = vmatmul.f32.gmra.mxu0 %v3275
    %v3300 = vpop.f32.mrf.mxu0
    %v3301 = vadd.f32 %v3267, %v3300
    %3302 = vdwg.mxu0
    %v3303 = vld [vmem:[%s2 + $0x1e0] sm:$0xff]
    %v3304 = vld [vmem:[%s2 + $0x1e8] sm:$0xff]
    %v3305 = vld [vmem:[%s2 + $0x1f0] sm:$0xff]
    %v3306 = vld [vmem:[%s2 + $0x1f8] sm:$0xff]
    %v3307 = vld [vmem:[%s2 + $0x264] sm:$0x1]
    %v3308 = vperm.slane %v3307, 0
    %3309 = vmatpush.msra.mxu0 0.0
    %3310 = vmatpush.msra.mxu0 0.0
    %3311 = vmatpush.msra.mxu0 0.0
    %3312 = vmatpush.msra.mxu0 0.0
    %3313 = vmatpush.msra.mxu0 0.0
    %3314 = vmatpush.msra.mxu0 0.0
    %3315 = vmatpush.msra.mxu0 0.0
    %3316 = vmatpush.msra.mxu0 0.0
    %3317 = vmatpush.msra.mxu0 0.0
    %3318 = vmatpush.msra.mxu0 0.0
    %3319 = vmatpush.msra.mxu0 0.0
    %3320 = vmatpush.msra.mxu0 0.0
    %3321 = vmatpush.msra.mxu0 %v3306
    %3322 = vmatpush.msra.mxu0 %v3305
    %3323 = vmatpush.msra.mxu0 %v3304
    %3324 = vmatpush.msra.mxu0 %v3303
    %3325 = vmatmul.f32.gmra.mxu0 %v3269
    %v3326 = vpop.f32.mrf.mxu0
    %v3327 = vadd.f32 %v3308, %v3326
    %3328 = vmatmul.f32.gmra.mxu0 %v3272
    %v3329 = vpop.f32.mrf.mxu0
    %v3330 = vadd.f32 %v3308, %v3329
    %3331 = vmatmul.f32.gmra.mxu0 %v3275
    %v3332 = vpop.f32.mrf.mxu0
    %v3333 = vadd.f32 %v3308, %v3332
    %3334 = vdwg.mxu0
    %v3335 = vmul.f32 %v3295, %v319
    %v3336 = vmul.f32 %v3298, %v319
    %v3337 = vmul.f32 %v3301, %v319
    %v3338 = vmul.f32 %v3327, %v319
    %v3339 = vmul.f32 %v3330, %v319
    %v3340 = vmul.f32 %v3333, %v319
    %v3342 = vsel %vm130, %v3254, 0
    %v3345 = vsel %vm130, %v3257, 0
    %v3348 = vsel %vm130, %v3260, 0
    %v3351 = vsel %vm130, %v3335, 0
    %v3354 = vsel %vm130, %v3336, 0
    %v3357 = vsel %vm130, %v3337, 0
    %3359 = vmatpush.xpose.msra.mxu0 0.0
    %3360 = vmatpush.xpose.msra.mxu0 0.0
    %3361 = vmatpush.xpose.msra.mxu0 0.0
    %3362 = vmatpush.xpose.msra.mxu0 0.0
    %3363 = vmatpush.xpose.msra.mxu0 0.0
    %3364 = vmatpush.xpose.msra.mxu0 0.0
    %3365 = vmatpush.xpose.msra.mxu0 0.0
    %3366 = vmatpush.xpose.msra.mxu0 0.0
    %3367 = vmatpush.xpose.msra.mxu0 0.0
    %3368 = vmatpush.xpose.msra.mxu0 0.0
    %3369 = vmatpush.xpose.msra.mxu0 0.0
    %3370 = vmatpush.xpose.msra.mxu0 0.0
    %3371 = vmatpush.xpose.msra.mxu0 0.0
    %3372 = vmatpush.xpose.msra.mxu0 %v3357
    %3373 = vmatpush.xpose.msra.mxu0 %v3354
    %3374 = vmatpush.xpose.msra.mxu0 %v3351
    %3375 = vmatmul.f32.gmra.mxu0 %v3342
    %v3376 = vpop.f32.mrf.mxu0
    %v3377 = vadd.f32 0.0, %v3376
    %3378 = vmatmul.f32.gmra.mxu0 %v3345
    %v3379 = vpop.f32.mrf.mxu0
    %v3380 = vadd.f32 0.0, %v3379
    %3381 = vmatmul.f32.gmra.mxu0 %v3348
    %v3382 = vpop.f32.mrf.mxu0
    %v3383 = vadd.f32 0.0, %v3382
    %3384 = vdwg.mxu0
    %v3385 = vmul.f32 %v3377, 0.5
    %v3386 = vmul.f32 %v3380, 0.5
    %v3387 = vmul.f32 %v3383, 0.5
    %v3388 = vadd.f32 %v3385, %v394
    %v3389 = vadd.f32 %v3386, %v395
    %v3390 = vadd.f32 %v3387, %v396
    %v3391 = vsel %vm652, %v3388, -inf
    %3392 = vmax.xlane.f32.xlu0 %v3391
    %v3393 = vpop.xlane.xlu0 %3392
    %v3394 = vsel %vm652, %v3389, -inf
    %3395 = vmax.xlane.f32.xlu0 %v3394
    %v3396 = vpop.xlane.xlu0 %3395
    %v3397 = vsel %vm652, %v3390, -inf
    %3398 = vmax.xlane.f32.xlu0 %v3397
    %v3399 = vpop.xlane.xlu0 %3398
    %v3400 = vsub.f32 %v3388, %v3393
    %v3401 = vsub.f32 %v3389, %v3396
    %v3402 = vsub.f32 %v3390, %v3399
    %v3403 = vmul.f32 %v3400, 1.442695
    %v3404 = vpow.pop %v3403
    %v3405 = vmul.f32 %v3401, 1.442695
    %v3406 = vpow.pop %v3405
    %v3407 = vmul.f32 %v3402, 1.442695
    %v3408 = vpow.pop %v3407
    %v3409 = vsel %vm652, %v3404, 0.0
    %3410 = vadd.xlane.f32.xlu0 %v3409
    %v3411 = vpop.xlane.xlu0 %3410
    %v3412 = vsel %vm652, %v3406, 0.0
    %3413 = vadd.xlane.f32.xlu0 %v3412
    %v3414 = vpop.xlane.xlu0 %3413
    %v3415 = vsel %vm652, %v3408, 0.0
    %3416 = vadd.xlane.f32.xlu0 %v3415
    %v3417 = vpop.xlane.xlu0 %3416
    %v3418 = vrcp.pop %v3411
    %v3419 = vrcp.pop %v3414
    %v3420 = vrcp.pop %v3417
    %v3421 = vmul.f32 %v3404, %v3418
    %v3422 = vmul.f32 %v3406, %v3419
    %v3423 = vmul.f32 %v3408, %v3420
    %v3424 = vmul.f32 %v3295, %v324
    %v3425 = vmul.f32 %v3298, %v324
    %v3426 = vmul.f32 %v3301, %v324
    %v3427 = vmul.f32 %v3327, %v324
    %v3428 = vmul.f32 %v3330, %v324
    %v3429 = vmul.f32 %v3333, %v324
    %v3431 = vsel %vm130, %v3424, 0
    %v3434 = vsel %vm130, %v3425, 0
    %v3437 = vsel %vm130, %v3426, 0
    %3439 = vmatpush.xpose.msra.mxu0 0.0
    %3440 = vmatpush.xpose.msra.mxu0 0.0
    %3441 = vmatpush.xpose.msra.mxu0 0.0
    %3442 = vmatpush.xpose.msra.mxu0 0.0
    %3443 = vmatpush.xpose.msra.mxu0 0.0
    %3444 = vmatpush.xpose.msra.mxu0 0.0
    %3445 = vmatpush.xpose.msra.mxu0 0.0
    %3446 = vmatpush.xpose.msra.mxu0 0.0
    %3447 = vmatpush.xpose.msra.mxu0 0.0
    %3448 = vmatpush.xpose.msra.mxu0 0.0
    %3449 = vmatpush.xpose.msra.mxu0 0.0
    %3450 = vmatpush.xpose.msra.mxu0 0.0
    %3451 = vmatpush.xpose.msra.mxu0 0.0
    %3452 = vmatpush.xpose.msra.mxu0 %v3437
    %3453 = vmatpush.xpose.msra.mxu0 %v3434
    %3454 = vmatpush.xpose.msra.mxu0 %v3431
    %3455 = vmatmul.f32.gmra.mxu0 %v3342
    %v3456 = vpop.f32.mrf.mxu0
    %v3457 = vadd.f32 0.0, %v3456
    %3458 = vmatmul.f32.gmra.mxu0 %v3345
    %v3459 = vpop.f32.mrf.mxu0
    %v3460 = vadd.f32 0.0, %v3459
    %3461 = vmatmul.f32.gmra.mxu0 %v3348
    %v3462 = vpop.f32.mrf.mxu0
    %v3463 = vadd.f32 0.0, %v3462
    %3464 = vdwg.mxu0
    %v3465 = vmul.f32 %v3457, 0.5
    %v3466 = vmul.f32 %v3460, 0.5
    %v3467 = vmul.f32 %v3463, 0.5
    %v3468 = vadd.f32 %v3465, %v394
    %v3469 = vadd.f32 %v3466, %v395
    %v3470 = vadd.f32 %v3467, %v396
    %v3471 = vsel %vm652, %v3468, -inf
    %3472 = vmax.xlane.f32.xlu0 %v3471
    %v3473 = vpop.xlane.xlu0 %3472
    %v3474 = vsel %vm652, %v3469, -inf
    %3475 = vmax.xlane.f32.xlu0 %v3474
    %v3476 = vpop.xlane.xlu0 %3475
    %v3477 = vsel %vm652, %v3470, -inf
    %3478 = vmax.xlane.f32.xlu0 %v3477
    %v3479 = vpop.xlane.xlu0 %3478
    %v3480 = vsub.f32 %v3468, %v3473
    %v3481 = vsub.f32 %v3469, %v3476
    %v3482 = vsub.f32 %v3470, %v3479
    %v3483 = vmul.f32 %v3480, 1.442695
    %v3484 = vpow.pop %v3483
    %v3485 = vmul.f32 %v3481, 1.442695
    %v3486 = vpow.pop %v3485
    %v3487 = vmul.f32 %v3482, 1.442695
    %v3488 = vpow.pop %v3487
    %v3489 = vsel %vm652, %v3484, 0.0
    %3490 = vadd.xlane.f32.xlu0 %v3489
    %v3491 = vpop.xlane.xlu0 %3490
    %v3492 = vsel %vm652, %v3486, 0.0
    %3493 = vadd.xlane.f32.xlu0 %v3492
    %v3494 = vpop.xlane.xlu0 %3493
    %v3495 = vsel %vm652, %v3488, 0.0
    %3496 = vadd.xlane.f32.xlu0 %v3495
    %v3497 = vpop.xlane.xlu0 %3496
    %v3498 = vrcp.pop %v3491
    %v3499 = vrcp.pop %v3494
    %v3500 = vrcp.pop %v3497
    %v3501 = vmul.f32 %v3484, %v3498
    %v3502 = vmul.f32 %v3486, %v3499
    %v3503 = vmul.f32 %v3488, %v3500
    %v3505 = vsel %vm652, %v3501, 0
    %v3508 = vsel %vm652, %v3502, 0
    %v3511 = vsel %vm652, %v3503, 0
    %3513 = vmatpush.msra.mxu0 0.0
    %3514 = vmatpush.msra.mxu0 0.0
    %3515 = vmatpush.msra.mxu0 0.0
    %3516 = vmatpush.msra.mxu0 0.0
    %3517 = vmatpush.msra.mxu0 0.0
    %3518 = vmatpush.msra.mxu0 0.0
    %3519 = vmatpush.msra.mxu0 0.0
    %3520 = vmatpush.msra.mxu0 0.0
    %3521 = vmatpush.msra.mxu0 0.0
    %3522 = vmatpush.msra.mxu0 0.0
    %3523 = vmatpush.msra.mxu0 0.0
    %3524 = vmatpush.msra.mxu0 0.0
    %3525 = vmatpush.msra.mxu0 0.0
    %3526 = vmatpush.msra.mxu0 %v3429
    %3527 = vmatpush.msra.mxu0 %v3428
    %3528 = vmatpush.msra.mxu0 %v3427
    %3529 = vmatmul.f32.gmra.mxu0 %v3505
    %v3530 = vpop.f32.mrf.mxu0
    %v3531 = vadd.f32 0.0, %v3530
    %3532 = vmatmul.f32.gmra.mxu0 %v3508
    %v3533 = vpop.f32.mrf.mxu0
    %v3534 = vadd.f32 0.0, %v3533
    %3535 = vmatmul.f32.gmra.mxu0 %v3511
    %v3536 = vpop.f32.mrf.mxu0
    %v3537 = vadd.f32 0.0, %v3536
    %3538 = vdwg.mxu0
    %v3540 = vsel %vm652, %v3421, 0
    %v3543 = vsel %vm652, %v3422, 0
    %v3546 = vsel %vm652, %v3423, 0
    %3548 = vmatpush.msra.mxu0 0.0
    %3549 = vmatpush.msra.mxu0 0.0
    %3550 = vmatpush.msra.mxu0 0.0
    %3551 = vmatpush.msra.mxu0 0.0
    %3552 = vmatpush.msra.mxu0 0.0
    %3553 = vmatpush.msra.mxu0 0.0
    %3554 = vmatpush.msra.mxu0 0.0
    %3555 = vmatpush.msra.mxu0 0.0
    %3556 = vmatpush.msra.mxu0 0.0
    %3557 = vmatpush.msra.mxu0 0.0
    %3558 = vmatpush.msra.mxu0 0.0
    %3559 = vmatpush.msra.mxu0 0.0
    %3560 = vmatpush.msra.mxu0 0.0
    %3561 = vmatpush.msra.mxu0 %v3340
    %3562 = vmatpush.msra.mxu0 %v3339
    %3563 = vmatpush.msra.mxu0 %v3338
    %3564 = vmatmul.f32.gmra.mxu0 %v3540
    %v3565 = vpop.f32.mrf.mxu0
    %v3566 = vadd.f32 %v3531, %v3565
    %3567 = vmatmul.f32.gmra.mxu0 %v3543
    %v3568 = vpop.f32.mrf.mxu0
    %v3569 = vadd.f32 %v3534, %v3568
    %3570 = vmatmul.f32.gmra.mxu0 %v3546
    %v3571 = vpop.f32.mrf.mxu0
    %v3572 = vadd.f32 %v3537, %v3571
    %3573 = vdwg.mxu0
    %v3574 = vmul.f32 %v3295, %v329
    %v3575 = vmul.f32 %v3298, %v329
    %v3576 = vmul.f32 %v3301, %v329
    %v3577 = vmul.f32 %v3327, %v329
    %v3578 = vmul.f32 %v3330, %v329
    %v3579 = vmul.f32 %v3333, %v329
    %v3581 = vsel %vm130, %v3574, 0
    %v3584 = vsel %vm130, %v3575, 0
    %v3587 = vsel %vm130, %v3576, 0
    %3589 = vmatpush.xpose.msra.mxu0 0.0
    %3590 = vmatpush.xpose.msra.mxu0 0.0
    %3591 = vmatpush.xpose.msra.mxu0 0.0
    %3592 = vmatpush.xpose.msra.mxu0 0.0
    %3593 = vmatpush.xpose.msra.mxu0 0.0
    %3594 = vmatpush.xpose.msra.mxu0 0.0
    %3595 = vmatpush.xpose.msra.mxu0 0.0
    %3596 = vmatpush.xpose.msra.mxu0 0.0
    %3597 = vmatpush.xpose.msra.mxu0 0.0
    %3598 = vmatpush.xpose.msra.mxu0 0.0
    %3599 = vmatpush.xpose.msra.mxu0 0.0
    %3600 = vmatpush.xpose.msra.mxu0 0.0
    %3601 = vmatpush.xpose.msra.mxu0 0.0
    %3602 = vmatpush.xpose.msra.mxu0 %v3587
    %3603 = vmatpush.xpose.msra.mxu0 %v3584
    %3604 = vmatpush.xpose.msra.mxu0 %v3581
    %3605 = vmatmul.f32.gmra.mxu0 %v3342
    %v3606 = vpop.f32.mrf.mxu0
    %v3607 = vadd.f32 0.0, %v3606
    %3608 = vmatmul.f32.gmra.mxu0 %v3345
    %v3609 = vpop.f32.mrf.mxu0
    %v3610 = vadd.f32 0.0, %v3609
    %3611 = vmatmul.f32.gmra.mxu0 %v3348
    %v3612 = vpop.f32.mrf.mxu0
    %v3613 = vadd.f32 0.0, %v3612
    %3614 = vdwg.mxu0
    %v3615 = vmul.f32 %v3607, 0.5
    %v3616 = vmul.f32 %v3610, 0.5
    %v3617 = vmul.f32 %v3613, 0.5
    %v3618 = vadd.f32 %v3615, %v394
    %v3619 = vadd.f32 %v3616, %v395
    %v3620 = vadd.f32 %v3617, %v396
    %v3621 = vsel %vm652, %v3618, -inf
    %3622 = vmax.xlane.f32.xlu0 %v3621
    %v3623 = vpop.xlane.xlu0 %3622
    %v3624 = vsel %vm652, %v3619, -inf
    %3625 = vmax.xlane.f32.xlu0 %v3624
    %v3626 = vpop.xlane.xlu0 %3625
    %v3627 = vsel %vm652, %v3620, -inf
    %3628 = vmax.xlane.f32.xlu0 %v3627
    %v3629 = vpop.xlane.xlu0 %3628
    %v3630 = vsub.f32 %v3618, %v3623
    %v3631 = vsub.f32 %v3619, %v3626
    %v3632 = vsub.f32 %v3620, %v3629
    %v3633 = vmul.f32 %v3630, 1.442695
    %v3634 = vpow.pop %v3633
    %v3635 = vmul.f32 %v3631, 1.442695
    %v3636 = vpow.pop %v3635
    %v3637 = vmul.f32 %v3632, 1.442695
    %v3638 = vpow.pop %v3637
    %v3639 = vsel %vm652, %v3634, 0.0
    %3640 = vadd.xlane.f32.xlu0 %v3639
    %v3641 = vpop.xlane.xlu0 %3640
    %v3642 = vsel %vm652, %v3636, 0.0
    %3643 = vadd.xlane.f32.xlu0 %v3642
    %v3644 = vpop.xlane.xlu0 %3643
    %v3645 = vsel %vm652, %v3638, 0.0
    %3646 = vadd.xlane.f32.xlu0 %v3645
    %v3647 = vpop.xlane.xlu0 %3646
    %v3648 = vrcp.pop %v3641
    %v3649 = vrcp.pop %v3644
    %v3650 = vrcp.pop %v3647
    %v3651 = vmul.f32 %v3634, %v3648
    %v3652 = vmul.f32 %v3636, %v3649
    %v3653 = vmul.f32 %v3638, %v3650
    %v3655 = vsel %vm652, %v3651, 0
    %v3658 = vsel %vm652, %v3652, 0
    %v3661 = vsel %vm652, %v3653, 0
    %3663 = vmatpush.msra.mxu0 0.0
    %3664 = vmatpush.msra.mxu0 0.0
    %3665 = vmatpush.msra.mxu0 0.0
    %3666 = vmatpush.msra.mxu0 0.0
    %3667 = vmatpush.msra.mxu0 0.0
    %3668 = vmatpush.msra.mxu0 0.0
    %3669 = vmatpush.msra.mxu0 0.0
    %3670 = vmatpush.msra.mxu0 0.0
    %3671 = vmatpush.msra.mxu0 0.0
    %3672 = vmatpush.msra.mxu0 0.0
    %3673 = vmatpush.msra.mxu0 0.0
    %3674 = vmatpush.msra.mxu0 0.0
    %3675 = vmatpush.msra.mxu0 0.0
    %3676 = vmatpush.msra.mxu0 %v3579
    %3677 = vmatpush.msra.mxu0 %v3578
    %3678 = vmatpush.msra.mxu0 %v3577
    %3679 = vmatmul.f32.gmra.mxu0 %v3655
    %v3680 = vpop.f32.mrf.mxu0
    %v3681 = vadd.f32 0.0, %v3680
    %3682 = vmatmul.f32.gmra.mxu0 %v3658
    %v3683 = vpop.f32.mrf.mxu0
    %v3684 = vadd.f32 0.0, %v3683
    %3685 = vmatmul.f32.gmra.mxu0 %v3661
    %v3686 = vpop.f32.mrf.mxu0
    %v3687 = vadd.f32 0.0, %v3686
    %3688 = vdwg.mxu0
    %v3689 = vadd.f32 %v3566, %v3681
    %v3690 = vadd.f32 %v3569, %v3684
    %v3691 = vadd.f32 %v3572, %v3687
    %v3692 = vmul.f32 %v3295, %v334
    %v3693 = vmul.f32 %v3298, %v334
    %v3694 = vmul.f32 %v3301, %v334
    %v3695 = vmul.f32 %v3327, %v334
    %v3696 = vmul.f32 %v3330, %v334
    %v3697 = vmul.f32 %v3333, %v334
    %v3699 = vsel %vm130, %v3692, 0
    %v3702 = vsel %vm130, %v3693, 0
    %v3705 = vsel %vm130, %v3694, 0
    %3707 = vmatpush.xpose.msra.mxu0 0.0
    %3708 = vmatpush.xpose.msra.mxu0 0.0
    %3709 = vmatpush.xpose.msra.mxu0 0.0
    %3710 = vmatpush.xpose.msra.mxu0 0.0
    %3711 = vmatpush.xpose.msra.mxu0 0.0
    %3712 = vmatpush.xpose.msra.mxu0 0.0
    %3713 = vmatpush.xpose.msra.mxu0 0.0
    %3714 = vmatpush.xpose.msra.mxu0 0.0
    %3715 = vmatpush.xpose.msra.mxu0 0.0
    %3716 = vmatpush.xpose.msra.mxu0 0.0
    %3717 = vmatpush.xpose.msra.mxu0 0.0
    %3718 = vmatpush.xpose.msra.mxu0 0.0
    %3719 = vmatpush.xpose.msra.mxu0 0.0
    %3720 = vmatpush.xpose.msra.mxu0 %v3705
    %3721 = vmatpush.xpose.msra.mxu0 %v3702
    %3722 = vmatpush.xpose.msra.mxu0 %v3699
    %3723 = vmatmul.f32.gmra.mxu0 %v3342
    %v3724 = vpop.f32.mrf.mxu0
    %v3725 = vadd.f32 0.0, %v3724
    %3726 = vmatmul.f32.gmra.mxu0 %v3345
    %v3727 = vpop.f32.mrf.mxu0
    %v3728 = vadd.f32 0.0, %v3727
    %3729 = vmatmul.f32.gmra.mxu0 %v3348
    %v3730 = vpop.f32.mrf.mxu0
    %v3731 = vadd.f32 0.0, %v3730
    %3732 = vdwg.mxu0
    %v3733 = vmul.f32 %v3725, 0.5
    %v3734 = vmul.f32 %v3728, 0.5
    %v3735 = vmul.f32 %v3731, 0.5
    %v3736 = vadd.f32 %v3733, %v394
    %v3737 = vadd.f32 %v3734, %v395
    %v3738 = vadd.f32 %v3735, %v396
    %v3739 = vsel %vm652, %v3736, -inf
    %3740 = vmax.xlane.f32.xlu0 %v3739
    %v3741 = vpop.xlane.xlu0 %3740
    %v3742 = vsel %vm652, %v3737, -inf
    %3743 = vmax.xlane.f32.xlu0 %v3742
    %v3744 = vpop.xlane.xlu0 %3743
    %v3745 = vsel %vm652, %v3738, -inf
    %3746 = vmax.xlane.f32.xlu0 %v3745
    %v3747 = vpop.xlane.xlu0 %3746
    %v3748 = vsub.f32 %v3736, %v3741
    %v3749 = vsub.f32 %v3737, %v3744
    %v3750 = vsub.f32 %v3738, %v3747
    %v3751 = vmul.f32 %v3748, 1.442695
    %v3752 = vpow.pop %v3751
    %v3753 = vmul.f32 %v3749, 1.442695
    %v3754 = vpow.pop %v3753
    %v3755 = vmul.f32 %v3750, 1.442695
    %v3756 = vpow.pop %v3755
    %v3757 = vsel %vm652, %v3752, 0.0
    %3758 = vadd.xlane.f32.xlu0 %v3757
    %v3759 = vpop.xlane.xlu0 %3758
    %v3760 = vsel %vm652, %v3754, 0.0
    %3761 = vadd.xlane.f32.xlu0 %v3760
    %v3762 = vpop.xlane.xlu0 %3761
    %v3763 = vsel %vm652, %v3756, 0.0
    %3764 = vadd.xlane.f32.xlu0 %v3763
    %v3765 = vpop.xlane.xlu0 %3764
    %v3766 = vrcp.pop %v3759
    %v3767 = vrcp.pop %v3762
    %v3768 = vrcp.pop %v3765
    %v3769 = vmul.f32 %v3752, %v3766
    %v3770 = vmul.f32 %v3754, %v3767
    %v3771 = vmul.f32 %v3756, %v3768
    %v3773 = vsel %vm652, %v3769, 0
    %v3776 = vsel %vm652, %v3770, 0
    %v3779 = vsel %vm652, %v3771, 0
    %3781 = vmatpush.msra.mxu0 0.0
    %3782 = vmatpush.msra.mxu0 0.0
    %3783 = vmatpush.msra.mxu0 0.0
    %3784 = vmatpush.msra.mxu0 0.0
    %3785 = vmatpush.msra.mxu0 0.0
    %3786 = vmatpush.msra.mxu0 0.0
    %3787 = vmatpush.msra.mxu0 0.0
    %3788 = vmatpush.msra.mxu0 0.0
    %3789 = vmatpush.msra.mxu0 0.0
    %3790 = vmatpush.msra.mxu0 0.0
    %3791 = vmatpush.msra.mxu0 0.0
    %3792 = vmatpush.msra.mxu0 0.0
    %3793 = vmatpush.msra.mxu0 0.0
    %3794 = vmatpush.msra.mxu0 %v3697
    %3795 = vmatpush.msra.mxu0 %v3696
    %3796 = vmatpush.msra.mxu0 %v3695
    %3797 = vmatmul.f32.gmra.mxu0 %v3773
    %v3798 = vpop.f32.mrf.mxu0
    %v3799 = vadd.f32 0.0, %v3798
    %3800 = vmatmul.f32.gmra.mxu0 %v3776
    %v3801 = vpop.f32.mrf.mxu0
    %v3802 = vadd.f32 0.0, %v3801
    %3803 = vmatmul.f32.gmra.mxu0 %v3779
    %v3804 = vpop.f32.mrf.mxu0
    %v3805 = vadd.f32 0.0, %v3804
    %3806 = vdwg.mxu0
    %v3807 = vadd.f32 %v3689, %v3799
    %v3808 = vadd.f32 %v3690, %v3802
    %v3809 = vadd.f32 %v3691, %v3805
    %v3810 = vmul.f32 %v3295, %v339
    %v3811 = vmul.f32 %v3298, %v339
    %v3812 = vmul.f32 %v3301, %v339
    %v3813 = vmul.f32 %v3327, %v339
    %v3814 = vmul.f32 %v3330, %v339
    %v3815 = vmul.f32 %v3333, %v339
    %v3817 = vsel %vm130, %v3810, 0
    %v3820 = vsel %vm130, %v3811, 0
    %v3823 = vsel %vm130, %v3812, 0
    %3825 = vmatpush.xpose.msra.mxu0 0.0
    %3826 = vmatpush.xpose.msra.mxu0 0.0
    %3827 = vmatpush.xpose.msra.mxu0 0.0
    %3828 = vmatpush.xpose.msra.mxu0 0.0
    %3829 = vmatpush.xpose.msra.mxu0 0.0
    %3830 = vmatpush.xpose.msra.mxu0 0.0
    %3831 = vmatpush.xpose.msra.mxu0 0.0
    %3832 = vmatpush.xpose.msra.mxu0 0.0
    %3833 = vmatpush.xpose.msra.mxu0 0.0
    %3834 = vmatpush.xpose.msra.mxu0 0.0
    %3835 = vmatpush.xpose.msra.mxu0 0.0
    %3836 = vmatpush.xpose.msra.mxu0 0.0
    %3837 = vmatpush.xpose.msra.mxu0 0.0
    %3838 = vmatpush.xpose.msra.mxu0 %v3823
    %3839 = vmatpush.xpose.msra.mxu0 %v3820
    %3840 = vmatpush.xpose.msra.mxu0 %v3817
    %3841 = vmatmul.f32.gmra.mxu0 %v3342
    %v3842 = vpop.f32.mrf.mxu0
    %v3843 = vadd.f32 0.0, %v3842
    %3844 = vmatmul.f32.gmra.mxu0 %v3345
    %v3845 = vpop.f32.mrf.mxu0
    %v3846 = vadd.f32 0.0, %v3845
    %3847 = vmatmul.f32.gmra.mxu0 %v3348
    %v3848 = vpop.f32.mrf.mxu0
    %v3849 = vadd.f32 0.0, %v3848
    %3850 = vdwg.mxu0
    %v3851 = vmul.f32 %v3843, 0.5
    %v3852 = vmul.f32 %v3846, 0.5
    %v3853 = vmul.f32 %v3849, 0.5
    %v3854 = vadd.f32 %v3851, %v394
    %v3855 = vadd.f32 %v3852, %v395
    %v3856 = vadd.f32 %v3853, %v396
    %v3857 = vsel %vm652, %v3854, -inf
    %3858 = vmax.xlane.f32.xlu0 %v3857
    %v3859 = vpop.xlane.xlu0 %3858
    %v3860 = vsel %vm652, %v3855, -inf
    %3861 = vmax.xlane.f32.xlu0 %v3860
    %v3862 = vpop.xlane.xlu0 %3861
    %v3863 = vsel %vm652, %v3856, -inf
    %3864 = vmax.xlane.f32.xlu0 %v3863
    %v3865 = vpop.xlane.xlu0 %3864
    %v3866 = vsub.f32 %v3854, %v3859
    %v3867 = vsub.f32 %v3855, %v3862
    %v3868 = vsub.f32 %v3856, %v3865
    %v3869 = vmul.f32 %v3866, 1.442695
    %v3870 = vpow.pop %v3869
    %v3871 = vmul.f32 %v3867, 1.442695
    %v3872 = vpow.pop %v3871
    %v3873 = vmul.f32 %v3868, 1.442695
    %v3874 = vpow.pop %v3873
    %v3875 = vsel %vm652, %v3870, 0.0
    %3876 = vadd.xlane.f32.xlu0 %v3875
    %v3877 = vpop.xlane.xlu0 %3876
    %v3878 = vsel %vm652, %v3872, 0.0
    %3879 = vadd.xlane.f32.xlu0 %v3878
    %v3880 = vpop.xlane.xlu0 %3879
    %v3881 = vsel %vm652, %v3874, 0.0
    %3882 = vadd.xlane.f32.xlu0 %v3881
    %v3883 = vpop.xlane.xlu0 %3882
    %v3884 = vrcp.pop %v3877
    %v3885 = vrcp.pop %v3880
    %v3886 = vrcp.pop %v3883
    %v3887 = vmul.f32 %v3870, %v3884
    %v3888 = vmul.f32 %v3872, %v3885
    %v3889 = vmul.f32 %v3874, %v3886
    %v3891 = vsel %vm652, %v3887, 0
    %v3894 = vsel %vm652, %v3888, 0
    %v3897 = vsel %vm652, %v3889, 0
    %3899 = vmatpush.msra.mxu0 0.0
    %3900 = vmatpush.msra.mxu0 0.0
    %3901 = vmatpush.msra.mxu0 0.0
    %3902 = vmatpush.msra.mxu0 0.0
    %3903 = vmatpush.msra.mxu0 0.0
    %3904 = vmatpush.msra.mxu0 0.0
    %3905 = vmatpush.msra.mxu0 0.0
    %3906 = vmatpush.msra.mxu0 0.0
    %3907 = vmatpush.msra.mxu0 0.0
    %3908 = vmatpush.msra.mxu0 0.0
    %3909 = vmatpush.msra.mxu0 0.0
    %3910 = vmatpush.msra.mxu0 0.0
    %3911 = vmatpush.msra.mxu0 0.0
    %3912 = vmatpush.msra.mxu0 %v3815
    %3913 = vmatpush.msra.mxu0 %v3814
    %3914 = vmatpush.msra.mxu0 %v3813
    %3915 = vmatmul.f32.gmra.mxu0 %v3891
    %v3916 = vpop.f32.mrf.mxu0
    %v3917 = vadd.f32 0.0, %v3916
    %3918 = vmatmul.f32.gmra.mxu0 %v3894
    %v3919 = vpop.f32.mrf.mxu0
    %v3920 = vadd.f32 0.0, %v3919
    %3921 = vmatmul.f32.gmra.mxu0 %v3897
    %v3922 = vpop.f32.mrf.mxu0
    %v3923 = vadd.f32 0.0, %v3922
    %3924 = vdwg.mxu0
    %v3925 = vadd.f32 %v3807, %v3917
    %v3926 = vadd.f32 %v3808, %v3920
    %v3927 = vadd.f32 %v3809, %v3923
    %v3928 = vmul.f32 %v3295, %v344
    %v3929 = vmul.f32 %v3298, %v344
    %v3930 = vmul.f32 %v3301, %v344
    %v3931 = vmul.f32 %v3327, %v344
    %v3932 = vmul.f32 %v3330, %v344
    %v3933 = vmul.f32 %v3333, %v344
    %v3935 = vsel %vm130, %v3928, 0
    %v3938 = vsel %vm130, %v3929, 0
    %v3941 = vsel %vm130, %v3930, 0
    %3943 = vmatpush.xpose.msra.mxu0 0.0
    %3944 = vmatpush.xpose.msra.mxu0 0.0
    %3945 = vmatpush.xpose.msra.mxu0 0.0
    %3946 = vmatpush.xpose.msra.mxu0 0.0
    %3947 = vmatpush.xpose.msra.mxu0 0.0
    %3948 = vmatpush.xpose.msra.mxu0 0.0
    %3949 = vmatpush.xpose.msra.mxu0 0.0
    %3950 = vmatpush.xpose.msra.mxu0 0.0
    %3951 = vmatpush.xpose.msra.mxu0 0.0
    %3952 = vmatpush.xpose.msra.mxu0 0.0
    %3953 = vmatpush.xpose.msra.mxu0 0.0
    %3954 = vmatpush.xpose.msra.mxu0 0.0
    %3955 = vmatpush.xpose.msra.mxu0 0.0
    %3956 = vmatpush.xpose.msra.mxu0 %v3941
    %3957 = vmatpush.xpose.msra.mxu0 %v3938
    %3958 = vmatpush.xpose.msra.mxu0 %v3935
    %3959 = vmatmul.f32.gmra.mxu0 %v3342
    %v3960 = vpop.f32.mrf.mxu0
    %v3961 = vadd.f32 0.0, %v3960
    %3962 = vmatmul.f32.gmra.mxu0 %v3345
    %v3963 = vpop.f32.mrf.mxu0
    %v3964 = vadd.f32 0.0, %v3963
    %3965 = vmatmul.f32.gmra.mxu0 %v3348
    %v3966 = vpop.f32.mrf.mxu0
    %v3967 = vadd.f32 0.0, %v3966
    %3968 = vdwg.mxu0
    %v3969 = vmul.f32 %v3961, 0.5
    %v3970 = vmul.f32 %v3964, 0.5
    %v3971 = vmul.f32 %v3967, 0.5
    %v3972 = vadd.f32 %v3969, %v394
    %v3973 = vadd.f32 %v3970, %v395
    %v3974 = vadd.f32 %v3971, %v396
    %v3975 = vsel %vm652, %v3972, -inf
    %3976 = vmax.xlane.f32.xlu0 %v3975
    %v3977 = vpop.xlane.xlu0 %3976
    %v3978 = vsel %vm652, %v3973, -inf
    %3979 = vmax.xlane.f32.xlu0 %v3978
    %v3980 = vpop.xlane.xlu0 %3979
    %v3981 = vsel %vm652, %v3974, -inf
    %3982 = vmax.xlane.f32.xlu0 %v3981
    %v3983 = vpop.xlane.xlu0 %3982
    %v3984 = vsub.f32 %v3972, %v3977
    %v3985 = vsub.f32 %v3973, %v3980
    %v3986 = vsub.f32 %v3974, %v3983
    %v3987 = vmul.f32 %v3984, 1.442695
    %v3988 = vpow.pop %v3987
    %v3989 = vmul.f32 %v3985, 1.442695
    %v3990 = vpow.pop %v3989
    %v3991 = vmul.f32 %v3986, 1.442695
    %v3992 = vpow.pop %v3991
    %v3993 = vsel %vm652, %v3988, 0.0
    %3994 = vadd.xlane.f32.xlu0 %v3993
    %v3995 = vpop.xlane.xlu0 %3994
    %v3996 = vsel %vm652, %v3990, 0.0
    %3997 = vadd.xlane.f32.xlu0 %v3996
    %v3998 = vpop.xlane.xlu0 %3997
    %v3999 = vsel %vm652, %v3992, 0.0
    %4000 = vadd.xlane.f32.xlu0 %v3999
    %v4001 = vpop.xlane.xlu0 %4000
    %v4002 = vrcp.pop %v3995
    %v4003 = vrcp.pop %v3998
    %v4004 = vrcp.pop %v4001
    %v4005 = vmul.f32 %v3988, %v4002
    %v4006 = vmul.f32 %v3990, %v4003
    %v4007 = vmul.f32 %v3992, %v4004
    %v4009 = vsel %vm652, %v4005, 0
    %v4012 = vsel %vm652, %v4006, 0
    %v4015 = vsel %vm652, %v4007, 0
    %4017 = vmatpush.msra.mxu0 0.0
    %4018 = vmatpush.msra.mxu0 0.0
    %4019 = vmatpush.msra.mxu0 0.0
    %4020 = vmatpush.msra.mxu0 0.0
    %4021 = vmatpush.msra.mxu0 0.0
    %4022 = vmatpush.msra.mxu0 0.0
    %4023 = vmatpush.msra.mxu0 0.0
    %4024 = vmatpush.msra.mxu0 0.0
    %4025 = vmatpush.msra.mxu0 0.0
    %4026 = vmatpush.msra.mxu0 0.0
    %4027 = vmatpush.msra.mxu0 0.0
    %4028 = vmatpush.msra.mxu0 0.0
    %4029 = vmatpush.msra.mxu0 0.0
    %4030 = vmatpush.msra.mxu0 %v3933
    %4031 = vmatpush.msra.mxu0 %v3932
    %4032 = vmatpush.msra.mxu0 %v3931
    %4033 = vmatmul.f32.gmra.mxu0 %v4009
    %v4034 = vpop.f32.mrf.mxu0
    %v4035 = vadd.f32 0.0, %v4034
    %4036 = vmatmul.f32.gmra.mxu0 %v4012
    %v4037 = vpop.f32.mrf.mxu0
    %v4038 = vadd.f32 0.0, %v4037
    %4039 = vmatmul.f32.gmra.mxu0 %v4015
    %v4040 = vpop.f32.mrf.mxu0
    %v4041 = vadd.f32 0.0, %v4040
    %4042 = vdwg.mxu0
    %v4043 = vadd.f32 %v3925, %v4035
    %v4044 = vadd.f32 %v3926, %v4038
    %v4045 = vadd.f32 %v3927, %v4041
    %v4046 = vmul.f32 %v3295, %v349
    %v4047 = vmul.f32 %v3298, %v349
    %v4048 = vmul.f32 %v3301, %v349
    %v4049 = vmul.f32 %v3327, %v349
    %v4050 = vmul.f32 %v3330, %v349
    %v4051 = vmul.f32 %v3333, %v349
    %v4053 = vsel %vm130, %v4046, 0
    %v4056 = vsel %vm130, %v4047, 0
    %v4059 = vsel %vm130, %v4048, 0
    %4061 = vmatpush.xpose.msra.mxu0 0.0
    %4062 = vmatpush.xpose.msra.mxu0 0.0
    %4063 = vmatpush.xpose.msra.mxu0 0.0
    %4064 = vmatpush.xpose.msra.mxu0 0.0
    %4065 = vmatpush.xpose.msra.mxu0 0.0
    %4066 = vmatpush.xpose.msra.mxu0 0.0
    %4067 = vmatpush.xpose.msra.mxu0 0.0
    %4068 = vmatpush.xpose.msra.mxu0 0.0
    %4069 = vmatpush.xpose.msra.mxu0 0.0
    %4070 = vmatpush.xpose.msra.mxu0 0.0
    %4071 = vmatpush.xpose.msra.mxu0 0.0
    %4072 = vmatpush.xpose.msra.mxu0 0.0
    %4073 = vmatpush.xpose.msra.mxu0 0.0
    %4074 = vmatpush.xpose.msra.mxu0 %v4059
    %4075 = vmatpush.xpose.msra.mxu0 %v4056
    %4076 = vmatpush.xpose.msra.mxu0 %v4053
    %4077 = vmatmul.f32.gmra.mxu0 %v3342
    %v4078 = vpop.f32.mrf.mxu0
    %v4079 = vadd.f32 0.0, %v4078
    %4080 = vmatmul.f32.gmra.mxu0 %v3345
    %v4081 = vpop.f32.mrf.mxu0
    %v4082 = vadd.f32 0.0, %v4081
    %4083 = vmatmul.f32.gmra.mxu0 %v3348
    %v4084 = vpop.f32.mrf.mxu0
    %v4085 = vadd.f32 0.0, %v4084
    %4086 = vdwg.mxu0
    %v4087 = vmul.f32 %v4079, 0.5
    %v4088 = vmul.f32 %v4082, 0.5
    %v4089 = vmul.f32 %v4085, 0.5
    %v4090 = vadd.f32 %v4087, %v394
    %v4091 = vadd.f32 %v4088, %v395
    %v4092 = vadd.f32 %v4089, %v396
    %v4093 = vsel %vm652, %v4090, -inf
    %4094 = vmax.xlane.f32.xlu0 %v4093
    %v4095 = vpop.xlane.xlu0 %4094
    %v4096 = vsel %vm652, %v4091, -inf
    %4097 = vmax.xlane.f32.xlu0 %v4096
    %v4098 = vpop.xlane.xlu0 %4097
    %v4099 = vsel %vm652, %v4092, -inf
    %4100 = vmax.xlane.f32.xlu0 %v4099
    %v4101 = vpop.xlane.xlu0 %4100
    %v4102 = vsub.f32 %v4090, %v4095
    %v4103 = vsub.f32 %v4091, %v4098
    %v4104 = vsub.f32 %v4092, %v4101
    %v4105 = vmul.f32 %v4102, 1.442695
    %v4106 = vpow.pop %v4105
    %v4107 = vmul.f32 %v4103, 1.442695
    %v4108 = vpow.pop %v4107
    %v4109 = vmul.f32 %v4104, 1.442695
    %v4110 = vpow.pop %v4109
    %v4111 = vsel %vm652, %v4106, 0.0
    %4112 = vadd.xlane.f32.xlu0 %v4111
    %v4113 = vpop.xlane.xlu0 %4112
    %v4114 = vsel %vm652, %v4108, 0.0
    %4115 = vadd.xlane.f32.xlu0 %v4114
    %v4116 = vpop.xlane.xlu0 %4115
    %v4117 = vsel %vm652, %v4110, 0.0
    %4118 = vadd.xlane.f32.xlu0 %v4117
    %v4119 = vpop.xlane.xlu0 %4118
    %v4120 = vrcp.pop %v4113
    %v4121 = vrcp.pop %v4116
    %v4122 = vrcp.pop %v4119
    %v4123 = vmul.f32 %v4106, %v4120
    %v4124 = vmul.f32 %v4108, %v4121
    %v4125 = vmul.f32 %v4110, %v4122
    %v4127 = vsel %vm652, %v4123, 0
    %v4130 = vsel %vm652, %v4124, 0
    %v4133 = vsel %vm652, %v4125, 0
    %4135 = vmatpush.msra.mxu0 0.0
    %4136 = vmatpush.msra.mxu0 0.0
    %4137 = vmatpush.msra.mxu0 0.0
    %4138 = vmatpush.msra.mxu0 0.0
    %4139 = vmatpush.msra.mxu0 0.0
    %4140 = vmatpush.msra.mxu0 0.0
    %4141 = vmatpush.msra.mxu0 0.0
    %4142 = vmatpush.msra.mxu0 0.0
    %4143 = vmatpush.msra.mxu0 0.0
    %4144 = vmatpush.msra.mxu0 0.0
    %4145 = vmatpush.msra.mxu0 0.0
    %4146 = vmatpush.msra.mxu0 0.0
    %4147 = vmatpush.msra.mxu0 0.0
    %4148 = vmatpush.msra.mxu0 %v4051
    %4149 = vmatpush.msra.mxu0 %v4050
    %4150 = vmatpush.msra.mxu0 %v4049
    %4151 = vmatmul.f32.gmra.mxu0 %v4127
    %v4152 = vpop.f32.mrf.mxu0
    %v4153 = vadd.f32 0.0, %v4152
    %4154 = vmatmul.f32.gmra.mxu0 %v4130
    %v4155 = vpop.f32.mrf.mxu0
    %v4156 = vadd.f32 0.0, %v4155
    %4157 = vmatmul.f32.gmra.mxu0 %v4133
    %v4158 = vpop.f32.mrf.mxu0
    %v4159 = vadd.f32 0.0, %v4158
    %4160 = vdwg.mxu0
    %v4161 = vadd.f32 %v4043, %v4153
    %v4162 = vadd.f32 %v4044, %v4156
    %v4163 = vadd.f32 %v4045, %v4159
    %v4164 = vmul.f32 %v3295, %v354
    %v4165 = vmul.f32 %v3298, %v354
    %v4166 = vmul.f32 %v3301, %v354
    %v4167 = vmul.f32 %v3327, %v354
    %v4168 = vmul.f32 %v3330, %v354
    %v4169 = vmul.f32 %v3333, %v354
    %v4171 = vsel %vm130, %v4164, 0
    %v4174 = vsel %vm130, %v4165, 0
    %v4177 = vsel %vm130, %v4166, 0
    %4179 = vmatpush.xpose.msra.mxu0 0.0
    %4180 = vmatpush.xpose.msra.mxu0 0.0
    %4181 = vmatpush.xpose.msra.mxu0 0.0
    %4182 = vmatpush.xpose.msra.mxu0 0.0
    %4183 = vmatpush.xpose.msra.mxu0 0.0
    %4184 = vmatpush.xpose.msra.mxu0 0.0
    %4185 = vmatpush.xpose.msra.mxu0 0.0
    %4186 = vmatpush.xpose.msra.mxu0 0.0
    %4187 = vmatpush.xpose.msra.mxu0 0.0
    %4188 = vmatpush.xpose.msra.mxu0 0.0
    %4189 = vmatpush.xpose.msra.mxu0 0.0
    %4190 = vmatpush.xpose.msra.mxu0 0.0
    %4191 = vmatpush.xpose.msra.mxu0 0.0
    %4192 = vmatpush.xpose.msra.mxu0 %v4177
    %4193 = vmatpush.xpose.msra.mxu0 %v4174
    %4194 = vmatpush.xpose.msra.mxu0 %v4171
    %4195 = vmatmul.f32.gmra.mxu0 %v3342
    %v4196 = vpop.f32.mrf.mxu0
    %v4197 = vadd.f32 0.0, %v4196
    %4198 = vmatmul.f32.gmra.mxu0 %v3345
    %v4199 = vpop.f32.mrf.mxu0
    %v4200 = vadd.f32 0.0, %v4199
    %4201 = vmatmul.f32.gmra.mxu0 %v3348
    %v4202 = vpop.f32.mrf.mxu0
    %v4203 = vadd.f32 0.0, %v4202
    %4204 = vdwg.mxu0
    %v4205 = vmul.f32 %v4197, 0.5
    %v4206 = vmul.f32 %v4200, 0.5
    %v4207 = vmul.f32 %v4203, 0.5
    %v4208 = vadd.f32 %v4205, %v394
    %v4209 = vadd.f32 %v4206, %v395
    %v4210 = vadd.f32 %v4207, %v396
    %v4211 = vsel %vm652, %v4208, -inf
    %4212 = vmax.xlane.f32.xlu0 %v4211
    %v4213 = vpop.xlane.xlu0 %4212
    %v4214 = vsel %vm652, %v4209, -inf
    %4215 = vmax.xlane.f32.xlu0 %v4214
    %v4216 = vpop.xlane.xlu0 %4215
    %v4217 = vsel %vm652, %v4210, -inf
    %4218 = vmax.xlane.f32.xlu0 %v4217
    %v4219 = vpop.xlane.xlu0 %4218
    %v4220 = vsub.f32 %v4208, %v4213
    %v4221 = vsub.f32 %v4209, %v4216
    %v4222 = vsub.f32 %v4210, %v4219
    %v4223 = vmul.f32 %v4220, 1.442695
    %v4224 = vpow.pop %v4223
    %v4225 = vmul.f32 %v4221, 1.442695
    %v4226 = vpow.pop %v4225
    %v4227 = vmul.f32 %v4222, 1.442695
    %v4228 = vpow.pop %v4227
    %v4229 = vsel %vm652, %v4224, 0.0
    %4230 = vadd.xlane.f32.xlu0 %v4229
    %v4231 = vpop.xlane.xlu0 %4230
    %v4232 = vsel %vm652, %v4226, 0.0
    %4233 = vadd.xlane.f32.xlu0 %v4232
    %v4234 = vpop.xlane.xlu0 %4233
    %v4235 = vsel %vm652, %v4228, 0.0
    %4236 = vadd.xlane.f32.xlu0 %v4235
    %v4237 = vpop.xlane.xlu0 %4236
    %v4238 = vrcp.pop %v4231
    %v4239 = vrcp.pop %v4234
    %v4240 = vrcp.pop %v4237
    %v4241 = vmul.f32 %v4224, %v4238
    %v4242 = vmul.f32 %v4226, %v4239
    %v4243 = vmul.f32 %v4228, %v4240
    %v4245 = vsel %vm652, %v4241, 0
    %v4248 = vsel %vm652, %v4242, 0
    %v4251 = vsel %vm652, %v4243, 0
    %4253 = vmatpush.msra.mxu0 0.0
    %4254 = vmatpush.msra.mxu0 0.0
    %4255 = vmatpush.msra.mxu0 0.0
    %4256 = vmatpush.msra.mxu0 0.0
    %4257 = vmatpush.msra.mxu0 0.0
    %4258 = vmatpush.msra.mxu0 0.0
    %4259 = vmatpush.msra.mxu0 0.0
    %4260 = vmatpush.msra.mxu0 0.0
    %4261 = vmatpush.msra.mxu0 0.0
    %4262 = vmatpush.msra.mxu0 0.0
    %4263 = vmatpush.msra.mxu0 0.0
    %4264 = vmatpush.msra.mxu0 0.0
    %4265 = vmatpush.msra.mxu0 0.0
    %4266 = vmatpush.msra.mxu0 %v4169
    %4267 = vmatpush.msra.mxu0 %v4168
    %4268 = vmatpush.msra.mxu0 %v4167
    %4269 = vmatmul.f32.gmra.mxu0 %v4245
    %v4270 = vpop.f32.mrf.mxu0
    %v4271 = vadd.f32 0.0, %v4270
    %4272 = vmatmul.f32.gmra.mxu0 %v4248
    %v4273 = vpop.f32.mrf.mxu0
    %v4274 = vadd.f32 0.0, %v4273
    %4275 = vmatmul.f32.gmra.mxu0 %v4251
    %v4276 = vpop.f32.mrf.mxu0
    %v4277 = vadd.f32 0.0, %v4276
    %4278 = vdwg.mxu0
    %v4279 = vadd.f32 %v4161, %v4271
    %v4280 = vadd.f32 %v4162, %v4274
    %v4281 = vadd.f32 %v4163, %v4277
    %v4282 = vld [vmem:[%s2 + $0x200] sm:$0xff]
    %v4283 = vld [vmem:[%s2 + $0x208] sm:$0xff]
    %v4284 = vld [vmem:[%s2 + $0x210] sm:$0xff]
    %v4285 = vld [vmem:[%s2 + $0x218] sm:$0xff]
    %v4287 = vsel %vm130, %v4279, 0
    %v4290 = vsel %vm130, %v4280, 0
    %v4293 = vsel %vm130, %v4281, 0
    %4295 = vmatpush.msra.mxu0 0.0
    %4296 = vmatpush.msra.mxu0 0.0
    %4297 = vmatpush.msra.mxu0 0.0
    %4298 = vmatpush.msra.mxu0 0.0
    %4299 = vmatpush.msra.mxu0 0.0
    %4300 = vmatpush.msra.mxu0 0.0
    %4301 = vmatpush.msra.mxu0 0.0
    %4302 = vmatpush.msra.mxu0 0.0
    %4303 = vmatpush.msra.mxu0 0.0
    %4304 = vmatpush.msra.mxu0 0.0
    %4305 = vmatpush.msra.mxu0 0.0
    %4306 = vmatpush.msra.mxu0 0.0
    %4307 = vmatpush.msra.mxu0 %v4285
    %4308 = vmatpush.msra.mxu0 %v4284
    %4309 = vmatpush.msra.mxu0 %v4283
    %4310 = vmatpush.msra.mxu0 %v4282
    %4311 = vmatmul.f32.gmra.mxu0 %v4287
    %v4312 = vpop.f32.mrf.mxu0
    %v4313 = vadd.f32 0.0, %v4312
    %4314 = vmatmul.f32.gmra.mxu0 %v4290
    %v4315 = vpop.f32.mrf.mxu0
    %v4316 = vadd.f32 0.0, %v4315
    %4317 = vmatmul.f32.gmra.mxu0 %v4293
    %v4318 = vpop.f32.mrf.mxu0
    %v4319 = vadd.f32 0.0, %v4318
    %4320 = vdwg.mxu0
    %v4321 = vadd.f32 %v3133, %v4313
    %v4322 = vadd.f32 %v3134, %v4316
    %v4323 = vadd.f32 %v3135, %v4319
    %v4324 = vld [vmem:[%s2 + $0x265] sm:$0x1]
    %v4325 = vperm.slane %v4324, 0
    %v4326 = vadd.f32 %v4321, %v4325
    %v4327 = vadd.f32 %v4322, %v4325
    %v4328 = vadd.f32 %v4323, %v4325
    %v4329 = vld [vmem:[%s2 + $0x266] sm:$0x1]
    %v4330 = vld [vmem:[%s2 + $0x267] sm:$0x1]
    %v4331 = vsel %vm130, %v4326, 0.0
    %4332 = vadd.xlane.f32.xlu0 %v4331
    %v4333 = vpop.xlane.xlu0 %4332
    %v4334 = vsel %vm130, %v4327, 0.0
    %4335 = vadd.xlane.f32.xlu0 %v4334
    %v4336 = vpop.xlane.xlu0 %4335
    %v4337 = vsel %vm130, %v4328, 0.0
    %4338 = vadd.xlane.f32.xlu0 %v4337
    %v4339 = vpop.xlane.xlu0 %4338
    %v4340 = vmul.f32 %v4333, %v240
    %v4341 = vmul.f32 %v4336, %v240
    %v4342 = vmul.f32 %v4339, %v240
    %v4343 = vsub.f32 %v4326, %v4340
    %v4344 = vsub.f32 %v4327, %v4341
    %v4345 = vsub.f32 %v4328, %v4342
    %v4346 = vmul.f32 %v4343, %v4343
    %v4347 = vmul.f32 %v4344, %v4344
    %v4348 = vmul.f32 %v4345, %v4345
    %v4349 = vsel %vm130, %v4346, 0.0
    %4350 = vadd.xlane.f32.xlu0 %v4349
    %v4351 = vpop.xlane.xlu0 %4350
    %v4352 = vsel %vm130, %v4347, 0.0
    %4353 = vadd.xlane.f32.xlu0 %v4352
    %v4354 = vpop.xlane.xlu0 %4353
    %v4355 = vsel %vm130, %v4348, 0.0
    %4356 = vadd.xlane.f32.xlu0 %v4355
    %v4357 = vpop.xlane.xlu0 %4356
    %v4358 = vmul.f32 %v4351, 0.032258064
    %v4359 = vmul.f32 %v4354, 0.032258064
    %v4360 = vmul.f32 %v4357, 0.032258064
    %v4361 = vrsqrt.pop %v4358
    %v4362 = vmul.f32 %v4361, %v4358
    %v4363 = vmul.f32 %v4362, %v4361
    %v4364 = vmul.f32 0.5, %v4363
    %v4365 = vsub.f32 1.5, %v4364
    %v4366 = vmul.f32 %v4361, %v4365
    %v4367 = vmul.f32 %v4358, %v4366
    %vm4368 = vcmp.eq.f32.partialorder %v4358, inf
    %v4369 = vsel %vm4368, %v4358, %v4367
    %vm4370 = vcmp.eq.f32.partialorder %v4358, 0.0
    %v4371 = vand.u32 %v4358, 2147483648
    %v4372 = vsel %vm4370, %v4371, %v4369
    %v4373 = vrsqrt.pop %v4359
    %v4374 = vmul.f32 %v4373, %v4359
    %v4375 = vmul.f32 %v4374, %v4373
    %v4376 = vmul.f32 0.5, %v4375
    %v4377 = vsub.f32 1.5, %v4376
    %v4378 = vmul.f32 %v4373, %v4377
    %v4379 = vmul.f32 %v4359, %v4378
    %vm4380 = vcmp.eq.f32.partialorder %v4359, inf
    %v4381 = vsel %vm4380, %v4359, %v4379
    %vm4382 = vcmp.eq.f32.partialorder %v4359, 0.0
    %v4383 = vand.u32 %v4359, 2147483648
    %v4384 = vsel %vm4382, %v4383, %v4381
    %v4385 = vrsqrt.pop %v4360
    %v4386 = vmul.f32 %v4385, %v4360
    %v4387 = vmul.f32 %v4386, %v4385
    %v4388 = vmul.f32 0.5, %v4387
    %v4389 = vsub.f32 1.5, %v4388
    %v4390 = vmul.f32 %v4385, %v4389
    %v4391 = vmul.f32 %v4360, %v4390
    %vm4392 = vcmp.eq.f32.partialorder %v4360, inf
    %v4393 = vsel %vm4392, %v4360, %v4391
    %vm4394 = vcmp.eq.f32.partialorder %v4360, 0.0
    %v4395 = vand.u32 %v4360, 2147483648
    %v4396 = vsel %vm4394, %v4395, %v4393
    %v4397 = vadd.f32 %v4372, 1e-06
    %v4398 = vadd.f32 %v4384, 1e-06
    %v4399 = vadd.f32 %v4396, 1e-06
    %v4400 = vrcp.pop %v4397
    %v4401 = vrcp.pop %v4398
    %v4402 = vrcp.pop %v4399
    %v4403 = vperm.slane %v4329, 0
    %v4404 = vmul.f32 %v4403, %v4343
    %v4405 = vmul.f32 %v4403, %v4344
    %v4406 = vmul.f32 %v4403, %v4345
    %v4407 = vmul.f32 %v4404, %v4400
    %v4408 = vmul.f32 %v4405, %v4401
    %v4409 = vmul.f32 %v4406, %v4402
    %v4410 = vperm.slane %v4330, 0
    %v4411 = vadd.f32 %v4407, %v4410
    %v4412 = vadd.f32 %v4408, %v4410
    %v4413 = vadd.f32 %v4409, %v4410
    %v4414 = vld [vmem:[%s2 + $0x220] sm:$0xff]
    %v4415 = vld [vmem:[%s2 + $0x228] sm:$0xff]
    %v4416 = vld [vmem:[%s2 + $0x230] sm:$0xff]
    %v4417 = vld [vmem:[%s2 + $0x238] sm:$0xff]
    %v4418 = vld [vmem:[%s2 + $0x268] sm:$0x1]
    %v4419 = vperm.slane %v4418, 0
    %v4421 = vsel %vm130, %v4411, 0
    %v4424 = vsel %vm130, %v4412, 0
    %v4427 = vsel %vm130, %v4413, 0
    %4429 = vmatpush.msra.mxu0 0.0
    %4430 = vmatpush.msra.mxu0 0.0
    %4431 = vmatpush.msra.mxu0 0.0
    %4432 = vmatpush.msra.mxu0 0.0
    %4433 = vmatpush.msra.mxu0 0.0
    %4434 = vmatpush.msra.mxu0 0.0
    %4435 = vmatpush.msra.mxu0 0.0
    %4436 = vmatpush.msra.mxu0 0.0
    %4437 = vmatpush.msra.mxu0 0.0
    %4438 = vmatpush.msra.mxu0 0.0
    %4439 = vmatpush.msra.mxu0 0.0
    %4440 = vmatpush.msra.mxu0 0.0
    %4441 = vmatpush.msra.mxu0 %v4417
    %4442 = vmatpush.msra.mxu0 %v4416
    %4443 = vmatpush.msra.mxu0 %v4415
    %4444 = vmatpush.msra.mxu0 %v4414
    %4445 = vmatmul.f32.gmra.mxu0 %v4421
    %v4446 = vpop.f32.mrf.mxu0
    %v4447 = vadd.f32 %v4419, %v4446
    %4448 = vmatmul.f32.gmra.mxu0 %v4424
    %v4449 = vpop.f32.mrf.mxu0
    %v4450 = vadd.f32 %v4419, %v4449
    %4451 = vmatmul.f32.gmra.mxu0 %v4427
    %v4452 = vpop.f32.mrf.mxu0
    %v4453 = vadd.f32 %v4419, %v4452
    %4454 = vdwg.mxu0
    %v4455 = vmax.f32 %v4447, 0.0
    %v4456 = vmax.f32 %v4450, 0.0
    %v4457 = vmax.f32 %v4453, 0.0
    %v4458 = vld [vmem:[%s2 + $0x240] sm:$0xff]
    %v4459 = vld [vmem:[%s2 + $0x248] sm:$0xff]
    %v4460 = vld [vmem:[%s2 + $0x250] sm:$0xff]
    %v4461 = vld [vmem:[%s2 + $0x258] sm:$0xff]
    %v4463 = vsel %vm130, %v4455, 0
    %v4466 = vsel %vm130, %v4456, 0
    %v4469 = vsel %vm130, %v4457, 0
    %4471 = vmatpush.msra.mxu0 0.0
    %4472 = vmatpush.msra.mxu0 0.0
    %4473 = vmatpush.msra.mxu0 0.0
    %4474 = vmatpush.msra.mxu0 0.0
    %4475 = vmatpush.msra.mxu0 0.0
    %4476 = vmatpush.msra.mxu0 0.0
    %4477 = vmatpush.msra.mxu0 0.0
    %4478 = vmatpush.msra.mxu0 0.0
    %4479 = vmatpush.msra.mxu0 0.0
    %4480 = vmatpush.msra.mxu0 0.0
    %4481 = vmatpush.msra.mxu0 0.0
    %4482 = vmatpush.msra.mxu0 0.0
    %4483 = vmatpush.msra.mxu0 %v4461
    %4484 = vmatpush.msra.mxu0 %v4460
    %4485 = vmatpush.msra.mxu0 %v4459
    %4486 = vmatpush.msra.mxu0 %v4458
    %4487 = vmatmul.f32.gmra.mxu0 %v4463
    %v4488 = vpop.f32.mrf.mxu0
    %v4489 = vadd.f32 0.0, %v4488
    %4490 = vmatmul.f32.gmra.mxu0 %v4466
    %v4491 = vpop.f32.mrf.mxu0
    %v4492 = vadd.f32 0.0, %v4491
    %4493 = vmatmul.f32.gmra.mxu0 %v4469
    %v4494 = vpop.f32.mrf.mxu0
    %v4495 = vadd.f32 0.0, %v4494
    %4496 = vdwg.mxu0
    %v4497 = vadd.f32 %v4326, %v4489
    %v4498 = vadd.f32 %v4327, %v4492
    %v4499 = vadd.f32 %v4328, %v4495
    %v4500 = vld [vmem:[%s2 + $0x269] sm:$0x1]
    %v4501 = vperm.slane %v4500, 0
    %v4502 = vadd.f32 %v4497, %v4501
    %v4503 = vadd.f32 %v4498, %v4501
    %v4504 = vadd.f32 %v4499, %v4501
    %v4505 = vld [vmem:[%s2 + $0x330] sm:$0x1]
    %v4506 = vld [vmem:[%s2 + $0x331] sm:$0x1]
    %v4507 = vsel %vm130, %v4502, 0.0
    %4508 = vadd.xlane.f32.xlu0 %v4507
    %v4509 = vpop.xlane.xlu0 %4508
    %v4510 = vsel %vm130, %v4503, 0.0
    %4511 = vadd.xlane.f32.xlu0 %v4510
    %v4512 = vpop.xlane.xlu0 %4511
    %v4513 = vsel %vm130, %v4504, 0.0
    %4514 = vadd.xlane.f32.xlu0 %v4513
    %v4515 = vpop.xlane.xlu0 %4514
    %v4516 = vmul.f32 %v4509, %v240
    %v4517 = vmul.f32 %v4512, %v240
    %v4518 = vmul.f32 %v4515, %v240
    %v4519 = vsub.f32 %v4502, %v4516
    %v4520 = vsub.f32 %v4503, %v4517
    %v4521 = vsub.f32 %v4504, %v4518
    %v4522 = vmul.f32 %v4519, %v4519
    %v4523 = vmul.f32 %v4520, %v4520
    %v4524 = vmul.f32 %v4521, %v4521
    %v4525 = vsel %vm130, %v4522, 0.0
    %4526 = vadd.xlane.f32.xlu0 %v4525
    %v4527 = vpop.xlane.xlu0 %4526
    %v4528 = vsel %vm130, %v4523, 0.0
    %4529 = vadd.xlane.f32.xlu0 %v4528
    %v4530 = vpop.xlane.xlu0 %4529
    %v4531 = vsel %vm130, %v4524, 0.0
    %4532 = vadd.xlane.f32.xlu0 %v4531
    %v4533 = vpop.xlane.xlu0 %4532
    %v4534 = vmul.f32 %v4527, 0.032258064
    %v4535 = vmul.f32 %v4530, 0.032258064
    %v4536 = vmul.f32 %v4533, 0.032258064
    %v4537 = vrsqrt.pop %v4534
    %v4538 = vmul.f32 %v4537, %v4534
    %v4539 = vmul.f32 %v4538, %v4537
    %v4540 = vmul.f32 0.5, %v4539
    %v4541 = vsub.f32 1.5, %v4540
    %v4542 = vmul.f32 %v4537, %v4541
    %v4543 = vmul.f32 %v4534, %v4542
    %vm4544 = vcmp.eq.f32.partialorder %v4534, inf
    %v4545 = vsel %vm4544, %v4534, %v4543
    %vm4546 = vcmp.eq.f32.partialorder %v4534, 0.0
    %v4547 = vand.u32 %v4534, 2147483648
    %v4548 = vsel %vm4546, %v4547, %v4545
    %v4549 = vrsqrt.pop %v4535
    %v4550 = vmul.f32 %v4549, %v4535
    %v4551 = vmul.f32 %v4550, %v4549
    %v4552 = vmul.f32 0.5, %v4551
    %v4553 = vsub.f32 1.5, %v4552
    %v4554 = vmul.f32 %v4549, %v4553
    %v4555 = vmul.f32 %v4535, %v4554
    %vm4556 = vcmp.eq.f32.partialorder %v4535, inf
    %v4557 = vsel %vm4556, %v4535, %v4555
    %vm4558 = vcmp.eq.f32.partialorder %v4535, 0.0
    %v4559 = vand.u32 %v4535, 2147483648
    %v4560 = vsel %vm4558, %v4559, %v4557
    %v4561 = vrsqrt.pop %v4536
    %v4562 = vmul.f32 %v4561, %v4536
    %v4563 = vmul.f32 %v4562, %v4561
    %v4564 = vmul.f32 0.5, %v4563
    %v4565 = vsub.f32 1.5, %v4564
    %v4566 = vmul.f32 %v4561, %v4565
    %v4567 = vmul.f32 %v4536, %v4566
    %vm4568 = vcmp.eq.f32.partialorder %v4536, inf
    %v4569 = vsel %vm4568, %v4536, %v4567
    %vm4570 = vcmp.eq.f32.partialorder %v4536, 0.0
    %v4571 = vand.u32 %v4536, 2147483648
    %v4572 = vsel %vm4570, %v4571, %v4569
    %v4573 = vadd.f32 %v4548, 1e-06
    %v4574 = vadd.f32 %v4560, 1e-06
    %v4575 = vadd.f32 %v4572, 1e-06
    %v4576 = vrcp.pop %v4573
    %v4577 = vrcp.pop %v4574
    %v4578 = vrcp.pop %v4575
    %v4579 = vperm.slane %v4505, 0
    %v4580 = vmul.f32 %v4579, %v4519
    %v4581 = vmul.f32 %v4579, %v4520
    %v4582 = vmul.f32 %v4579, %v4521
    %v4583 = vmul.f32 %v4580, %v4576
    %v4584 = vmul.f32 %v4581, %v4577
    %v4585 = vmul.f32 %v4582, %v4578
    %v4586 = vperm.slane %v4506, 0
    %v4587 = vadd.f32 %v4583, %v4586
    %v4588 = vadd.f32 %v4584, %v4586
    %v4589 = vadd.f32 %v4585, %v4586
    %v4590 = vld [vmem:[%s2 + $0x270] sm:$0xff]
    %v4591 = vld [vmem:[%s2 + $0x278] sm:$0xff]
    %v4592 = vld [vmem:[%s2 + $0x280] sm:$0xff]
    %v4593 = vld [vmem:[%s2 + $0x288] sm:$0xff]
    %v4594 = vld [vmem:[%s2 + $0x332] sm:$0x1]
    %v4595 = vperm.slane %v4594, 0
    %v4597 = vsel %vm130, %v4587, 0
    %v4600 = vsel %vm130, %v4588, 0
    %v4603 = vsel %vm130, %v4589, 0
    %4605 = vmatpush.msra.mxu0 0.0
    %4606 = vmatpush.msra.mxu0 0.0
    %4607 = vmatpush.msra.mxu0 0.0
    %4608 = vmatpush.msra.mxu0 0.0
    %4609 = vmatpush.msra.mxu0 0.0
    %4610 = vmatpush.msra.mxu0 0.0
    %4611 = vmatpush.msra.mxu0 0.0
    %4612 = vmatpush.msra.mxu0 0.0
    %4613 = vmatpush.msra.mxu0 0.0
    %4614 = vmatpush.msra.mxu0 0.0
    %4615 = vmatpush.msra.mxu0 0.0
    %4616 = vmatpush.msra.mxu0 0.0
    %4617 = vmatpush.msra.mxu0 %v4593
    %4618 = vmatpush.msra.mxu0 %v4592
    %4619 = vmatpush.msra.mxu0 %v4591
    %4620 = vmatpush.msra.mxu0 %v4590
    %4621 = vmatmul.f32.gmra.mxu0 %v4597
    %v4622 = vpop.f32.mrf.mxu0
    %v4623 = vadd.f32 %v4595, %v4622
    %4624 = vmatmul.f32.gmra.mxu0 %v4600
    %v4625 = vpop.f32.mrf.mxu0
    %v4626 = vadd.f32 %v4595, %v4625
    %4627 = vmatmul.f32.gmra.mxu0 %v4603
    %v4628 = vpop.f32.mrf.mxu0
    %v4629 = vadd.f32 %v4595, %v4628
    %4630 = vdwg.mxu0
    %v4631 = vld [vmem:[%s2 + $0x290] sm:$0xff]
    %v4632 = vld [vmem:[%s2 + $0x298] sm:$0xff]
    %v4633 = vld [vmem:[%s2 + $0x2a0] sm:$0xff]
    %v4634 = vld [vmem:[%s2 + $0x2a8] sm:$0xff]
    %v4635 = vld [vmem:[%s2 + $0x333] sm:$0x1]
    %v4636 = vperm.slane %v4635, 0
    %v4638 = vsel %vm130, %v4502, 0
    %v4641 = vsel %vm130, %v4503, 0
    %v4644 = vsel %vm130, %v4504, 0
    %4646 = vmatpush.msra.mxu0 0.0
    %4647 = vmatpush.msra.mxu0 0.0
    %4648 = vmatpush.msra.mxu0 0.0
    %4649 = vmatpush.msra.mxu0 0.0
    %4650 = vmatpush.msra.mxu0 0.0
    %4651 = vmatpush.msra.mxu0 0.0
    %4652 = vmatpush.msra.mxu0 0.0
    %4653 = vmatpush.msra.mxu0 0.0
    %4654 = vmatpush.msra.mxu0 0.0
    %4655 = vmatpush.msra.mxu0 0.0
    %4656 = vmatpush.msra.mxu0 0.0
    %4657 = vmatpush.msra.mxu0 0.0
    %4658 = vmatpush.msra.mxu0 %v4634
    %4659 = vmatpush.msra.mxu0 %v4633
    %4660 = vmatpush.msra.mxu0 %v4632
    %4661 = vmatpush.msra.mxu0 %v4631
    %4662 = vmatmul.f32.gmra.mxu0 %v4638
    %v4663 = vpop.f32.mrf.mxu0
    %v4664 = vadd.f32 %v4636, %v4663
    %4665 = vmatmul.f32.gmra.mxu0 %v4641
    %v4666 = vpop.f32.mrf.mxu0
    %v4667 = vadd.f32 %v4636, %v4666
    %4668 = vmatmul.f32.gmra.mxu0 %v4644
    %v4669 = vpop.f32.mrf.mxu0
    %v4670 = vadd.f32 %v4636, %v4669
    %4671 = vdwg.mxu0
    %v4672 = vld [vmem:[%s2 + $0x2b0] sm:$0xff]
    %v4673 = vld [vmem:[%s2 + $0x2b8] sm:$0xff]
    %v4674 = vld [vmem:[%s2 + $0x2c0] sm:$0xff]
    %v4675 = vld [vmem:[%s2 + $0x2c8] sm:$0xff]
    %v4676 = vld [vmem:[%s2 + $0x334] sm:$0x1]
    %v4677 = vperm.slane %v4676, 0
    %4678 = vmatpush.msra.mxu0 0.0
    %4679 = vmatpush.msra.mxu0 0.0
    %4680 = vmatpush.msra.mxu0 0.0
    %4681 = vmatpush.msra.mxu0 0.0
    %4682 = vmatpush.msra.mxu0 0.0
    %4683 = vmatpush.msra.mxu0 0.0
    %4684 = vmatpush.msra.mxu0 0.0
    %4685 = vmatpush.msra.mxu0 0.0
    %4686 = vmatpush.msra.mxu0 0.0
    %4687 = vmatpush.msra.mxu0 0.0
    %4688 = vmatpush.msra.mxu0 0.0
    %4689 = vmatpush.msra.mxu0 0.0
    %4690 = vmatpush.msra.mxu0 %v4675
    %4691 = vmatpush.msra.mxu0 %v4674
    %4692 = vmatpush.msra.mxu0 %v4673
    %4693 = vmatpush.msra.mxu0 %v4672
    %4694 = vmatmul.f32.gmra.mxu0 %v4638
    %v4695 = vpop.f32.mrf.mxu0
    %v4696 = vadd.f32 %v4677, %v4695
    %4697 = vmatmul.f32.gmra.mxu0 %v4641
    %v4698 = vpop.f32.mrf.mxu0
    %v4699 = vadd.f32 %v4677, %v4698
    %4700 = vmatmul.f32.gmra.mxu0 %v4644
    %v4701 = vpop.f32.mrf.mxu0
    %v4702 = vadd.f32 %v4677, %v4701
    %4703 = vdwg.mxu0
    %v4704 = vmul.f32 %v4664, %v319
    %v4705 = vmul.f32 %v4667, %v319
    %v4706 = vmul.f32 %v4670, %v319
    %v4707 = vmul.f32 %v4696, %v319
    %v4708 = vmul.f32 %v4699, %v319
    %v4709 = vmul.f32 %v4702, %v319
    %v4711 = vsel %vm130, %v4623, 0
    %v4714 = vsel %vm130, %v4626, 0
    %v4717 = vsel %vm130, %v4629, 0
    %v4720 = vsel %vm130, %v4704, 0
    %v4723 = vsel %vm130, %v4705, 0
    %v4726 = vsel %vm130, %v4706, 0
    %4728 = vmatpush.xpose.msra.mxu0 0.0
    %4729 = vmatpush.xpose.msra.mxu0 0.0
    %4730 = vmatpush.xpose.msra.mxu0 0.0
    %4731 = vmatpush.xpose.msra.mxu0 0.0
    %4732 = vmatpush.xpose.msra.mxu0 0.0
    %4733 = vmatpush.xpose.msra.mxu0 0.0
    %4734 = vmatpush.xpose.msra.mxu0 0.0
    %4735 = vmatpush.xpose.msra.mxu0 0.0
    %4736 = vmatpush.xpose.msra.mxu0 0.0
    %4737 = vmatpush.xpose.msra.mxu0 0.0
    %4738 = vmatpush.xpose.msra.mxu0 0.0
    %4739 = vmatpush.xpose.msra.mxu0 0.0
    %4740 = vmatpush.xpose.msra.mxu0 0.0
    %4741 = vmatpush.xpose.msra.mxu0 %v4726
    %4742 = vmatpush.xpose.msra.mxu0 %v4723
    %4743 = vmatpush.xpose.msra.mxu0 %v4720
    %4744 = vmatmul.f32.gmra.mxu0 %v4711
    %v4745 = vpop.f32.mrf.mxu0
    %v4746 = vadd.f32 0.0, %v4745
    %4747 = vmatmul.f32.gmra.mxu0 %v4714
    %v4748 = vpop.f32.mrf.mxu0
    %v4749 = vadd.f32 0.0, %v4748
    %4750 = vmatmul.f32.gmra.mxu0 %v4717
    %v4751 = vpop.f32.mrf.mxu0
    %v4752 = vadd.f32 0.0, %v4751
    %4753 = vdwg.mxu0
    %v4754 = vmul.f32 %v4746, 0.5
    %v4755 = vmul.f32 %v4749, 0.5
    %v4756 = vmul.f32 %v4752, 0.5
    %v4757 = vadd.f32 %v4754, %v394
    %v4758 = vadd.f32 %v4755, %v395
    %v4759 = vadd.f32 %v4756, %v396
    %v4760 = vsel %vm652, %v4757, -inf
    %4761 = vmax.xlane.f32.xlu0 %v4760
    %v4762 = vpop.xlane.xlu0 %4761
    %v4763 = vsel %vm652, %v4758, -inf
    %4764 = vmax.xlane.f32.xlu0 %v4763
    %v4765 = vpop.xlane.xlu0 %4764
    %v4766 = vsel %vm652, %v4759, -inf
    %4767 = vmax.xlane.f32.xlu0 %v4766
    %v4768 = vpop.xlane.xlu0 %4767
    %v4769 = vsub.f32 %v4757, %v4762
    %v4770 = vsub.f32 %v4758, %v4765
    %v4771 = vsub.f32 %v4759, %v4768
    %v4772 = vmul.f32 %v4769, 1.442695
    %v4773 = vpow.pop %v4772
    %v4774 = vmul.f32 %v4770, 1.442695
    %v4775 = vpow.pop %v4774
    %v4776 = vmul.f32 %v4771, 1.442695
    %v4777 = vpow.pop %v4776
    %v4778 = vsel %vm652, %v4773, 0.0
    %4779 = vadd.xlane.f32.xlu0 %v4778
    %v4780 = vpop.xlane.xlu0 %4779
    %v4781 = vsel %vm652, %v4775, 0.0
    %4782 = vadd.xlane.f32.xlu0 %v4781
    %v4783 = vpop.xlane.xlu0 %4782
    %v4784 = vsel %vm652, %v4777, 0.0
    %4785 = vadd.xlane.f32.xlu0 %v4784
    %v4786 = vpop.xlane.xlu0 %4785
    %v4787 = vrcp.pop %v4780
    %v4788 = vrcp.pop %v4783
    %v4789 = vrcp.pop %v4786
    %v4790 = vmul.f32 %v4773, %v4787
    %v4791 = vmul.f32 %v4775, %v4788
    %v4792 = vmul.f32 %v4777, %v4789
    %v4793 = vmul.f32 %v4664, %v324
    %v4794 = vmul.f32 %v4667, %v324
    %v4795 = vmul.f32 %v4670, %v324
    %v4796 = vmul.f32 %v4696, %v324
    %v4797 = vmul.f32 %v4699, %v324
    %v4798 = vmul.f32 %v4702, %v324
    %v4800 = vsel %vm130, %v4793, 0
    %v4803 = vsel %vm130, %v4794, 0
    %v4806 = vsel %vm130, %v4795, 0
    %4808 = vmatpush.xpose.msra.mxu0 0.0
    %4809 = vmatpush.xpose.msra.mxu0 0.0
    %4810 = vmatpush.xpose.msra.mxu0 0.0
    %4811 = vmatpush.xpose.msra.mxu0 0.0
    %4812 = vmatpush.xpose.msra.mxu0 0.0
    %4813 = vmatpush.xpose.msra.mxu0 0.0
    %4814 = vmatpush.xpose.msra.mxu0 0.0
    %4815 = vmatpush.xpose.msra.mxu0 0.0
    %4816 = vmatpush.xpose.msra.mxu0 0.0
    %4817 = vmatpush.xpose.msra.mxu0 0.0
    %4818 = vmatpush.xpose.msra.mxu0 0.0
    %4819 = vmatpush.xpose.msra.mxu0 0.0
    %4820 = vmatpush.xpose.msra.mxu0 0.0
    %4821 = vmatpush.xpose.msra.mxu0 %v4806
    %4822 = vmatpush.xpose.msra.mxu0 %v4803
    %4823 = vmatpush.xpose.msra.mxu0 %v4800
    %4824 = vmatmul.f32.gmra.mxu0 %v4711
    %v4825 = vpop.f32.mrf.mxu0
    %v4826 = vadd.f32 0.0, %v4825
    %4827 = vmatmul.f32.gmra.mxu0 %v4714
    %v4828 = vpop.f32.mrf.mxu0
    %v4829 = vadd.f32 0.0, %v4828
    %4830 = vmatmul.f32.gmra.mxu0 %v4717
    %v4831 = vpop.f32.mrf.mxu0
    %v4832 = vadd.f32 0.0, %v4831
    %4833 = vdwg.mxu0
    %v4834 = vmul.f32 %v4826, 0.5
    %v4835 = vmul.f32 %v4829, 0.5
    %v4836 = vmul.f32 %v4832, 0.5
    %v4837 = vadd.f32 %v4834, %v394
    %v4838 = vadd.f32 %v4835, %v395
    %v4839 = vadd.f32 %v4836, %v396
    %v4840 = vsel %vm652, %v4837, -inf
    %4841 = vmax.xlane.f32.xlu0 %v4840
    %v4842 = vpop.xlane.xlu0 %4841
    %v4843 = vsel %vm652, %v4838, -inf
    %4844 = vmax.xlane.f32.xlu0 %v4843
    %v4845 = vpop.xlane.xlu0 %4844
    %v4846 = vsel %vm652, %v4839, -inf
    %4847 = vmax.xlane.f32.xlu0 %v4846
    %v4848 = vpop.xlane.xlu0 %4847
    %v4849 = vsub.f32 %v4837, %v4842
    %v4850 = vsub.f32 %v4838, %v4845
    %v4851 = vsub.f32 %v4839, %v4848
    %v4852 = vmul.f32 %v4849, 1.442695
    %v4853 = vpow.pop %v4852
    %v4854 = vmul.f32 %v4850, 1.442695
    %v4855 = vpow.pop %v4854
    %v4856 = vmul.f32 %v4851, 1.442695
    %v4857 = vpow.pop %v4856
    %v4858 = vsel %vm652, %v4853, 0.0
    %4859 = vadd.xlane.f32.xlu0 %v4858
    %v4860 = vpop.xlane.xlu0 %4859
    %v4861 = vsel %vm652, %v4855, 0.0
    %4862 = vadd.xlane.f32.xlu0 %v4861
    %v4863 = vpop.xlane.xlu0 %4862
    %v4864 = vsel %vm652, %v4857, 0.0
    %4865 = vadd.xlane.f32.xlu0 %v4864
    %v4866 = vpop.xlane.xlu0 %4865
    %v4867 = vrcp.pop %v4860
    %v4868 = vrcp.pop %v4863
    %v4869 = vrcp.pop %v4866
    %v4870 = vmul.f32 %v4853, %v4867
    %v4871 = vmul.f32 %v4855, %v4868
    %v4872 = vmul.f32 %v4857, %v4869
    %v4874 = vsel %vm652, %v4870, 0
    %v4877 = vsel %vm652, %v4871, 0
    %v4880 = vsel %vm652, %v4872, 0
    %4882 = vmatpush.msra.mxu0 0.0
    %4883 = vmatpush.msra.mxu0 0.0
    %4884 = vmatpush.msra.mxu0 0.0
    %4885 = vmatpush.msra.mxu0 0.0
    %4886 = vmatpush.msra.mxu0 0.0
    %4887 = vmatpush.msra.mxu0 0.0
    %4888 = vmatpush.msra.mxu0 0.0
    %4889 = vmatpush.msra.mxu0 0.0
    %4890 = vmatpush.msra.mxu0 0.0
    %4891 = vmatpush.msra.mxu0 0.0
    %4892 = vmatpush.msra.mxu0 0.0
    %4893 = vmatpush.msra.mxu0 0.0
    %4894 = vmatpush.msra.mxu0 0.0
    %4895 = vmatpush.msra.mxu0 %v4798
    %4896 = vmatpush.msra.mxu0 %v4797
    %4897 = vmatpush.msra.mxu0 %v4796
    %4898 = vmatmul.f32.gmra.mxu0 %v4874
    %v4899 = vpop.f32.mrf.mxu0
    %v4900 = vadd.f32 0.0, %v4899
    %4901 = vmatmul.f32.gmra.mxu0 %v4877
    %v4902 = vpop.f32.mrf.mxu0
    %v4903 = vadd.f32 0.0, %v4902
    %4904 = vmatmul.f32.gmra.mxu0 %v4880
    %v4905 = vpop.f32.mrf.mxu0
    %v4906 = vadd.f32 0.0, %v4905
    %4907 = vdwg.mxu0
    %v4909 = vsel %vm652, %v4790, 0
    %v4912 = vsel %vm652, %v4791, 0
    %v4915 = vsel %vm652, %v4792, 0
    %4917 = vmatpush.msra.mxu0 0.0
    %4918 = vmatpush.msra.mxu0 0.0
    %4919 = vmatpush.msra.mxu0 0.0
    %4920 = vmatpush.msra.mxu0 0.0
    %4921 = vmatpush.msra.mxu0 0.0
    %4922 = vmatpush.msra.mxu0 0.0
    %4923 = vmatpush.msra.mxu0 0.0
    %4924 = vmatpush.msra.mxu0 0.0
    %4925 = vmatpush.msra.mxu0 0.0
    %4926 = vmatpush.msra.mxu0 0.0
    %4927 = vmatpush.msra.mxu0 0.0
    %4928 = vmatpush.msra.mxu0 0.0
    %4929 = vmatpush.msra.mxu0 0.0
    %4930 = vmatpush.msra.mxu0 %v4709
    %4931 = vmatpush.msra.mxu0 %v4708
    %4932 = vmatpush.msra.mxu0 %v4707
    %4933 = vmatmul.f32.gmra.mxu0 %v4909
    %v4934 = vpop.f32.mrf.mxu0
    %v4935 = vadd.f32 %v4900, %v4934
    %4936 = vmatmul.f32.gmra.mxu0 %v4912
    %v4937 = vpop.f32.mrf.mxu0
    %v4938 = vadd.f32 %v4903, %v4937
    %4939 = vmatmul.f32.gmra.mxu0 %v4915
    %v4940 = vpop.f32.mrf.mxu0
    %v4941 = vadd.f32 %v4906, %v4940
    %4942 = vdwg.mxu0
    %v4943 = vmul.f32 %v4664, %v329
    %v4944 = vmul.f32 %v4667, %v329
    %v4945 = vmul.f32 %v4670, %v329
    %v4946 = vmul.f32 %v4696, %v329
    %v4947 = vmul.f32 %v4699, %v329
    %v4948 = vmul.f32 %v4702, %v329
    %v4950 = vsel %vm130, %v4943, 0
    %v4953 = vsel %vm130, %v4944, 0
    %v4956 = vsel %vm130, %v4945, 0
    %4958 = vmatpush.xpose.msra.mxu0 0.0
    %4959 = vmatpush.xpose.msra.mxu0 0.0
    %4960 = vmatpush.xpose.msra.mxu0 0.0
    %4961 = vmatpush.xpose.msra.mxu0 0.0
    %4962 = vmatpush.xpose.msra.mxu0 0.0
    %4963 = vmatpush.xpose.msra.mxu0 0.0
    %4964 = vmatpush.xpose.msra.mxu0 0.0
    %4965 = vmatpush.xpose.msra.mxu0 0.0
    %4966 = vmatpush.xpose.msra.mxu0 0.0
    %4967 = vmatpush.xpose.msra.mxu0 0.0
    %4968 = vmatpush.xpose.msra.mxu0 0.0
    %4969 = vmatpush.xpose.msra.mxu0 0.0
    %4970 = vmatpush.xpose.msra.mxu0 0.0
    %4971 = vmatpush.xpose.msra.mxu0 %v4956
    %4972 = vmatpush.xpose.msra.mxu0 %v4953
    %4973 = vmatpush.xpose.msra.mxu0 %v4950
    %4974 = vmatmul.f32.gmra.mxu0 %v4711
    %v4975 = vpop.f32.mrf.mxu0
    %v4976 = vadd.f32 0.0, %v4975
    %4977 = vmatmul.f32.gmra.mxu0 %v4714
    %v4978 = vpop.f32.mrf.mxu0
    %v4979 = vadd.f32 0.0, %v4978
    %4980 = vmatmul.f32.gmra.mxu0 %v4717
    %v4981 = vpop.f32.mrf.mxu0
    %v4982 = vadd.f32 0.0, %v4981
    %4983 = vdwg.mxu0
    %v4984 = vmul.f32 %v4976, 0.5
    %v4985 = vmul.f32 %v4979, 0.5
    %v4986 = vmul.f32 %v4982, 0.5
    %v4987 = vadd.f32 %v4984, %v394
    %v4988 = vadd.f32 %v4985, %v395
    %v4989 = vadd.f32 %v4986, %v396
    %v4990 = vsel %vm652, %v4987, -inf
    %4991 = vmax.xlane.f32.xlu0 %v4990
    %v4992 = vpop.xlane.xlu0 %4991
    %v4993 = vsel %vm652, %v4988, -inf
    %4994 = vmax.xlane.f32.xlu0 %v4993
    %v4995 = vpop.xlane.xlu0 %4994
    %v4996 = vsel %vm652, %v4989, -inf
    %4997 = vmax.xlane.f32.xlu0 %v4996
    %v4998 = vpop.xlane.xlu0 %4997
    %v4999 = vsub.f32 %v4987, %v4992
    %v5000 = vsub.f32 %v4988, %v4995
    %v5001 = vsub.f32 %v4989, %v4998
    %v5002 = vmul.f32 %v4999, 1.442695
    %v5003 = vpow.pop %v5002
    %v5004 = vmul.f32 %v5000, 1.442695
    %v5005 = vpow.pop %v5004
    %v5006 = vmul.f32 %v5001, 1.442695
    %v5007 = vpow.pop %v5006
    %v5008 = vsel %vm652, %v5003, 0.0
    %5009 = vadd.xlane.f32.xlu0 %v5008
    %v5010 = vpop.xlane.xlu0 %5009
    %v5011 = vsel %vm652, %v5005, 0.0
    %5012 = vadd.xlane.f32.xlu0 %v5011
    %v5013 = vpop.xlane.xlu0 %5012
    %v5014 = vsel %vm652, %v5007, 0.0
    %5015 = vadd.xlane.f32.xlu0 %v5014
    %v5016 = vpop.xlane.xlu0 %5015
    %v5017 = vrcp.pop %v5010
    %v5018 = vrcp.pop %v5013
    %v5019 = vrcp.pop %v5016
    %v5020 = vmul.f32 %v5003, %v5017
    %v5021 = vmul.f32 %v5005, %v5018
    %v5022 = vmul.f32 %v5007, %v5019
    %v5024 = vsel %vm652, %v5020, 0
    %v5027 = vsel %vm652, %v5021, 0
    %v5030 = vsel %vm652, %v5022, 0
    %5032 = vmatpush.msra.mxu0 0.0
    %5033 = vmatpush.msra.mxu0 0.0
    %5034 = vmatpush.msra.mxu0 0.0
    %5035 = vmatpush.msra.mxu0 0.0
    %5036 = vmatpush.msra.mxu0 0.0
    %5037 = vmatpush.msra.mxu0 0.0
    %5038 = vmatpush.msra.mxu0 0.0
    %5039 = vmatpush.msra.mxu0 0.0
    %5040 = vmatpush.msra.mxu0 0.0
    %5041 = vmatpush.msra.mxu0 0.0
    %5042 = vmatpush.msra.mxu0 0.0
    %5043 = vmatpush.msra.mxu0 0.0
    %5044 = vmatpush.msra.mxu0 0.0
    %5045 = vmatpush.msra.mxu0 %v4948
    %5046 = vmatpush.msra.mxu0 %v4947
    %5047 = vmatpush.msra.mxu0 %v4946
    %5048 = vmatmul.f32.gmra.mxu0 %v5024
    %v5049 = vpop.f32.mrf.mxu0
    %v5050 = vadd.f32 0.0, %v5049
    %5051 = vmatmul.f32.gmra.mxu0 %v5027
    %v5052 = vpop.f32.mrf.mxu0
    %v5053 = vadd.f32 0.0, %v5052
    %5054 = vmatmul.f32.gmra.mxu0 %v5030
    %v5055 = vpop.f32.mrf.mxu0
    %v5056 = vadd.f32 0.0, %v5055
    %5057 = vdwg.mxu0
    %v5058 = vadd.f32 %v4935, %v5050
    %v5059 = vadd.f32 %v4938, %v5053
    %v5060 = vadd.f32 %v4941, %v5056
    %v5061 = vmul.f32 %v4664, %v334
    %v5062 = vmul.f32 %v4667, %v334
    %v5063 = vmul.f32 %v4670, %v334
    %v5064 = vmul.f32 %v4696, %v334
    %v5065 = vmul.f32 %v4699, %v334
    %v5066 = vmul.f32 %v4702, %v334
    %v5068 = vsel %vm130, %v5061, 0
    %v5071 = vsel %vm130, %v5062, 0
    %v5074 = vsel %vm130, %v5063, 0
    %5076 = vmatpush.xpose.msra.mxu0 0.0
    %5077 = vmatpush.xpose.msra.mxu0 0.0
    %5078 = vmatpush.xpose.msra.mxu0 0.0
    %5079 = vmatpush.xpose.msra.mxu0 0.0
    %5080 = vmatpush.xpose.msra.mxu0 0.0
    %5081 = vmatpush.xpose.msra.mxu0 0.0
    %5082 = vmatpush.xpose.msra.mxu0 0.0
    %5083 = vmatpush.xpose.msra.mxu0 0.0
    %5084 = vmatpush.xpose.msra.mxu0 0.0
    %5085 = vmatpush.xpose.msra.mxu0 0.0
    %5086 = vmatpush.xpose.msra.mxu0 0.0
    %5087 = vmatpush.xpose.msra.mxu0 0.0
    %5088 = vmatpush.xpose.msra.mxu0 0.0
    %5089 = vmatpush.xpose.msra.mxu0 %v5074
    %5090 = vmatpush.xpose.msra.mxu0 %v5071
    %5091 = vmatpush.xpose.msra.mxu0 %v5068
    %5092 = vmatmul.f32.gmra.mxu0 %v4711
    %v5093 = vpop.f32.mrf.mxu0
    %v5094 = vadd.f32 0.0, %v5093
    %5095 = vmatmul.f32.gmra.mxu0 %v4714
    %v5096 = vpop.f32.mrf.mxu0
    %v5097 = vadd.f32 0.0, %v5096
    %5098 = vmatmul.f32.gmra.mxu0 %v4717
    %v5099 = vpop.f32.mrf.mxu0
    %v5100 = vadd.f32 0.0, %v5099
    %5101 = vdwg.mxu0
    %v5102 = vmul.f32 %v5094, 0.5
    %v5103 = vmul.f32 %v5097, 0.5
    %v5104 = vmul.f32 %v5100, 0.5
    %v5105 = vadd.f32 %v5102, %v394
    %v5106 = vadd.f32 %v5103, %v395
    %v5107 = vadd.f32 %v5104, %v396
    %v5108 = vsel %vm652, %v5105, -inf
    %5109 = vmax.xlane.f32.xlu0 %v5108
    %v5110 = vpop.xlane.xlu0 %5109
    %v5111 = vsel %vm652, %v5106, -inf
    %5112 = vmax.xlane.f32.xlu0 %v5111
    %v5113 = vpop.xlane.xlu0 %5112
    %v5114 = vsel %vm652, %v5107, -inf
    %5115 = vmax.xlane.f32.xlu0 %v5114
    %v5116 = vpop.xlane.xlu0 %5115
    %v5117 = vsub.f32 %v5105, %v5110
    %v5118 = vsub.f32 %v5106, %v5113
    %v5119 = vsub.f32 %v5107, %v5116
    %v5120 = vmul.f32 %v5117, 1.442695
    %v5121 = vpow.pop %v5120
    %v5122 = vmul.f32 %v5118, 1.442695
    %v5123 = vpow.pop %v5122
    %v5124 = vmul.f32 %v5119, 1.442695
    %v5125 = vpow.pop %v5124
    %v5126 = vsel %vm652, %v5121, 0.0
    %5127 = vadd.xlane.f32.xlu0 %v5126
    %v5128 = vpop.xlane.xlu0 %5127
    %v5129 = vsel %vm652, %v5123, 0.0
    %5130 = vadd.xlane.f32.xlu0 %v5129
    %v5131 = vpop.xlane.xlu0 %5130
    %v5132 = vsel %vm652, %v5125, 0.0
    %5133 = vadd.xlane.f32.xlu0 %v5132
    %v5134 = vpop.xlane.xlu0 %5133
    %v5135 = vrcp.pop %v5128
    %v5136 = vrcp.pop %v5131
    %v5137 = vrcp.pop %v5134
    %v5138 = vmul.f32 %v5121, %v5135
    %v5139 = vmul.f32 %v5123, %v5136
    %v5140 = vmul.f32 %v5125, %v5137
    %v5142 = vsel %vm652, %v5138, 0
    %v5145 = vsel %vm652, %v5139, 0
    %v5148 = vsel %vm652, %v5140, 0
    %5150 = vmatpush.msra.mxu0 0.0
    %5151 = vmatpush.msra.mxu0 0.0
    %5152 = vmatpush.msra.mxu0 0.0
    %5153 = vmatpush.msra.mxu0 0.0
    %5154 = vmatpush.msra.mxu0 0.0
    %5155 = vmatpush.msra.mxu0 0.0
    %5156 = vmatpush.msra.mxu0 0.0
    %5157 = vmatpush.msra.mxu0 0.0
    %5158 = vmatpush.msra.mxu0 0.0
    %5159 = vmatpush.msra.mxu0 0.0
    %5160 = vmatpush.msra.mxu0 0.0
    %5161 = vmatpush.msra.mxu0 0.0
    %5162 = vmatpush.msra.mxu0 0.0
    %5163 = vmatpush.msra.mxu0 %v5066
    %5164 = vmatpush.msra.mxu0 %v5065
    %5165 = vmatpush.msra.mxu0 %v5064
    %5166 = vmatmul.f32.gmra.mxu0 %v5142
    %v5167 = vpop.f32.mrf.mxu0
    %v5168 = vadd.f32 0.0, %v5167
    %5169 = vmatmul.f32.gmra.mxu0 %v5145
    %v5170 = vpop.f32.mrf.mxu0
    %v5171 = vadd.f32 0.0, %v5170
    %5172 = vmatmul.f32.gmra.mxu0 %v5148
    %v5173 = vpop.f32.mrf.mxu0
    %v5174 = vadd.f32 0.0, %v5173
    %5175 = vdwg.mxu0
    %v5176 = vadd.f32 %v5058, %v5168
    %v5177 = vadd.f32 %v5059, %v5171
    %v5178 = vadd.f32 %v5060, %v5174
    %v5179 = vmul.f32 %v4664, %v339
    %v5180 = vmul.f32 %v4667, %v339
    %v5181 = vmul.f32 %v4670, %v339
    %v5182 = vmul.f32 %v4696, %v339
    %v5183 = vmul.f32 %v4699, %v339
    %v5184 = vmul.f32 %v4702, %v339
    %v5186 = vsel %vm130, %v5179, 0
    %v5189 = vsel %vm130, %v5180, 0
    %v5192 = vsel %vm130, %v5181, 0
    %5194 = vmatpush.xpose.msra.mxu0 0.0
    %5195 = vmatpush.xpose.msra.mxu0 0.0
    %5196 = vmatpush.xpose.msra.mxu0 0.0
    %5197 = vmatpush.xpose.msra.mxu0 0.0
    %5198 = vmatpush.xpose.msra.mxu0 0.0
    %5199 = vmatpush.xpose.msra.mxu0 0.0
    %5200 = vmatpush.xpose.msra.mxu0 0.0
    %5201 = vmatpush.xpose.msra.mxu0 0.0
    %5202 = vmatpush.xpose.msra.mxu0 0.0
    %5203 = vmatpush.xpose.msra.mxu0 0.0
    %5204 = vmatpush.xpose.msra.mxu0 0.0
    %5205 = vmatpush.xpose.msra.mxu0 0.0
    %5206 = vmatpush.xpose.msra.mxu0 0.0
    %5207 = vmatpush.xpose.msra.mxu0 %v5192
    %5208 = vmatpush.xpose.msra.mxu0 %v5189
    %5209 = vmatpush.xpose.msra.mxu0 %v5186
    %5210 = vmatmul.f32.gmra.mxu0 %v4711
    %v5211 = vpop.f32.mrf.mxu0
    %v5212 = vadd.f32 0.0, %v5211
    %5213 = vmatmul.f32.gmra.mxu0 %v4714
    %v5214 = vpop.f32.mrf.mxu0
    %v5215 = vadd.f32 0.0, %v5214
    %5216 = vmatmul.f32.gmra.mxu0 %v4717
    %v5217 = vpop.f32.mrf.mxu0
    %v5218 = vadd.f32 0.0, %v5217
    %5219 = vdwg.mxu0
    %v5220 = vmul.f32 %v5212, 0.5
    %v5221 = vmul.f32 %v5215, 0.5
    %v5222 = vmul.f32 %v5218, 0.5
    %v5223 = vadd.f32 %v5220, %v394
    %v5224 = vadd.f32 %v5221, %v395
    %v5225 = vadd.f32 %v5222, %v396
    %v5226 = vsel %vm652, %v5223, -inf
    %5227 = vmax.xlane.f32.xlu0 %v5226
    %v5228 = vpop.xlane.xlu0 %5227
    %v5229 = vsel %vm652, %v5224, -inf
    %5230 = vmax.xlane.f32.xlu0 %v5229
    %v5231 = vpop.xlane.xlu0 %5230
    %v5232 = vsel %vm652, %v5225, -inf
    %5233 = vmax.xlane.f32.xlu0 %v5232
    %v5234 = vpop.xlane.xlu0 %5233
    %v5235 = vsub.f32 %v5223, %v5228
    %v5236 = vsub.f32 %v5224, %v5231
    %v5237 = vsub.f32 %v5225, %v5234
    %v5238 = vmul.f32 %v5235, 1.442695
    %v5239 = vpow.pop %v5238
    %v5240 = vmul.f32 %v5236, 1.442695
    %v5241 = vpow.pop %v5240
    %v5242 = vmul.f32 %v5237, 1.442695
    %v5243 = vpow.pop %v5242
    %v5244 = vsel %vm652, %v5239, 0.0
    %5245 = vadd.xlane.f32.xlu0 %v5244
    %v5246 = vpop.xlane.xlu0 %5245
    %v5247 = vsel %vm652, %v5241, 0.0
    %5248 = vadd.xlane.f32.xlu0 %v5247
    %v5249 = vpop.xlane.xlu0 %5248
    %v5250 = vsel %vm652, %v5243, 0.0
    %5251 = vadd.xlane.f32.xlu0 %v5250
    %v5252 = vpop.xlane.xlu0 %5251
    %v5253 = vrcp.pop %v5246
    %v5254 = vrcp.pop %v5249
    %v5255 = vrcp.pop %v5252
    %v5256 = vmul.f32 %v5239, %v5253
    %v5257 = vmul.f32 %v5241, %v5254
    %v5258 = vmul.f32 %v5243, %v5255
    %v5260 = vsel %vm652, %v5256, 0
    %v5263 = vsel %vm652, %v5257, 0
    %v5266 = vsel %vm652, %v5258, 0
    %5268 = vmatpush.msra.mxu0 0.0
    %5269 = vmatpush.msra.mxu0 0.0
    %5270 = vmatpush.msra.mxu0 0.0
    %5271 = vmatpush.msra.mxu0 0.0
    %5272 = vmatpush.msra.mxu0 0.0
    %5273 = vmatpush.msra.mxu0 0.0
    %5274 = vmatpush.msra.mxu0 0.0
    %5275 = vmatpush.msra.mxu0 0.0
    %5276 = vmatpush.msra.mxu0 0.0
    %5277 = vmatpush.msra.mxu0 0.0
    %5278 = vmatpush.msra.mxu0 0.0
    %5279 = vmatpush.msra.mxu0 0.0
    %5280 = vmatpush.msra.mxu0 0.0
    %5281 = vmatpush.msra.mxu0 %v5184
    %5282 = vmatpush.msra.mxu0 %v5183
    %5283 = vmatpush.msra.mxu0 %v5182
    %5284 = vmatmul.f32.gmra.mxu0 %v5260
    %v5285 = vpop.f32.mrf.mxu0
    %v5286 = vadd.f32 0.0, %v5285
    %5287 = vmatmul.f32.gmra.mxu0 %v5263
    %v5288 = vpop.f32.mrf.mxu0
    %v5289 = vadd.f32 0.0, %v5288
    %5290 = vmatmul.f32.gmra.mxu0 %v5266
    %v5291 = vpop.f32.mrf.mxu0
    %v5292 = vadd.f32 0.0, %v5291
    %5293 = vdwg.mxu0
    %v5294 = vadd.f32 %v5176, %v5286
    %v5295 = vadd.f32 %v5177, %v5289
    %v5296 = vadd.f32 %v5178, %v5292
    %v5297 = vmul.f32 %v4664, %v344
    %v5298 = vmul.f32 %v4667, %v344
    %v5299 = vmul.f32 %v4670, %v344
    %v5300 = vmul.f32 %v4696, %v344
    %v5301 = vmul.f32 %v4699, %v344
    %v5302 = vmul.f32 %v4702, %v344
    %v5304 = vsel %vm130, %v5297, 0
    %v5307 = vsel %vm130, %v5298, 0
    %v5310 = vsel %vm130, %v5299, 0
    %5312 = vmatpush.xpose.msra.mxu0 0.0
    %5313 = vmatpush.xpose.msra.mxu0 0.0
    %5314 = vmatpush.xpose.msra.mxu0 0.0
    %5315 = vmatpush.xpose.msra.mxu0 0.0
    %5316 = vmatpush.xpose.msra.mxu0 0.0
    %5317 = vmatpush.xpose.msra.mxu0 0.0
    %5318 = vmatpush.xpose.msra.mxu0 0.0
    %5319 = vmatpush.xpose.msra.mxu0 0.0
    %5320 = vmatpush.xpose.msra.mxu0 0.0
    %5321 = vmatpush.xpose.msra.mxu0 0.0
    %5322 = vmatpush.xpose.msra.mxu0 0.0
    %5323 = vmatpush.xpose.msra.mxu0 0.0
    %5324 = vmatpush.xpose.msra.mxu0 0.0
    %5325 = vmatpush.xpose.msra.mxu0 %v5310
    %5326 = vmatpush.xpose.msra.mxu0 %v5307
    %5327 = vmatpush.xpose.msra.mxu0 %v5304
    %5328 = vmatmul.f32.gmra.mxu0 %v4711
    %v5329 = vpop.f32.mrf.mxu0
    %v5330 = vadd.f32 0.0, %v5329
    %5331 = vmatmul.f32.gmra.mxu0 %v4714
    %v5332 = vpop.f32.mrf.mxu0
    %v5333 = vadd.f32 0.0, %v5332
    %5334 = vmatmul.f32.gmra.mxu0 %v4717
    %v5335 = vpop.f32.mrf.mxu0
    %v5336 = vadd.f32 0.0, %v5335
    %5337 = vdwg.mxu0
    %v5338 = vmul.f32 %v5330, 0.5
    %v5339 = vmul.f32 %v5333, 0.5
    %v5340 = vmul.f32 %v5336, 0.5
    %v5341 = vadd.f32 %v5338, %v394
    %v5342 = vadd.f32 %v5339, %v395
    %v5343 = vadd.f32 %v5340, %v396
    %v5344 = vsel %vm652, %v5341, -inf
    %5345 = vmax.xlane.f32.xlu0 %v5344
    %v5346 = vpop.xlane.xlu0 %5345
    %v5347 = vsel %vm652, %v5342, -inf
    %5348 = vmax.xlane.f32.xlu0 %v5347
    %v5349 = vpop.xlane.xlu0 %5348
    %v5350 = vsel %vm652, %v5343, -inf
    %5351 = vmax.xlane.f32.xlu0 %v5350
    %v5352 = vpop.xlane.xlu0 %5351
    %v5353 = vsub.f32 %v5341, %v5346
    %v5354 = vsub.f32 %v5342, %v5349
    %v5355 = vsub.f32 %v5343, %v5352
    %v5356 = vmul.f32 %v5353, 1.442695
    %v5357 = vpow.pop %v5356
    %v5358 = vmul.f32 %v5354, 1.442695
    %v5359 = vpow.pop %v5358
    %v5360 = vmul.f32 %v5355, 1.442695
    %v5361 = vpow.pop %v5360
    %v5362 = vsel %vm652, %v5357, 0.0
    %5363 = vadd.xlane.f32.xlu0 %v5362
    %v5364 = vpop.xlane.xlu0 %5363
    %v5365 = vsel %vm652, %v5359, 0.0
    %5366 = vadd.xlane.f32.xlu0 %v5365
    %v5367 = vpop.xlane.xlu0 %5366
    %v5368 = vsel %vm652, %v5361, 0.0
    %5369 = vadd.xlane.f32.xlu0 %v5368
    %v5370 = vpop.xlane.xlu0 %5369
    %v5371 = vrcp.pop %v5364
    %v5372 = vrcp.pop %v5367
    %v5373 = vrcp.pop %v5370
    %v5374 = vmul.f32 %v5357, %v5371
    %v5375 = vmul.f32 %v5359, %v5372
    %v5376 = vmul.f32 %v5361, %v5373
    %v5378 = vsel %vm652, %v5374, 0
    %v5381 = vsel %vm652, %v5375, 0
    %v5384 = vsel %vm652, %v5376, 0
    %5386 = vmatpush.msra.mxu0 0.0
    %5387 = vmatpush.msra.mxu0 0.0
    %5388 = vmatpush.msra.mxu0 0.0
    %5389 = vmatpush.msra.mxu0 0.0
    %5390 = vmatpush.msra.mxu0 0.0
    %5391 = vmatpush.msra.mxu0 0.0
    %5392 = vmatpush.msra.mxu0 0.0
    %5393 = vmatpush.msra.mxu0 0.0
    %5394 = vmatpush.msra.mxu0 0.0
    %5395 = vmatpush.msra.mxu0 0.0
    %5396 = vmatpush.msra.mxu0 0.0
    %5397 = vmatpush.msra.mxu0 0.0
    %5398 = vmatpush.msra.mxu0 0.0
    %5399 = vmatpush.msra.mxu0 %v5302
    %5400 = vmatpush.msra.mxu0 %v5301
    %5401 = vmatpush.msra.mxu0 %v5300
    %5402 = vmatmul.f32.gmra.mxu0 %v5378
    %v5403 = vpop.f32.mrf.mxu0
    %v5404 = vadd.f32 0.0, %v5403
    %5405 = vmatmul.f32.gmra.mxu0 %v5381
    %v5406 = vpop.f32.mrf.mxu0
    %v5407 = vadd.f32 0.0, %v5406
    %5408 = vmatmul.f32.gmra.mxu0 %v5384
    %v5409 = vpop.f32.mrf.mxu0
    %v5410 = vadd.f32 0.0, %v5409
    %5411 = vdwg.mxu0
    %v5412 = vadd.f32 %v5294, %v5404
    %v5413 = vadd.f32 %v5295, %v5407
    %v5414 = vadd.f32 %v5296, %v5410
    %v5415 = vmul.f32 %v4664, %v349
    %v5416 = vmul.f32 %v4667, %v349
    %v5417 = vmul.f32 %v4670, %v349
    %v5418 = vmul.f32 %v4696, %v349
    %v5419 = vmul.f32 %v4699, %v349
    %v5420 = vmul.f32 %v4702, %v349
    %v5422 = vsel %vm130, %v5415, 0
    %v5425 = vsel %vm130, %v5416, 0
    %v5428 = vsel %vm130, %v5417, 0
    %5430 = vmatpush.xpose.msra.mxu0 0.0
    %5431 = vmatpush.xpose.msra.mxu0 0.0
    %5432 = vmatpush.xpose.msra.mxu0 0.0
    %5433 = vmatpush.xpose.msra.mxu0 0.0
    %5434 = vmatpush.xpose.msra.mxu0 0.0
    %5435 = vmatpush.xpose.msra.mxu0 0.0
    %5436 = vmatpush.xpose.msra.mxu0 0.0
    %5437 = vmatpush.xpose.msra.mxu0 0.0
    %5438 = vmatpush.xpose.msra.mxu0 0.0
    %5439 = vmatpush.xpose.msra.mxu0 0.0
    %5440 = vmatpush.xpose.msra.mxu0 0.0
    %5441 = vmatpush.xpose.msra.mxu0 0.0
    %5442 = vmatpush.xpose.msra.mxu0 0.0
    %5443 = vmatpush.xpose.msra.mxu0 %v5428
    %5444 = vmatpush.xpose.msra.mxu0 %v5425
    %5445 = vmatpush.xpose.msra.mxu0 %v5422
    %5446 = vmatmul.f32.gmra.mxu0 %v4711
    %v5447 = vpop.f32.mrf.mxu0
    %v5448 = vadd.f32 0.0, %v5447
    %5449 = vmatmul.f32.gmra.mxu0 %v4714
    %v5450 = vpop.f32.mrf.mxu0
    %v5451 = vadd.f32 0.0, %v5450
    %5452 = vmatmul.f32.gmra.mxu0 %v4717
    %v5453 = vpop.f32.mrf.mxu0
    %v5454 = vadd.f32 0.0, %v5453
    %5455 = vdwg.mxu0
    %v5456 = vmul.f32 %v5448, 0.5
    %v5457 = vmul.f32 %v5451, 0.5
    %v5458 = vmul.f32 %v5454, 0.5
    %v5459 = vadd.f32 %v5456, %v394
    %v5460 = vadd.f32 %v5457, %v395
    %v5461 = vadd.f32 %v5458, %v396
    %v5462 = vsel %vm652, %v5459, -inf
    %5463 = vmax.xlane.f32.xlu0 %v5462
    %v5464 = vpop.xlane.xlu0 %5463
    %v5465 = vsel %vm652, %v5460, -inf
    %5466 = vmax.xlane.f32.xlu0 %v5465
    %v5467 = vpop.xlane.xlu0 %5466
    %v5468 = vsel %vm652, %v5461, -inf
    %5469 = vmax.xlane.f32.xlu0 %v5468
    %v5470 = vpop.xlane.xlu0 %5469
    %v5471 = vsub.f32 %v5459, %v5464
    %v5472 = vsub.f32 %v5460, %v5467
    %v5473 = vsub.f32 %v5461, %v5470
    %v5474 = vmul.f32 %v5471, 1.442695
    %v5475 = vpow.pop %v5474
    %v5476 = vmul.f32 %v5472, 1.442695
    %v5477 = vpow.pop %v5476
    %v5478 = vmul.f32 %v5473, 1.442695
    %v5479 = vpow.pop %v5478
    %v5480 = vsel %vm652, %v5475, 0.0
    %5481 = vadd.xlane.f32.xlu0 %v5480
    %v5482 = vpop.xlane.xlu0 %5481
    %v5483 = vsel %vm652, %v5477, 0.0
    %5484 = vadd.xlane.f32.xlu0 %v5483
    %v5485 = vpop.xlane.xlu0 %5484
    %v5486 = vsel %vm652, %v5479, 0.0
    %5487 = vadd.xlane.f32.xlu0 %v5486
    %v5488 = vpop.xlane.xlu0 %5487
    %v5489 = vrcp.pop %v5482
    %v5490 = vrcp.pop %v5485
    %v5491 = vrcp.pop %v5488
    %v5492 = vmul.f32 %v5475, %v5489
    %v5493 = vmul.f32 %v5477, %v5490
    %v5494 = vmul.f32 %v5479, %v5491
    %v5496 = vsel %vm652, %v5492, 0
    %v5499 = vsel %vm652, %v5493, 0
    %v5502 = vsel %vm652, %v5494, 0
    %5504 = vmatpush.msra.mxu0 0.0
    %5505 = vmatpush.msra.mxu0 0.0
    %5506 = vmatpush.msra.mxu0 0.0
    %5507 = vmatpush.msra.mxu0 0.0
    %5508 = vmatpush.msra.mxu0 0.0
    %5509 = vmatpush.msra.mxu0 0.0
    %5510 = vmatpush.msra.mxu0 0.0
    %5511 = vmatpush.msra.mxu0 0.0
    %5512 = vmatpush.msra.mxu0 0.0
    %5513 = vmatpush.msra.mxu0 0.0
    %5514 = vmatpush.msra.mxu0 0.0
    %5515 = vmatpush.msra.mxu0 0.0
    %5516 = vmatpush.msra.mxu0 0.0
    %5517 = vmatpush.msra.mxu0 %v5420
    %5518 = vmatpush.msra.mxu0 %v5419
    %5519 = vmatpush.msra.mxu0 %v5418
    %5520 = vmatmul.f32.gmra.mxu0 %v5496
    %v5521 = vpop.f32.mrf.mxu0
    %v5522 = vadd.f32 0.0, %v5521
    %5523 = vmatmul.f32.gmra.mxu0 %v5499
    %v5524 = vpop.f32.mrf.mxu0
    %v5525 = vadd.f32 0.0, %v5524
    %5526 = vmatmul.f32.gmra.mxu0 %v5502
    %v5527 = vpop.f32.mrf.mxu0
    %v5528 = vadd.f32 0.0, %v5527
    %5529 = vdwg.mxu0
    %v5530 = vadd.f32 %v5412, %v5522
    %v5531 = vadd.f32 %v5413, %v5525
    %v5532 = vadd.f32 %v5414, %v5528
    %v5533 = vmul.f32 %v4664, %v354
    %v5534 = vmul.f32 %v4667, %v354
    %v5535 = vmul.f32 %v4670, %v354
    %v5536 = vmul.f32 %v4696, %v354
    %v5537 = vmul.f32 %v4699, %v354
    %v5538 = vmul.f32 %v4702, %v354
    %v5540 = vsel %vm130, %v5533, 0
    %v5543 = vsel %vm130, %v5534, 0
    %v5546 = vsel %vm130, %v5535, 0
    %5548 = vmatpush.xpose.msra.mxu0 0.0
    %5549 = vmatpush.xpose.msra.mxu0 0.0
    %5550 = vmatpush.xpose.msra.mxu0 0.0
    %5551 = vmatpush.xpose.msra.mxu0 0.0
    %5552 = vmatpush.xpose.msra.mxu0 0.0
    %5553 = vmatpush.xpose.msra.mxu0 0.0
    %5554 = vmatpush.xpose.msra.mxu0 0.0
    %5555 = vmatpush.xpose.msra.mxu0 0.0
    %5556 = vmatpush.xpose.msra.mxu0 0.0
    %5557 = vmatpush.xpose.msra.mxu0 0.0
    %5558 = vmatpush.xpose.msra.mxu0 0.0
    %5559 = vmatpush.xpose.msra.mxu0 0.0
    %5560 = vmatpush.xpose.msra.mxu0 0.0
    %5561 = vmatpush.xpose.msra.mxu0 %v5546
    %5562 = vmatpush.xpose.msra.mxu0 %v5543
    %5563 = vmatpush.xpose.msra.mxu0 %v5540
    %5564 = vmatmul.f32.gmra.mxu0 %v4711
    %v5565 = vpop.f32.mrf.mxu0
    %v5566 = vadd.f32 0.0, %v5565
    %5567 = vmatmul.f32.gmra.mxu0 %v4714
    %v5568 = vpop.f32.mrf.mxu0
    %v5569 = vadd.f32 0.0, %v5568
    %5570 = vmatmul.f32.gmra.mxu0 %v4717
    %v5571 = vpop.f32.mrf.mxu0
    %v5572 = vadd.f32 0.0, %v5571
    %5573 = vdwg.mxu0
    %v5574 = vmul.f32 %v5566, 0.5
    %v5575 = vmul.f32 %v5569, 0.5
    %v5576 = vmul.f32 %v5572, 0.5
    %v5577 = vadd.f32 %v5574, %v394
    %v5578 = vadd.f32 %v5575, %v395
    %v5579 = vadd.f32 %v5576, %v396
    %v5580 = vsel %vm652, %v5577, -inf
    %5581 = vmax.xlane.f32.xlu0 %v5580
    %v5582 = vpop.xlane.xlu0 %5581
    %v5583 = vsel %vm652, %v5578, -inf
    %5584 = vmax.xlane.f32.xlu0 %v5583
    %v5585 = vpop.xlane.xlu0 %5584
    %v5586 = vsel %vm652, %v5579, -inf
    %5587 = vmax.xlane.f32.xlu0 %v5586
    %v5588 = vpop.xlane.xlu0 %5587
    %v5589 = vsub.f32 %v5577, %v5582
    %v5590 = vsub.f32 %v5578, %v5585
    %v5591 = vsub.f32 %v5579, %v5588
    %v5592 = vmul.f32 %v5589, 1.442695
    %v5593 = vpow.pop %v5592
    %v5594 = vmul.f32 %v5590, 1.442695
    %v5595 = vpow.pop %v5594
    %v5596 = vmul.f32 %v5591, 1.442695
    %v5597 = vpow.pop %v5596
    %v5598 = vsel %vm652, %v5593, 0.0
    %5599 = vadd.xlane.f32.xlu0 %v5598
    %v5600 = vpop.xlane.xlu0 %5599
    %v5601 = vsel %vm652, %v5595, 0.0
    %5602 = vadd.xlane.f32.xlu0 %v5601
    %v5603 = vpop.xlane.xlu0 %5602
    %v5604 = vsel %vm652, %v5597, 0.0
    %5605 = vadd.xlane.f32.xlu0 %v5604
    %v5606 = vpop.xlane.xlu0 %5605
    %v5607 = vrcp.pop %v5600
    %v5608 = vrcp.pop %v5603
    %v5609 = vrcp.pop %v5606
    %v5610 = vmul.f32 %v5593, %v5607
    %v5611 = vmul.f32 %v5595, %v5608
    %v5612 = vmul.f32 %v5597, %v5609
    %v5614 = vsel %vm652, %v5610, 0
    %v5617 = vsel %vm652, %v5611, 0
    %v5620 = vsel %vm652, %v5612, 0
    %5622 = vmatpush.msra.mxu0 0.0
    %5623 = vmatpush.msra.mxu0 0.0
    %5624 = vmatpush.msra.mxu0 0.0
    %5625 = vmatpush.msra.mxu0 0.0
    %5626 = vmatpush.msra.mxu0 0.0
    %5627 = vmatpush.msra.mxu0 0.0
    %5628 = vmatpush.msra.mxu0 0.0
    %5629 = vmatpush.msra.mxu0 0.0
    %5630 = vmatpush.msra.mxu0 0.0
    %5631 = vmatpush.msra.mxu0 0.0
    %5632 = vmatpush.msra.mxu0 0.0
    %5633 = vmatpush.msra.mxu0 0.0
    %5634 = vmatpush.msra.mxu0 0.0
    %5635 = vmatpush.msra.mxu0 %v5538
    %5636 = vmatpush.msra.mxu0 %v5537
    %5637 = vmatpush.msra.mxu0 %v5536
    %5638 = vmatmul.f32.gmra.mxu0 %v5614
    %v5639 = vpop.f32.mrf.mxu0
    %v5640 = vadd.f32 0.0, %v5639
    %5641 = vmatmul.f32.gmra.mxu0 %v5617
    %v5642 = vpop.f32.mrf.mxu0
    %v5643 = vadd.f32 0.0, %v5642
    %5644 = vmatmul.f32.gmra.mxu0 %v5620
    %v5645 = vpop.f32.mrf.mxu0
    %v5646 = vadd.f32 0.0, %v5645
    %5647 = vdwg.mxu0
    %v5648 = vadd.f32 %v5530, %v5640
    %v5649 = vadd.f32 %v5531, %v5643
    %v5650 = vadd.f32 %v5532, %v5646
    %v5651 = vld [vmem:[%s2 + $0x2d0] sm:$0xff]
    %v5652 = vld [vmem:[%s2 + $0x2d8] sm:$0xff]
    %v5653 = vld [vmem:[%s2 + $0x2e0] sm:$0xff]
    %v5654 = vld [vmem:[%s2 + $0x2e8] sm:$0xff]
    %v5656 = vsel %vm130, %v5648, 0
    %v5659 = vsel %vm130, %v5649, 0
    %v5662 = vsel %vm130, %v5650, 0
    %5664 = vmatpush.msra.mxu0 0.0
    %5665 = vmatpush.msra.mxu0 0.0
    %5666 = vmatpush.msra.mxu0 0.0
    %5667 = vmatpush.msra.mxu0 0.0
    %5668 = vmatpush.msra.mxu0 0.0
    %5669 = vmatpush.msra.mxu0 0.0
    %5670 = vmatpush.msra.mxu0 0.0
    %5671 = vmatpush.msra.mxu0 0.0
    %5672 = vmatpush.msra.mxu0 0.0
    %5673 = vmatpush.msra.mxu0 0.0
    %5674 = vmatpush.msra.mxu0 0.0
    %5675 = vmatpush.msra.mxu0 0.0
    %5676 = vmatpush.msra.mxu0 %v5654
    %5677 = vmatpush.msra.mxu0 %v5653
    %5678 = vmatpush.msra.mxu0 %v5652
    %5679 = vmatpush.msra.mxu0 %v5651
    %5680 = vmatmul.f32.gmra.mxu0 %v5656
    %v5681 = vpop.f32.mrf.mxu0
    %v5682 = vadd.f32 0.0, %v5681
    %5683 = vmatmul.f32.gmra.mxu0 %v5659
    %v5684 = vpop.f32.mrf.mxu0
    %v5685 = vadd.f32 0.0, %v5684
    %5686 = vmatmul.f32.gmra.mxu0 %v5662
    %v5687 = vpop.f32.mrf.mxu0
    %v5688 = vadd.f32 0.0, %v5687
    %5689 = vdwg.mxu0
    %v5690 = vadd.f32 %v4502, %v5682
    %v5691 = vadd.f32 %v4503, %v5685
    %v5692 = vadd.f32 %v4504, %v5688
    %v5693 = vld [vmem:[%s2 + $0x335] sm:$0x1]
    %v5694 = vperm.slane %v5693, 0
    %v5695 = vadd.f32 %v5690, %v5694
    %v5696 = vadd.f32 %v5691, %v5694
    %v5697 = vadd.f32 %v5692, %v5694
    %v5698 = vld [vmem:[%s2 + $0x336] sm:$0x1]
    %v5699 = vld [vmem:[%s2 + $0x337] sm:$0x1]
    %v5700 = vsel %vm130, %v5695, 0.0
    %5701 = vadd.xlane.f32.xlu0 %v5700
    %v5702 = vpop.xlane.xlu0 %5701
    %v5703 = vsel %vm130, %v5696, 0.0
    %5704 = vadd.xlane.f32.xlu0 %v5703
    %v5705 = vpop.xlane.xlu0 %5704
    %v5706 = vsel %vm130, %v5697, 0.0
    %5707 = vadd.xlane.f32.xlu0 %v5706
    %v5708 = vpop.xlane.xlu0 %5707
    %v5709 = vmul.f32 %v5702, %v240
    %v5710 = vmul.f32 %v5705, %v240
    %v5711 = vmul.f32 %v5708, %v240
    %v5712 = vsub.f32 %v5695, %v5709
    %v5713 = vsub.f32 %v5696, %v5710
    %v5714 = vsub.f32 %v5697, %v5711
    %v5715 = vmul.f32 %v5712, %v5712
    %v5716 = vmul.f32 %v5713, %v5713
    %v5717 = vmul.f32 %v5714, %v5714
    %v5718 = vsel %vm130, %v5715, 0.0
    %5719 = vadd.xlane.f32.xlu0 %v5718
    %v5720 = vpop.xlane.xlu0 %5719
    %v5721 = vsel %vm130, %v5716, 0.0
    %5722 = vadd.xlane.f32.xlu0 %v5721
    %v5723 = vpop.xlane.xlu0 %5722
    %v5724 = vsel %vm130, %v5717, 0.0
    %5725 = vadd.xlane.f32.xlu0 %v5724
    %v5726 = vpop.xlane.xlu0 %5725
    %v5727 = vmul.f32 %v5720, 0.032258064
    %v5728 = vmul.f32 %v5723, 0.032258064
    %v5729 = vmul.f32 %v5726, 0.032258064
    %v5730 = vrsqrt.pop %v5727
    %v5731 = vmul.f32 %v5730, %v5727
    %v5732 = vmul.f32 %v5731, %v5730
    %v5733 = vmul.f32 0.5, %v5732
    %v5734 = vsub.f32 1.5, %v5733
    %v5735 = vmul.f32 %v5730, %v5734
    %v5736 = vmul.f32 %v5727, %v5735
    %vm5737 = vcmp.eq.f32.partialorder %v5727, inf
    %v5738 = vsel %vm5737, %v5727, %v5736
    %vm5739 = vcmp.eq.f32.partialorder %v5727, 0.0
    %v5740 = vand.u32 %v5727, 2147483648
    %v5741 = vsel %vm5739, %v5740, %v5738
    %v5742 = vrsqrt.pop %v5728
    %v5743 = vmul.f32 %v5742, %v5728
    %v5744 = vmul.f32 %v5743, %v5742
    %v5745 = vmul.f32 0.5, %v5744
    %v5746 = vsub.f32 1.5, %v5745
    %v5747 = vmul.f32 %v5742, %v5746
    %v5748 = vmul.f32 %v5728, %v5747
    %vm5749 = vcmp.eq.f32.partialorder %v5728, inf
    %v5750 = vsel %vm5749, %v5728, %v5748
    %vm5751 = vcmp.eq.f32.partialorder %v5728, 0.0
    %v5752 = vand.u32 %v5728, 2147483648
    %v5753 = vsel %vm5751, %v5752, %v5750
    %v5754 = vrsqrt.pop %v5729
    %v5755 = vmul.f32 %v5754, %v5729
    %v5756 = vmul.f32 %v5755, %v5754
    %v5757 = vmul.f32 0.5, %v5756
    %v5758 = vsub.f32 1.5, %v5757
    %v5759 = vmul.f32 %v5754, %v5758
    %v5760 = vmul.f32 %v5729, %v5759
    %vm5761 = vcmp.eq.f32.partialorder %v5729, inf
    %v5762 = vsel %vm5761, %v5729, %v5760
    %vm5763 = vcmp.eq.f32.partialorder %v5729, 0.0
    %v5764 = vand.u32 %v5729, 2147483648
    %v5765 = vsel %vm5763, %v5764, %v5762
    %v5766 = vadd.f32 %v5741, 1e-06
    %v5767 = vadd.f32 %v5753, 1e-06
    %v5768 = vadd.f32 %v5765, 1e-06
    %v5769 = vrcp.pop %v5766
    %v5770 = vrcp.pop %v5767
    %v5771 = vrcp.pop %v5768
    %v5772 = vperm.slane %v5698, 0
    %v5773 = vmul.f32 %v5772, %v5712
    %v5774 = vmul.f32 %v5772, %v5713
    %v5775 = vmul.f32 %v5772, %v5714
    %v5776 = vmul.f32 %v5773, %v5769
    %v5777 = vmul.f32 %v5774, %v5770
    %v5778 = vmul.f32 %v5775, %v5771
    %v5779 = vperm.slane %v5699, 0
    %v5780 = vadd.f32 %v5776, %v5779
    %v5781 = vadd.f32 %v5777, %v5779
    %v5782 = vadd.f32 %v5778, %v5779
    %v5783 = vld [vmem:[%s2 + $0x2f0] sm:$0xff]
    %v5784 = vld [vmem:[%s2 + $0x2f8] sm:$0xff]
    %v5785 = vld [vmem:[%s2 + $0x300] sm:$0xff]
    %v5786 = vld [vmem:[%s2 + $0x308] sm:$0xff]
    %v5787 = vld [vmem:[%s2 + $0x338] sm:$0x1]
    %v5788 = vperm.slane %v5787, 0
    %v5790 = vsel %vm130, %v5780, 0
    %v5793 = vsel %vm130, %v5781, 0
    %v5796 = vsel %vm130, %v5782, 0
    %5798 = vmatpush.msra.mxu0 0.0
    %5799 = vmatpush.msra.mxu0 0.0
    %5800 = vmatpush.msra.mxu0 0.0
    %5801 = vmatpush.msra.mxu0 0.0
    %5802 = vmatpush.msra.mxu0 0.0
    %5803 = vmatpush.msra.mxu0 0.0
    %5804 = vmatpush.msra.mxu0 0.0
    %5805 = vmatpush.msra.mxu0 0.0
    %5806 = vmatpush.msra.mxu0 0.0
    %5807 = vmatpush.msra.mxu0 0.0
    %5808 = vmatpush.msra.mxu0 0.0
    %5809 = vmatpush.msra.mxu0 0.0
    %5810 = vmatpush.msra.mxu0 %v5786
    %5811 = vmatpush.msra.mxu0 %v5785
    %5812 = vmatpush.msra.mxu0 %v5784
    %5813 = vmatpush.msra.mxu0 %v5783
    %5814 = vmatmul.f32.gmra.mxu0 %v5790
    %v5815 = vpop.f32.mrf.mxu0
    %v5816 = vadd.f32 %v5788, %v5815
    %5817 = vmatmul.f32.gmra.mxu0 %v5793
    %v5818 = vpop.f32.mrf.mxu0
    %v5819 = vadd.f32 %v5788, %v5818
    %5820 = vmatmul.f32.gmra.mxu0 %v5796
    %v5821 = vpop.f32.mrf.mxu0
    %v5822 = vadd.f32 %v5788, %v5821
    %5823 = vdwg.mxu0
    %v5824 = vmax.f32 %v5816, 0.0
    %v5825 = vmax.f32 %v5819, 0.0
    %v5826 = vmax.f32 %v5822, 0.0
    %v5827 = vld [vmem:[%s2 + $0x310] sm:$0xff]
    %v5828 = vld [vmem:[%s2 + $0x318] sm:$0xff]
    %v5829 = vld [vmem:[%s2 + $0x320] sm:$0xff]
    %v5830 = vld [vmem:[%s2 + $0x328] sm:$0xff]
    %v5832 = vsel %vm130, %v5824, 0
    %v5835 = vsel %vm130, %v5825, 0
    %v5838 = vsel %vm130, %v5826, 0
    %5840 = vmatpush.msra.mxu0 0.0
    %5841 = vmatpush.msra.mxu0 0.0
    %5842 = vmatpush.msra.mxu0 0.0
    %5843 = vmatpush.msra.mxu0 0.0
    %5844 = vmatpush.msra.mxu0 0.0
    %5845 = vmatpush.msra.mxu0 0.0
    %5846 = vmatpush.msra.mxu0 0.0
    %5847 = vmatpush.msra.mxu0 0.0
    %5848 = vmatpush.msra.mxu0 0.0
    %5849 = vmatpush.msra.mxu0 0.0
    %5850 = vmatpush.msra.mxu0 0.0
    %5851 = vmatpush.msra.mxu0 0.0
    %5852 = vmatpush.msra.mxu0 %v5830
    %5853 = vmatpush.msra.mxu0 %v5829
    %5854 = vmatpush.msra.mxu0 %v5828
    %5855 = vmatpush.msra.mxu0 %v5827
    %5856 = vmatmul.f32.gmra.mxu0 %v5832
    %v5857 = vpop.f32.mrf.mxu0
    %v5858 = vadd.f32 0.0, %v5857
    %5859 = vmatmul.f32.gmra.mxu0 %v5835
    %v5860 = vpop.f32.mrf.mxu0
    %v5861 = vadd.f32 0.0, %v5860
    %5862 = vmatmul.f32.gmra.mxu0 %v5838
    %v5863 = vpop.f32.mrf.mxu0
    %v5864 = vadd.f32 0.0, %v5863
    %5865 = vdwg.mxu0
    %v5866 = vadd.f32 %v5695, %v5858
    %v5867 = vadd.f32 %v5696, %v5861
    %v5868 = vadd.f32 %v5697, %v5864
    %v5869 = vld [vmem:[%s2 + $0x339] sm:$0x1]
    %v5870 = vperm.slane %v5869, 0
    %v5871 = vadd.f32 %v5866, %v5870
    %v5872 = vadd.f32 %v5867, %v5870
    %v5873 = vadd.f32 %v5868, %v5870
    %v5874 = vmul.u32 %v356, 10
    %vm5875 = vcmp.ge.s32.totalorder %v29, %v5874
    %v5876 = vadd.s32 %v356, 1
    %v5877 = vmul.u32 %v5876, 10
    %vm5878 = vcmp.lt.s32.totalorder %v29, %v5877
    %vm5879 = vmand %vm5875, %vm5878
    %v5880 = vsel %vm5879, 0.1, 0.0
    %v5882 = vsel %vm652, %v5880, 0
    %5884 = vmatpush.msra.mxu0 0.0
    %5885 = vmatpush.msra.mxu0 0.0
    %5886 = vmatpush.msra.mxu0 0.0
    %5887 = vmatpush.msra.mxu0 0.0
    %5888 = vmatpush.msra.mxu0 0.0
    %5889 = vmatpush.msra.mxu0 0.0
    %5890 = vmatpush.msra.mxu0 0.0
    %5891 = vmatpush.msra.mxu0 0.0
    %5892 = vmatpush.msra.mxu0 0.0
    %5893 = vmatpush.msra.mxu0 0.0
    %5894 = vmatpush.msra.mxu0 0.0
    %5895 = vmatpush.msra.mxu0 0.0
    %5896 = vmatpush.msra.mxu0 0.0
    %5897 = vmatpush.msra.mxu0 %v5873
    %5898 = vmatpush.msra.mxu0 %v5872
    %5899 = vmatpush.msra.mxu0 %v5871
    %5900 = vmatmul.f32.gmra.mxu0 %v5882
    %v5901 = vpop.f32.mrf.mxu0
    %v5902 = vadd.f32 0.0, %v5901
    %5903 = vdwg.mxu0
    %v5904 = vld [vmem:[%s3 + $0x20] sm:$0xff]
    %v5905 = vld [vmem:[%s3 + $0x28] sm:$0xff]
    %v5906 = vld [vmem:[%s3 + $0x30] sm:$0xff]
    %v5907 = vld [vmem:[%s3 + $0x38] sm:$0xff]
    %v5909 = vsel %vm130, %v115, 0
    %v5912 = vsel %vm130, %v118, 0
    %5914 = vmatpush.msra.mxu0 0.0
    %5915 = vmatpush.msra.mxu0 0.0
    %5916 = vmatpush.msra.mxu0 0.0
    %5917 = vmatpush.msra.mxu0 0.0
    %5918 = vmatpush.msra.mxu0 0.0
    %5919 = vmatpush.msra.mxu0 0.0
    %5920 = vmatpush.msra.mxu0 0.0
    %5921 = vmatpush.msra.mxu0 0.0
    %5922 = vmatpush.msra.mxu0 0.0
    %5923 = vmatpush.msra.mxu0 0.0
    %5924 = vmatpush.msra.mxu0 0.0
    %5925 = vmatpush.msra.mxu0 0.0
    %5926 = vmatpush.msra.mxu0 %v5907
    %5927 = vmatpush.msra.mxu0 %v5906
    %5928 = vmatpush.msra.mxu0 %v5905
    %5929 = vmatpush.msra.mxu0 %v5904
    %5930 = vmatmul.f32.gmra.mxu0 %v5909
    %v5931 = vpop.f32.mrf.mxu0
    %v5932 = vadd.f32 0.0, %v5931
    %5933 = vmatmul.f32.gmra.mxu0 %v5912
    %v5934 = vpop.f32.mrf.mxu0
    %v5935 = vadd.f32 0.0, %v5934
    %5936 = vdwg.mxu0
    %v5937 = vld [vmem:[%s3 + $0x40] sm:$0xff]
    %v5938 = vld [vmem:[%s3 + $0x48] sm:$0xff]
    %v5939 = vld [vmem:[%s3 + $0x50] sm:$0xff]
    %v5940 = vld [vmem:[%s3 + $0x58] sm:$0xff]
    %5941 = vmatpush.msra.mxu0 0.0
    %5942 = vmatpush.msra.mxu0 0.0
    %5943 = vmatpush.msra.mxu0 0.0
    %5944 = vmatpush.msra.mxu0 0.0
    %5945 = vmatpush.msra.mxu0 0.0
    %5946 = vmatpush.msra.mxu0 0.0
    %5947 = vmatpush.msra.mxu0 0.0
    %5948 = vmatpush.msra.mxu0 0.0
    %5949 = vmatpush.msra.mxu0 0.0
    %5950 = vmatpush.msra.mxu0 0.0
    %5951 = vmatpush.msra.mxu0 0.0
    %5952 = vmatpush.msra.mxu0 0.0
    %5953 = vmatpush.msra.mxu0 %v5940
    %5954 = vmatpush.msra.mxu0 %v5939
    %5955 = vmatpush.msra.mxu0 %v5938
    %5956 = vmatpush.msra.mxu0 %v5937
    %5957 = vmatmul.f32.gmra.mxu0 %v5909
    %v5958 = vpop.f32.mrf.mxu0
    %v5959 = vadd.f32 0.0, %v5958
    %5960 = vmatmul.f32.gmra.mxu0 %v5912
    %v5961 = vpop.f32.mrf.mxu0
    %v5962 = vadd.f32 0.0, %v5961
    %5963 = vdwg.mxu0
    %v5964 = vld [vmem:[%s3 + $0x60] sm:$0xff]
    %v5965 = vld [vmem:[%s3 + $0x68] sm:$0xff]
    %v5966 = vld [vmem:[%s3 + $0x70] sm:$0xff]
    %v5967 = vld [vmem:[%s3 + $0x78] sm:$0xff]
    %5968 = vmatpush.msra.mxu0 0.0
    %5969 = vmatpush.msra.mxu0 0.0
    %5970 = vmatpush.msra.mxu0 0.0
    %5971 = vmatpush.msra.mxu0 0.0
    %5972 = vmatpush.msra.mxu0 0.0
    %5973 = vmatpush.msra.mxu0 0.0
    %5974 = vmatpush.msra.mxu0 0.0
    %5975 = vmatpush.msra.mxu0 0.0
    %5976 = vmatpush.msra.mxu0 0.0
    %5977 = vmatpush.msra.mxu0 0.0
    %5978 = vmatpush.msra.mxu0 0.0
    %5979 = vmatpush.msra.mxu0 0.0
    %5980 = vmatpush.msra.mxu0 %v5967
    %5981 = vmatpush.msra.mxu0 %v5966
    %5982 = vmatpush.msra.mxu0 %v5965
    %5983 = vmatpush.msra.mxu0 %v5964
    %5984 = vmatmul.f32.gmra.mxu0 %v5909
    %v5985 = vpop.f32.mrf.mxu0
    %v5986 = vadd.f32 0.0, %v5985
    %5987 = vmatmul.f32.gmra.mxu0 %v5912
    %v5988 = vpop.f32.mrf.mxu0
    %v5989 = vadd.f32 0.0, %v5988
    %5990 = vdwg.mxu0
    %v5991 = vld [vmem:[%s3 + $0x80] sm:$0xff]
    %v5992 = vld [vmem:[%s3 + $0x88] sm:$0xff]
    %v5993 = vld [vmem:[%s3 + $0x90] sm:$0xff]
    %v5994 = vld [vmem:[%s3 + $0x98] sm:$0xff]
    %v5995 = vld [vmem:[%s3 + $0xa0] sm:$0xff]
    %v5996 = vld [vmem:[%s3 + $0xa8] sm:$0xff]
    %v5997 = vld [vmem:[%s3 + $0xb0] sm:$0xff]
    %v5998 = vld [vmem:[%s3 + $0xb8] sm:$0xff]
    %v5999 = vld [vmem:[%s3 + $0xc0] sm:$0xff]
    %v6000 = vld [vmem:[%s3 + $0xc8] sm:$0xff]
    %v6001 = vld [vmem:[%s3 + $0xd0] sm:$0xff]
    %v6002 = vld [vmem:[%s3 + $0xd8] sm:$0xff]
    %v6003 = vld [vmem:[%s3 + $0xe0] sm:$0xff]
    %v6004 = vld [vmem:[%s3 + $0xe8] sm:$0xff]
    %v6005 = vld [vmem:[%s3 + $0xf0] sm:$0xff]
    %v6006 = vld [vmem:[%s3 + $0xf8] sm:$0xff]
    %v6007 = vld [vmem:[%s3 + $0x100] sm:$0xff]
    %v6008 = vld [vmem:[%s3 + $0x108] sm:$0xff]
    %v6009 = vld [vmem:[%s3 + $0x110] sm:$0xff]
    %v6010 = vld [vmem:[%s3 + $0x118] sm:$0xff]
    %v6011 = vld [vmem:[%s3 + $0x120] sm:$0xff]
    %v6012 = vld [vmem:[%s3 + $0x128] sm:$0xff]
    %v6013 = vld [vmem:[%s3 + $0x130] sm:$0xff]
    %v6014 = vld [vmem:[%s3 + $0x138] sm:$0xff]
    %v6015 = vld [vmem:[%s3 + $0x140] sm:$0xff]
    %v6016 = vld [vmem:[%s3 + $0x148] sm:$0xff]
    %v6017 = vld [vmem:[%s3 + $0x150] sm:$0xff]
    %v6018 = vld [vmem:[%s3 + $0x158] sm:$0xff]
    %v6019 = vld [vmem:[%s3 + $0x160] sm:$0xff]
    %v6020 = vld [vmem:[%s3 + $0x168] sm:$0xff]
    %v6021 = vld [vmem:[%s3 + $0x170] sm:$0xff]
    %v6022 = vld [vmem:[%s3 + $0x178] sm:$0xff]
    %v6023 = vld [vmem:[%s3 + $0x180] sm:$0xff]
    %v6024 = vld [vmem:[%s3 + $0x188] sm:$0xff]
    %v6025 = vld [vmem:[%s3 + $0x190] sm:$0xff]
    %v6026 = vld [vmem:[%s3 + $0x198] sm:$0xff]
    %v6027 = vld [vmem:[%s3 + $0x1a0] sm:$0xff]
    %v6028 = vld [vmem:[%s3 + $0x1a8] sm:$0xff]
    %v6029 = vld [vmem:[%s3 + $0x1b0] sm:$0xff]
    %v6030 = vld [vmem:[%s3 + $0x1b8] sm:$0xff]
    %v6031 = vld [vmem:[%s3 + $0x1c0] sm:$0xff]
    %v6032 = vld [vmem:[%s3 + $0x1c8] sm:$0xff]
    %v6033 = vld [vmem:[%s3 + $0x1d0] sm:$0xff]
    %v6034 = vld [vmem:[%s3 + $0x1d8] sm:$0xff]
    %6035 = vst.msk [vmem:[#allocation2] sm:$0xff] %vm130, 0.0
    %6036 = vst.msk [vmem:[#allocation2 + $0x8] sm:$0xff] %vm130, 0.0
    %v6038 = vsel %vm130, %v5902, 0
    %6040 = vmatpush.msra.mxu0 0.0
    %6041 = vmatpush.msra.mxu0 0.0
    %6042 = vmatpush.msra.mxu0 0.0
    %6043 = vmatpush.msra.mxu0 0.0
    %6044 = vmatpush.msra.mxu0 0.0
    %6045 = vmatpush.msra.mxu0 0.0
    %6046 = vmatpush.msra.mxu0 0.0
    %6047 = vmatpush.msra.mxu0 0.0
    %6048 = vmatpush.msra.mxu0 0.0
    %6049 = vmatpush.msra.mxu0 0.0
    %6050 = vmatpush.msra.mxu0 0.0
    %6051 = vmatpush.msra.mxu0 0.0
    %6052 = vmatpush.msra.mxu0 %v5994
    %6053 = vmatpush.msra.mxu0 %v5993
    %6054 = vmatpush.msra.mxu0 %v5992
    %6055 = vmatpush.msra.mxu0 %v5991
    %6056 = vmatmul.f32.gmra.mxu0 %v6038
    %v6057 = vpop.f32.mrf.mxu0
    %v6058 = vadd.f32 0.0, %v6057
    %6059 = vdwg.mxu0
    %v6060 = vadd.f32 %v5932, %v6058
    %v6061 = vxor.u32 %v6060, 2147483648
    %v6062 = vmul.f32 %v6061, 1.442695
    %v6063 = vpow.pop %v6062
    %v6064 = vadd.f32 %v6063, 1.0
    %v6065 = vrcp.pop %v6064
    %v6066 = vmul.f32 %v6064, %v6065
    %v6067 = vsub.f32 1.0, %v6066
    %v6068 = vmul.f32 %v6065, %v6067
    %v6069 = vadd.f32 %v6065, %v6068
    %vm6070 = vweird.f32 %v6064
    %vm6071 = vweird.f32 %v6065
    %vm6072 = vmor %vm6070, %vm6071
    %v6073 = vsel %vm6072, %v6065, %v6069
    %v6074 = vand.u32 2147483647, %v6064
    %vm6075 = vcmp.eq.f32.partialorder %v6074, 8.507059e+37
    %v6076 = vand.u32 %v6064, 2147483648
    %v6077 = vor.u32 1.1754944e-38, %v6076
    %v6078 = vsel %vm6075, %v6077, %v6073
    %v6079 = vmul.f32 1.0, %v6078
    %6080 = vmatpush.msra.mxu0 0.0
    %6081 = vmatpush.msra.mxu0 0.0
    %6082 = vmatpush.msra.mxu0 0.0
    %6083 = vmatpush.msra.mxu0 0.0
    %6084 = vmatpush.msra.mxu0 0.0
    %6085 = vmatpush.msra.mxu0 0.0
    %6086 = vmatpush.msra.mxu0 0.0
    %6087 = vmatpush.msra.mxu0 0.0
    %6088 = vmatpush.msra.mxu0 0.0
    %6089 = vmatpush.msra.mxu0 0.0
    %6090 = vmatpush.msra.mxu0 0.0
    %6091 = vmatpush.msra.mxu0 0.0
    %6092 = vmatpush.msra.mxu0 %v5998
    %6093 = vmatpush.msra.mxu0 %v5997
    %6094 = vmatpush.msra.mxu0 %v5996
    %6095 = vmatpush.msra.mxu0 %v5995
    %6096 = vmatmul.f32.gmra.mxu0 %v6038
    %v6097 = vpop.f32.mrf.mxu0
    %v6098 = vadd.f32 0.0, %v6097
    %6099 = vdwg.mxu0
    %v6100 = vadd.f32 %v5959, %v6098
    %v6101 = vxor.u32 %v6100, 2147483648
    %v6102 = vmul.f32 %v6101, 1.442695
    %v6103 = vpow.pop %v6102
    %v6104 = vadd.f32 %v6103, 1.0
    %v6105 = vrcp.pop %v6104
    %v6106 = vmul.f32 %v6104, %v6105
    %v6107 = vsub.f32 1.0, %v6106
    %v6108 = vmul.f32 %v6105, %v6107
    %v6109 = vadd.f32 %v6105, %v6108
    %vm6110 = vweird.f32 %v6104
    %vm6111 = vweird.f32 %v6105
    %vm6112 = vmor %vm6110, %vm6111
    %v6113 = vsel %vm6112, %v6105, %v6109
    %v6114 = vand.u32 2147483647, %v6104
    %vm6115 = vcmp.eq.f32.partialorder %v6114, 8.507059e+37
    %v6116 = vand.u32 %v6104, 2147483648
    %v6117 = vor.u32 1.1754944e-38, %v6116
    %v6118 = vsel %vm6115, %v6117, %v6113
    %v6119 = vmul.f32 1.0, %v6118
    %6120 = vmatpush.msra.mxu0 0.0
    %6121 = vmatpush.msra.mxu0 0.0
    %6122 = vmatpush.msra.mxu0 0.0
    %6123 = vmatpush.msra.mxu0 0.0
    %6124 = vmatpush.msra.mxu0 0.0
    %6125 = vmatpush.msra.mxu0 0.0
    %6126 = vmatpush.msra.mxu0 0.0
    %6127 = vmatpush.msra.mxu0 0.0
    %6128 = vmatpush.msra.mxu0 0.0
    %6129 = vmatpush.msra.mxu0 0.0
    %6130 = vmatpush.msra.mxu0 0.0
    %6131 = vmatpush.msra.mxu0 0.0
    %6132 = vmatpush.msra.mxu0 %v6002
    %6133 = vmatpush.msra.mxu0 %v6001
    %6134 = vmatpush.msra.mxu0 %v6000
    %6135 = vmatpush.msra.mxu0 %v5999
    %6136 = vmatmul.f32.gmra.mxu0 %v6038
    %v6137 = vpop.f32.mrf.mxu0
    %v6138 = vadd.f32 0.0, %v6137
    %6139 = vdwg.mxu0
    %v6140 = vmul.f32 %v6079, %v6138
    %v6141 = vadd.f32 %v5986, %v6140
    %v6142 = vtanh.pop %v6141
    %v6143 = vsub.f32 1.0, %v6119
    %v6144 = vmul.f32 %v6143, %v6142
    %v6145 = vmul.f32 %v6119, %v5902
    %v6146 = vadd.f32 %v6144, %v6145
    %6147 = vmatpush.msra.mxu0 0.0
    %6148 = vmatpush.msra.mxu0 0.0
    %6149 = vmatpush.msra.mxu0 0.0
    %6150 = vmatpush.msra.mxu0 0.0
    %6151 = vmatpush.msra.mxu0 0.0
    %6152 = vmatpush.msra.mxu0 0.0
    %6153 = vmatpush.msra.mxu0 0.0
    %6154 = vmatpush.msra.mxu0 0.0
    %6155 = vmatpush.msra.mxu0 0.0
    %6156 = vmatpush.msra.mxu0 0.0
    %6157 = vmatpush.msra.mxu0 0.0
    %6158 = vmatpush.msra.mxu0 0.0
    %6159 = vmatpush.msra.mxu0 %v6018
    %6160 = vmatpush.msra.mxu0 %v6017
    %6161 = vmatpush.msra.mxu0 %v6016
    %6162 = vmatpush.msra.mxu0 %v6015
    %6163 = vmatmul.f32.gmra.mxu0 %v6038
    %v6164 = vpop.f32.mrf.mxu0
    %v6165 = vadd.f32 0.0, %v6164
    %6166 = vdwg.mxu0
    %v6168 = vsel %vm130, %v6146, 0
    %6170 = vmatpush.msra.mxu0 0.0
    %6171 = vmatpush.msra.mxu0 0.0
    %6172 = vmatpush.msra.mxu0 0.0
    %6173 = vmatpush.msra.mxu0 0.0
    %6174 = vmatpush.msra.mxu0 0.0
    %6175 = vmatpush.msra.mxu0 0.0
    %6176 = vmatpush.msra.mxu0 0.0
    %6177 = vmatpush.msra.mxu0 0.0
    %6178 = vmatpush.msra.mxu0 0.0
    %6179 = vmatpush.msra.mxu0 0.0
    %6180 = vmatpush.msra.mxu0 0.0
    %6181 = vmatpush.msra.mxu0 0.0
    %6182 = vmatpush.msra.mxu0 %v6006
    %6183 = vmatpush.msra.mxu0 %v6005
    %6184 = vmatpush.msra.mxu0 %v6004
    %6185 = vmatpush.msra.mxu0 %v6003
    %6186 = vmatmul.f32.gmra.mxu0 %v6168
    %v6187 = vpop.f32.mrf.mxu0
    %v6188 = vadd.f32 %v6165, %v6187
    %6189 = vdwg.mxu0
    %v6190 = vxor.u32 %v6188, 2147483648
    %v6191 = vmul.f32 %v6190, 1.442695
    %v6192 = vpow.pop %v6191
    %v6193 = vadd.f32 %v6192, 1.0
    %v6194 = vrcp.pop %v6193
    %v6195 = vmul.f32 %v6193, %v6194
    %v6196 = vsub.f32 1.0, %v6195
    %v6197 = vmul.f32 %v6194, %v6196
    %v6198 = vadd.f32 %v6194, %v6197
    %vm6199 = vweird.f32 %v6193
    %vm6200 = vweird.f32 %v6194
    %vm6201 = vmor %vm6199, %vm6200
    %v6202 = vsel %vm6201, %v6194, %v6198
    %v6203 = vand.u32 2147483647, %v6193
    %vm6204 = vcmp.eq.f32.partialorder %v6203, 8.507059e+37
    %v6205 = vand.u32 %v6193, 2147483648
    %v6206 = vor.u32 1.1754944e-38, %v6205
    %v6207 = vsel %vm6204, %v6206, %v6202
    %v6208 = vmul.f32 1.0, %v6207
    %6209 = vmatpush.msra.mxu0 0.0
    %6210 = vmatpush.msra.mxu0 0.0
    %6211 = vmatpush.msra.mxu0 0.0
    %6212 = vmatpush.msra.mxu0 0.0
    %6213 = vmatpush.msra.mxu0 0.0
    %6214 = vmatpush.msra.mxu0 0.0
    %6215 = vmatpush.msra.mxu0 0.0
    %6216 = vmatpush.msra.mxu0 0.0
    %6217 = vmatpush.msra.mxu0 0.0
    %6218 = vmatpush.msra.mxu0 0.0
    %6219 = vmatpush.msra.mxu0 0.0
    %6220 = vmatpush.msra.mxu0 0.0
    %6221 = vmatpush.msra.mxu0 %v6022
    %6222 = vmatpush.msra.mxu0 %v6021
    %6223 = vmatpush.msra.mxu0 %v6020
    %6224 = vmatpush.msra.mxu0 %v6019
    %6225 = vmatmul.f32.gmra.mxu0 %v6038
    %v6226 = vpop.f32.mrf.mxu0
    %v6227 = vadd.f32 0.0, %v6226
    %6228 = vdwg.mxu0
    %6229 = vmatpush.msra.mxu0 0.0
    %6230 = vmatpush.msra.mxu0 0.0
    %6231 = vmatpush.msra.mxu0 0.0
    %6232 = vmatpush.msra.mxu0 0.0
    %6233 = vmatpush.msra.mxu0 0.0
    %6234 = vmatpush.msra.mxu0 0.0
    %6235 = vmatpush.msra.mxu0 0.0
    %6236 = vmatpush.msra.mxu0 0.0
    %6237 = vmatpush.msra.mxu0 0.0
    %6238 = vmatpush.msra.mxu0 0.0
    %6239 = vmatpush.msra.mxu0 0.0
    %6240 = vmatpush.msra.mxu0 0.0
    %6241 = vmatpush.msra.mxu0 %v6010
    %6242 = vmatpush.msra.mxu0 %v6009
    %6243 = vmatpush.msra.mxu0 %v6008
    %6244 = vmatpush.msra.mxu0 %v6007
    %6245 = vmatmul.f32.gmra.mxu0 %v6168
    %v6246 = vpop.f32.mrf.mxu0
    %v6247 = vadd.f32 %v6227, %v6246
    %6248 = vdwg.mxu0
    %v6249 = vxor.u32 %v6247, 2147483648
    %v6250 = vmul.f32 %v6249, 1.442695
    %v6251 = vpow.pop %v6250
    %v6252 = vadd.f32 %v6251, 1.0
    %v6253 = vrcp.pop %v6252
    %v6254 = vmul.f32 %v6252, %v6253
    %v6255 = vsub.f32 1.0, %v6254
    %v6256 = vmul.f32 %v6253, %v6255
    %v6257 = vadd.f32 %v6253, %v6256
    %vm6258 = vweird.f32 %v6252
    %vm6259 = vweird.f32 %v6253
    %vm6260 = vmor %vm6258, %vm6259
    %v6261 = vsel %vm6260, %v6253, %v6257
    %v6262 = vand.u32 2147483647, %v6252
    %vm6263 = vcmp.eq.f32.partialorder %v6262, 8.507059e+37
    %v6264 = vand.u32 %v6252, 2147483648
    %v6265 = vor.u32 1.1754944e-38, %v6264
    %v6266 = vsel %vm6263, %v6265, %v6261
    %v6267 = vmul.f32 1.0, %v6266
    %6268 = vmatpush.msra.mxu0 0.0
    %6269 = vmatpush.msra.mxu0 0.0
    %6270 = vmatpush.msra.mxu0 0.0
    %6271 = vmatpush.msra.mxu0 0.0
    %6272 = vmatpush.msra.mxu0 0.0
    %6273 = vmatpush.msra.mxu0 0.0
    %6274 = vmatpush.msra.mxu0 0.0
    %6275 = vmatpush.msra.mxu0 0.0
    %6276 = vmatpush.msra.mxu0 0.0
    %6277 = vmatpush.msra.mxu0 0.0
    %6278 = vmatpush.msra.mxu0 0.0
    %6279 = vmatpush.msra.mxu0 0.0
    %6280 = vmatpush.msra.mxu0 %v6026
    %6281 = vmatpush.msra.mxu0 %v6025
    %6282 = vmatpush.msra.mxu0 %v6024
    %6283 = vmatpush.msra.mxu0 %v6023
    %6284 = vmatmul.f32.gmra.mxu0 %v6038
    %v6285 = vpop.f32.mrf.mxu0
    %v6286 = vadd.f32 0.0, %v6285
    %6287 = vdwg.mxu0
    %v6288 = vmul.f32 %v6208, %v6286
    %6289 = vmatpush.msra.mxu0 0.0
    %6290 = vmatpush.msra.mxu0 0.0
    %6291 = vmatpush.msra.mxu0 0.0
    %6292 = vmatpush.msra.mxu0 0.0
    %6293 = vmatpush.msra.mxu0 0.0
    %6294 = vmatpush.msra.mxu0 0.0
    %6295 = vmatpush.msra.mxu0 0.0
    %6296 = vmatpush.msra.mxu0 0.0
    %6297 = vmatpush.msra.mxu0 0.0
    %6298 = vmatpush.msra.mxu0 0.0
    %6299 = vmatpush.msra.mxu0 0.0
    %6300 = vmatpush.msra.mxu0 0.0
    %6301 = vmatpush.msra.mxu0 %v6014
    %6302 = vmatpush.msra.mxu0 %v6013
    %6303 = vmatpush.msra.mxu0 %v6012
    %6304 = vmatpush.msra.mxu0 %v6011
    %6305 = vmatmul.f32.gmra.mxu0 %v6168
    %v6306 = vpop.f32.mrf.mxu0
    %v6307 = vadd.f32 %v6288, %v6306
    %6308 = vdwg.mxu0
    %v6309 = vtanh.pop %v6307
    %v6310 = vsub.f32 1.0, %v6267
    %v6311 = vmul.f32 %v6310, %v6309
    %v6312 = vmul.f32 %v6267, %v5902
    %v6313 = vadd.f32 %v6311, %v6312
    %v6315 = vsel %vm130, %v6313, 0
    %6317 = vmatpush.msra.mxu0 0.0
    %6318 = vmatpush.msra.mxu0 0.0
    %6319 = vmatpush.msra.mxu0 0.0
    %6320 = vmatpush.msra.mxu0 0.0
    %6321 = vmatpush.msra.mxu0 0.0
    %6322 = vmatpush.msra.mxu0 0.0
    %6323 = vmatpush.msra.mxu0 0.0
    %6324 = vmatpush.msra.mxu0 0.0
    %6325 = vmatpush.msra.mxu0 0.0
    %6326 = vmatpush.msra.mxu0 0.0
    %6327 = vmatpush.msra.mxu0 0.0
    %6328 = vmatpush.msra.mxu0 0.0
    %6329 = vmatpush.msra.mxu0 %v6034
    %6330 = vmatpush.msra.mxu0 %v6033
    %6331 = vmatpush.msra.mxu0 %v6032
    %6332 = vmatpush.msra.mxu0 %v6031
    %6333 = vmatmul.f32.gmra.mxu0 %v6315
    %v6334 = vpop.f32.mrf.mxu0
    %v6335 = vadd.f32 0.0, %v6334
    %6336 = vdwg.mxu0
    %6337 = vmatpush.msra.mxu0 0.0
    %6338 = vmatpush.msra.mxu0 0.0
    %6339 = vmatpush.msra.mxu0 0.0
    %6340 = vmatpush.msra.mxu0 0.0
    %6341 = vmatpush.msra.mxu0 0.0
    %6342 = vmatpush.msra.mxu0 0.0
    %6343 = vmatpush.msra.mxu0 0.0
    %6344 = vmatpush.msra.mxu0 0.0
    %6345 = vmatpush.msra.mxu0 0.0
    %6346 = vmatpush.msra.mxu0 0.0
    %6347 = vmatpush.msra.mxu0 0.0
    %6348 = vmatpush.msra.mxu0 0.0
    %6349 = vmatpush.msra.mxu0 %v6030
    %6350 = vmatpush.msra.mxu0 %v6029
    %6351 = vmatpush.msra.mxu0 %v6028
    %6352 = vmatpush.msra.mxu0 %v6027
    %6353 = vmatmul.f32.gmra.mxu0 %v6038
    %v6354 = vpop.f32.mrf.mxu0
    %v6355 = vadd.f32 %v6335, %v6354
    %6356 = vdwg.mxu0
    %v6357 = vtanh.pop %v6355
    %vm6358 = vcmask 254976
    %6359 = vst.msk [vmem:[#allocation2] sm:$0x3] %vm6358, %v6357
    %v6361 = vsel %vm130, %v6357, 0
    %6363 = vmatpush.msra.mxu0 0.0
    %6364 = vmatpush.msra.mxu0 0.0
    %6365 = vmatpush.msra.mxu0 0.0
    %6366 = vmatpush.msra.mxu0 0.0
    %6367 = vmatpush.msra.mxu0 0.0
    %6368 = vmatpush.msra.mxu0 0.0
    %6369 = vmatpush.msra.mxu0 0.0
    %6370 = vmatpush.msra.mxu0 0.0
    %6371 = vmatpush.msra.mxu0 0.0
    %6372 = vmatpush.msra.mxu0 0.0
    %6373 = vmatpush.msra.mxu0 0.0
    %6374 = vmatpush.msra.mxu0 0.0
    %6375 = vmatpush.msra.mxu0 %v5994
    %6376 = vmatpush.msra.mxu0 %v5993
    %6377 = vmatpush.msra.mxu0 %v5992
    %6378 = vmatpush.msra.mxu0 %v5991
    %6379 = vmatmul.f32.gmra.mxu0 %v6361
    %v6380 = vpop.f32.mrf.mxu0
    %v6381 = vadd.f32 0.0, %v6380
    %6382 = vdwg.mxu0
    %v6384 = vrot.slane %v6381, 6
    %v6386 = vadd.f32 %v5932, %v6384
    %v6387 = vxor.u32 %v6386, 2147483648
    %v6388 = vmul.f32 %v6387, 1.442695
    %v6389 = vpow.pop %v6388
    %v6390 = vadd.f32 %v6389, 1.0
    %v6391 = vrcp.pop %v6390
    %v6392 = vmul.f32 %v6390, %v6391
    %v6393 = vsub.f32 1.0, %v6392
    %v6394 = vmul.f32 %v6391, %v6393
    %v6395 = vadd.f32 %v6391, %v6394
    %vm6396 = vweird.f32 %v6390
    %vm6397 = vweird.f32 %v6391
    %vm6398 = vmor %vm6396, %vm6397
    %v6399 = vsel %vm6398, %v6391, %v6395
    %v6400 = vand.u32 2147483647, %v6390
    %vm6401 = vcmp.eq.f32.partialorder %v6400, 8.507059e+37
    %v6402 = vand.u32 %v6390, 2147483648
    %v6403 = vor.u32 1.1754944e-38, %v6402
    %v6404 = vsel %vm6401, %v6403, %v6399
    %v6405 = vmul.f32 1.0, %v6404
    %6406 = vmatpush.msra.mxu0 0.0
    %6407 = vmatpush.msra.mxu0 0.0
    %6408 = vmatpush.msra.mxu0 0.0
    %6409 = vmatpush.msra.mxu0 0.0
    %6410 = vmatpush.msra.mxu0 0.0
    %6411 = vmatpush.msra.mxu0 0.0
    %6412 = vmatpush.msra.mxu0 0.0
    %6413 = vmatpush.msra.mxu0 0.0
    %6414 = vmatpush.msra.mxu0 0.0
    %6415 = vmatpush.msra.mxu0 0.0
    %6416 = vmatpush.msra.mxu0 0.0
    %6417 = vmatpush.msra.mxu0 0.0
    %6418 = vmatpush.msra.mxu0 %v5998
    %6419 = vmatpush.msra.mxu0 %v5997
    %6420 = vmatpush.msra.mxu0 %v5996
    %6421 = vmatpush.msra.mxu0 %v5995
    %6422 = vmatmul.f32.gmra.mxu0 %v6361
    %v6423 = vpop.f32.mrf.mxu0
    %v6424 = vadd.f32 0.0, %v6423
    %6425 = vdwg.mxu0
    %v6427 = vrot.slane %v6424, 6
    %v6429 = vadd.f32 %v5959, %v6427
    %v6430 = vxor.u32 %v6429, 2147483648
    %v6431 = vmul.f32 %v6430, 1.442695
    %v6432 = vpow.pop %v6431
    %v6433 = vadd.f32 %v6432, 1.0
    %v6434 = vrcp.pop %v6433
    %v6435 = vmul.f32 %v6433, %v6434
    %v6436 = vsub.f32 1.0, %v6435
    %v6437 = vmul.f32 %v6434, %v6436
    %v6438 = vadd.f32 %v6434, %v6437
    %vm6439 = vweird.f32 %v6433
    %vm6440 = vweird.f32 %v6434
    %vm6441 = vmor %vm6439, %vm6440
    %v6442 = vsel %vm6441, %v6434, %v6438
    %v6443 = vand.u32 2147483647, %v6433
    %vm6444 = vcmp.eq.f32.partialorder %v6443, 8.507059e+37
    %v6445 = vand.u32 %v6433, 2147483648
    %v6446 = vor.u32 1.1754944e-38, %v6445
    %v6447 = vsel %vm6444, %v6446, %v6442
    %v6448 = vmul.f32 1.0, %v6447
    %6449 = vmatpush.msra.mxu0 0.0
    %6450 = vmatpush.msra.mxu0 0.0
    %6451 = vmatpush.msra.mxu0 0.0
    %6452 = vmatpush.msra.mxu0 0.0
    %6453 = vmatpush.msra.mxu0 0.0
    %6454 = vmatpush.msra.mxu0 0.0
    %6455 = vmatpush.msra.mxu0 0.0
    %6456 = vmatpush.msra.mxu0 0.0
    %6457 = vmatpush.msra.mxu0 0.0
    %6458 = vmatpush.msra.mxu0 0.0
    %6459 = vmatpush.msra.mxu0 0.0
    %6460 = vmatpush.msra.mxu0 0.0
    %6461 = vmatpush.msra.mxu0 %v6002
    %6462 = vmatpush.msra.mxu0 %v6001
    %6463 = vmatpush.msra.mxu0 %v6000
    %6464 = vmatpush.msra.mxu0 %v5999
    %6465 = vmatmul.f32.gmra.mxu0 %v6361
    %v6466 = vpop.f32.mrf.mxu0
    %v6467 = vadd.f32 0.0, %v6466
    %6468 = vdwg.mxu0
    %v6470 = vrot.slane %v6467, 6
    %v6472 = vmul.f32 %v6405, %v6470
    %v6473 = vadd.f32 %v5986, %v6472
    %v6474 = vtanh.pop %v6473
    %v6475 = vsub.f32 1.0, %v6448
    %v6476 = vmul.f32 %v6475, %v6474
    %v6477 = vrot.slane %v6357, 6
    %v6479 = vmul.f32 %v6448, %v6477
    %v6480 = vadd.f32 %v6476, %v6479
    %6481 = vmatpush.msra.mxu0 0.0
    %6482 = vmatpush.msra.mxu0 0.0
    %6483 = vmatpush.msra.mxu0 0.0
    %6484 = vmatpush.msra.mxu0 0.0
    %6485 = vmatpush.msra.mxu0 0.0
    %6486 = vmatpush.msra.mxu0 0.0
    %6487 = vmatpush.msra.mxu0 0.0
    %6488 = vmatpush.msra.mxu0 0.0
    %6489 = vmatpush.msra.mxu0 0.0
    %6490 = vmatpush.msra.mxu0 0.0
    %6491 = vmatpush.msra.mxu0 0.0
    %6492 = vmatpush.msra.mxu0 0.0
    %6493 = vmatpush.msra.mxu0 %v6018
    %6494 = vmatpush.msra.mxu0 %v6017
    %6495 = vmatpush.msra.mxu0 %v6016
    %6496 = vmatpush.msra.mxu0 %v6015
    %6497 = vmatmul.f32.gmra.mxu0 %v6315
    %v6498 = vpop.f32.mrf.mxu0
    %v6499 = vadd.f32 0.0, %v6498
    %6500 = vdwg.mxu0
    %v6502 = vrot.slane %v6480, 2
    %v6503 = vsel %vm130, %v6502, 0
    %6505 = vmatpush.msra.mxu0 0.0
    %6506 = vmatpush.msra.mxu0 0.0
    %6507 = vmatpush.msra.mxu0 0.0
    %6508 = vmatpush.msra.mxu0 0.0
    %6509 = vmatpush.msra.mxu0 0.0
    %6510 = vmatpush.msra.mxu0 0.0
    %6511 = vmatpush.msra.mxu0 0.0
    %6512 = vmatpush.msra.mxu0 0.0
    %6513 = vmatpush.msra.mxu0 0.0
    %6514 = vmatpush.msra.mxu0 0.0
    %6515 = vmatpush.msra.mxu0 0.0
    %6516 = vmatpush.msra.mxu0 0.0
    %6517 = vmatpush.msra.mxu0 %v6006
    %6518 = vmatpush.msra.mxu0 %v6005
    %6519 = vmatpush.msra.mxu0 %v6004
    %6520 = vmatpush.msra.mxu0 %v6003
    %6521 = vmatmul.f32.gmra.mxu0 %v6503
    %v6522 = vpop.f32.mrf.mxu0
    %v6523 = vadd.f32 %v6499, %v6522
    %6524 = vdwg.mxu0
    %v6525 = vxor.u32 %v6523, 2147483648
    %v6526 = vmul.f32 %v6525, 1.442695
    %v6527 = vpow.pop %v6526
    %v6528 = vadd.f32 %v6527, 1.0
    %v6529 = vrcp.pop %v6528
    %v6530 = vmul.f32 %v6528, %v6529
    %v6531 = vsub.f32 1.0, %v6530
    %v6532 = vmul.f32 %v6529, %v6531
    %v6533 = vadd.f32 %v6529, %v6532
    %vm6534 = vweird.f32 %v6528
    %vm6535 = vweird.f32 %v6529
    %vm6536 = vmor %vm6534, %vm6535
    %v6537 = vsel %vm6536, %v6529, %v6533
    %v6538 = vand.u32 2147483647, %v6528
    %vm6539 = vcmp.eq.f32.partialorder %v6538, 8.507059e+37
    %v6540 = vand.u32 %v6528, 2147483648
    %v6541 = vor.u32 1.1754944e-38, %v6540
    %v6542 = vsel %vm6539, %v6541, %v6537
    %v6543 = vmul.f32 1.0, %v6542
    %6544 = vmatpush.msra.mxu0 0.0
    %6545 = vmatpush.msra.mxu0 0.0
    %6546 = vmatpush.msra.mxu0 0.0
    %6547 = vmatpush.msra.mxu0 0.0
    %6548 = vmatpush.msra.mxu0 0.0
    %6549 = vmatpush.msra.mxu0 0.0
    %6550 = vmatpush.msra.mxu0 0.0
    %6551 = vmatpush.msra.mxu0 0.0
    %6552 = vmatpush.msra.mxu0 0.0
    %6553 = vmatpush.msra.mxu0 0.0
    %6554 = vmatpush.msra.mxu0 0.0
    %6555 = vmatpush.msra.mxu0 0.0
    %6556 = vmatpush.msra.mxu0 %v6022
    %6557 = vmatpush.msra.mxu0 %v6021
    %6558 = vmatpush.msra.mxu0 %v6020
    %6559 = vmatpush.msra.mxu0 %v6019
    %6560 = vmatmul.f32.gmra.mxu0 %v6315
    %v6561 = vpop.f32.mrf.mxu0
    %v6562 = vadd.f32 0.0, %v6561
    %6563 = vdwg.mxu0
    %6564 = vmatpush.msra.mxu0 0.0
    %6565 = vmatpush.msra.mxu0 0.0
    %6566 = vmatpush.msra.mxu0 0.0
    %6567 = vmatpush.msra.mxu0 0.0
    %6568 = vmatpush.msra.mxu0 0.0
    %6569 = vmatpush.msra.mxu0 0.0
    %6570 = vmatpush.msra.mxu0 0.0
    %6571 = vmatpush.msra.mxu0 0.0
    %6572 = vmatpush.msra.mxu0 0.0
    %6573 = vmatpush.msra.mxu0 0.0
    %6574 = vmatpush.msra.mxu0 0.0
    %6575 = vmatpush.msra.mxu0 0.0
    %6576 = vmatpush.msra.mxu0 %v6010
    %6577 = vmatpush.msra.mxu0 %v6009
    %6578 = vmatpush.msra.mxu0 %v6008
    %6579 = vmatpush.msra.mxu0 %v6007
    %6580 = vmatmul.f32.gmra.mxu0 %v6503
    %v6581 = vpop.f32.mrf.mxu0
    %v6582 = vadd.f32 %v6562, %v6581
    %6583 = vdwg.mxu0
    %v6584 = vxor.u32 %v6582, 2147483648
    %v6585 = vmul.f32 %v6584, 1.442695
    %v6586 = vpow.pop %v6585
    %v6587 = vadd.f32 %v6586, 1.0
    %v6588 = vrcp.pop %v6587
    %v6589 = vmul.f32 %v6587, %v6588
    %v6590 = vsub.f32 1.0, %v6589
    %v6591 = vmul.f32 %v6588, %v6590
    %v6592 = vadd.f32 %v6588, %v6591
    %vm6593 = vweird.f32 %v6587
    %vm6594 = vweird.f32 %v6588
    %vm6595 = vmor %vm6593, %vm6594
    %v6596 = vsel %vm6595, %v6588, %v6592
    %v6597 = vand.u32 2147483647, %v6587
    %vm6598 = vcmp.eq.f32.partialorder %v6597, 8.507059e+37
    %v6599 = vand.u32 %v6587, 2147483648
    %v6600 = vor.u32 1.1754944e-38, %v6599
    %v6601 = vsel %vm6598, %v6600, %v6596
    %v6602 = vmul.f32 1.0, %v6601
    %6603 = vmatpush.msra.mxu0 0.0
    %6604 = vmatpush.msra.mxu0 0.0
    %6605 = vmatpush.msra.mxu0 0.0
    %6606 = vmatpush.msra.mxu0 0.0
    %6607 = vmatpush.msra.mxu0 0.0
    %6608 = vmatpush.msra.mxu0 0.0
    %6609 = vmatpush.msra.mxu0 0.0
    %6610 = vmatpush.msra.mxu0 0.0
    %6611 = vmatpush.msra.mxu0 0.0
    %6612 = vmatpush.msra.mxu0 0.0
    %6613 = vmatpush.msra.mxu0 0.0
    %6614 = vmatpush.msra.mxu0 0.0
    %6615 = vmatpush.msra.mxu0 %v6026
    %6616 = vmatpush.msra.mxu0 %v6025
    %6617 = vmatpush.msra.mxu0 %v6024
    %6618 = vmatpush.msra.mxu0 %v6023
    %6619 = vmatmul.f32.gmra.mxu0 %v6315
    %v6620 = vpop.f32.mrf.mxu0
    %v6621 = vadd.f32 0.0, %v6620
    %6622 = vdwg.mxu0
    %v6623 = vmul.f32 %v6543, %v6621
    %6624 = vmatpush.msra.mxu0 0.0
    %6625 = vmatpush.msra.mxu0 0.0
    %6626 = vmatpush.msra.mxu0 0.0
    %6627 = vmatpush.msra.mxu0 0.0
    %6628 = vmatpush.msra.mxu0 0.0
    %6629 = vmatpush.msra.mxu0 0.0
    %6630 = vmatpush.msra.mxu0 0.0
    %6631 = vmatpush.msra.mxu0 0.0
    %6632 = vmatpush.msra.mxu0 0.0
    %6633 = vmatpush.msra.mxu0 0.0
    %6634 = vmatpush.msra.mxu0 0.0
    %6635 = vmatpush.msra.mxu0 0.0
    %6636 = vmatpush.msra.mxu0 %v6014
    %6637 = vmatpush.msra.mxu0 %v6013
    %6638 = vmatpush.msra.mxu0 %v6012
    %6639 = vmatpush.msra.mxu0 %v6011
    %6640 = vmatmul.f32.gmra.mxu0 %v6503
    %v6641 = vpop.f32.mrf.mxu0
    %v6642 = vadd.f32 %v6623, %v6641
    %6643 = vdwg.mxu0
    %v6644 = vtanh.pop %v6642
    %v6645 = vsub.f32 1.0, %v6602
    %v6646 = vmul.f32 %v6645, %v6644
    %v6647 = vmul.f32 %v6602, %v6313
    %v6648 = vadd.f32 %v6646, %v6647
    %v6650 = vsel %vm130, %v6648, 0
    %6652 = vmatpush.msra.mxu0 0.0
    %6653 = vmatpush.msra.mxu0 0.0
    %6654 = vmatpush.msra.mxu0 0.0
    %6655 = vmatpush.msra.mxu0 0.0
    %6656 = vmatpush.msra.mxu0 0.0
    %6657 = vmatpush.msra.mxu0 0.0
    %6658 = vmatpush.msra.mxu0 0.0
    %6659 = vmatpush.msra.mxu0 0.0
    %6660 = vmatpush.msra.mxu0 0.0
    %6661 = vmatpush.msra.mxu0 0.0
    %6662 = vmatpush.msra.mxu0 0.0
    %6663 = vmatpush.msra.mxu0 0.0
    %6664 = vmatpush.msra.mxu0 %v6034
    %6665 = vmatpush.msra.mxu0 %v6033
    %6666 = vmatpush.msra.mxu0 %v6032
    %6667 = vmatpush.msra.mxu0 %v6031
    %6668 = vmatmul.f32.gmra.mxu0 %v6650
    %v6669 = vpop.f32.mrf.mxu0
    %v6670 = vadd.f32 0.0, %v6669
    %6671 = vdwg.mxu0
    %6672 = vmatpush.msra.mxu0 0.0
    %6673 = vmatpush.msra.mxu0 0.0
    %6674 = vmatpush.msra.mxu0 0.0
    %6675 = vmatpush.msra.mxu0 0.0
    %6676 = vmatpush.msra.mxu0 0.0
    %6677 = vmatpush.msra.mxu0 0.0
    %6678 = vmatpush.msra.mxu0 0.0
    %6679 = vmatpush.msra.mxu0 0.0
    %6680 = vmatpush.msra.mxu0 0.0
    %6681 = vmatpush.msra.mxu0 0.0
    %6682 = vmatpush.msra.mxu0 0.0
    %6683 = vmatpush.msra.mxu0 0.0
    %6684 = vmatpush.msra.mxu0 %v6030
    %6685 = vmatpush.msra.mxu0 %v6029
    %6686 = vmatpush.msra.mxu0 %v6028
    %6687 = vmatpush.msra.mxu0 %v6027
    %6688 = vmatmul.f32.gmra.mxu0 %v6361
    %v6689 = vpop.f32.mrf.mxu0
    %v6690 = vadd.f32 %v6670, %v6689
    %6691 = vdwg.mxu0
    %v6692 = vtanh.pop %v6690
    %6693 = vst.msk [vmem:[#allocation2 + $0x2] sm:$0x3] %vm6358, %v6692
    %v6695 = vsel %vm130, %v6692, 0
    %6697 = vmatpush.msra.mxu0 0.0
    %6698 = vmatpush.msra.mxu0 0.0
    %6699 = vmatpush.msra.mxu0 0.0
    %6700 = vmatpush.msra.mxu0 0.0
    %6701 = vmatpush.msra.mxu0 0.0
    %6702 = vmatpush.msra.mxu0 0.0
    %6703 = vmatpush.msra.mxu0 0.0
    %6704 = vmatpush.msra.mxu0 0.0
    %6705 = vmatpush.msra.mxu0 0.0
    %6706 = vmatpush.msra.mxu0 0.0
    %6707 = vmatpush.msra.mxu0 0.0
    %6708 = vmatpush.msra.mxu0 0.0
    %6709 = vmatpush.msra.mxu0 %v5994
    %6710 = vmatpush.msra.mxu0 %v5993
    %6711 = vmatpush.msra.mxu0 %v5992
    %6712 = vmatpush.msra.mxu0 %v5991
    %6713 = vmatmul.f32.gmra.mxu0 %v6695
    %v6714 = vpop.f32.mrf.mxu0
    %v6715 = vadd.f32 0.0, %v6714
    %6716 = vdwg.mxu0
    %v6718 = vrot.slane %v6715, 4
    %v6720 = vadd.f32 %v5932, %v6718
    %v6721 = vxor.u32 %v6720, 2147483648
    %v6722 = vmul.f32 %v6721, 1.442695
    %v6723 = vpow.pop %v6722
    %v6724 = vadd.f32 %v6723, 1.0
    %v6725 = vrcp.pop %v6724
    %v6726 = vmul.f32 %v6724, %v6725
    %v6727 = vsub.f32 1.0, %v6726
    %v6728 = vmul.f32 %v6725, %v6727
    %v6729 = vadd.f32 %v6725, %v6728
    %vm6730 = vweird.f32 %v6724
    %vm6731 = vweird.f32 %v6725
    %vm6732 = vmor %vm6730, %vm6731
    %v6733 = vsel %vm6732, %v6725, %v6729
    %v6734 = vand.u32 2147483647, %v6724
    %vm6735 = vcmp.eq.f32.partialorder %v6734, 8.507059e+37
    %v6736 = vand.u32 %v6724, 2147483648
    %v6737 = vor.u32 1.1754944e-38, %v6736
    %v6738 = vsel %vm6735, %v6737, %v6733
    %v6739 = vmul.f32 1.0, %v6738
    %6740 = vmatpush.msra.mxu0 0.0
    %6741 = vmatpush.msra.mxu0 0.0
    %6742 = vmatpush.msra.mxu0 0.0
    %6743 = vmatpush.msra.mxu0 0.0
    %6744 = vmatpush.msra.mxu0 0.0
    %6745 = vmatpush.msra.mxu0 0.0
    %6746 = vmatpush.msra.mxu0 0.0
    %6747 = vmatpush.msra.mxu0 0.0
    %6748 = vmatpush.msra.mxu0 0.0
    %6749 = vmatpush.msra.mxu0 0.0
    %6750 = vmatpush.msra.mxu0 0.0
    %6751 = vmatpush.msra.mxu0 0.0
    %6752 = vmatpush.msra.mxu0 %v5998
    %6753 = vmatpush.msra.mxu0 %v5997
    %6754 = vmatpush.msra.mxu0 %v5996
    %6755 = vmatpush.msra.mxu0 %v5995
    %6756 = vmatmul.f32.gmra.mxu0 %v6695
    %v6757 = vpop.f32.mrf.mxu0
    %v6758 = vadd.f32 0.0, %v6757
    %6759 = vdwg.mxu0
    %v6761 = vrot.slane %v6758, 4
    %v6763 = vadd.f32 %v5959, %v6761
    %v6764 = vxor.u32 %v6763, 2147483648
    %v6765 = vmul.f32 %v6764, 1.442695
    %v6766 = vpow.pop %v6765
    %v6767 = vadd.f32 %v6766, 1.0
    %v6768 = vrcp.pop %v6767
    %v6769 = vmul.f32 %v6767, %v6768
    %v6770 = vsub.f32 1.0, %v6769
    %v6771 = vmul.f32 %v6768, %v6770
    %v6772 = vadd.f32 %v6768, %v6771
    %vm6773 = vweird.f32 %v6767
    %vm6774 = vweird.f32 %v6768
    %vm6775 = vmor %vm6773, %vm6774
    %v6776 = vsel %vm6775, %v6768, %v6772
    %v6777 = vand.u32 2147483647, %v6767
    %vm6778 = vcmp.eq.f32.partialorder %v6777, 8.507059e+37
    %v6779 = vand.u32 %v6767, 2147483648
    %v6780 = vor.u32 1.1754944e-38, %v6779
    %v6781 = vsel %vm6778, %v6780, %v6776
    %v6782 = vmul.f32 1.0, %v6781
    %6783 = vmatpush.msra.mxu0 0.0
    %6784 = vmatpush.msra.mxu0 0.0
    %6785 = vmatpush.msra.mxu0 0.0
    %6786 = vmatpush.msra.mxu0 0.0
    %6787 = vmatpush.msra.mxu0 0.0
    %6788 = vmatpush.msra.mxu0 0.0
    %6789 = vmatpush.msra.mxu0 0.0
    %6790 = vmatpush.msra.mxu0 0.0
    %6791 = vmatpush.msra.mxu0 0.0
    %6792 = vmatpush.msra.mxu0 0.0
    %6793 = vmatpush.msra.mxu0 0.0
    %6794 = vmatpush.msra.mxu0 0.0
    %6795 = vmatpush.msra.mxu0 %v6002
    %6796 = vmatpush.msra.mxu0 %v6001
    %6797 = vmatpush.msra.mxu0 %v6000
    %6798 = vmatpush.msra.mxu0 %v5999
    %6799 = vmatmul.f32.gmra.mxu0 %v6695
    %v6800 = vpop.f32.mrf.mxu0
    %v6801 = vadd.f32 0.0, %v6800
    %6802 = vdwg.mxu0
    %v6804 = vrot.slane %v6801, 4
    %v6806 = vmul.f32 %v6739, %v6804
    %v6807 = vadd.f32 %v5986, %v6806
    %v6808 = vtanh.pop %v6807
    %v6809 = vsub.f32 1.0, %v6782
    %v6810 = vmul.f32 %v6809, %v6808
    %v6811 = vrot.slane %v6692, 4
    %v6813 = vmul.f32 %v6782, %v6811
    %v6814 = vadd.f32 %v6810, %v6813
    %6815 = vmatpush.msra.mxu0 0.0
    %6816 = vmatpush.msra.mxu0 0.0
    %6817 = vmatpush.msra.mxu0 0.0
    %6818 = vmatpush.msra.mxu0 0.0
    %6819 = vmatpush.msra.mxu0 0.0
    %6820 = vmatpush.msra.mxu0 0.0
    %6821 = vmatpush.msra.mxu0 0.0
    %6822 = vmatpush.msra.mxu0 0.0
    %6823 = vmatpush.msra.mxu0 0.0
    %6824 = vmatpush.msra.mxu0 0.0
    %6825 = vmatpush.msra.mxu0 0.0
    %6826 = vmatpush.msra.mxu0 0.0
    %6827 = vmatpush.msra.mxu0 %v6018
    %6828 = vmatpush.msra.mxu0 %v6017
    %6829 = vmatpush.msra.mxu0 %v6016
    %6830 = vmatpush.msra.mxu0 %v6015
    %6831 = vmatmul.f32.gmra.mxu0 %v6650
    %v6832 = vpop.f32.mrf.mxu0
    %v6833 = vadd.f32 0.0, %v6832
    %6834 = vdwg.mxu0
    %v6836 = vrot.slane %v6814, 4
    %v6837 = vsel %vm130, %v6836, 0
    %6839 = vmatpush.msra.mxu0 0.0
    %6840 = vmatpush.msra.mxu0 0.0
    %6841 = vmatpush.msra.mxu0 0.0
    %6842 = vmatpush.msra.mxu0 0.0
    %6843 = vmatpush.msra.mxu0 0.0
    %6844 = vmatpush.msra.mxu0 0.0
    %6845 = vmatpush.msra.mxu0 0.0
    %6846 = vmatpush.msra.mxu0 0.0
    %6847 = vmatpush.msra.mxu0 0.0
    %6848 = vmatpush.msra.mxu0 0.0
    %6849 = vmatpush.msra.mxu0 0.0
    %6850 = vmatpush.msra.mxu0 0.0
    %6851 = vmatpush.msra.mxu0 %v6006
    %6852 = vmatpush.msra.mxu0 %v6005
    %6853 = vmatpush.msra.mxu0 %v6004
    %6854 = vmatpush.msra.mxu0 %v6003
    %6855 = vmatmul.f32.gmra.mxu0 %v6837
    %v6856 = vpop.f32.mrf.mxu0
    %v6857 = vadd.f32 %v6833, %v6856
    %6858 = vdwg.mxu0
    %v6859 = vxor.u32 %v6857, 2147483648
    %v6860 = vmul.f32 %v6859, 1.442695
    %v6861 = vpow.pop %v6860
    %v6862 = vadd.f32 %v6861, 1.0
    %v6863 = vrcp.pop %v6862
    %v6864 = vmul.f32 %v6862, %v6863
    %v6865 = vsub.f32 1.0, %v6864
    %v6866 = vmul.f32 %v6863, %v6865
    %v6867 = vadd.f32 %v6863, %v6866
    %vm6868 = vweird.f32 %v6862
    %vm6869 = vweird.f32 %v6863
    %vm6870 = vmor %vm6868, %vm6869
    %v6871 = vsel %vm6870, %v6863, %v6867
    %v6872 = vand.u32 2147483647, %v6862
    %vm6873 = vcmp.eq.f32.partialorder %v6872, 8.507059e+37
    %v6874 = vand.u32 %v6862, 2147483648
    %v6875 = vor.u32 1.1754944e-38, %v6874
    %v6876 = vsel %vm6873, %v6875, %v6871
    %v6877 = vmul.f32 1.0, %v6876
    %6878 = vmatpush.msra.mxu0 0.0
    %6879 = vmatpush.msra.mxu0 0.0
    %6880 = vmatpush.msra.mxu0 0.0
    %6881 = vmatpush.msra.mxu0 0.0
    %6882 = vmatpush.msra.mxu0 0.0
    %6883 = vmatpush.msra.mxu0 0.0
    %6884 = vmatpush.msra.mxu0 0.0
    %6885 = vmatpush.msra.mxu0 0.0
    %6886 = vmatpush.msra.mxu0 0.0
    %6887 = vmatpush.msra.mxu0 0.0
    %6888 = vmatpush.msra.mxu0 0.0
    %6889 = vmatpush.msra.mxu0 0.0
    %6890 = vmatpush.msra.mxu0 %v6022
    %6891 = vmatpush.msra.mxu0 %v6021
    %6892 = vmatpush.msra.mxu0 %v6020
    %6893 = vmatpush.msra.mxu0 %v6019
    %6894 = vmatmul.f32.gmra.mxu0 %v6650
    %v6895 = vpop.f32.mrf.mxu0
    %v6896 = vadd.f32 0.0, %v6895
    %6897 = vdwg.mxu0
    %6898 = vmatpush.msra.mxu0 0.0
    %6899 = vmatpush.msra.mxu0 0.0
    %6900 = vmatpush.msra.mxu0 0.0
    %6901 = vmatpush.msra.mxu0 0.0
    %6902 = vmatpush.msra.mxu0 0.0
    %6903 = vmatpush.msra.mxu0 0.0
    %6904 = vmatpush.msra.mxu0 0.0
    %6905 = vmatpush.msra.mxu0 0.0
    %6906 = vmatpush.msra.mxu0 0.0
    %6907 = vmatpush.msra.mxu0 0.0
    %6908 = vmatpush.msra.mxu0 0.0
    %6909 = vmatpush.msra.mxu0 0.0
    %6910 = vmatpush.msra.mxu0 %v6010
    %6911 = vmatpush.msra.mxu0 %v6009
    %6912 = vmatpush.msra.mxu0 %v6008
    %6913 = vmatpush.msra.mxu0 %v6007
    %6914 = vmatmul.f32.gmra.mxu0 %v6837
    %v6915 = vpop.f32.mrf.mxu0
    %v6916 = vadd.f32 %v6896, %v6915
    %6917 = vdwg.mxu0
    %v6918 = vxor.u32 %v6916, 2147483648
    %v6919 = vmul.f32 %v6918, 1.442695
    %v6920 = vpow.pop %v6919
    %v6921 = vadd.f32 %v6920, 1.0
    %v6922 = vrcp.pop %v6921
    %v6923 = vmul.f32 %v6921, %v6922
    %v6924 = vsub.f32 1.0, %v6923
    %v6925 = vmul.f32 %v6922, %v6924
    %v6926 = vadd.f32 %v6922, %v6925
    %vm6927 = vweird.f32 %v6921
    %vm6928 = vweird.f32 %v6922
    %vm6929 = vmor %vm6927, %vm6928
    %v6930 = vsel %vm6929, %v6922, %v6926
    %v6931 = vand.u32 2147483647, %v6921
    %vm6932 = vcmp.eq.f32.partialorder %v6931, 8.507059e+37
    %v6933 = vand.u32 %v6921, 2147483648
    %v6934 = vor.u32 1.1754944e-38, %v6933
    %v6935 = vsel %vm6932, %v6934, %v6930
    %v6936 = vmul.f32 1.0, %v6935
    %6937 = vmatpush.msra.mxu0 0.0
    %6938 = vmatpush.msra.mxu0 0.0
    %6939 = vmatpush.msra.mxu0 0.0
    %6940 = vmatpush.msra.mxu0 0.0
    %6941 = vmatpush.msra.mxu0 0.0
    %6942 = vmatpush.msra.mxu0 0.0
    %6943 = vmatpush.msra.mxu0 0.0
    %6944 = vmatpush.msra.mxu0 0.0
    %6945 = vmatpush.msra.mxu0 0.0
    %6946 = vmatpush.msra.mxu0 0.0
    %6947 = vmatpush.msra.mxu0 0.0
    %6948 = vmatpush.msra.mxu0 0.0
    %6949 = vmatpush.msra.mxu0 %v6026
    %6950 = vmatpush.msra.mxu0 %v6025
    %6951 = vmatpush.msra.mxu0 %v6024
    %6952 = vmatpush.msra.mxu0 %v6023
    %6953 = vmatmul.f32.gmra.mxu0 %v6650
    %v6954 = vpop.f32.mrf.mxu0
    %v6955 = vadd.f32 0.0, %v6954
    %6956 = vdwg.mxu0
    %v6957 = vmul.f32 %v6877, %v6955
    %6958 = vmatpush.msra.mxu0 0.0
    %6959 = vmatpush.msra.mxu0 0.0
    %6960 = vmatpush.msra.mxu0 0.0
    %6961 = vmatpush.msra.mxu0 0.0
    %6962 = vmatpush.msra.mxu0 0.0
    %6963 = vmatpush.msra.mxu0 0.0
    %6964 = vmatpush.msra.mxu0 0.0
    %6965 = vmatpush.msra.mxu0 0.0
    %6966 = vmatpush.msra.mxu0 0.0
    %6967 = vmatpush.msra.mxu0 0.0
    %6968 = vmatpush.msra.mxu0 0.0
    %6969 = vmatpush.msra.mxu0 0.0
    %6970 = vmatpush.msra.mxu0 %v6014
    %6971 = vmatpush.msra.mxu0 %v6013
    %6972 = vmatpush.msra.mxu0 %v6012
    %6973 = vmatpush.msra.mxu0 %v6011
    %6974 = vmatmul.f32.gmra.mxu0 %v6837
    %v6975 = vpop.f32.mrf.mxu0
    %v6976 = vadd.f32 %v6957, %v6975
    %6977 = vdwg.mxu0
    %v6978 = vtanh.pop %v6976
    %v6979 = vsub.f32 1.0, %v6936
    %v6980 = vmul.f32 %v6979, %v6978
    %v6981 = vmul.f32 %v6936, %v6648
    %v6982 = vadd.f32 %v6980, %v6981
    %v6984 = vsel %vm130, %v6982, 0
    %6986 = vmatpush.msra.mxu0 0.0
    %6987 = vmatpush.msra.mxu0 0.0
    %6988 = vmatpush.msra.mxu0 0.0
    %6989 = vmatpush.msra.mxu0 0.0
    %6990 = vmatpush.msra.mxu0 0.0
    %6991 = vmatpush.msra.mxu0 0.0
    %6992 = vmatpush.msra.mxu0 0.0
    %6993 = vmatpush.msra.mxu0 0.0
    %6994 = vmatpush.msra.mxu0 0.0
    %6995 = vmatpush.msra.mxu0 0.0
    %6996 = vmatpush.msra.mxu0 0.0
    %6997 = vmatpush.msra.mxu0 0.0
    %6998 = vmatpush.msra.mxu0 %v6034
    %6999 = vmatpush.msra.mxu0 %v6033
    %7000 = vmatpush.msra.mxu0 %v6032
    %7001 = vmatpush.msra.mxu0 %v6031
    %7002 = vmatmul.f32.gmra.mxu0 %v6984
    %v7003 = vpop.f32.mrf.mxu0
    %v7004 = vadd.f32 0.0, %v7003
    %7005 = vdwg.mxu0
    %7006 = vmatpush.msra.mxu0 0.0
    %7007 = vmatpush.msra.mxu0 0.0
    %7008 = vmatpush.msra.mxu0 0.0
    %7009 = vmatpush.msra.mxu0 0.0
    %7010 = vmatpush.msra.mxu0 0.0
    %7011 = vmatpush.msra.mxu0 0.0
    %7012 = vmatpush.msra.mxu0 0.0
    %7013 = vmatpush.msra.mxu0 0.0
    %7014 = vmatpush.msra.mxu0 0.0
    %7015 = vmatpush.msra.mxu0 0.0
    %7016 = vmatpush.msra.mxu0 0.0
    %7017 = vmatpush.msra.mxu0 0.0
    %7018 = vmatpush.msra.mxu0 %v6030
    %7019 = vmatpush.msra.mxu0 %v6029
    %7020 = vmatpush.msra.mxu0 %v6028
    %7021 = vmatpush.msra.mxu0 %v6027
    %7022 = vmatmul.f32.gmra.mxu0 %v6695
    %v7023 = vpop.f32.mrf.mxu0
    %v7024 = vadd.f32 %v7004, %v7023
    %7025 = vdwg.mxu0
    %v7026 = vtanh.pop %v7024
    %7027 = vst.msk [vmem:[#allocation2 + $0x4] sm:$0x3] %vm6358, %v7026
    %v7029 = vsel %vm130, %v7026, 0
    %7031 = vmatpush.msra.mxu0 0.0
    %7032 = vmatpush.msra.mxu0 0.0
    %7033 = vmatpush.msra.mxu0 0.0
    %7034 = vmatpush.msra.mxu0 0.0
    %7035 = vmatpush.msra.mxu0 0.0
    %7036 = vmatpush.msra.mxu0 0.0
    %7037 = vmatpush.msra.mxu0 0.0
    %7038 = vmatpush.msra.mxu0 0.0
    %7039 = vmatpush.msra.mxu0 0.0
    %7040 = vmatpush.msra.mxu0 0.0
    %7041 = vmatpush.msra.mxu0 0.0
    %7042 = vmatpush.msra.mxu0 0.0
    %7043 = vmatpush.msra.mxu0 %v5994
    %7044 = vmatpush.msra.mxu0 %v5993
    %7045 = vmatpush.msra.mxu0 %v5992
    %7046 = vmatpush.msra.mxu0 %v5991
    %7047 = vmatmul.f32.gmra.mxu0 %v7029
    %v7048 = vpop.f32.mrf.mxu0
    %v7049 = vadd.f32 0.0, %v7048
    %7050 = vdwg.mxu0
    %v7052 = vrot.slane %v7049, 2
    %v7054 = vadd.f32 %v5932, %v7052
    %v7055 = vxor.u32 %v7054, 2147483648
    %v7056 = vmul.f32 %v7055, 1.442695
    %v7057 = vpow.pop %v7056
    %v7058 = vadd.f32 %v7057, 1.0
    %v7059 = vrcp.pop %v7058
    %v7060 = vmul.f32 %v7058, %v7059
    %v7061 = vsub.f32 1.0, %v7060
    %v7062 = vmul.f32 %v7059, %v7061
    %v7063 = vadd.f32 %v7059, %v7062
    %vm7064 = vweird.f32 %v7058
    %vm7065 = vweird.f32 %v7059
    %vm7066 = vmor %vm7064, %vm7065
    %v7067 = vsel %vm7066, %v7059, %v7063
    %v7068 = vand.u32 2147483647, %v7058
    %vm7069 = vcmp.eq.f32.partialorder %v7068, 8.507059e+37
    %v7070 = vand.u32 %v7058, 2147483648
    %v7071 = vor.u32 1.1754944e-38, %v7070
    %v7072 = vsel %vm7069, %v7071, %v7067
    %v7073 = vmul.f32 1.0, %v7072
    %7074 = vmatpush.msra.mxu0 0.0
    %7075 = vmatpush.msra.mxu0 0.0
    %7076 = vmatpush.msra.mxu0 0.0
    %7077 = vmatpush.msra.mxu0 0.0
    %7078 = vmatpush.msra.mxu0 0.0
    %7079 = vmatpush.msra.mxu0 0.0
    %7080 = vmatpush.msra.mxu0 0.0
    %7081 = vmatpush.msra.mxu0 0.0
    %7082 = vmatpush.msra.mxu0 0.0
    %7083 = vmatpush.msra.mxu0 0.0
    %7084 = vmatpush.msra.mxu0 0.0
    %7085 = vmatpush.msra.mxu0 0.0
    %7086 = vmatpush.msra.mxu0 %v5998
    %7087 = vmatpush.msra.mxu0 %v5997
    %7088 = vmatpush.msra.mxu0 %v5996
    %7089 = vmatpush.msra.mxu0 %v5995
    %7090 = vmatmul.f32.gmra.mxu0 %v7029
    %v7091 = vpop.f32.mrf.mxu0
    %v7092 = vadd.f32 0.0, %v7091
    %7093 = vdwg.mxu0
    %v7095 = vrot.slane %v7092, 2
    %v7097 = vadd.f32 %v5959, %v7095
    %v7098 = vxor.u32 %v7097, 2147483648
    %v7099 = vmul.f32 %v7098, 1.442695
    %v7100 = vpow.pop %v7099
    %v7101 = vadd.f32 %v7100, 1.0
    %v7102 = vrcp.pop %v7101
    %v7103 = vmul.f32 %v7101, %v7102
    %v7104 = vsub.f32 1.0, %v7103
    %v7105 = vmul.f32 %v7102, %v7104
    %v7106 = vadd.f32 %v7102, %v7105
    %vm7107 = vweird.f32 %v7101
    %vm7108 = vweird.f32 %v7102
    %vm7109 = vmor %vm7107, %vm7108
    %v7110 = vsel %vm7109, %v7102, %v7106
    %v7111 = vand.u32 2147483647, %v7101
    %vm7112 = vcmp.eq.f32.partialorder %v7111, 8.507059e+37
    %v7113 = vand.u32 %v7101, 2147483648
    %v7114 = vor.u32 1.1754944e-38, %v7113
    %v7115 = vsel %vm7112, %v7114, %v7110
    %v7116 = vmul.f32 1.0, %v7115
    %7117 = vmatpush.msra.mxu0 0.0
    %7118 = vmatpush.msra.mxu0 0.0
    %7119 = vmatpush.msra.mxu0 0.0
    %7120 = vmatpush.msra.mxu0 0.0
    %7121 = vmatpush.msra.mxu0 0.0
    %7122 = vmatpush.msra.mxu0 0.0
    %7123 = vmatpush.msra.mxu0 0.0
    %7124 = vmatpush.msra.mxu0 0.0
    %7125 = vmatpush.msra.mxu0 0.0
    %7126 = vmatpush.msra.mxu0 0.0
    %7127 = vmatpush.msra.mxu0 0.0
    %7128 = vmatpush.msra.mxu0 0.0
    %7129 = vmatpush.msra.mxu0 %v6002
    %7130 = vmatpush.msra.mxu0 %v6001
    %7131 = vmatpush.msra.mxu0 %v6000
    %7132 = vmatpush.msra.mxu0 %v5999
    %7133 = vmatmul.f32.gmra.mxu0 %v7029
    %v7134 = vpop.f32.mrf.mxu0
    %v7135 = vadd.f32 0.0, %v7134
    %7136 = vdwg.mxu0
    %v7138 = vrot.slane %v7135, 2
    %v7140 = vmul.f32 %v7073, %v7138
    %v7141 = vadd.f32 %v5986, %v7140
    %v7142 = vtanh.pop %v7141
    %v7143 = vsub.f32 1.0, %v7116
    %v7144 = vmul.f32 %v7143, %v7142
    %v7145 = vrot.slane %v7026, 2
    %v7147 = vmul.f32 %v7116, %v7145
    %v7148 = vadd.f32 %v7144, %v7147
    %7149 = vmatpush.msra.mxu0 0.0
    %7150 = vmatpush.msra.mxu0 0.0
    %7151 = vmatpush.msra.mxu0 0.0
    %7152 = vmatpush.msra.mxu0 0.0
    %7153 = vmatpush.msra.mxu0 0.0
    %7154 = vmatpush.msra.mxu0 0.0
    %7155 = vmatpush.msra.mxu0 0.0
    %7156 = vmatpush.msra.mxu0 0.0
    %7157 = vmatpush.msra.mxu0 0.0
    %7158 = vmatpush.msra.mxu0 0.0
    %7159 = vmatpush.msra.mxu0 0.0
    %7160 = vmatpush.msra.mxu0 0.0
    %7161 = vmatpush.msra.mxu0 %v6018
    %7162 = vmatpush.msra.mxu0 %v6017
    %7163 = vmatpush.msra.mxu0 %v6016
    %7164 = vmatpush.msra.mxu0 %v6015
    %7165 = vmatmul.f32.gmra.mxu0 %v6984
    %v7166 = vpop.f32.mrf.mxu0
    %v7167 = vadd.f32 0.0, %v7166
    %7168 = vdwg.mxu0
    %v7170 = vrot.slane %v7148, 6
    %v7171 = vsel %vm130, %v7170, 0
    %7173 = vmatpush.msra.mxu0 0.0
    %7174 = vmatpush.msra.mxu0 0.0
    %7175 = vmatpush.msra.mxu0 0.0
    %7176 = vmatpush.msra.mxu0 0.0
    %7177 = vmatpush.msra.mxu0 0.0
    %7178 = vmatpush.msra.mxu0 0.0
    %7179 = vmatpush.msra.mxu0 0.0
    %7180 = vmatpush.msra.mxu0 0.0
    %7181 = vmatpush.msra.mxu0 0.0
    %7182 = vmatpush.msra.mxu0 0.0
    %7183 = vmatpush.msra.mxu0 0.0
    %7184 = vmatpush.msra.mxu0 0.0
    %7185 = vmatpush.msra.mxu0 %v6006
    %7186 = vmatpush.msra.mxu0 %v6005
    %7187 = vmatpush.msra.mxu0 %v6004
    %7188 = vmatpush.msra.mxu0 %v6003
    %7189 = vmatmul.f32.gmra.mxu0 %v7171
    %v7190 = vpop.f32.mrf.mxu0
    %v7191 = vadd.f32 %v7167, %v7190
    %7192 = vdwg.mxu0
    %v7193 = vxor.u32 %v7191, 2147483648
    %v7194 = vmul.f32 %v7193, 1.442695
    %v7195 = vpow.pop %v7194
    %v7196 = vadd.f32 %v7195, 1.0
    %v7197 = vrcp.pop %v7196
    %v7198 = vmul.f32 %v7196, %v7197
    %v7199 = vsub.f32 1.0, %v7198
    %v7200 = vmul.f32 %v7197, %v7199
    %v7201 = vadd.f32 %v7197, %v7200
    %vm7202 = vweird.f32 %v7196
    %vm7203 = vweird.f32 %v7197
    %vm7204 = vmor %vm7202, %vm7203
    %v7205 = vsel %vm7204, %v7197, %v7201
    %v7206 = vand.u32 2147483647, %v7196
    %vm7207 = vcmp.eq.f32.partialorder %v7206, 8.507059e+37
    %v7208 = vand.u32 %v7196, 2147483648
    %v7209 = vor.u32 1.1754944e-38, %v7208
    %v7210 = vsel %vm7207, %v7209, %v7205
    %v7211 = vmul.f32 1.0, %v7210
    %7212 = vmatpush.msra.mxu0 0.0
    %7213 = vmatpush.msra.mxu0 0.0
    %7214 = vmatpush.msra.mxu0 0.0
    %7215 = vmatpush.msra.mxu0 0.0
    %7216 = vmatpush.msra.mxu0 0.0
    %7217 = vmatpush.msra.mxu0 0.0
    %7218 = vmatpush.msra.mxu0 0.0
    %7219 = vmatpush.msra.mxu0 0.0
    %7220 = vmatpush.msra.mxu0 0.0
    %7221 = vmatpush.msra.mxu0 0.0
    %7222 = vmatpush.msra.mxu0 0.0
    %7223 = vmatpush.msra.mxu0 0.0
    %7224 = vmatpush.msra.mxu0 %v6022
    %7225 = vmatpush.msra.mxu0 %v6021
    %7226 = vmatpush.msra.mxu0 %v6020
    %7227 = vmatpush.msra.mxu0 %v6019
    %7228 = vmatmul.f32.gmra.mxu0 %v6984
    %v7229 = vpop.f32.mrf.mxu0
    %v7230 = vadd.f32 0.0, %v7229
    %7231 = vdwg.mxu0
    %7232 = vmatpush.msra.mxu0 0.0
    %7233 = vmatpush.msra.mxu0 0.0
    %7234 = vmatpush.msra.mxu0 0.0
    %7235 = vmatpush.msra.mxu0 0.0
    %7236 = vmatpush.msra.mxu0 0.0
    %7237 = vmatpush.msra.mxu0 0.0
    %7238 = vmatpush.msra.mxu0 0.0
    %7239 = vmatpush.msra.mxu0 0.0
    %7240 = vmatpush.msra.mxu0 0.0
    %7241 = vmatpush.msra.mxu0 0.0
    %7242 = vmatpush.msra.mxu0 0.0
    %7243 = vmatpush.msra.mxu0 0.0
    %7244 = vmatpush.msra.mxu0 %v6010
    %7245 = vmatpush.msra.mxu0 %v6009
    %7246 = vmatpush.msra.mxu0 %v6008
    %7247 = vmatpush.msra.mxu0 %v6007
    %7248 = vmatmul.f32.gmra.mxu0 %v7171
    %v7249 = vpop.f32.mrf.mxu0
    %v7250 = vadd.f32 %v7230, %v7249
    %7251 = vdwg.mxu0
    %v7252 = vxor.u32 %v7250, 2147483648
    %v7253 = vmul.f32 %v7252, 1.442695
    %v7254 = vpow.pop %v7253
    %v7255 = vadd.f32 %v7254, 1.0
    %v7256 = vrcp.pop %v7255
    %v7257 = vmul.f32 %v7255, %v7256
    %v7258 = vsub.f32 1.0, %v7257
    %v7259 = vmul.f32 %v7256, %v7258
    %v7260 = vadd.f32 %v7256, %v7259
    %vm7261 = vweird.f32 %v7255
    %vm7262 = vweird.f32 %v7256
    %vm7263 = vmor %vm7261, %vm7262
    %v7264 = vsel %vm7263, %v7256, %v7260
    %v7265 = vand.u32 2147483647, %v7255
    %vm7266 = vcmp.eq.f32.partialorder %v7265, 8.507059e+37
    %v7267 = vand.u32 %v7255, 2147483648
    %v7268 = vor.u32 1.1754944e-38, %v7267
    %v7269 = vsel %vm7266, %v7268, %v7264
    %v7270 = vmul.f32 1.0, %v7269
    %7271 = vmatpush.msra.mxu0 0.0
    %7272 = vmatpush.msra.mxu0 0.0
    %7273 = vmatpush.msra.mxu0 0.0
    %7274 = vmatpush.msra.mxu0 0.0
    %7275 = vmatpush.msra.mxu0 0.0
    %7276 = vmatpush.msra.mxu0 0.0
    %7277 = vmatpush.msra.mxu0 0.0
    %7278 = vmatpush.msra.mxu0 0.0
    %7279 = vmatpush.msra.mxu0 0.0
    %7280 = vmatpush.msra.mxu0 0.0
    %7281 = vmatpush.msra.mxu0 0.0
    %7282 = vmatpush.msra.mxu0 0.0
    %7283 = vmatpush.msra.mxu0 %v6026
    %7284 = vmatpush.msra.mxu0 %v6025
    %7285 = vmatpush.msra.mxu0 %v6024
    %7286 = vmatpush.msra.mxu0 %v6023
    %7287 = vmatmul.f32.gmra.mxu0 %v6984
    %v7288 = vpop.f32.mrf.mxu0
    %v7289 = vadd.f32 0.0, %v7288
    %7290 = vdwg.mxu0
    %v7291 = vmul.f32 %v7211, %v7289
    %7292 = vmatpush.msra.mxu0 0.0
    %7293 = vmatpush.msra.mxu0 0.0
    %7294 = vmatpush.msra.mxu0 0.0
    %7295 = vmatpush.msra.mxu0 0.0
    %7296 = vmatpush.msra.mxu0 0.0
    %7297 = vmatpush.msra.mxu0 0.0
    %7298 = vmatpush.msra.mxu0 0.0
    %7299 = vmatpush.msra.mxu0 0.0
    %7300 = vmatpush.msra.mxu0 0.0
    %7301 = vmatpush.msra.mxu0 0.0
    %7302 = vmatpush.msra.mxu0 0.0
    %7303 = vmatpush.msra.mxu0 0.0
    %7304 = vmatpush.msra.mxu0 %v6014
    %7305 = vmatpush.msra.mxu0 %v6013
    %7306 = vmatpush.msra.mxu0 %v6012
    %7307 = vmatpush.msra.mxu0 %v6011
    %7308 = vmatmul.f32.gmra.mxu0 %v7171
    %v7309 = vpop.f32.mrf.mxu0
    %v7310 = vadd.f32 %v7291, %v7309
    %7311 = vdwg.mxu0
    %v7312 = vtanh.pop %v7310
    %v7313 = vsub.f32 1.0, %v7270
    %v7314 = vmul.f32 %v7313, %v7312
    %v7315 = vmul.f32 %v7270, %v6982
    %v7316 = vadd.f32 %v7314, %v7315
    %v7318 = vsel %vm130, %v7316, 0
    %7320 = vmatpush.msra.mxu0 0.0
    %7321 = vmatpush.msra.mxu0 0.0
    %7322 = vmatpush.msra.mxu0 0.0
    %7323 = vmatpush.msra.mxu0 0.0
    %7324 = vmatpush.msra.mxu0 0.0
    %7325 = vmatpush.msra.mxu0 0.0
    %7326 = vmatpush.msra.mxu0 0.0
    %7327 = vmatpush.msra.mxu0 0.0
    %7328 = vmatpush.msra.mxu0 0.0
    %7329 = vmatpush.msra.mxu0 0.0
    %7330 = vmatpush.msra.mxu0 0.0
    %7331 = vmatpush.msra.mxu0 0.0
    %7332 = vmatpush.msra.mxu0 %v6034
    %7333 = vmatpush.msra.mxu0 %v6033
    %7334 = vmatpush.msra.mxu0 %v6032
    %7335 = vmatpush.msra.mxu0 %v6031
    %7336 = vmatmul.f32.gmra.mxu0 %v7318
    %v7337 = vpop.f32.mrf.mxu0
    %v7338 = vadd.f32 0.0, %v7337
    %7339 = vdwg.mxu0
    %7340 = vmatpush.msra.mxu0 0.0
    %7341 = vmatpush.msra.mxu0 0.0
    %7342 = vmatpush.msra.mxu0 0.0
    %7343 = vmatpush.msra.mxu0 0.0
    %7344 = vmatpush.msra.mxu0 0.0
    %7345 = vmatpush.msra.mxu0 0.0
    %7346 = vmatpush.msra.mxu0 0.0
    %7347 = vmatpush.msra.mxu0 0.0
    %7348 = vmatpush.msra.mxu0 0.0
    %7349 = vmatpush.msra.mxu0 0.0
    %7350 = vmatpush.msra.mxu0 0.0
    %7351 = vmatpush.msra.mxu0 0.0
    %7352 = vmatpush.msra.mxu0 %v6030
    %7353 = vmatpush.msra.mxu0 %v6029
    %7354 = vmatpush.msra.mxu0 %v6028
    %7355 = vmatpush.msra.mxu0 %v6027
    %7356 = vmatmul.f32.gmra.mxu0 %v7029
    %v7357 = vpop.f32.mrf.mxu0
    %v7358 = vadd.f32 %v7338, %v7357
    %7359 = vdwg.mxu0
    %v7360 = vtanh.pop %v7358
    %7361 = vst.msk [vmem:[#allocation2 + $0x6] sm:$0x3] %vm6358, %v7360
    %v7363 = vsel %vm130, %v7360, 0
    %7365 = vmatpush.msra.mxu0 0.0
    %7366 = vmatpush.msra.mxu0 0.0
    %7367 = vmatpush.msra.mxu0 0.0
    %7368 = vmatpush.msra.mxu0 0.0
    %7369 = vmatpush.msra.mxu0 0.0
    %7370 = vmatpush.msra.mxu0 0.0
    %7371 = vmatpush.msra.mxu0 0.0
    %7372 = vmatpush.msra.mxu0 0.0
    %7373 = vmatpush.msra.mxu0 0.0
    %7374 = vmatpush.msra.mxu0 0.0
    %7375 = vmatpush.msra.mxu0 0.0
    %7376 = vmatpush.msra.mxu0 0.0
    %7377 = vmatpush.msra.mxu0 %v5994
    %7378 = vmatpush.msra.mxu0 %v5993
    %7379 = vmatpush.msra.mxu0 %v5992
    %7380 = vmatpush.msra.mxu0 %v5991
    %7381 = vmatmul.f32.gmra.mxu0 %v7363
    %v7382 = vpop.f32.mrf.mxu0
    %v7383 = vadd.f32 0.0, %v7382
    %7384 = vdwg.mxu0
    %v7385 = vadd.f32 %v5935, %v7383
    %v7386 = vxor.u32 %v7385, 2147483648
    %v7387 = vmul.f32 %v7386, 1.442695
    %v7388 = vpow.pop %v7387
    %v7389 = vadd.f32 %v7388, 1.0
    %v7390 = vrcp.pop %v7389
    %v7391 = vmul.f32 %v7389, %v7390
    %v7392 = vsub.f32 1.0, %v7391
    %v7393 = vmul.f32 %v7390, %v7392
    %v7394 = vadd.f32 %v7390, %v7393
    %vm7395 = vweird.f32 %v7389
    %vm7396 = vweird.f32 %v7390
    %vm7397 = vmor %vm7395, %vm7396
    %v7398 = vsel %vm7397, %v7390, %v7394
    %v7399 = vand.u32 2147483647, %v7389
    %vm7400 = vcmp.eq.f32.partialorder %v7399, 8.507059e+37
    %v7401 = vand.u32 %v7389, 2147483648
    %v7402 = vor.u32 1.1754944e-38, %v7401
    %v7403 = vsel %vm7400, %v7402, %v7398
    %v7404 = vmul.f32 1.0, %v7403
    %7405 = vmatpush.msra.mxu0 0.0
    %7406 = vmatpush.msra.mxu0 0.0
    %7407 = vmatpush.msra.mxu0 0.0
    %7408 = vmatpush.msra.mxu0 0.0
    %7409 = vmatpush.msra.mxu0 0.0
    %7410 = vmatpush.msra.mxu0 0.0
    %7411 = vmatpush.msra.mxu0 0.0
    %7412 = vmatpush.msra.mxu0 0.0
    %7413 = vmatpush.msra.mxu0 0.0
    %7414 = vmatpush.msra.mxu0 0.0
    %7415 = vmatpush.msra.mxu0 0.0
    %7416 = vmatpush.msra.mxu0 0.0
    %7417 = vmatpush.msra.mxu0 %v5998
    %7418 = vmatpush.msra.mxu0 %v5997
    %7419 = vmatpush.msra.mxu0 %v5996
    %7420 = vmatpush.msra.mxu0 %v5995
    %7421 = vmatmul.f32.gmra.mxu0 %v7363
    %v7422 = vpop.f32.mrf.mxu0
    %v7423 = vadd.f32 0.0, %v7422
    %7424 = vdwg.mxu0
    %v7425 = vadd.f32 %v5962, %v7423
    %v7426 = vxor.u32 %v7425, 2147483648
    %v7427 = vmul.f32 %v7426, 1.442695
    %v7428 = vpow.pop %v7427
    %v7429 = vadd.f32 %v7428, 1.0
    %v7430 = vrcp.pop %v7429
    %v7431 = vmul.f32 %v7429, %v7430
    %v7432 = vsub.f32 1.0, %v7431
    %v7433 = vmul.f32 %v7430, %v7432
    %v7434 = vadd.f32 %v7430, %v7433
    %vm7435 = vweird.f32 %v7429
    %vm7436 = vweird.f32 %v7430
    %vm7437 = vmor %vm7435, %vm7436
    %v7438 = vsel %vm7437, %v7430, %v7434
    %v7439 = vand.u32 2147483647, %v7429
    %vm7440 = vcmp.eq.f32.partialorder %v7439, 8.507059e+37
    %v7441 = vand.u32 %v7429, 2147483648
    %v7442 = vor.u32 1.1754944e-38, %v7441
    %v7443 = vsel %vm7440, %v7442, %v7438
    %v7444 = vmul.f32 1.0, %v7443
    %7445 = vmatpush.msra.mxu0 0.0
    %7446 = vmatpush.msra.mxu0 0.0
    %7447 = vmatpush.msra.mxu0 0.0
    %7448 = vmatpush.msra.mxu0 0.0
    %7449 = vmatpush.msra.mxu0 0.0
    %7450 = vmatpush.msra.mxu0 0.0
    %7451 = vmatpush.msra.mxu0 0.0
    %7452 = vmatpush.msra.mxu0 0.0
    %7453 = vmatpush.msra.mxu0 0.0
    %7454 = vmatpush.msra.mxu0 0.0
    %7455 = vmatpush.msra.mxu0 0.0
    %7456 = vmatpush.msra.mxu0 0.0
    %7457 = vmatpush.msra.mxu0 %v6002
    %7458 = vmatpush.msra.mxu0 %v6001
    %7459 = vmatpush.msra.mxu0 %v6000
    %7460 = vmatpush.msra.mxu0 %v5999
    %7461 = vmatmul.f32.gmra.mxu0 %v7363
    %v7462 = vpop.f32.mrf.mxu0
    %v7463 = vadd.f32 0.0, %v7462
    %7464 = vdwg.mxu0
    %v7465 = vmul.f32 %v7404, %v7463
    %v7466 = vadd.f32 %v5989, %v7465
    %v7467 = vtanh.pop %v7466
    %v7468 = vsub.f32 1.0, %v7444
    %v7469 = vmul.f32 %v7468, %v7467
    %v7470 = vmul.f32 %v7444, %v7360
    %v7471 = vadd.f32 %v7469, %v7470
    %7472 = vmatpush.msra.mxu0 0.0
    %7473 = vmatpush.msra.mxu0 0.0
    %7474 = vmatpush.msra.mxu0 0.0
    %7475 = vmatpush.msra.mxu0 0.0
    %7476 = vmatpush.msra.mxu0 0.0
    %7477 = vmatpush.msra.mxu0 0.0
    %7478 = vmatpush.msra.mxu0 0.0
    %7479 = vmatpush.msra.mxu0 0.0
    %7480 = vmatpush.msra.mxu0 0.0
    %7481 = vmatpush.msra.mxu0 0.0
    %7482 = vmatpush.msra.mxu0 0.0
    %7483 = vmatpush.msra.mxu0 0.0
    %7484 = vmatpush.msra.mxu0 %v6018
    %7485 = vmatpush.msra.mxu0 %v6017
    %7486 = vmatpush.msra.mxu0 %v6016
    %7487 = vmatpush.msra.mxu0 %v6015
    %7488 = vmatmul.f32.gmra.mxu0 %v7318
    %v7489 = vpop.f32.mrf.mxu0
    %v7490 = vadd.f32 0.0, %v7489
    %7491 = vdwg.mxu0
    %v7493 = vsel %vm130, %v7471, 0
    %7495 = vmatpush.msra.mxu0 0.0
    %7496 = vmatpush.msra.mxu0 0.0
    %7497 = vmatpush.msra.mxu0 0.0
    %7498 = vmatpush.msra.mxu0 0.0
    %7499 = vmatpush.msra.mxu0 0.0
    %7500 = vmatpush.msra.mxu0 0.0
    %7501 = vmatpush.msra.mxu0 0.0
    %7502 = vmatpush.msra.mxu0 0.0
    %7503 = vmatpush.msra.mxu0 0.0
    %7504 = vmatpush.msra.mxu0 0.0
    %7505 = vmatpush.msra.mxu0 0.0
    %7506 = vmatpush.msra.mxu0 0.0
    %7507 = vmatpush.msra.mxu0 %v6006
    %7508 = vmatpush.msra.mxu0 %v6005
    %7509 = vmatpush.msra.mxu0 %v6004
    %7510 = vmatpush.msra.mxu0 %v6003
    %7511 = vmatmul.f32.gmra.mxu0 %v7493
    %v7512 = vpop.f32.mrf.mxu0
    %v7513 = vadd.f32 %v7490, %v7512
    %7514 = vdwg.mxu0
    %v7515 = vxor.u32 %v7513, 2147483648
    %v7516 = vmul.f32 %v7515, 1.442695
    %v7517 = vpow.pop %v7516
    %v7518 = vadd.f32 %v7517, 1.0
    %v7519 = vrcp.pop %v7518
    %v7520 = vmul.f32 %v7518, %v7519
    %v7521 = vsub.f32 1.0, %v7520
    %v7522 = vmul.f32 %v7519, %v7521
    %v7523 = vadd.f32 %v7519, %v7522
    %vm7524 = vweird.f32 %v7518
    %vm7525 = vweird.f32 %v7519
    %vm7526 = vmor %vm7524, %vm7525
    %v7527 = vsel %vm7526, %v7519, %v7523
    %v7528 = vand.u32 2147483647, %v7518
    %vm7529 = vcmp.eq.f32.partialorder %v7528, 8.507059e+37
    %v7530 = vand.u32 %v7518, 2147483648
    %v7531 = vor.u32 1.1754944e-38, %v7530
    %v7532 = vsel %vm7529, %v7531, %v7527
    %v7533 = vmul.f32 1.0, %v7532
    %7534 = vmatpush.msra.mxu0 0.0
    %7535 = vmatpush.msra.mxu0 0.0
    %7536 = vmatpush.msra.mxu0 0.0
    %7537 = vmatpush.msra.mxu0 0.0
    %7538 = vmatpush.msra.mxu0 0.0
    %7539 = vmatpush.msra.mxu0 0.0
    %7540 = vmatpush.msra.mxu0 0.0
    %7541 = vmatpush.msra.mxu0 0.0
    %7542 = vmatpush.msra.mxu0 0.0
    %7543 = vmatpush.msra.mxu0 0.0
    %7544 = vmatpush.msra.mxu0 0.0
    %7545 = vmatpush.msra.mxu0 0.0
    %7546 = vmatpush.msra.mxu0 %v6022
    %7547 = vmatpush.msra.mxu0 %v6021
    %7548 = vmatpush.msra.mxu0 %v6020
    %7549 = vmatpush.msra.mxu0 %v6019
    %7550 = vmatmul.f32.gmra.mxu0 %v7318
    %v7551 = vpop.f32.mrf.mxu0
    %v7552 = vadd.f32 0.0, %v7551
    %7553 = vdwg.mxu0
    %7554 = vmatpush.msra.mxu0 0.0
    %7555 = vmatpush.msra.mxu0 0.0
    %7556 = vmatpush.msra.mxu0 0.0
    %7557 = vmatpush.msra.mxu0 0.0
    %7558 = vmatpush.msra.mxu0 0.0
    %7559 = vmatpush.msra.mxu0 0.0
    %7560 = vmatpush.msra.mxu0 0.0
    %7561 = vmatpush.msra.mxu0 0.0
    %7562 = vmatpush.msra.mxu0 0.0
    %7563 = vmatpush.msra.mxu0 0.0
    %7564 = vmatpush.msra.mxu0 0.0
    %7565 = vmatpush.msra.mxu0 0.0
    %7566 = vmatpush.msra.mxu0 %v6010
    %7567 = vmatpush.msra.mxu0 %v6009
    %7568 = vmatpush.msra.mxu0 %v6008
    %7569 = vmatpush.msra.mxu0 %v6007
    %7570 = vmatmul.f32.gmra.mxu0 %v7493
    %v7571 = vpop.f32.mrf.mxu0
    %v7572 = vadd.f32 %v7552, %v7571
    %7573 = vdwg.mxu0
    %v7574 = vxor.u32 %v7572, 2147483648
    %v7575 = vmul.f32 %v7574, 1.442695
    %v7576 = vpow.pop %v7575
    %v7577 = vadd.f32 %v7576, 1.0
    %v7578 = vrcp.pop %v7577
    %v7579 = vmul.f32 %v7577, %v7578
    %v7580 = vsub.f32 1.0, %v7579
    %v7581 = vmul.f32 %v7578, %v7580
    %v7582 = vadd.f32 %v7578, %v7581
    %vm7583 = vweird.f32 %v7577
    %vm7584 = vweird.f32 %v7578
    %vm7585 = vmor %vm7583, %vm7584
    %v7586 = vsel %vm7585, %v7578, %v7582
    %v7587 = vand.u32 2147483647, %v7577
    %vm7588 = vcmp.eq.f32.partialorder %v7587, 8.507059e+37
    %v7589 = vand.u32 %v7577, 2147483648
    %v7590 = vor.u32 1.1754944e-38, %v7589
    %v7591 = vsel %vm7588, %v7590, %v7586
    %v7592 = vmul.f32 1.0, %v7591
    %7593 = vmatpush.msra.mxu0 0.0
    %7594 = vmatpush.msra.mxu0 0.0
    %7595 = vmatpush.msra.mxu0 0.0
    %7596 = vmatpush.msra.mxu0 0.0
    %7597 = vmatpush.msra.mxu0 0.0
    %7598 = vmatpush.msra.mxu0 0.0
    %7599 = vmatpush.msra.mxu0 0.0
    %7600 = vmatpush.msra.mxu0 0.0
    %7601 = vmatpush.msra.mxu0 0.0
    %7602 = vmatpush.msra.mxu0 0.0
    %7603 = vmatpush.msra.mxu0 0.0
    %7604 = vmatpush.msra.mxu0 0.0
    %7605 = vmatpush.msra.mxu0 %v6026
    %7606 = vmatpush.msra.mxu0 %v6025
    %7607 = vmatpush.msra.mxu0 %v6024
    %7608 = vmatpush.msra.mxu0 %v6023
    %7609 = vmatmul.f32.gmra.mxu0 %v7318
    %v7610 = vpop.f32.mrf.mxu0
    %v7611 = vadd.f32 0.0, %v7610
    %7612 = vdwg.mxu0
    %v7613 = vmul.f32 %v7533, %v7611
    %7614 = vmatpush.msra.mxu0 0.0
    %7615 = vmatpush.msra.mxu0 0.0
    %7616 = vmatpush.msra.mxu0 0.0
    %7617 = vmatpush.msra.mxu0 0.0
    %7618 = vmatpush.msra.mxu0 0.0
    %7619 = vmatpush.msra.mxu0 0.0
    %7620 = vmatpush.msra.mxu0 0.0
    %7621 = vmatpush.msra.mxu0 0.0
    %7622 = vmatpush.msra.mxu0 0.0
    %7623 = vmatpush.msra.mxu0 0.0
    %7624 = vmatpush.msra.mxu0 0.0
    %7625 = vmatpush.msra.mxu0 0.0
    %7626 = vmatpush.msra.mxu0 %v6014
    %7627 = vmatpush.msra.mxu0 %v6013
    %7628 = vmatpush.msra.mxu0 %v6012
    %7629 = vmatpush.msra.mxu0 %v6011
    %7630 = vmatmul.f32.gmra.mxu0 %v7493
    %v7631 = vpop.f32.mrf.mxu0
    %v7632 = vadd.f32 %v7613, %v7631
    %7633 = vdwg.mxu0
    %v7634 = vtanh.pop %v7632
    %v7635 = vsub.f32 1.0, %v7592
    %v7636 = vmul.f32 %v7635, %v7634
    %v7637 = vmul.f32 %v7592, %v7316
    %v7638 = vadd.f32 %v7636, %v7637
    %v7640 = vsel %vm130, %v7638, 0
    %7642 = vmatpush.msra.mxu0 0.0
    %7643 = vmatpush.msra.mxu0 0.0
    %7644 = vmatpush.msra.mxu0 0.0
    %7645 = vmatpush.msra.mxu0 0.0
    %7646 = vmatpush.msra.mxu0 0.0
    %7647 = vmatpush.msra.mxu0 0.0
    %7648 = vmatpush.msra.mxu0 0.0
    %7649 = vmatpush.msra.mxu0 0.0
    %7650 = vmatpush.msra.mxu0 0.0
    %7651 = vmatpush.msra.mxu0 0.0
    %7652 = vmatpush.msra.mxu0 0.0
    %7653 = vmatpush.msra.mxu0 0.0
    %7654 = vmatpush.msra.mxu0 %v6034
    %7655 = vmatpush.msra.mxu0 %v6033
    %7656 = vmatpush.msra.mxu0 %v6032
    %7657 = vmatpush.msra.mxu0 %v6031
    %7658 = vmatmul.f32.gmra.mxu0 %v7640
    %v7659 = vpop.f32.mrf.mxu0
    %v7660 = vadd.f32 0.0, %v7659
    %7661 = vdwg.mxu0
    %7662 = vmatpush.msra.mxu0 0.0
    %7663 = vmatpush.msra.mxu0 0.0
    %7664 = vmatpush.msra.mxu0 0.0
    %7665 = vmatpush.msra.mxu0 0.0
    %7666 = vmatpush.msra.mxu0 0.0
    %7667 = vmatpush.msra.mxu0 0.0
    %7668 = vmatpush.msra.mxu0 0.0
    %7669 = vmatpush.msra.mxu0 0.0
    %7670 = vmatpush.msra.mxu0 0.0
    %7671 = vmatpush.msra.mxu0 0.0
    %7672 = vmatpush.msra.mxu0 0.0
    %7673 = vmatpush.msra.mxu0 0.0
    %7674 = vmatpush.msra.mxu0 %v6030
    %7675 = vmatpush.msra.mxu0 %v6029
    %7676 = vmatpush.msra.mxu0 %v6028
    %7677 = vmatpush.msra.mxu0 %v6027
    %7678 = vmatmul.f32.gmra.mxu0 %v7363
    %v7679 = vpop.f32.mrf.mxu0
    %v7680 = vadd.f32 %v7660, %v7679
    %7681 = vdwg.mxu0
    %v7682 = vtanh.pop %v7680
    %7683 = vst.msk [vmem:[#allocation2 + $0x8] sm:$0x3] %vm6358, %v7682
    %v7685 = vsel %vm130, %v7682, 0
    %7687 = vmatpush.msra.mxu0 0.0
    %7688 = vmatpush.msra.mxu0 0.0
    %7689 = vmatpush.msra.mxu0 0.0
    %7690 = vmatpush.msra.mxu0 0.0
    %7691 = vmatpush.msra.mxu0 0.0
    %7692 = vmatpush.msra.mxu0 0.0
    %7693 = vmatpush.msra.mxu0 0.0
    %7694 = vmatpush.msra.mxu0 0.0
    %7695 = vmatpush.msra.mxu0 0.0
    %7696 = vmatpush.msra.mxu0 0.0
    %7697 = vmatpush.msra.mxu0 0.0
    %7698 = vmatpush.msra.mxu0 0.0
    %7699 = vmatpush.msra.mxu0 %v5994
    %7700 = vmatpush.msra.mxu0 %v5993
    %7701 = vmatpush.msra.mxu0 %v5992
    %7702 = vmatpush.msra.mxu0 %v5991
    %7703 = vmatmul.f32.gmra.mxu0 %v7685
    %v7704 = vpop.f32.mrf.mxu0
    %v7705 = vadd.f32 0.0, %v7704
    %7706 = vdwg.mxu0
    %v7708 = vrot.slane %v7705, 6
    %v7710 = vadd.f32 %v5935, %v7708
    %v7711 = vxor.u32 %v7710, 2147483648
    %v7712 = vmul.f32 %v7711, 1.442695
    %v7713 = vpow.pop %v7712
    %v7714 = vadd.f32 %v7713, 1.0
    %v7715 = vrcp.pop %v7714
    %v7716 = vmul.f32 %v7714, %v7715
    %v7717 = vsub.f32 1.0, %v7716
    %v7718 = vmul.f32 %v7715, %v7717
    %v7719 = vadd.f32 %v7715, %v7718
    %vm7720 = vweird.f32 %v7714
    %vm7721 = vweird.f32 %v7715
    %vm7722 = vmor %vm7720, %vm7721
    %v7723 = vsel %vm7722, %v7715, %v7719
    %v7724 = vand.u32 2147483647, %v7714
    %vm7725 = vcmp.eq.f32.partialorder %v7724, 8.507059e+37
    %v7726 = vand.u32 %v7714, 2147483648
    %v7727 = vor.u32 1.1754944e-38, %v7726
    %v7728 = vsel %vm7725, %v7727, %v7723
    %v7729 = vmul.f32 1.0, %v7728
    %7730 = vmatpush.msra.mxu0 0.0
    %7731 = vmatpush.msra.mxu0 0.0
    %7732 = vmatpush.msra.mxu0 0.0
    %7733 = vmatpush.msra.mxu0 0.0
    %7734 = vmatpush.msra.mxu0 0.0
    %7735 = vmatpush.msra.mxu0 0.0
    %7736 = vmatpush.msra.mxu0 0.0
    %7737 = vmatpush.msra.mxu0 0.0
    %7738 = vmatpush.msra.mxu0 0.0
    %7739 = vmatpush.msra.mxu0 0.0
    %7740 = vmatpush.msra.mxu0 0.0
    %7741 = vmatpush.msra.mxu0 0.0
    %7742 = vmatpush.msra.mxu0 %v5998
    %7743 = vmatpush.msra.mxu0 %v5997
    %7744 = vmatpush.msra.mxu0 %v5996
    %7745 = vmatpush.msra.mxu0 %v5995
    %7746 = vmatmul.f32.gmra.mxu0 %v7685
    %v7747 = vpop.f32.mrf.mxu0
    %v7748 = vadd.f32 0.0, %v7747
    %7749 = vdwg.mxu0
    %v7751 = vrot.slane %v7748, 6
    %v7753 = vadd.f32 %v5962, %v7751
    %v7754 = vxor.u32 %v7753, 2147483648
    %v7755 = vmul.f32 %v7754, 1.442695
    %v7756 = vpow.pop %v7755
    %v7757 = vadd.f32 %v7756, 1.0
    %v7758 = vrcp.pop %v7757
    %v7759 = vmul.f32 %v7757, %v7758
    %v7760 = vsub.f32 1.0, %v7759
    %v7761 = vmul.f32 %v7758, %v7760
    %v7762 = vadd.f32 %v7758, %v7761
    %vm7763 = vweird.f32 %v7757
    %vm7764 = vweird.f32 %v7758
    %vm7765 = vmor %vm7763, %vm7764
    %v7766 = vsel %vm7765, %v7758, %v7762
    %v7767 = vand.u32 2147483647, %v7757
    %vm7768 = vcmp.eq.f32.partialorder %v7767, 8.507059e+37
    %v7769 = vand.u32 %v7757, 2147483648
    %v7770 = vor.u32 1.1754944e-38, %v7769
    %v7771 = vsel %vm7768, %v7770, %v7766
    %v7772 = vmul.f32 1.0, %v7771
    %7773 = vmatpush.msra.mxu0 0.0
    %7774 = vmatpush.msra.mxu0 0.0
    %7775 = vmatpush.msra.mxu0 0.0
    %7776 = vmatpush.msra.mxu0 0.0
    %7777 = vmatpush.msra.mxu0 0.0
    %7778 = vmatpush.msra.mxu0 0.0
    %7779 = vmatpush.msra.mxu0 0.0
    %7780 = vmatpush.msra.mxu0 0.0
    %7781 = vmatpush.msra.mxu0 0.0
    %7782 = vmatpush.msra.mxu0 0.0
    %7783 = vmatpush.msra.mxu0 0.0
    %7784 = vmatpush.msra.mxu0 0.0
    %7785 = vmatpush.msra.mxu0 %v6002
    %7786 = vmatpush.msra.mxu0 %v6001
    %7787 = vmatpush.msra.mxu0 %v6000
    %7788 = vmatpush.msra.mxu0 %v5999
    %7789 = vmatmul.f32.gmra.mxu0 %v7685
    %v7790 = vpop.f32.mrf.mxu0
    %v7791 = vadd.f32 0.0, %v7790
    %7792 = vdwg.mxu0
    %v7794 = vrot.slane %v7791, 6
    %v7796 = vmul.f32 %v7729, %v7794
    %v7797 = vadd.f32 %v5989, %v7796
    %v7798 = vtanh.pop %v7797
    %v7799 = vsub.f32 1.0, %v7772
    %v7800 = vmul.f32 %v7799, %v7798
    %v7801 = vrot.slane %v7682, 6
    %v7803 = vmul.f32 %v7772, %v7801
    %v7804 = vadd.f32 %v7800, %v7803
    %7805 = vmatpush.msra.mxu0 0.0
    %7806 = vmatpush.msra.mxu0 0.0
    %7807 = vmatpush.msra.mxu0 0.0
    %7808 = vmatpush.msra.mxu0 0.0
    %7809 = vmatpush.msra.mxu0 0.0
    %7810 = vmatpush.msra.mxu0 0.0
    %7811 = vmatpush.msra.mxu0 0.0
    %7812 = vmatpush.msra.mxu0 0.0
    %7813 = vmatpush.msra.mxu0 0.0
    %7814 = vmatpush.msra.mxu0 0.0
    %7815 = vmatpush.msra.mxu0 0.0
    %7816 = vmatpush.msra.mxu0 0.0
    %7817 = vmatpush.msra.mxu0 %v6018
    %7818 = vmatpush.msra.mxu0 %v6017
    %7819 = vmatpush.msra.mxu0 %v6016
    %7820 = vmatpush.msra.mxu0 %v6015
    %7821 = vmatmul.f32.gmra.mxu0 %v7640
    %v7822 = vpop.f32.mrf.mxu0
    %v7823 = vadd.f32 0.0, %v7822
    %7824 = vdwg.mxu0
    %v7826 = vrot.slane %v7804, 2
    %v7827 = vsel %vm130, %v7826, 0
    %7829 = vmatpush.msra.mxu0 0.0
    %7830 = vmatpush.msra.mxu0 0.0
    %7831 = vmatpush.msra.mxu0 0.0
    %7832 = vmatpush.msra.mxu0 0.0
    %7833 = vmatpush.msra.mxu0 0.0
    %7834 = vmatpush.msra.mxu0 0.0
    %7835 = vmatpush.msra.mxu0 0.0
    %7836 = vmatpush.msra.mxu0 0.0
    %7837 = vmatpush.msra.mxu0 0.0
    %7838 = vmatpush.msra.mxu0 0.0
    %7839 = vmatpush.msra.mxu0 0.0
    %7840 = vmatpush.msra.mxu0 0.0
    %7841 = vmatpush.msra.mxu0 %v6006
    %7842 = vmatpush.msra.mxu0 %v6005
    %7843 = vmatpush.msra.mxu0 %v6004
    %7844 = vmatpush.msra.mxu0 %v6003
    %7845 = vmatmul.f32.gmra.mxu0 %v7827
    %v7846 = vpop.f32.mrf.mxu0
    %v7847 = vadd.f32 %v7823, %v7846
    %7848 = vdwg.mxu0
    %v7849 = vxor.u32 %v7847, 2147483648
    %v7850 = vmul.f32 %v7849, 1.442695
    %v7851 = vpow.pop %v7850
    %v7852 = vadd.f32 %v7851, 1.0
    %v7853 = vrcp.pop %v7852
    %v7854 = vmul.f32 %v7852, %v7853
    %v7855 = vsub.f32 1.0, %v7854
    %v7856 = vmul.f32 %v7853, %v7855
    %v7857 = vadd.f32 %v7853, %v7856
    %vm7858 = vweird.f32 %v7852
    %vm7859 = vweird.f32 %v7853
    %vm7860 = vmor %vm7858, %vm7859
    %v7861 = vsel %vm7860, %v7853, %v7857
    %v7862 = vand.u32 2147483647, %v7852
    %vm7863 = vcmp.eq.f32.partialorder %v7862, 8.507059e+37
    %v7864 = vand.u32 %v7852, 2147483648
    %v7865 = vor.u32 1.1754944e-38, %v7864
    %v7866 = vsel %vm7863, %v7865, %v7861
    %v7867 = vmul.f32 1.0, %v7866
    %7868 = vmatpush.msra.mxu0 0.0
    %7869 = vmatpush.msra.mxu0 0.0
    %7870 = vmatpush.msra.mxu0 0.0
    %7871 = vmatpush.msra.mxu0 0.0
    %7872 = vmatpush.msra.mxu0 0.0
    %7873 = vmatpush.msra.mxu0 0.0
    %7874 = vmatpush.msra.mxu0 0.0
    %7875 = vmatpush.msra.mxu0 0.0
    %7876 = vmatpush.msra.mxu0 0.0
    %7877 = vmatpush.msra.mxu0 0.0
    %7878 = vmatpush.msra.mxu0 0.0
    %7879 = vmatpush.msra.mxu0 0.0
    %7880 = vmatpush.msra.mxu0 %v6022
    %7881 = vmatpush.msra.mxu0 %v6021
    %7882 = vmatpush.msra.mxu0 %v6020
    %7883 = vmatpush.msra.mxu0 %v6019
    %7884 = vmatmul.f32.gmra.mxu0 %v7640
    %v7885 = vpop.f32.mrf.mxu0
    %v7886 = vadd.f32 0.0, %v7885
    %7887 = vdwg.mxu0
    %7888 = vmatpush.msra.mxu0 0.0
    %7889 = vmatpush.msra.mxu0 0.0
    %7890 = vmatpush.msra.mxu0 0.0
    %7891 = vmatpush.msra.mxu0 0.0
    %7892 = vmatpush.msra.mxu0 0.0
    %7893 = vmatpush.msra.mxu0 0.0
    %7894 = vmatpush.msra.mxu0 0.0
    %7895 = vmatpush.msra.mxu0 0.0
    %7896 = vmatpush.msra.mxu0 0.0
    %7897 = vmatpush.msra.mxu0 0.0
    %7898 = vmatpush.msra.mxu0 0.0
    %7899 = vmatpush.msra.mxu0 0.0
    %7900 = vmatpush.msra.mxu0 %v6010
    %7901 = vmatpush.msra.mxu0 %v6009
    %7902 = vmatpush.msra.mxu0 %v6008
    %7903 = vmatpush.msra.mxu0 %v6007
    %7904 = vmatmul.f32.gmra.mxu0 %v7827
    %v7905 = vpop.f32.mrf.mxu0
    %v7906 = vadd.f32 %v7886, %v7905
    %7907 = vdwg.mxu0
    %v7908 = vxor.u32 %v7906, 2147483648
    %v7909 = vmul.f32 %v7908, 1.442695
    %v7910 = vpow.pop %v7909
    %v7911 = vadd.f32 %v7910, 1.0
    %v7912 = vrcp.pop %v7911
    %v7913 = vmul.f32 %v7911, %v7912
    %v7914 = vsub.f32 1.0, %v7913
    %v7915 = vmul.f32 %v7912, %v7914
    %v7916 = vadd.f32 %v7912, %v7915
    %vm7917 = vweird.f32 %v7911
    %vm7918 = vweird.f32 %v7912
    %vm7919 = vmor %vm7917, %vm7918
    %v7920 = vsel %vm7919, %v7912, %v7916
    %v7921 = vand.u32 2147483647, %v7911
    %vm7922 = vcmp.eq.f32.partialorder %v7921, 8.507059e+37
    %v7923 = vand.u32 %v7911, 2147483648
    %v7924 = vor.u32 1.1754944e-38, %v7923
    %v7925 = vsel %vm7922, %v7924, %v7920
    %v7926 = vmul.f32 1.0, %v7925
    %7927 = vmatpush.msra.mxu0 0.0
    %7928 = vmatpush.msra.mxu0 0.0
    %7929 = vmatpush.msra.mxu0 0.0
    %7930 = vmatpush.msra.mxu0 0.0
    %7931 = vmatpush.msra.mxu0 0.0
    %7932 = vmatpush.msra.mxu0 0.0
    %7933 = vmatpush.msra.mxu0 0.0
    %7934 = vmatpush.msra.mxu0 0.0
    %7935 = vmatpush.msra.mxu0 0.0
    %7936 = vmatpush.msra.mxu0 0.0
    %7937 = vmatpush.msra.mxu0 0.0
    %7938 = vmatpush.msra.mxu0 0.0
    %7939 = vmatpush.msra.mxu0 %v6026
    %7940 = vmatpush.msra.mxu0 %v6025
    %7941 = vmatpush.msra.mxu0 %v6024
    %7942 = vmatpush.msra.mxu0 %v6023
    %7943 = vmatmul.f32.gmra.mxu0 %v7640
    %v7944 = vpop.f32.mrf.mxu0
    %v7945 = vadd.f32 0.0, %v7944
    %7946 = vdwg.mxu0
    %v7947 = vmul.f32 %v7867, %v7945
    %7948 = vmatpush.msra.mxu0 0.0
    %7949 = vmatpush.msra.mxu0 0.0
    %7950 = vmatpush.msra.mxu0 0.0
    %7951 = vmatpush.msra.mxu0 0.0
    %7952 = vmatpush.msra.mxu0 0.0
    %7953 = vmatpush.msra.mxu0 0.0
    %7954 = vmatpush.msra.mxu0 0.0
    %7955 = vmatpush.msra.mxu0 0.0
    %7956 = vmatpush.msra.mxu0 0.0
    %7957 = vmatpush.msra.mxu0 0.0
    %7958 = vmatpush.msra.mxu0 0.0
    %7959 = vmatpush.msra.mxu0 0.0
    %7960 = vmatpush.msra.mxu0 %v6014
    %7961 = vmatpush.msra.mxu0 %v6013
    %7962 = vmatpush.msra.mxu0 %v6012
    %7963 = vmatpush.msra.mxu0 %v6011
    %7964 = vmatmul.f32.gmra.mxu0 %v7827
    %v7965 = vpop.f32.mrf.mxu0
    %v7966 = vadd.f32 %v7947, %v7965
    %7967 = vdwg.mxu0
    %v7968 = vtanh.pop %v7966
    %v7969 = vsub.f32 1.0, %v7926
    %v7970 = vmul.f32 %v7969, %v7968
    %v7971 = vmul.f32 %v7926, %v7638
    %v7972 = vadd.f32 %v7970, %v7971
    %v7974 = vsel %vm130, %v7972, 0
    %7976 = vmatpush.msra.mxu0 0.0
    %7977 = vmatpush.msra.mxu0 0.0
    %7978 = vmatpush.msra.mxu0 0.0
    %7979 = vmatpush.msra.mxu0 0.0
    %7980 = vmatpush.msra.mxu0 0.0
    %7981 = vmatpush.msra.mxu0 0.0
    %7982 = vmatpush.msra.mxu0 0.0
    %7983 = vmatpush.msra.mxu0 0.0
    %7984 = vmatpush.msra.mxu0 0.0
    %7985 = vmatpush.msra.mxu0 0.0
    %7986 = vmatpush.msra.mxu0 0.0
    %7987 = vmatpush.msra.mxu0 0.0
    %7988 = vmatpush.msra.mxu0 %v6034
    %7989 = vmatpush.msra.mxu0 %v6033
    %7990 = vmatpush.msra.mxu0 %v6032
    %7991 = vmatpush.msra.mxu0 %v6031
    %7992 = vmatmul.f32.gmra.mxu0 %v7974
    %v7993 = vpop.f32.mrf.mxu0
    %v7994 = vadd.f32 0.0, %v7993
    %7995 = vdwg.mxu0
    %7996 = vmatpush.msra.mxu0 0.0
    %7997 = vmatpush.msra.mxu0 0.0
    %7998 = vmatpush.msra.mxu0 0.0
    %7999 = vmatpush.msra.mxu0 0.0
    %8000 = vmatpush.msra.mxu0 0.0
    %8001 = vmatpush.msra.mxu0 0.0
    %8002 = vmatpush.msra.mxu0 0.0
    %8003 = vmatpush.msra.mxu0 0.0
    %8004 = vmatpush.msra.mxu0 0.0
    %8005 = vmatpush.msra.mxu0 0.0
    %8006 = vmatpush.msra.mxu0 0.0
    %8007 = vmatpush.msra.mxu0 0.0
    %8008 = vmatpush.msra.mxu0 %v6030
    %8009 = vmatpush.msra.mxu0 %v6029
    %8010 = vmatpush.msra.mxu0 %v6028
    %8011 = vmatpush.msra.mxu0 %v6027
    %8012 = vmatmul.f32.gmra.mxu0 %v7685
    %v8013 = vpop.f32.mrf.mxu0
    %v8014 = vadd.f32 %v7994, %v8013
    %8015 = vdwg.mxu0
    %v8016 = vtanh.pop %v8014
    %8017 = vst.msk [vmem:[#allocation2 + $0xa] sm:$0x3] %vm6358, %v8016
    %v8019 = vsel %vm130, %v8016, 0
    %8021 = vmatpush.msra.mxu0 0.0
    %8022 = vmatpush.msra.mxu0 0.0
    %8023 = vmatpush.msra.mxu0 0.0
    %8024 = vmatpush.msra.mxu0 0.0
    %8025 = vmatpush.msra.mxu0 0.0
    %8026 = vmatpush.msra.mxu0 0.0
    %8027 = vmatpush.msra.mxu0 0.0
    %8028 = vmatpush.msra.mxu0 0.0
    %8029 = vmatpush.msra.mxu0 0.0
    %8030 = vmatpush.msra.mxu0 0.0
    %8031 = vmatpush.msra.mxu0 0.0
    %8032 = vmatpush.msra.mxu0 0.0
    %8033 = vmatpush.msra.mxu0 %v5994
    %8034 = vmatpush.msra.mxu0 %v5993
    %8035 = vmatpush.msra.mxu0 %v5992
    %8036 = vmatpush.msra.mxu0 %v5991
    %8037 = vmatmul.f32.gmra.mxu0 %v8019
    %v8038 = vpop.f32.mrf.mxu0
    %v8039 = vadd.f32 0.0, %v8038
    %8040 = vdwg.mxu0
    %v8042 = vrot.slane %v8039, 4
    %v8044 = vadd.f32 %v5935, %v8042
    %v8045 = vxor.u32 %v8044, 2147483648
    %v8046 = vmul.f32 %v8045, 1.442695
    %v8047 = vpow.pop %v8046
    %v8048 = vadd.f32 %v8047, 1.0
    %v8049 = vrcp.pop %v8048
    %v8050 = vmul.f32 %v8048, %v8049
    %v8051 = vsub.f32 1.0, %v8050
    %v8052 = vmul.f32 %v8049, %v8051
    %v8053 = vadd.f32 %v8049, %v8052
    %vm8054 = vweird.f32 %v8048
    %vm8055 = vweird.f32 %v8049
    %vm8056 = vmor %vm8054, %vm8055
    %v8057 = vsel %vm8056, %v8049, %v8053
    %v8058 = vand.u32 2147483647, %v8048
    %vm8059 = vcmp.eq.f32.partialorder %v8058, 8.507059e+37
    %v8060 = vand.u32 %v8048, 2147483648
    %v8061 = vor.u32 1.1754944e-38, %v8060
    %v8062 = vsel %vm8059, %v8061, %v8057
    %v8063 = vmul.f32 1.0, %v8062
    %8064 = vmatpush.msra.mxu0 0.0
    %8065 = vmatpush.msra.mxu0 0.0
    %8066 = vmatpush.msra.mxu0 0.0
    %8067 = vmatpush.msra.mxu0 0.0
    %8068 = vmatpush.msra.mxu0 0.0
    %8069 = vmatpush.msra.mxu0 0.0
    %8070 = vmatpush.msra.mxu0 0.0
    %8071 = vmatpush.msra.mxu0 0.0
    %8072 = vmatpush.msra.mxu0 0.0
    %8073 = vmatpush.msra.mxu0 0.0
    %8074 = vmatpush.msra.mxu0 0.0
    %8075 = vmatpush.msra.mxu0 0.0
    %8076 = vmatpush.msra.mxu0 %v5998
    %8077 = vmatpush.msra.mxu0 %v5997
    %8078 = vmatpush.msra.mxu0 %v5996
    %8079 = vmatpush.msra.mxu0 %v5995
    %8080 = vmatmul.f32.gmra.mxu0 %v8019
    %v8081 = vpop.f32.mrf.mxu0
    %v8082 = vadd.f32 0.0, %v8081
    %8083 = vdwg.mxu0
    %v8085 = vrot.slane %v8082, 4
    %v8087 = vadd.f32 %v5962, %v8085
    %v8088 = vxor.u32 %v8087, 2147483648
    %v8089 = vmul.f32 %v8088, 1.442695
    %v8090 = vpow.pop %v8089
    %v8091 = vadd.f32 %v8090, 1.0
    %v8092 = vrcp.pop %v8091
    %v8093 = vmul.f32 %v8091, %v8092
    %v8094 = vsub.f32 1.0, %v8093
    %v8095 = vmul.f32 %v8092, %v8094
    %v8096 = vadd.f32 %v8092, %v8095
    %vm8097 = vweird.f32 %v8091
    %vm8098 = vweird.f32 %v8092
    %vm8099 = vmor %vm8097, %vm8098
    %v8100 = vsel %vm8099, %v8092, %v8096
    %v8101 = vand.u32 2147483647, %v8091
    %vm8102 = vcmp.eq.f32.partialorder %v8101, 8.507059e+37
    %v8103 = vand.u32 %v8091, 2147483648
    %v8104 = vor.u32 1.1754944e-38, %v8103
    %v8105 = vsel %vm8102, %v8104, %v8100
    %v8106 = vmul.f32 1.0, %v8105
    %8107 = vmatpush.msra.mxu0 0.0
    %8108 = vmatpush.msra.mxu0 0.0
    %8109 = vmatpush.msra.mxu0 0.0
    %8110 = vmatpush.msra.mxu0 0.0
    %8111 = vmatpush.msra.mxu0 0.0
    %8112 = vmatpush.msra.mxu0 0.0
    %8113 = vmatpush.msra.mxu0 0.0
    %8114 = vmatpush.msra.mxu0 0.0
    %8115 = vmatpush.msra.mxu0 0.0
    %8116 = vmatpush.msra.mxu0 0.0
    %8117 = vmatpush.msra.mxu0 0.0
    %8118 = vmatpush.msra.mxu0 0.0
    %8119 = vmatpush.msra.mxu0 %v6002
    %8120 = vmatpush.msra.mxu0 %v6001
    %8121 = vmatpush.msra.mxu0 %v6000
    %8122 = vmatpush.msra.mxu0 %v5999
    %8123 = vmatmul.f32.gmra.mxu0 %v8019
    %v8124 = vpop.f32.mrf.mxu0
    %v8125 = vadd.f32 0.0, %v8124
    %8126 = vdwg.mxu0
    %v8128 = vrot.slane %v8125, 4
    %v8130 = vmul.f32 %v8063, %v8128
    %v8131 = vadd.f32 %v5989, %v8130
    %v8132 = vtanh.pop %v8131
    %v8133 = vsub.f32 1.0, %v8106
    %v8134 = vmul.f32 %v8133, %v8132
    %v8135 = vrot.slane %v8016, 4
    %v8137 = vmul.f32 %v8106, %v8135
    %v8138 = vadd.f32 %v8134, %v8137
    %8139 = vmatpush.msra.mxu0 0.0
    %8140 = vmatpush.msra.mxu0 0.0
    %8141 = vmatpush.msra.mxu0 0.0
    %8142 = vmatpush.msra.mxu0 0.0
    %8143 = vmatpush.msra.mxu0 0.0
    %8144 = vmatpush.msra.mxu0 0.0
    %8145 = vmatpush.msra.mxu0 0.0
    %8146 = vmatpush.msra.mxu0 0.0
    %8147 = vmatpush.msra.mxu0 0.0
    %8148 = vmatpush.msra.mxu0 0.0
    %8149 = vmatpush.msra.mxu0 0.0
    %8150 = vmatpush.msra.mxu0 0.0
    %8151 = vmatpush.msra.mxu0 %v6018
    %8152 = vmatpush.msra.mxu0 %v6017
    %8153 = vmatpush.msra.mxu0 %v6016
    %8154 = vmatpush.msra.mxu0 %v6015
    %8155 = vmatmul.f32.gmra.mxu0 %v7974
    %v8156 = vpop.f32.mrf.mxu0
    %v8157 = vadd.f32 0.0, %v8156
    %8158 = vdwg.mxu0
    %v8160 = vrot.slane %v8138, 4
    %v8161 = vsel %vm130, %v8160, 0
    %8163 = vmatpush.msra.mxu0 0.0
    %8164 = vmatpush.msra.mxu0 0.0
    %8165 = vmatpush.msra.mxu0 0.0
    %8166 = vmatpush.msra.mxu0 0.0
    %8167 = vmatpush.msra.mxu0 0.0
    %8168 = vmatpush.msra.mxu0 0.0
    %8169 = vmatpush.msra.mxu0 0.0
    %8170 = vmatpush.msra.mxu0 0.0
    %8171 = vmatpush.msra.mxu0 0.0
    %8172 = vmatpush.msra.mxu0 0.0
    %8173 = vmatpush.msra.mxu0 0.0
    %8174 = vmatpush.msra.mxu0 0.0
    %8175 = vmatpush.msra.mxu0 %v6006
    %8176 = vmatpush.msra.mxu0 %v6005
    %8177 = vmatpush.msra.mxu0 %v6004
    %8178 = vmatpush.msra.mxu0 %v6003
    %8179 = vmatmul.f32.gmra.mxu0 %v8161
    %v8180 = vpop.f32.mrf.mxu0
    %v8181 = vadd.f32 %v8157, %v8180
    %8182 = vdwg.mxu0
    %v8183 = vxor.u32 %v8181, 2147483648
    %v8184 = vmul.f32 %v8183, 1.442695
    %v8185 = vpow.pop %v8184
    %v8186 = vadd.f32 %v8185, 1.0
    %v8187 = vrcp.pop %v8186
    %v8188 = vmul.f32 %v8186, %v8187
    %v8189 = vsub.f32 1.0, %v8188
    %v8190 = vmul.f32 %v8187, %v8189
    %v8191 = vadd.f32 %v8187, %v8190
    %vm8192 = vweird.f32 %v8186
    %vm8193 = vweird.f32 %v8187
    %vm8194 = vmor %vm8192, %vm8193
    %v8195 = vsel %vm8194, %v8187, %v8191
    %v8196 = vand.u32 2147483647, %v8186
    %vm8197 = vcmp.eq.f32.partialorder %v8196, 8.507059e+37
    %v8198 = vand.u32 %v8186, 2147483648
    %v8199 = vor.u32 1.1754944e-38, %v8198
    %v8200 = vsel %vm8197, %v8199, %v8195
    %v8201 = vmul.f32 1.0, %v8200
    %8202 = vmatpush.msra.mxu0 0.0
    %8203 = vmatpush.msra.mxu0 0.0
    %8204 = vmatpush.msra.mxu0 0.0
    %8205 = vmatpush.msra.mxu0 0.0
    %8206 = vmatpush.msra.mxu0 0.0
    %8207 = vmatpush.msra.mxu0 0.0
    %8208 = vmatpush.msra.mxu0 0.0
    %8209 = vmatpush.msra.mxu0 0.0
    %8210 = vmatpush.msra.mxu0 0.0
    %8211 = vmatpush.msra.mxu0 0.0
    %8212 = vmatpush.msra.mxu0 0.0
    %8213 = vmatpush.msra.mxu0 0.0
    %8214 = vmatpush.msra.mxu0 %v6022
    %8215 = vmatpush.msra.mxu0 %v6021
    %8216 = vmatpush.msra.mxu0 %v6020
    %8217 = vmatpush.msra.mxu0 %v6019
    %8218 = vmatmul.f32.gmra.mxu0 %v7974
    %v8219 = vpop.f32.mrf.mxu0
    %v8220 = vadd.f32 0.0, %v8219
    %8221 = vdwg.mxu0
    %8222 = vmatpush.msra.mxu0 0.0
    %8223 = vmatpush.msra.mxu0 0.0
    %8224 = vmatpush.msra.mxu0 0.0
    %8225 = vmatpush.msra.mxu0 0.0
    %8226 = vmatpush.msra.mxu0 0.0
    %8227 = vmatpush.msra.mxu0 0.0
    %8228 = vmatpush.msra.mxu0 0.0
    %8229 = vmatpush.msra.mxu0 0.0
    %8230 = vmatpush.msra.mxu0 0.0
    %8231 = vmatpush.msra.mxu0 0.0
    %8232 = vmatpush.msra.mxu0 0.0
    %8233 = vmatpush.msra.mxu0 0.0
    %8234 = vmatpush.msra.mxu0 %v6010
    %8235 = vmatpush.msra.mxu0 %v6009
    %8236 = vmatpush.msra.mxu0 %v6008
    %8237 = vmatpush.msra.mxu0 %v6007
    %8238 = vmatmul.f32.gmra.mxu0 %v8161
    %v8239 = vpop.f32.mrf.mxu0
    %v8240 = vadd.f32 %v8220, %v8239
    %8241 = vdwg.mxu0
    %v8242 = vxor.u32 %v8240, 2147483648
    %v8243 = vmul.f32 %v8242, 1.442695
    %v8244 = vpow.pop %v8243
    %v8245 = vadd.f32 %v8244, 1.0
    %v8246 = vrcp.pop %v8245
    %v8247 = vmul.f32 %v8245, %v8246
    %v8248 = vsub.f32 1.0, %v8247
    %v8249 = vmul.f32 %v8246, %v8248
    %v8250 = vadd.f32 %v8246, %v8249
    %vm8251 = vweird.f32 %v8245
    %vm8252 = vweird.f32 %v8246
    %vm8253 = vmor %vm8251, %vm8252
    %v8254 = vsel %vm8253, %v8246, %v8250
    %v8255 = vand.u32 2147483647, %v8245
    %vm8256 = vcmp.eq.f32.partialorder %v8255, 8.507059e+37
    %v8257 = vand.u32 %v8245, 2147483648
    %v8258 = vor.u32 1.1754944e-38, %v8257
    %v8259 = vsel %vm8256, %v8258, %v8254
    %v8260 = vmul.f32 1.0, %v8259
    %8261 = vmatpush.msra.mxu0 0.0
    %8262 = vmatpush.msra.mxu0 0.0
    %8263 = vmatpush.msra.mxu0 0.0
    %8264 = vmatpush.msra.mxu0 0.0
    %8265 = vmatpush.msra.mxu0 0.0
    %8266 = vmatpush.msra.mxu0 0.0
    %8267 = vmatpush.msra.mxu0 0.0
    %8268 = vmatpush.msra.mxu0 0.0
    %8269 = vmatpush.msra.mxu0 0.0
    %8270 = vmatpush.msra.mxu0 0.0
    %8271 = vmatpush.msra.mxu0 0.0
    %8272 = vmatpush.msra.mxu0 0.0
    %8273 = vmatpush.msra.mxu0 %v6026
    %8274 = vmatpush.msra.mxu0 %v6025
    %8275 = vmatpush.msra.mxu0 %v6024
    %8276 = vmatpush.msra.mxu0 %v6023
    %8277 = vmatmul.f32.gmra.mxu0 %v7974
    %v8278 = vpop.f32.mrf.mxu0
    %v8279 = vadd.f32 0.0, %v8278
    %8280 = vdwg.mxu0
    %v8281 = vmul.f32 %v8201, %v8279
    %8282 = vmatpush.msra.mxu0 0.0
    %8283 = vmatpush.msra.mxu0 0.0
    %8284 = vmatpush.msra.mxu0 0.0
    %8285 = vmatpush.msra.mxu0 0.0
    %8286 = vmatpush.msra.mxu0 0.0
    %8287 = vmatpush.msra.mxu0 0.0
    %8288 = vmatpush.msra.mxu0 0.0
    %8289 = vmatpush.msra.mxu0 0.0
    %8290 = vmatpush.msra.mxu0 0.0
    %8291 = vmatpush.msra.mxu0 0.0
    %8292 = vmatpush.msra.mxu0 0.0
    %8293 = vmatpush.msra.mxu0 0.0
    %8294 = vmatpush.msra.mxu0 %v6014
    %8295 = vmatpush.msra.mxu0 %v6013
    %8296 = vmatpush.msra.mxu0 %v6012
    %8297 = vmatpush.msra.mxu0 %v6011
    %8298 = vmatmul.f32.gmra.mxu0 %v8161
    %v8299 = vpop.f32.mrf.mxu0
    %v8300 = vadd.f32 %v8281, %v8299
    %8301 = vdwg.mxu0
    %v8302 = vtanh.pop %v8300
    %v8303 = vsub.f32 1.0, %v8260
    %v8304 = vmul.f32 %v8303, %v8302
    %v8305 = vmul.f32 %v8260, %v7972
    %v8306 = vadd.f32 %v8304, %v8305
    %v8308 = vsel %vm130, %v8306, 0
    %8310 = vmatpush.msra.mxu0 0.0
    %8311 = vmatpush.msra.mxu0 0.0
    %8312 = vmatpush.msra.mxu0 0.0
    %8313 = vmatpush.msra.mxu0 0.0
    %8314 = vmatpush.msra.mxu0 0.0
    %8315 = vmatpush.msra.mxu0 0.0
    %8316 = vmatpush.msra.mxu0 0.0
    %8317 = vmatpush.msra.mxu0 0.0
    %8318 = vmatpush.msra.mxu0 0.0
    %8319 = vmatpush.msra.mxu0 0.0
    %8320 = vmatpush.msra.mxu0 0.0
    %8321 = vmatpush.msra.mxu0 0.0
    %8322 = vmatpush.msra.mxu0 %v6034
    %8323 = vmatpush.msra.mxu0 %v6033
    %8324 = vmatpush.msra.mxu0 %v6032
    %8325 = vmatpush.msra.mxu0 %v6031
    %8326 = vmatmul.f32.gmra.mxu0 %v8308
    %v8327 = vpop.f32.mrf.mxu0
    %v8328 = vadd.f32 0.0, %v8327
    %8329 = vdwg.mxu0
    %8330 = vmatpush.msra.mxu0 0.0
    %8331 = vmatpush.msra.mxu0 0.0
    %8332 = vmatpush.msra.mxu0 0.0
    %8333 = vmatpush.msra.mxu0 0.0
    %8334 = vmatpush.msra.mxu0 0.0
    %8335 = vmatpush.msra.mxu0 0.0
    %8336 = vmatpush.msra.mxu0 0.0
    %8337 = vmatpush.msra.mxu0 0.0
    %8338 = vmatpush.msra.mxu0 0.0
    %8339 = vmatpush.msra.mxu0 0.0
    %8340 = vmatpush.msra.mxu0 0.0
    %8341 = vmatpush.msra.mxu0 0.0
    %8342 = vmatpush.msra.mxu0 %v6030
    %8343 = vmatpush.msra.mxu0 %v6029
    %8344 = vmatpush.msra.mxu0 %v6028
    %8345 = vmatpush.msra.mxu0 %v6027
    %8346 = vmatmul.f32.gmra.mxu0 %v8019
    %v8347 = vpop.f32.mrf.mxu0
    %v8348 = vadd.f32 %v8328, %v8347
    %8349 = vdwg.mxu0
    %v8350 = vtanh.pop %v8348
    %8351 = vst.msk [vmem:[#allocation2 + $0xc] sm:$0x3] %vm6358, %v8350
    %v8352 = vld [vmem:[#allocation2] sm:$0xff]
    %v8353 = vld [vmem:[#allocation2 + $0x8] sm:$0xff]
    %v8354 = vld [vmem:[%s3 + $0x1e3] sm:$0x1]
    %v8355 = vld [vmem:[%s3 + $0x1e4] sm:$0x1]
    %v8356 = vsel %vm130, %v8352, 0.0
    %8357 = vadd.xlane.f32.xlu0 %v8356
    %v8358 = vpop.xlane.xlu0 %8357
    %v8359 = vsel %vm130, %v8353, 0.0
    %8360 = vadd.xlane.f32.xlu0 %v8359
    %v8361 = vpop.xlane.xlu0 %8360
    %v8362 = vmul.f32 %v8358, %v240
    %v8363 = vmul.f32 %v8361, %v240
    %v8364 = vsub.f32 %v8352, %v8362
    %v8365 = vsub.f32 %v8353, %v8363
    %v8366 = vmul.f32 %v8364, %v8364
    %v8367 = vmul.f32 %v8365, %v8365
    %v8368 = vsel %vm130, %v8366, 0.0
    %8369 = vadd.xlane.f32.xlu0 %v8368
    %v8370 = vpop.xlane.xlu0 %8369
    %v8371 = vsel %vm130, %v8367, 0.0
    %8372 = vadd.xlane.f32.xlu0 %v8371
    %v8373 = vpop.xlane.xlu0 %8372
    %v8374 = vmul.f32 %v8370, 0.032258064
    %v8375 = vmul.f32 %v8373, 0.032258064
    %v8376 = vrsqrt.pop %v8374
    %v8377 = vmul.f32 %v8376, %v8374
    %v8378 = vmul.f32 %v8377, %v8376
    %v8379 = vmul.f32 0.5, %v8378
    %v8380 = vsub.f32 1.5, %v8379
    %v8381 = vmul.f32 %v8376, %v8380
    %v8382 = vmul.f32 %v8374, %v8381
    %vm8383 = vcmp.eq.f32.partialorder %v8374, inf
    %v8384 = vsel %vm8383, %v8374, %v8382
    %vm8385 = vcmp.eq.f32.partialorder %v8374, 0.0
    %v8386 = vand.u32 %v8374, 2147483648
    %v8387 = vsel %vm8385, %v8386, %v8384
    %v8388 = vrsqrt.pop %v8375
    %v8389 = vmul.f32 %v8388, %v8375
    %v8390 = vmul.f32 %v8389, %v8388
    %v8391 = vmul.f32 0.5, %v8390
    %v8392 = vsub.f32 1.5, %v8391
    %v8393 = vmul.f32 %v8388, %v8392
    %v8394 = vmul.f32 %v8375, %v8393
    %vm8395 = vcmp.eq.f32.partialorder %v8375, inf
    %v8396 = vsel %vm8395, %v8375, %v8394
    %vm8397 = vcmp.eq.f32.partialorder %v8375, 0.0
    %v8398 = vand.u32 %v8375, 2147483648
    %v8399 = vsel %vm8397, %v8398, %v8396
    %v8400 = vadd.f32 %v8387, 1e-06
    %v8401 = vadd.f32 %v8399, 1e-06
    %v8402 = vrcp.pop %v8400
    %v8403 = vrcp.pop %v8401
    %v8404 = vperm.slane %v8354, 0
    %v8405 = vmul.f32 %v8404, %v8364
    %v8406 = vmul.f32 %v8404, %v8365
    %v8407 = vmul.f32 %v8405, %v8402
    %v8408 = vmul.f32 %v8406, %v8403
    %v8409 = vperm.slane %v8355, 0
    %v8410 = vadd.f32 %v8407, %v8409
    %v8411 = vadd.f32 %v8408, %v8409
    %v8412 = vld [vmem:[%s4] sm:$0xff]
    %v8413 = vld [vmem:[%s4 + $0x8] sm:$0xff]
    %v8414 = vld [vmem:[%s4 + $0x10] sm:$0xff]
    %v8415 = vld [vmem:[%s4 + $0x18] sm:$0xff]
    %v8416 = vld [vmem:[%s4 + $0x20] sm:$0x1]
    %v8417 = vperm.slane %v8416, 0
    %v8419 = vsel %vm130, %v8410, 0
    %v8422 = vsel %vm130, %v8411, 0
    %8424 = vmatpush.msra.mxu0 0.0
    %8425 = vmatpush.msra.mxu0 0.0
    %8426 = vmatpush.msra.mxu0 0.0
    %8427 = vmatpush.msra.mxu0 0.0
    %8428 = vmatpush.msra.mxu0 0.0
    %8429 = vmatpush.msra.mxu0 0.0
    %8430 = vmatpush.msra.mxu0 0.0
    %8431 = vmatpush.msra.mxu0 0.0
    %8432 = vmatpush.msra.mxu0 0.0
    %8433 = vmatpush.msra.mxu0 0.0
    %8434 = vmatpush.msra.mxu0 0.0
    %8435 = vmatpush.msra.mxu0 0.0
    %8436 = vmatpush.msra.mxu0 %v8415
    %8437 = vmatpush.msra.mxu0 %v8414
    %8438 = vmatpush.msra.mxu0 %v8413
    %8439 = vmatpush.msra.mxu0 %v8412
    %8440 = vmatmul.f32.gmra.mxu0 %v8419
    %v8441 = vpop.f32.mrf.mxu0
    %v8442 = vadd.f32 %v8417, %v8441
    %8443 = vmatmul.f32.gmra.mxu0 %v8422
    %v8444 = vpop.f32.mrf.mxu0
    %v8445 = vadd.f32 %v8417, %v8444
    %8446 = vdwg.mxu0
    %v8447 = vld [vmem:[%s0 + $0x28] sm:$0xff]
    %v8448 = vld [vmem:[%s0 + $0x30] sm:$0xff]
    %8449 = vmax.xlane.f32.xlu0 %v8442
    %v8450 = vpop.xlane.xlu0 %8449
    %8451 = vmax.xlane.f32.xlu0 %v8445
    %v8452 = vpop.xlane.xlu0 %8451
    %v8453 = vsub.f32 %v8442, %v8450
    %v8454 = vsub.f32 %v8445, %v8452
    %v8455 = vmul.f32 %v8453, 1.442695
    %v8456 = vpow.pop %v8455
    %v8457 = vmul.f32 %v8454, 1.442695
    %v8458 = vpow.pop %v8457
    %8459 = vadd.xlane.f32.xlu0 %v8456
    %v8460 = vpop.xlane.xlu0 %8459
    %8461 = vadd.xlane.f32.xlu0 %v8458
    %v8462 = vpop.xlane.xlu0 %8461
    %v8463 = vlog2.pop %v8460
    %v8464 = vmul.f32 %v8463, 0.6931472
    %v8465 = vlog2.pop %v8462
    %v8466 = vmul.f32 %v8465, 0.6931472
    %v8467 = vadd.f32 %v8464, %v8450
    %v8468 = vadd.f32 %v8466, %v8452
    %8469 = vset.pattern.permute.xlu0 0
    %8470 = vperm.xlu0 %8469, %v8447
    %v8471 = vpop.permute.xlu0 %8470
    %8472 = vset.pattern.permute.xlu0 0
    %8473 = vperm.xlu0 %8472, %v8448
    %v8474 = vpop.permute.xlu0 %8473
    %vm8475 = vcmp.eq.s32.totalorder %v8471, %v29
    %vm8476 = vcmp.eq.s32.totalorder %v8474, %v29
    %v8477 = vsel %vm8475, 1, 0
    %v8478 = vsel %vm8476, 1, 0
    %v8479 = vcvt.s32.f32 %v8477
    %v8480 = vcvt.s32.f32 %v8478
    %v8481 = vmul.f32 %v8442, %v8479
    %v8482 = vmul.f32 %v8445, %v8480
    %8483 = vadd.xlane.f32.xlu0 %v8481
    %v8484 = vpop.xlane.xlu0 %8483
    %8485 = vadd.xlane.f32.xlu0 %v8482
    %v8486 = vpop.xlane.xlu0 %8485
    %vm8487 = vcmp.ne.s32.totalorder %v8447, 0
    %vm8488 = vcmp.ne.s32.totalorder %v8448, 0
    %v8489 = vsel %vm8487, 1, 0
    %v8490 = vsel %vm8488, 1, 0
    %v8491 = vcvt.s32.f32 %v8489
    %v8492 = vcvt.s32.f32 %v8490
    %v8493 = vsub.f32 %v8467, %v8484
    %v8494 = vsub.f32 %v8468, %v8486
    %v8495 = vmul.f32 %v8493, %v8491
    %v8496 = vmul.f32 %v8494, %v8492
    %vm8497 = vcmask 130048
    %v8499 = vsel %vm8497, 0.071428575, 0
    %8501 = vmatpush.msra.mxu0 0.0
    %8502 = vmatpush.msra.mxu0 0.0
    %8503 = vmatpush.msra.mxu0 0.0
    %8504 = vmatpush.msra.mxu0 0.0
    %8505 = vmatpush.msra.mxu0 0.0
    %8506 = vmatpush.msra.mxu0 0.0
    %8507 = vmatpush.msra.mxu0 0.0
    %8508 = vmatpush.msra.mxu0 0.0
    %8509 = vmatpush.msra.mxu0 0.0
    %8510 = vmatpush.msra.mxu0 0.0
    %8511 = vmatpush.msra.mxu0 0.0
    %8512 = vmatpush.msra.mxu0 0.0
    %8513 = vmatpush.msra.mxu0 0.0
    %8514 = vmatpush.msra.mxu0 0.0
    %8515 = vmatpush.msra.mxu0 %v8496
    %8516 = vmatpush.msra.mxu0 %v8495
    %8517 = vmatmul.f32.gmra.mxu0 %v8499
    %v8518 = vpop.f32.mrf.mxu0
    %v8519 = vadd.f32 0.0, %v8518
    %8520 = vdwg.mxu0
    %vm8521 = vcmask 0
    %8522 = vst.msk [vmem:[#allocation3] sm:$0x1] %vm8521, %v8519
    // Predicated region
    $region22: #{model_forward.1} parent=1 // pred_check
      _
    $region23: #{model_forward.1} parent=1 // pred_check_branch
      %8524 = sbr.rel (0) target = $region25
    $region24: #{model_forward.1} parent=1 // pred_region
      %8526 = vsyncadd [#allocation4], 0
      %s8528 = sshll.u32 [#allocation3], 4
      %s8529 = int_to_ptr.vmem [resolvable:$true] %s8528
      %s8530 = sshll.u32 %s5, 4
      %s8531 = int_to_ptr.hbm [resolvable:$true] %s8530
      %8533 = dma.vmem_to_hbm [thread:$0]  %s8529, 16, %s8531, [#allocation4]
    $region25: #{model_forward.1} parent=1 // pred_fallthru
      _
    // Predicated region
    $region26: #{model_forward.1} parent=1 // pred_check
      _
    $region27: #{model_forward.1} parent=1 // pred_check_branch
      %8535 = sbr.rel (0) target = $region29
    $region28: #{model_forward.1} parent=1 // pred_region
      %8537 = dma.done [#allocation4], 16
    $region29: #{model_forward.1} parent=1 // pred_fallthru
      _
    %8538 = vsyncpa [#allocation4], 1

</llo_original>
